<compile_context>
chip_gen: v6e
topology: v6e:2x2x1
jax: 0.10.0
libtpu: 0.0.40
codegen_flags: <defaults>
</compile_context>

<pallas_src>
import functools

import jax
import jax.numpy as jnp
from jax.experimental import pallas as pl
from jax.experimental.pallas import tpu as pltpu

_EPS = 1e-5
_LANE = 128


def _round_up(v, m):
    return (v + m - 1) // m * m


# ----------------------- kernel 1: BN1 + ReLU + 1x1 conv --------------------- #

def _bn_relu_conv1x1_kernel(x_ref, s_ref, b_ref, w_ref,
                            h_ref, sum_ref, ssq_ref):
    # x:(TM,Cin)  s/b:(1,Cin)  w:(Cin,Cmid_p) -> h:(TM,Cmid_p), channel stats
    a = jnp.maximum(x_ref[...] * s_ref[...] + b_ref[...], 0.0)        # BN1+ReLU
    h = jnp.dot(a, w_ref[...], preferred_element_type=jnp.float32)    # 1x1 conv
    h_ref[...] = h                                                    # lane-dense store

    @pl.when(pl.program_id(0) == 0)
    def _init():
        sum_ref[...] = jnp.zeros_like(sum_ref)
        ssq_ref[...] = jnp.zeros_like(ssq_ref)

    # accumulated per-channel stats of h for BatchNorm2 (saves an HBM pass over h)
    sum_ref[...] += jnp.sum(h, axis=0, keepdims=True)
    ssq_ref[...] += jnp.sum(h * h, axis=0, keepdims=True)


# ------------------ kernel 2: BN2 + ReLU + 3x3 conv (im2col) ------------------ #

def _bn_relu_conv3x3_kernel(h_ref, s_ref, b_ref, w_ref, yy_ref, xx_ref,
                            o_ref, slab_ref, *, H, W):
    # h:(M,Cmid_p)  s/b:(1,Cmid_p)  w:(9*Cmid_p,Cout_p)  yy/xx:(M,1) int32
    # slab (VMEM scratch): (M, 9*Cmid_p) im2col patches.
    M, C = h_ref.shape
    a = jnp.maximum(h_ref[...] * s_ref[...] + b_ref[...], 0.0)        # BN2+ReLU
    y = yy_ref[...]
    x = xx_ref[...]

    # Build the 9 shifted taps with XLU rolls on the flattened (M, C) layout.
    # Rolls that cross a row / image boundary land on positions whose in-image
    # coordinate is out of range, so the border mask zeroes exactly those.
    t = 0
    for dy in (-1, 0, 1):
        for dx in (-1, 0, 1):
            off = dy * W + dx
            shifted = a if off == 0 else pltpu.roll(a, (-off) % M, 0)
            valid = ((y + dy >= 0) & (y + dy < H) &
                     (x + dx >= 0) & (x + dx < W))
            slab_ref[:, t * C:(t + 1) * C] = jnp.where(valid, shifted, 0.0)
            t += 1

    # single im2col matmul: (M, 9*Cmid_p) @ (9*Cmid_p, Cout_p)
    o_ref[...] = jnp.dot(slab_ref[...], w_ref[...],
                         preferred_element_type=jnp.float32)


# ------------------------------ pallas_call glue ------------------------------ #

def _conv1_call(x_flat, s1, b1, w1p, tm):
    M, Cin = x_flat.shape
    Cmid_p = w1p.shape[1]
    return pl.pallas_call(
        _bn_relu_conv1x1_kernel,
        grid=(M // tm,),
        in_specs=[
            pl.BlockSpec((tm, Cin), lambda i: (i, 0)),
            pl.BlockSpec((1, Cin), lambda i: (0, 0)),
            pl.BlockSpec((1, Cin), lambda i: (0, 0)),
            pl.BlockSpec((Cin, Cmid_p), lambda i: (0, 0)),
        ],
        out_specs=[
            pl.BlockSpec((tm, Cmid_p), lambda i: (i, 0)),
            pl.BlockSpec((1, Cmid_p), lambda i: (0, 0)),   # accumulated stats
            pl.BlockSpec((1, Cmid_p), lambda i: (0, 0)),
        ],
        out_shape=[
            jax.ShapeDtypeStruct((M, Cmid_p), jnp.float32),
            jax.ShapeDtypeStruct((1, Cmid_p), jnp.float32),
            jax.ShapeDtypeStruct((1, Cmid_p), jnp.float32),
        ],
        compiler_params=pltpu.CompilerParams(
            # stats accumulate across row tiles -> sequential axis
            dimension_semantics=("arbitrary",)),
    )(x_flat, s1, b1, w1p)


def _conv2_call(h_flat, s2, b2, w2_flat, yy, xx, H, W):
    M, Cmid_p = h_flat.shape
    Kc, Cout_p = w2_flat.shape
    kernel = functools.partial(_bn_relu_conv3x3_kernel, H=H, W=W)
    return pl.pallas_call(
        kernel,
        grid=(1,),
        in_specs=[
            pl.BlockSpec((M, Cmid_p), lambda i: (0, 0)),
            pl.BlockSpec((1, Cmid_p), lambda i: (0, 0)),
            pl.BlockSpec((1, Cmid_p), lambda i: (0, 0)),
            pl.BlockSpec((Kc, Cout_p), lambda i: (0, 0)),
            pl.BlockSpec((M, 1), lambda i: (0, 0)),
            pl.BlockSpec((M, 1), lambda i: (0, 0)),
        ],
        out_specs=pl.BlockSpec((M, Cout_p), lambda i: (0, 0)),
        out_shape=jax.ShapeDtypeStruct((M, Cout_p), jnp.float32),
        scratch_shapes=[pltpu.VMEM((M, 9 * Cmid_p), jnp.float32)],
        compiler_params=pltpu.CompilerParams(
            dimension_semantics=("arbitrary",)),
    )(h_flat, s2, b2, w2_flat, yy, xx)


@jax.jit
def dense_layer_forward(x_nchw, params):
    """x_nchw: (N, C_in, H, W) -> (N, growth_rate, H, W), matching PyTorch."""
    N, Cin, H, W = x_nchw.shape
    Cmid = params["w1"].shape[1]
    Cout = params["w2"].shape[3]
    Cmid_p = _round_up(Cmid, _LANE)
    Cout_p = _round_up(Cout, _LANE)
    M = N * H * W

    # NCHW -> flattened channels-last rows: channel contraction on the 128-lane
    # axis, batch+spatial collapsed into the matmul M dimension.
    x_flat = jnp.transpose(x_nchw, (0, 2, 3, 1)).reshape(M, Cin)

    # --- BatchNorm1 (training mode batch stats) folded to per-channel affine ---
    mean1 = jnp.mean(x_flat, axis=0)
    var1 = jnp.mean((x_flat - mean1) ** 2, axis=0)          # biased variance
    scale1 = params["gamma1"] / jnp.sqrt(var1 + _EPS)
    shift1 = params["beta1"] - mean1 * scale1

    # lane-pad conv1 weight so h (and the MXU output columns) are 128-lane dense
    w1p = jnp.zeros((Cin, Cmid_p), jnp.float32).at[:, :Cmid].set(params["w1"])

    tm = 256 if (M % 256 == 0 and M > 256) else M            # row tile (mult. of 8)
    h_flat, h_sum, h_ssq = _conv1_call(
        x_flat, scale1[None, :], shift1[None, :], w1p, tm)

    # --- BatchNorm2 affine from kernel-accumulated sums (no extra pass over h) ---
    gamma2 = jnp.ones((Cmid_p,), jnp.float32).at[:Cmid].set(params["gamma2"])
    beta2 = jnp.zeros((Cmid_p,), jnp.float32).at[:Cmid].set(params["beta2"])
    mean2 = h_sum[0] / M
    var2 = jnp.maximum(h_ssq[0] / M - mean2 ** 2, 0.0)       # biased variance
    scale2 = gamma2 / jnp.sqrt(var2 + _EPS)
    shift2 = beta2 - mean2 * scale2

    # conv2 weight HWIO -> lane-padded im2col layout (9*Cmid_p, Cout_p), built once
    w2p = jnp.zeros((3, 3, Cmid_p, Cout_p), jnp.float32)
    w2p = w2p.at[:, :, :Cmid, :Cout].set(params["w2"])
    w2_flat = w2p.reshape(9 * Cmid_p, Cout_p)

    # flat-row coordinates used for 3x3 border masking inside the kernel
    rows = jnp.arange(M, dtype=jnp.int32)
    yy = ((rows // W) % H).reshape(M, 1)
    xx = (rows % W).reshape(M, 1)

    out_flat = _conv2_call(h_flat, scale2[None, :], shift2[None, :],
                           w2_flat, yy, xx, H, W)

    out = out_flat.reshape(N, H, W, Cout_p)[..., :Cout]      # drop lane padding
    return jnp.transpose(out, (0, 3, 1, 2))                  # NHWC -> NCHW


# -------------------------------- reference ----------------------------------- #

def reference(x_nchw, params, eps=1e-5):
    def bn(x, g, b):
        mean = x.mean(axis=(0, 2, 3), keepdims=True)
        var = ((x - mean) ** 2).mean(axis=(0, 2, 3), keepdims=True)
        return (x - mean) / jnp.sqrt(var + eps) * g[None, :, None, None] \
               + b[None, :, None, None]

    a1 = jax.nn.relu(bn(x_nchw, params["gamma1"], params["beta1"]))
    w1_oihw = params["w1"].T[:, :, None, None]                    # (Cmid,Cin,1,1)
    h = jax.lax.conv_general_dilated(a1, w1_oihw, (1, 1), "VALID",
                                     dimension_numbers=("NCHW", "OIHW", "NCHW"))
    a2 = jax.nn.relu(bn(h, params["gamma2"], params["beta2"]))
    w2_oihw = jnp.transpose(params["w2"], (3, 2, 0, 1))           # (Cout,Cmid,3,3)
    y = jax.lax.conv_general_dilated(a2, w2_oihw, (1, 1), ((1, 1), (1, 1)),
                                     dimension_numbers=("NCHW", "OIHW", "NCHW"))
    return y


# ----------------------------------- main -------------------------------------- #

if __name__ == "__main__":
    key = jax.random.PRNGKey(0)
    N, Cin, H, W = 2, 4, 16, 16
    growth_rate, bn_size = 8, 4
    Cmid = bn_size * growth_rate  # 32
    ks = jax.random.split(key, 7)

    x = jax.random.normal(ks[0], (N, Cin, H, W), jnp.float32)
    params = {
        # BatchNorm affine params (PyTorch init is ones/zeros; perturbed here to
        # keep the synthetic computation non-trivial).
        "gamma1": 1.0 + 0.1 * jax.random.normal(ks[1], (Cin,), jnp.float32),
        "beta1": 0.1 * jax.random.normal(ks[2], (Cin,), jnp.float32),
        "gamma2": 1.0 + 0.1 * jax.random.normal(ks[3], (Cmid,), jnp.float32),
        "beta2": 0.1 * jax.random.normal(ks[4], (Cmid,), jnp.float32),
        # conv1 weight stored as (Cin, Cmid)  (== PyTorch (Cmid,Cin,1,1) squeezed+T)
        "w1": 0.1 * jax.random.normal(ks[5], (Cin, Cmid), jnp.float32),
        # conv2 weight stored HWIO (3,3,Cmid,Cout) (== PyTorch (Cout,Cmid,3,3) perm)
        "w2": 0.1 * jax.random.normal(ks[6], (3, 3, Cmid, growth_rate), jnp.float32),
    }

    out = jax.block_until_ready(dense_layer_forward(x, params))
    ref = reference(x, params)

    assert out.shape == (N, growth_rate, H, W), out.shape
    assert jnp.allclose(out, ref, atol=1e-4, rtol=1e-4), \
        float(jnp.max(jnp.abs(out - ref)))
    print("KERNEL_OK")
</pallas_src>

<mosaic_0001>
module attributes {stable_mosaic.version = 11 : i64} {
  func.func @_bn_relu_conv1x1_kernel(%arg0: i32, %arg1: memref<256x4xf32, #tpu.memory_space<vmem>>, %arg2: memref<1x4xf32, #tpu.memory_space<vmem>>, %arg3: memref<1x4xf32, #tpu.memory_space<vmem>>, %arg4: memref<4x128xf32, #tpu.memory_space<vmem>>, %arg5: memref<256x128xf32, #tpu.memory_space<vmem>>, %arg6: memref<1x128xf32, #tpu.memory_space<vmem>>, %arg7: memref<1x128xf32, #tpu.memory_space<vmem>>) attributes {dimension_semantics = [#tpu.dimension_semantics<arbitrary>], iteration_bounds = array<i64: 2>, scalar_prefetch = 0 : i64, scratch_operands = 0 : i64, tpu.core_type = #tpu.core_type<tc>, window_params = [{transform_indices = @transform_0, window_bounds = array<i64: 256, 4>}, {pipeline_mode = #tpu.pipeline_mode<synchronous>, transform_indices = @transform_1, window_bounds = array<i64: 1, 4>}, {pipeline_mode = #tpu.pipeline_mode<synchronous>, transform_indices = @transform_2, window_bounds = array<i64: 1, 4>}, {pipeline_mode = #tpu.pipeline_mode<synchronous>, transform_indices = @transform_3, window_bounds = array<i64: 4, 128>}, {transform_indices = @transform_4, window_bounds = array<i64: 256, 128>}, {pipeline_mode = #tpu.pipeline_mode<synchronous>, transform_indices = @transform_5, window_bounds = array<i64: 1, 128>}, {pipeline_mode = #tpu.pipeline_mode<synchronous>, transform_indices = @transform_6, window_bounds = array<i64: 1, 128>}]} {
    %c0 = arith.constant 0 : index
    %c0_0 = arith.constant 0 : index
    %0 = vector.load %arg1[%c0, %c0_0] : memref<256x4xf32, #tpu.memory_space<vmem>>, vector<256x4xf32>
    %c0_1 = arith.constant 0 : index
    %c0_2 = arith.constant 0 : index
    %1 = vector.load %arg2[%c0_1, %c0_2] : memref<1x4xf32, #tpu.memory_space<vmem>>, vector<1x4xf32>
    %2 = vector.broadcast %1 : vector<1x4xf32> to vector<256x4xf32>
    %3 = arith.mulf %0, %2 : vector<256x4xf32>
    %c0_3 = arith.constant 0 : index
    %c0_4 = arith.constant 0 : index
    %4 = vector.load %arg3[%c0_3, %c0_4] : memref<1x4xf32, #tpu.memory_space<vmem>>, vector<1x4xf32>
    %5 = vector.broadcast %4 : vector<1x4xf32> to vector<256x4xf32>
    %6 = arith.addf %3, %5 : vector<256x4xf32>
    %cst = arith.constant 0.000000e+00 : f32
    %7 = vector.broadcast %cst : f32 to vector<256x4xf32>
    %8 = arith.maximumf %6, %7 : vector<256x4xf32>
    %c0_5 = arith.constant 0 : index
    %c0_6 = arith.constant 0 : index
    %9 = vector.load %arg4[%c0_5, %c0_6] : memref<4x128xf32, #tpu.memory_space<vmem>>, vector<4x128xf32>
    %cst_7 = arith.constant dense<0.000000e+00> : vector<256x128xf32>
    %10 = tpu.matmul %8, %9, %cst_7 {dimension_numbers = #tpu.dot_dimension_numbers<[1], [0], [0], [1], [0, 0, 1, 1], [], []>} : vector<256x4xf32>, vector<4x128xf32>, vector<256x128xf32> -> vector<256x128xf32>
    %c0_8 = arith.constant 0 : index
    %c0_9 = arith.constant 0 : index
    %11 = vector.load %arg5[%c0_8, %c0_9] : memref<256x128xf32, #tpu.memory_space<vmem>>, vector<256x128xf32>
    tpu.vector_store %arg5[%c0_8, %c0_9], %10 {strides = array<i32>} : memref<256x128xf32, #tpu.memory_space<vmem>>, vector<256x128xf32>,
    %c0_i32 = arith.constant 0 : i32
    %12 = arith.cmpi eq, %arg0, %c0_i32 : i32
    %13 = arith.extui %12 : i1 to i32
    %c0_i32_10 = arith.constant 0 : i32
    %14 = arith.cmpi ne, %13, %c0_i32_10 : i32
    scf.if %14 {
      %cst_21 = arith.constant 0.000000e+00 : f32
      %26 = vector.broadcast %cst_21 : f32 to vector<1x128xf32>
      %c0_22 = arith.constant 0 : index
      %c0_23 = arith.constant 0 : index
      %27 = vector.load %arg6[%c0_22, %c0_23] : memref<1x128xf32, #tpu.memory_space<vmem>>, vector<1x128xf32>
      tpu.vector_store %arg6[%c0_22, %c0_23], %26 {strides = array<i32>} : memref<1x128xf32, #tpu.memory_space<vmem>>, vector<1x128xf32>,
      %cst_24 = arith.constant 0.000000e+00 : f32
      %28 = vector.broadcast %cst_24 : f32 to vector<1x128xf32>
      %c0_25 = arith.constant 0 : index
      %c0_26 = arith.constant 0 : index
      %29 = vector.load %arg7[%c0_25, %c0_26] : memref<1x128xf32, #tpu.memory_space<vmem>>, vector<1x128xf32>
      tpu.vector_store %arg7[%c0_25, %c0_26], %28 {strides = array<i32>} : memref<1x128xf32, #tpu.memory_space<vmem>>, vector<1x128xf32>,
    } else {
    }
    %c0_11 = arith.constant 0 : index
    %c0_12 = arith.constant 0 : index
    %15 = vector.load %arg6[%c0_11, %c0_12] : memref<1x128xf32, #tpu.memory_space<vmem>>, vector<1x128xf32>
    %cst_13 = arith.constant dense<0.000000e+00> : vector<128xf32>
    %16 = vector.multi_reduction <add>, %10, %cst_13 [0] : vector<256x128xf32> to vector<128xf32>
    %17 = vector.shape_cast %16 : vector<128xf32> to vector<1x128xf32>
    %18 = arith.addf %15, %17 : vector<1x128xf32>
    %c0_14 = arith.constant 0 : index
    %c0_15 = arith.constant 0 : index
    %19 = vector.load %arg6[%c0_14, %c0_15] : memref<1x128xf32, #tpu.memory_space<vmem>>, vector<1x128xf32>
    tpu.vector_store %arg6[%c0_14, %c0_15], %18 {strides = array<i32>} : memref<1x128xf32, #tpu.memory_space<vmem>>, vector<1x128xf32>,
    %c0_16 = arith.constant 0 : index
    %c0_17 = arith.constant 0 : index
    %20 = vector.load %arg7[%c0_16, %c0_17] : memref<1x128xf32, #tpu.memory_space<vmem>>, vector<1x128xf32>
    %21 = arith.mulf %10, %10 : vector<256x128xf32>
    %cst_18 = arith.constant dense<0.000000e+00> : vector<128xf32>
    %22 = vector.multi_reduction <add>, %21, %cst_18 [0] : vector<256x128xf32> to vector<128xf32>
    %23 = vector.shape_cast %22 : vector<128xf32> to vector<1x128xf32>
    %24 = arith.addf %20, %23 : vector<1x128xf32>
    %c0_19 = arith.constant 0 : index
    %c0_20 = arith.constant 0 : index
    %25 = vector.load %arg7[%c0_19, %c0_20] : memref<1x128xf32, #tpu.memory_space<vmem>>, vector<1x128xf32>
    tpu.vector_store %arg7[%c0_19, %c0_20], %24 {strides = array<i32>} : memref<1x128xf32, #tpu.memory_space<vmem>>, vector<1x128xf32>,
    return
  }
  func.func @transform_0(%arg0: i32) -> (i32, i32) {
    %c0_i32 = arith.constant 0 : i32
    %c0_i32_0 = arith.constant 0 : i32
    return %arg0, %c0_i32 : i32, i32
  }
  func.func @transform_1(%arg0: i32) -> (i32, i32) {
    %c0_i32 = arith.constant 0 : i32
    %c0_i32_0 = arith.constant 0 : i32
    %c0_i32_1 = arith.constant 0 : i32
    return %c0_i32, %c0_i32_0 : i32, i32
  }
  func.func @transform_2(%arg0: i32) -> (i32, i32) {
    %c0_i32 = arith.constant 0 : i32
    %c0_i32_0 = arith.constant 0 : i32
    %c0_i32_1 = arith.constant 0 : i32
    return %c0_i32, %c0_i32_0 : i32, i32
  }
  func.func @transform_3(%arg0: i32) -> (i32, i32) {
    %c0_i32 = arith.constant 0 : i32
    %c0_i32_0 = arith.constant 0 : i32
    %c0_i32_1 = arith.constant 0 : i32
    return %c0_i32, %c0_i32_0 : i32, i32
  }
  func.func @transform_4(%arg0: i32) -> (i32, i32) {
    %c0_i32 = arith.constant 0 : i32
    %c0_i32_0 = arith.constant 0 : i32
    return %arg0, %c0_i32 : i32, i32
  }
  func.func @transform_5(%arg0: i32) -> (i32, i32) {
    %c0_i32 = arith.constant 0 : i32
    %c0_i32_0 = arith.constant 0 : i32
    %c0_i32_1 = arith.constant 0 : i32
    return %c0_i32, %c0_i32_0 : i32, i32
  }
  func.func @transform_6(%arg0: i32) -> (i32, i32) {
    %c0_i32 = arith.constant 0 : i32
    %c0_i32_0 = arith.constant 0 : i32
    %c0_i32_1 = arith.constant 0 : i32
    return %c0_i32, %c0_i32_0 : i32, i32
  }
}

module attributes {stable_mosaic.version = 11 : i64} {
  func.func @_bn_relu_conv3x3_kernel(%arg0: i32, %arg1: memref<512x128xf32, #tpu.memory_space<vmem>>, %arg2: memref<1x128xf32, #tpu.memory_space<vmem>>, %arg3: memref<1x128xf32, #tpu.memory_space<vmem>>, %arg4: memref<1152x128xf32, #tpu.memory_space<vmem>>, %arg5: memref<512x1xi32, #tpu.memory_space<vmem>>, %arg6: memref<512x1xi32, #tpu.memory_space<vmem>>, %arg7: memref<512x128xf32, #tpu.memory_space<vmem>>, %arg8: memref<512x1152xf32, #tpu.memory_space<vmem>>) attributes {dimension_semantics = [#tpu.dimension_semantics<arbitrary>], iteration_bounds = array<i64: 1>, scalar_prefetch = 0 : i64, scratch_operands = 1 : i64, tpu.core_type = #tpu.core_type<tc>, window_params = [{pipeline_mode = #tpu.pipeline_mode<synchronous>, transform_indices = @transform_0, window_bounds = array<i64: 512, 128>}, {pipeline_mode = #tpu.pipeline_mode<synchronous>, transform_indices = @transform_1, window_bounds = array<i64: 1, 128>}, {pipeline_mode = #tpu.pipeline_mode<synchronous>, transform_indices = @transform_2, window_bounds = array<i64: 1, 128>}, {pipeline_mode = #tpu.pipeline_mode<synchronous>, transform_indices = @transform_3, window_bounds = array<i64: 1152, 128>}, {pipeline_mode = #tpu.pipeline_mode<synchronous>, transform_indices = @transform_4, window_bounds = array<i64: 512, 1>}, {pipeline_mode = #tpu.pipeline_mode<synchronous>, transform_indices = @transform_5, window_bounds = array<i64: 512, 1>}, {pipeline_mode = #tpu.pipeline_mode<synchronous>, transform_indices = @transform_6, window_bounds = array<i64: 512, 128>}]} {
    %c0 = arith.constant 0 : index
    %c0_0 = arith.constant 0 : index
    %0 = vector.load %arg1[%c0, %c0_0] : memref<512x128xf32, #tpu.memory_space<vmem>>, vector<512x128xf32>
    %c0_1 = arith.constant 0 : index
    %c0_2 = arith.constant 0 : index
    %1 = vector.load %arg2[%c0_1, %c0_2] : memref<1x128xf32, #tpu.memory_space<vmem>>, vector<1x128xf32>
    %2 = vector.broadcast %1 : vector<1x128xf32> to vector<512x128xf32>
    %3 = arith.mulf %0, %2 : vector<512x128xf32>
    %c0_3 = arith.constant 0 : index
    %c0_4 = arith.constant 0 : index
    %4 = vector.load %arg3[%c0_3, %c0_4] : memref<1x128xf32, #tpu.memory_space<vmem>>, vector<1x128xf32>
    %5 = vector.broadcast %4 : vector<1x128xf32> to vector<512x128xf32>
    %6 = arith.addf %3, %5 : vector<512x128xf32>
    %cst = arith.constant 0.000000e+00 : f32
    %7 = vector.broadcast %cst : f32 to vector<512x128xf32>
    %8 = arith.maximumf %6, %7 : vector<512x128xf32>
    %c0_5 = arith.constant 0 : index
    %c0_6 = arith.constant 0 : index
    %9 = vector.load %arg5[%c0_5, %c0_6] : memref<512x1xi32, #tpu.memory_space<vmem>>, vector<512x1xi32>
    %c0_7 = arith.constant 0 : index
    %c0_8 = arith.constant 0 : index
    %10 = vector.load %arg6[%c0_7, %c0_8] : memref<512x1xi32, #tpu.memory_space<vmem>>, vector<512x1xi32>
    %c17_i32 = arith.constant 17 : i32
    %11 = tpu.dynamic_rotate %8 by %c17_i32 dim 0 : vector<512x128xf32>, i32 -> vector<512x128xf32>
    %c-1_i32 = arith.constant -1 : i32
    %12 = vector.broadcast %c-1_i32 : i32 to vector<512x1xi32>
    %13 = arith.addi %9, %12 : vector<512x1xi32>
    %c0_i32 = arith.constant 0 : i32
    %14 = vector.broadcast %c0_i32 : i32 to vector<512x1xi32>
    %15 = arith.cmpi sge, %13, %14 : vector<512x1xi32>
    %c-1_i32_9 = arith.constant -1 : i32
    %16 = vector.broadcast %c-1_i32_9 : i32 to vector<512x1xi32>
    %17 = arith.addi %9, %16 : vector<512x1xi32>
    %c16_i32 = arith.constant 16 : i32
    %18 = vector.broadcast %c16_i32 : i32 to vector<512x1xi32>
    %19 = arith.cmpi slt, %17, %18 : vector<512x1xi32>
    %20 = arith.andi %15, %19 : vector<512x1xi1>
    %c-1_i32_10 = arith.constant -1 : i32
    %21 = vector.broadcast %c-1_i32_10 : i32 to vector<512x1xi32>
    %22 = arith.addi %10, %21 : vector<512x1xi32>
    %c0_i32_11 = arith.constant 0 : i32
    %23 = vector.broadcast %c0_i32_11 : i32 to vector<512x1xi32>
    %24 = arith.cmpi sge, %22, %23 : vector<512x1xi32>
    %25 = arith.andi %20, %24 : vector<512x1xi1>
    %c-1_i32_12 = arith.constant -1 : i32
    %26 = vector.broadcast %c-1_i32_12 : i32 to vector<512x1xi32>
    %27 = arith.addi %10, %26 : vector<512x1xi32>
    %c16_i32_13 = arith.constant 16 : i32
    %28 = vector.broadcast %c16_i32_13 : i32 to vector<512x1xi32>
    %29 = arith.cmpi slt, %27, %28 : vector<512x1xi32>
    %30 = arith.andi %25, %29 : vector<512x1xi1>
    %cst_14 = arith.constant 0.000000e+00 : f32
    %31 = vector.shape_cast %30 : vector<512x1xi1> to vector<512x1xi1>
    %32 = vector.broadcast %31 : vector<512x1xi1> to vector<512x128xi1>
    %33 = vector.broadcast %cst_14 : f32 to vector<512x128xf32>
    %34 = arith.select %32, %11, %33 : vector<512x128xi1>, vector<512x128xf32>
    %c0_15 = arith.constant 0 : index
    %c0_16 = arith.constant 0 : index
    %35 = vector.load %arg8[%c0_15, %c0_16] : memref<512x1152xf32, #tpu.memory_space<vmem>>, vector<512x128xf32>
    tpu.vector_store %arg8[%c0_15, %c0_16], %34 {strides = array<i32>} : memref<512x1152xf32, #tpu.memory_space<vmem>>, vector<512x128xf32>,
    %c16_i32_17 = arith.constant 16 : i32
    %36 = tpu.dynamic_rotate %8 by %c16_i32_17 dim 0 : vector<512x128xf32>, i32 -> vector<512x128xf32>
    %c-1_i32_18 = arith.constant -1 : i32
    %37 = vector.broadcast %c-1_i32_18 : i32 to vector<512x1xi32>
    %38 = arith.addi %9, %37 : vector<512x1xi32>
    %c0_i32_19 = arith.constant 0 : i32
    %39 = vector.broadcast %c0_i32_19 : i32 to vector<512x1xi32>
    %40 = arith.cmpi sge, %38, %39 : vector<512x1xi32>
    %c-1_i32_20 = arith.constant -1 : i32
    %41 = vector.broadcast %c-1_i32_20 : i32 to vector<512x1xi32>
    %42 = arith.addi %9, %41 : vector<512x1xi32>
    %c16_i32_21 = arith.constant 16 : i32
    %43 = vector.broadcast %c16_i32_21 : i32 to vector<512x1xi32>
    %44 = arith.cmpi slt, %42, %43 : vector<512x1xi32>
    %45 = arith.andi %40, %44 : vector<512x1xi1>
    %c0_i32_22 = arith.constant 0 : i32
    %46 = vector.broadcast %c0_i32_22 : i32 to vector<512x1xi32>
    %47 = arith.addi %10, %46 : vector<512x1xi32>
    %c0_i32_23 = arith.constant 0 : i32
    %48 = vector.broadcast %c0_i32_23 : i32 to vector<512x1xi32>
    %49 = arith.cmpi sge, %47, %48 : vector<512x1xi32>
    %50 = arith.andi %45, %49 : vector<512x1xi1>
    %c0_i32_24 = arith.constant 0 : i32
    %51 = vector.broadcast %c0_i32_24 : i32 to vector<512x1xi32>
    %52 = arith.addi %10, %51 : vector<512x1xi32>
    %c16_i32_25 = arith.constant 16 : i32
    %53 = vector.broadcast %c16_i32_25 : i32 to vector<512x1xi32>
    %54 = arith.cmpi slt, %52, %53 : vector<512x1xi32>
    %55 = arith.andi %50, %54 : vector<512x1xi1>
    %cst_26 = arith.constant 0.000000e+00 : f32
    %56 = vector.shape_cast %55 : vector<512x1xi1> to vector<512x1xi1>
    %57 = vector.broadcast %56 : vector<512x1xi1> to vector<512x128xi1>
    %58 = vector.broadcast %cst_26 : f32 to vector<512x128xf32>
    %59 = arith.select %57, %36, %58 : vector<512x128xi1>, vector<512x128xf32>
    %c0_27 = arith.constant 0 : index
    %c128 = arith.constant 128 : index
    %60 = vector.load %arg8[%c0_27, %c128] : memref<512x1152xf32, #tpu.memory_space<vmem>>, vector<512x128xf32>
    tpu.vector_store %arg8[%c0_27, %c128], %59 {strides = array<i32>} : memref<512x1152xf32, #tpu.memory_space<vmem>>, vector<512x128xf32>,
    %c15_i32 = arith.constant 15 : i32
    %61 = tpu.dynamic_rotate %8 by %c15_i32 dim 0 : vector<512x128xf32>, i32 -> vector<512x128xf32>
    %c-1_i32_28 = arith.constant -1 : i32
    %62 = vector.broadcast %c-1_i32_28 : i32 to vector<512x1xi32>
    %63 = arith.addi %9, %62 : vector<512x1xi32>
    %c0_i32_29 = arith.constant 0 : i32
    %64 = vector.broadcast %c0_i32_29 : i32 to vector<512x1xi32>
    %65 = arith.cmpi sge, %63, %64 : vector<512x1xi32>
    %c-1_i32_30 = arith.constant -1 : i32
    %66 = vector.broadcast %c-1_i32_30 : i32 to vector<512x1xi32>
    %67 = arith.addi %9, %66 : vector<512x1xi32>
    %c16_i32_31 = arith.constant 16 : i32
    %68 = vector.broadcast %c16_i32_31 : i32 to vector<512x1xi32>
    %69 = arith.cmpi slt, %67, %68 : vector<512x1xi32>
    %70 = arith.andi %65, %69 : vector<512x1xi1>
    %c1_i32 = arith.constant 1 : i32
    %71 = vector.broadcast %c1_i32 : i32 to vector<512x1xi32>
    %72 = arith.addi %10, %71 : vector<512x1xi32>
    %c0_i32_32 = arith.constant 0 : i32
    %73 = vector.broadcast %c0_i32_32 : i32 to vector<512x1xi32>
    %74 = arith.cmpi sge, %72, %73 : vector<512x1xi32>
    %75 = arith.andi %70, %74 : vector<512x1xi1>
    %c1_i32_33 = arith.constant 1 : i32
    %76 = vector.broadcast %c1_i32_33 : i32 to vector<512x1xi32>
    %77 = arith.addi %10, %76 : vector<512x1xi32>
    %c16_i32_34 = arith.constant 16 : i32
    %78 = vector.broadcast %c16_i32_34 : i32 to vector<512x1xi32>
    %79 = arith.cmpi slt, %77, %78 : vector<512x1xi32>
    %80 = arith.andi %75, %79 : vector<512x1xi1>
    %cst_35 = arith.constant 0.000000e+00 : f32
    %81 = vector.shape_cast %80 : vector<512x1xi1> to vector<512x1xi1>
    %82 = vector.broadcast %81 : vector<512x1xi1> to vector<512x128xi1>
    %83 = vector.broadcast %cst_35 : f32 to vector<512x128xf32>
    %84 = arith.select %82, %61, %83 : vector<512x128xi1>, vector<512x128xf32>
    %c0_36 = arith.constant 0 : index
    %c256 = arith.constant 256 : index
    %85 = vector.load %arg8[%c0_36, %c256] : memref<512x1152xf32, #tpu.memory_space<vmem>>, vector<512x128xf32>
    tpu.vector_store %arg8[%c0_36, %c256], %84 {strides = array<i32>} : memref<512x1152xf32, #tpu.memory_space<vmem>>, vector<512x128xf32>,
    %c1_i32_37 = arith.constant 1 : i32
    %86 = tpu.dynamic_rotate %8 by %c1_i32_37 dim 0 : vector<512x128xf32>, i32 -> vector<512x128xf32>
    %c0_i32_38 = arith.constant 0 : i32
    %87 = vector.broadcast %c0_i32_38 : i32 to vector<512x1xi32>
    %88 = arith.addi %9, %87 : vector<512x1xi32>
    %c0_i32_39 = arith.constant 0 : i32
    %89 = vector.broadcast %c0_i32_39 : i32 to vector<512x1xi32>
    %90 = arith.cmpi sge, %88, %89 : vector<512x1xi32>
    %c0_i32_40 = arith.constant 0 : i32
    %91 = vector.broadcast %c0_i32_40 : i32 to vector<512x1xi32>
    %92 = arith.addi %9, %91 : vector<512x1xi32>
    %c16_i32_41 = arith.constant 16 : i32
    %93 = vector.broadcast %c16_i32_41 : i32 to vector<512x1xi32>
    %94 = arith.cmpi slt, %92, %93 : vector<512x1xi32>
    %95 = arith.andi %90, %94 : vector<512x1xi1>
    %c-1_i32_42 = arith.constant -1 : i32
    %96 = vector.broadcast %c-1_i32_42 : i32 to vector<512x1xi32>
    %97 = arith.addi %10, %96 : vector<512x1xi32>
    %c0_i32_43 = arith.constant 0 : i32
    %98 = vector.broadcast %c0_i32_43 : i32 to vector<512x1xi32>
    %99 = arith.cmpi sge, %97, %98 : vector<512x1xi32>
    %100 = arith.andi %95, %99 : vector<512x1xi1>
    %c-1_i32_44 = arith.constant -1 : i32
    %101 = vector.broadcast %c-1_i32_44 : i32 to vector<512x1xi32>
    %102 = arith.addi %10, %101 : vector<512x1xi32>
    %c16_i32_45 = arith.constant 16 : i32
    %103 = vector.broadcast %c16_i32_45 : i32 to vector<512x1xi32>
    %104 = arith.cmpi slt, %102, %103 : vector<512x1xi32>
    %105 = arith.andi %100, %104 : vector<512x1xi1>
    %cst_46 = arith.constant 0.000000e+00 : f32
    %106 = vector.shape_cast %105 : vector<512x1xi1> to vector<512x1xi1>
    %107 = vector.broadcast %106 : vector<512x1xi1> to vector<512x128xi1>
    %108 = vector.broadcast %cst_46 : f32 to vector<512x128xf32>
    %109 = arith.select %107, %86, %108 : vector<512x128xi1>, vector<512x128xf32>
    %c0_47 = arith.constant 0 : index
    %c384 = arith.constant 384 : index
    %110 = vector.load %arg8[%c0_47, %c384] : memref<512x1152xf32, #tpu.memory_space<vmem>>, vector<512x128xf32>
    tpu.vector_store %arg8[%c0_47, %c384], %109 {strides = array<i32>} : memref<512x1152xf32, #tpu.memory_space<vmem>>, vector<512x128xf32>,
    %c0_i32_48 = arith.constant 0 : i32
    %111 = vector.broadcast %c0_i32_48 : i32 to vector<512x1xi32>
    %112 = arith.addi %9, %111 : vector<512x1xi32>
    %c0_i32_49 = arith.constant 0 : i32
    %113 = vector.broadcast %c0_i32_49 : i32 to vector<512x1xi32>
    %114 = arith.cmpi sge, %112, %113 : vector<512x1xi32>
    %c0_i32_50 = arith.constant 0 : i32
    %115 = vector.broadcast %c0_i32_50 : i32 to vector<512x1xi32>
    %116 = arith.addi %9, %115 : vector<512x1xi32>
    %c16_i32_51 = arith.constant 16 : i32
    %117 = vector.broadcast %c16_i32_51 : i32 to vector<512x1xi32>
    %118 = arith.cmpi slt, %116, %117 : vector<512x1xi32>
    %119 = arith.andi %114, %118 : vector<512x1xi1>
    %c0_i32_52 = arith.constant 0 : i32
    %120 = vector.broadcast %c0_i32_52 : i32 to vector<512x1xi32>
    %121 = arith.addi %10, %120 : vector<512x1xi32>
    %c0_i32_53 = arith.constant 0 : i32
    %122 = vector.broadcast %c0_i32_53 : i32 to vector<512x1xi32>
    %123 = arith.cmpi sge, %121, %122 : vector<512x1xi32>
    %124 = arith.andi %119, %123 : vector<512x1xi1>
    %c0_i32_54 = arith.constant 0 : i32
    %125 = vector.broadcast %c0_i32_54 : i32 to vector<512x1xi32>
    %126 = arith.addi %10, %125 : vector<512x1xi32>
    %c16_i32_55 = arith.constant 16 : i32
    %127 = vector.broadcast %c16_i32_55 : i32 to vector<512x1xi32>
    %128 = arith.cmpi slt, %126, %127 : vector<512x1xi32>
    %129 = arith.andi %124, %128 : vector<512x1xi1>
    %cst_56 = arith.constant 0.000000e+00 : f32
    %130 = vector.shape_cast %129 : vector<512x1xi1> to vector<512x1xi1>
    %131 = vector.broadcast %130 : vector<512x1xi1> to vector<512x128xi1>
    %132 = vector.broadcast %cst_56 : f32 to vector<512x128xf32>
    %133 = arith.select %131, %8, %132 : vector<512x128xi1>, vector<512x128xf32>
    %c0_57 = arith.constant 0 : index
    %c512 = arith.constant 512 : index
    %134 = vector.load %arg8[%c0_57, %c512] : memref<512x1152xf32, #tpu.memory_space<vmem>>, vector<512x128xf32>
    tpu.vector_store %arg8[%c0_57, %c512], %133 {strides = array<i32>} : memref<512x1152xf32, #tpu.memory_space<vmem>>, vector<512x128xf32>,
    %c511_i32 = arith.constant 511 : i32
    %135 = tpu.dynamic_rotate %8 by %c511_i32 dim 0 : vector<512x128xf32>, i32 -> vector<512x128xf32>
    %c0_i32_58 = arith.constant 0 : i32
    %136 = vector.broadcast %c0_i32_58 : i32 to vector<512x1xi32>
    %137 = arith.addi %9, %136 : vector<512x1xi32>
    %c0_i32_59 = arith.constant 0 : i32
    %138 = vector.broadcast %c0_i32_59 : i32 to vector<512x1xi32>
    %139 = arith.cmpi sge, %137, %138 : vector<512x1xi32>
    %c0_i32_60 = arith.constant 0 : i32
    %140 = vector.broadcast %c0_i32_60 : i32 to vector<512x1xi32>
    %141 = arith.addi %9, %140 : vector<512x1xi32>
    %c16_i32_61 = arith.constant 16 : i32
    %142 = vector.broadcast %c16_i32_61 : i32 to vector<512x1xi32>
    %143 = arith.cmpi slt, %141, %142 : vector<512x1xi32>
    %144 = arith.andi %139, %143 : vector<512x1xi1>
    %c1_i32_62 = arith.constant 1 : i32
    %145 = vector.broadcast %c1_i32_62 : i32 to vector<512x1xi32>
    %146 = arith.addi %10, %145 : vector<512x1xi32>
    %c0_i32_63 = arith.constant 0 : i32
    %147 = vector.broadcast %c0_i32_63 : i32 to vector<512x1xi32>
    %148 = arith.cmpi sge, %146, %147 : vector<512x1xi32>
    %149 = arith.andi %144, %148 : vector<512x1xi1>
    %c1_i32_64 = arith.constant 1 : i32
    %150 = vector.broadcast %c1_i32_64 : i32 to vector<512x1xi32>
    %151 = arith.addi %10, %150 : vector<512x1xi32>
    %c16_i32_65 = arith.constant 16 : i32
    %152 = vector.broadcast %c16_i32_65 : i32 to vector<512x1xi32>
    %153 = arith.cmpi slt, %151, %152 : vector<512x1xi32>
    %154 = arith.andi %149, %153 : vector<512x1xi1>
    %cst_66 = arith.constant 0.000000e+00 : f32
    %155 = vector.shape_cast %154 : vector<512x1xi1> to vector<512x1xi1>
    %156 = vector.broadcast %155 : vector<512x1xi1> to vector<512x128xi1>
    %157 = vector.broadcast %cst_66 : f32 to vector<512x128xf32>
    %158 = arith.select %156, %135, %157 : vector<512x128xi1>, vector<512x128xf32>
    %c0_67 = arith.constant 0 : index
    %c640 = arith.constant 640 : index
    %159 = vector.load %arg8[%c0_67, %c640] : memref<512x1152xf32, #tpu.memory_space<vmem>>, vector<512x128xf32>
    tpu.vector_store %arg8[%c0_67, %c640], %158 {strides = array<i32>} : memref<512x1152xf32, #tpu.memory_space<vmem>>, vector<512x128xf32>,
    %c497_i32 = arith.constant 497 : i32
    %160 = tpu.dynamic_rotate %8 by %c497_i32 dim 0 : vector<512x128xf32>, i32 -> vector<512x128xf32>
    %c1_i32_68 = arith.constant 1 : i32
    %161 = vector.broadcast %c1_i32_68 : i32 to vector<512x1xi32>
    %162 = arith.addi %9, %161 : vector<512x1xi32>
    %c0_i32_69 = arith.constant 0 : i32
    %163 = vector.broadcast %c0_i32_69 : i32 to vector<512x1xi32>
    %164 = arith.cmpi sge, %162, %163 : vector<512x1xi32>
    %c1_i32_70 = arith.constant 1 : i32
    %165 = vector.broadcast %c1_i32_70 : i32 to vector<512x1xi32>
    %166 = arith.addi %9, %165 : vector<512x1xi32>
    %c16_i32_71 = arith.constant 16 : i32
    %167 = vector.broadcast %c16_i32_71 : i32 to vector<512x1xi32>
    %168 = arith.cmpi slt, %166, %167 : vector<512x1xi32>
    %169 = arith.andi %164, %168 : vector<512x1xi1>
    %c-1_i32_72 = arith.constant -1 : i32
    %170 = vector.broadcast %c-1_i32_72 : i32 to vector<512x1xi32>
    %171 = arith.addi %10, %170 : vector<512x1xi32>
    %c0_i32_73 = arith.constant 0 : i32
    %172 = vector.broadcast %c0_i32_73 : i32 to vector<512x1xi32>
    %173 = arith.cmpi sge, %171, %172 : vector<512x1xi32>
    %174 = arith.andi %169, %173 : vector<512x1xi1>
    %c-1_i32_74 = arith.constant -1 : i32
    %175 = vector.broadcast %c-1_i32_74 : i32 to vector<512x1xi32>
    %176 = arith.addi %10, %175 : vector<512x1xi32>
    %c16_i32_75 = arith.constant 16 : i32
    %177 = vector.broadcast %c16_i32_75 : i32 to vector<512x1xi32>
    %178 = arith.cmpi slt, %176, %177 : vector<512x1xi32>
    %179 = arith.andi %174, %178 : vector<512x1xi1>
    %cst_76 = arith.constant 0.000000e+00 : f32
    %180 = vector.shape_cast %179 : vector<512x1xi1> to vector<512x1xi1>
    %181 = vector.broadcast %180 : vector<512x1xi1> to vector<512x128xi1>
    %182 = vector.broadcast %cst_76 : f32 to vector<512x128xf32>
    %183 = arith.select %181, %160, %182 : vector<512x128xi1>, vector<512x128xf32>
    %c0_77 = arith.constant 0 : index
    %c768 = arith.constant 768 : index
    %184 = vector.load %arg8[%c0_77, %c768] : memref<512x1152xf32, #tpu.memory_space<vmem>>, vector<512x128xf32>
    tpu.vector_store %arg8[%c0_77, %c768], %183 {strides = array<i32>} : memref<512x1152xf32, #tpu.memory_space<vmem>>, vector<512x128xf32>,
    %c496_i32 = arith.constant 496 : i32
    %185 = tpu.dynamic_rotate %8 by %c496_i32 dim 0 : vector<512x128xf32>, i32 -> vector<512x128xf32>
    %c1_i32_78 = arith.constant 1 : i32
    %186 = vector.broadcast %c1_i32_78 : i32 to vector<512x1xi32>
    %187 = arith.addi %9, %186 : vector<512x1xi32>
    %c0_i32_79 = arith.constant 0 : i32
    %188 = vector.broadcast %c0_i32_79 : i32 to vector<512x1xi32>
    %189 = arith.cmpi sge, %187, %188 : vector<512x1xi32>
    %c1_i32_80 = arith.constant 1 : i32
    %190 = vector.broadcast %c1_i32_80 : i32 to vector<512x1xi32>
    %191 = arith.addi %9, %190 : vector<512x1xi32>
    %c16_i32_81 = arith.constant 16 : i32
    %192 = vector.broadcast %c16_i32_81 : i32 to vector<512x1xi32>
    %193 = arith.cmpi slt, %191, %192 : vector<512x1xi32>
    %194 = arith.andi %189, %193 : vector<512x1xi1>
    %c0_i32_82 = arith.constant 0 : i32
    %195 = vector.broadcast %c0_i32_82 : i32 to vector<512x1xi32>
    %196 = arith.addi %10, %195 : vector<512x1xi32>
    %c0_i32_83 = arith.constant 0 : i32
    %197 = vector.broadcast %c0_i32_83 : i32 to vector<512x1xi32>
    %198 = arith.cmpi sge, %196, %197 : vector<512x1xi32>
    %199 = arith.andi %194, %198 : vector<512x1xi1>
    %c0_i32_84 = arith.constant 0 : i32
    %200 = vector.broadcast %c0_i32_84 : i32 to vector<512x1xi32>
    %201 = arith.addi %10, %200 : vector<512x1xi32>
    %c16_i32_85 = arith.constant 16 : i32
    %202 = vector.broadcast %c16_i32_85 : i32 to vector<512x1xi32>
    %203 = arith.cmpi slt, %201, %202 : vector<512x1xi32>
    %204 = arith.andi %199, %203 : vector<512x1xi1>
    %cst_86 = arith.constant 0.000000e+00 : f32
    %205 = vector.shape_cast %204 : vector<512x1xi1> to vector<512x1xi1>
    %206 = vector.broadcast %205 : vector<512x1xi1> to vector<512x128xi1>
    %207 = vector.broadcast %cst_86 : f32 to vector<512x128xf32>
    %208 = arith.select %206, %185, %207 : vector<512x128xi1>, vector<512x128xf32>
    %c0_87 = arith.constant 0 : index
    %c896 = arith.constant 896 : index
    %209 = vector.load %arg8[%c0_87, %c896] : memref<512x1152xf32, #tpu.memory_space<vmem>>, vector<512x128xf32>
    tpu.vector_store %arg8[%c0_87, %c896], %208 {strides = array<i32>} : memref<512x1152xf32, #tpu.memory_space<vmem>>, vector<512x128xf32>,
    %c495_i32 = arith.constant 495 : i32
    %210 = tpu.dynamic_rotate %8 by %c495_i32 dim 0 : vector<512x128xf32>, i32 -> vector<512x128xf32>
    %c1_i32_88 = arith.constant 1 : i32
    %211 = vector.broadcast %c1_i32_88 : i32 to vector<512x1xi32>
    %212 = arith.addi %9, %211 : vector<512x1xi32>
    %c0_i32_89 = arith.constant 0 : i32
    %213 = vector.broadcast %c0_i32_89 : i32 to vector<512x1xi32>
    %214 = arith.cmpi sge, %212, %213 : vector<512x1xi32>
    %c1_i32_90 = arith.constant 1 : i32
    %215 = vector.broadcast %c1_i32_90 : i32 to vector<512x1xi32>
    %216 = arith.addi %9, %215 : vector<512x1xi32>
    %c16_i32_91 = arith.constant 16 : i32
    %217 = vector.broadcast %c16_i32_91 : i32 to vector<512x1xi32>
    %218 = arith.cmpi slt, %216, %217 : vector<512x1xi32>
    %219 = arith.andi %214, %218 : vector<512x1xi1>
    %c1_i32_92 = arith.constant 1 : i32
    %220 = vector.broadcast %c1_i32_92 : i32 to vector<512x1xi32>
    %221 = arith.addi %10, %220 : vector<512x1xi32>
    %c0_i32_93 = arith.constant 0 : i32
    %222 = vector.broadcast %c0_i32_93 : i32 to vector<512x1xi32>
    %223 = arith.cmpi sge, %221, %222 : vector<512x1xi32>
    %224 = arith.andi %219, %223 : vector<512x1xi1>
    %c1_i32_94 = arith.constant 1 : i32
    %225 = vector.broadcast %c1_i32_94 : i32 to vector<512x1xi32>
    %226 = arith.addi %10, %225 : vector<512x1xi32>
    %c16_i32_95 = arith.constant 16 : i32
    %227 = vector.broadcast %c16_i32_95 : i32 to vector<512x1xi32>
    %228 = arith.cmpi slt, %226, %227 : vector<512x1xi32>
    %229 = arith.andi %224, %228 : vector<512x1xi1>
    %cst_96 = arith.constant 0.000000e+00 : f32
    %230 = vector.shape_cast %229 : vector<512x1xi1> to vector<512x1xi1>
    %231 = vector.broadcast %230 : vector<512x1xi1> to vector<512x128xi1>
    %232 = vector.broadcast %cst_96 : f32 to vector<512x128xf32>
    %233 = arith.select %231, %210, %232 : vector<512x128xi1>, vector<512x128xf32>
    %c0_97 = arith.constant 0 : index
    %c1024 = arith.constant 1024 : index
    %234 = vector.load %arg8[%c0_97, %c1024] : memref<512x1152xf32, #tpu.memory_space<vmem>>, vector<512x128xf32>
    tpu.vector_store %arg8[%c0_97, %c1024], %233 {strides = array<i32>} : memref<512x1152xf32, #tpu.memory_space<vmem>>, vector<512x128xf32>,
    %c0_98 = arith.constant 0 : index
    %c0_99 = arith.constant 0 : index
    %235 = vector.load %arg8[%c0_98, %c0_99] : memref<512x1152xf32, #tpu.memory_space<vmem>>, vector<512x1152xf32>
    %c0_100 = arith.constant 0 : index
    %c0_101 = arith.constant 0 : index
    %236 = vector.load %arg4[%c0_100, %c0_101] : memref<1152x128xf32, #tpu.memory_space<vmem>>, vector<1152x128xf32>
    %cst_102 = arith.constant dense<0.000000e+00> : vector<512x128xf32>
    %237 = tpu.matmul %235, %236, %cst_102 {dimension_numbers = #tpu.dot_dimension_numbers<[1], [0], [0], [1], [0, 0, 1, 1], [], []>} : vector<512x1152xf32>, vector<1152x128xf32>, vector<512x128xf32> -> vector<512x128xf32>
    %c0_103 = arith.constant 0 : index
    %c0_104 = arith.constant 0 : index
    %238 = vector.load %arg7[%c0_103, %c0_104] : memref<512x128xf32, #tpu.memory_space<vmem>>, vector<512x128xf32>
    tpu.vector_store %arg7[%c0_103, %c0_104], %237 {strides = array<i32>} : memref<512x128xf32, #tpu.memory_space<vmem>>, vector<512x128xf32>,
    return
  }
  func.func @transform_0(%arg0: i32) -> (i32, i32) {
    %c0_i32 = arith.constant 0 : i32
    %c0_i32_0 = arith.constant 0 : i32
    %c0_i32_1 = arith.constant 0 : i32
    return %c0_i32, %c0_i32_0 : i32, i32
  }
  func.func @transform_1(%arg0: i32) -> (i32, i32) {
    %c0_i32 = arith.constant 0 : i32
    %c0_i32_0 = arith.constant 0 : i32
    %c0_i32_1 = arith.constant 0 : i32
    return %c0_i32, %c0_i32_0 : i32, i32
  }
  func.func @transform_2(%arg0: i32) -> (i32, i32) {
    %c0_i32 = arith.constant 0 : i32
    %c0_i32_0 = arith.constant 0 : i32
    %c0_i32_1 = arith.constant 0 : i32
    return %c0_i32, %c0_i32_0 : i32, i32
  }
  func.func @transform_3(%arg0: i32) -> (i32, i32) {
    %c0_i32 = arith.constant 0 : i32
    %c0_i32_0 = arith.constant 0 : i32
    %c0_i32_1 = arith.constant 0 : i32
    return %c0_i32, %c0_i32_0 : i32, i32
  }
  func.func @transform_4(%arg0: i32) -> (i32, i32) {
    %c0_i32 = arith.constant 0 : i32
    %c0_i32_0 = arith.constant 0 : i32
    %c0_i32_1 = arith.constant 0 : i32
    return %c0_i32, %c0_i32_0 : i32, i32
  }
  func.func @transform_5(%arg0: i32) -> (i32, i32) {
    %c0_i32 = arith.constant 0 : i32
    %c0_i32_0 = arith.constant 0 : i32
    %c0_i32_1 = arith.constant 0 : i32
    return %c0_i32, %c0_i32_0 : i32, i32
  }
  func.func @transform_6(%arg0: i32) -> (i32, i32) {
    %c0_i32 = arith.constant 0 : i32
    %c0_i32_0 = arith.constant 0 : i32
    %c0_i32_1 = arith.constant 0 : i32
    return %c0_i32, %c0_i32_0 : i32, i32
  }
}

</mosaic_0001>

<llo_original>
// kernel: dense_layer_forward.2
$region0: #{dense_layer_forward.2}
  #allocation0 [shape = 'u32[]', space=smem, size = 0x4, offset = 0x4, fixed_abs, tag = 'smem constant byte address 0x4 - core index']
  #allocation1 [shape = 'u32[144,128]{1,0:T(1,128)}', space=vmem, size = 0x12000, scoped, tag = 'internal scratch']
  %s0 = inlined_call_operand.vmem [shape: f32[512,4], index: 0, kind: input, shape index: {}]
  %s1 = inlined_call_operand.vmem [shape: f32[1,4], index: 1, kind: input, shape index: {}]
  %s2 = inlined_call_operand.vmem [shape: f32[1,4], index: 2, kind: input, shape index: {}]
  %s3 = inlined_call_operand.vmem [shape: f32[4,128], index: 3, kind: input, shape index: {}]
  %s4 = inlined_call_operand.vmem [shape: f32[512,128], index: 4, kind: output, shape index: {0}]
  %s5 = inlined_call_operand.vmem [shape: f32[1,128], index: 5, kind: output, shape index: {1}]
  %s6 = inlined_call_operand.vmem [shape: f32[1,128], index: 6, kind: output, shape index: {2}]
  %7 = xla_tuple %s4, %s5, %s6
  %s8 = sld [smem:[#allocation0]]
  $region69: #{dense_layer_forward.2} parent=0
    _
  %s10 = ssub.s32 1, %s8
  %s11 = scalar_select 0, %s10, %s8
  loop: start=0, step=1, limit=4
  $region2: #{dense_layer_forward.2} parent=0 // loop_pre_header
    _
  $region3: #{dense_layer_forward.2} parent=0 // loop_header
    %s13 = sphi 0, %s17
    %p14 = scmp.ge.s32.totalorder %s13, 4
    %s23 = sphi 0, %s25
    %s26 = sphi 0, %s23
    %s27 = sphi 0, %s26
    %s43 = sphi 0, %s27
    %s47 = sphi 0, %s47
    %s49 = sphi 0, %s47
    %s50 = sphi 0, %s49
    %s64 = sphi 0, %s50
    %s68 = sphi 0, %s68
    %s70 = sphi 0, %s68
    %s71 = sphi 0, %s70
    %s85 = sphi 0, %s71
    %s89 = sphi 0, %s89
    %s91 = sphi 0, %s89
    %s92 = sphi 0, %s91
    %s106 = sphi 0, %s92
    %s112 = sphi 0, %s114
    %s115 = sphi 0, %s112
    %s116 = sphi 0, %s115
    %s132 = sphi 0, %s116
    %s136 = sphi 0, %s136
    %s138 = sphi 0, %s136
    %s139 = sphi 0, %s138
    %s153 = sphi 0, %s139
    %s157 = sphi 0, %s157
    %s159 = sphi 0, %s157
    %s160 = sphi 0, %s159
    %s174 = sphi 0, %s160
  $region4: #{dense_layer_forward.2} parent=0 // loop_header_branch
    %16 = sbr.rel (%p14) target = $region8
  $region5: #{dense_layer_forward.2} parent=0 // loop_body
    %s18 = ssub.s32 %s13, 1
    %s19 = ssub.s32 %s13, 2
    %s20 = sadd.s32 %s13, 1
    %s21 = ssub.s32 %s13, %s20
    %p22 = scmp.eq.s32.totalorder %s21, 0
    %s24 = sadd.s32 %s23, 1
    %s25 = scalar_select %p22, %s23, %s24
    %p28 = pneg %p22
    %p29 = scmp.eq.s32.totalorder %s13, 1
    %p30 = por %p28, %p29
    %p31 = scmp.ne.s32.totalorder %s23, %s26
    %p32 = scmp.eq.s32.totalorder %s13, 0
    %p33 = por %p31, %p32
    %p34 = scmp.ne.s32.totalorder %s23, %s26
    %p35 = scmp.eq.s32.totalorder %s18, 1
    %p36 = por %p34, %p35
    %p37 = scmp.ne.s32.totalorder %s26, %s27
    %p38 = scmp.eq.s32.totalorder %s18, 0
    %p39 = por %p37, %p38
    %p40 = scmp.ne.s32.totalorder %s26, %s27
    %p41 = scmp.eq.s32.totalorder %s19, 1
    %p42 = por %p40, %p41
    %p44 = scmp.ne.s32.totalorder %s27, %s43
    %p45 = scmp.eq.s32.totalorder %s19, 0
    %p46 = por %p44, %p45
    %s48 = sadd.s32 %s47, 1
    %p51 = scmp.eq.s32.totalorder %s13, 1
    %p52 = scmp.ne.s32.totalorder %s47, %s49
    %p53 = scmp.eq.s32.totalorder %s13, 0
    %p54 = por %p52, %p53
    %p55 = scmp.ne.s32.totalorder %s47, %s49
    %p56 = scmp.eq.s32.totalorder %s18, 1
    %p57 = por %p55, %p56
    %p58 = scmp.ne.s32.totalorder %s49, %s50
    %p59 = scmp.eq.s32.totalorder %s18, 0
    %p60 = por %p58, %p59
    %p61 = scmp.ne.s32.totalorder %s49, %s50
    %p62 = scmp.eq.s32.totalorder %s19, 1
    %p63 = por %p61, %p62
    %p65 = scmp.ne.s32.totalorder %s50, %s64
    %p66 = scmp.eq.s32.totalorder %s19, 0
    %p67 = por %p65, %p66
    %s69 = sadd.s32 %s68, 1
    %p72 = scmp.eq.s32.totalorder %s13, 1
    %p73 = scmp.ne.s32.totalorder %s68, %s70
    %p74 = scmp.eq.s32.totalorder %s13, 0
    %p75 = por %p73, %p74
    %p76 = scmp.ne.s32.totalorder %s68, %s70
    %p77 = scmp.eq.s32.totalorder %s18, 1
    %p78 = por %p76, %p77
    %p79 = scmp.ne.s32.totalorder %s70, %s71
    %p80 = scmp.eq.s32.totalorder %s18, 0
    %p81 = por %p79, %p80
    %p82 = scmp.ne.s32.totalorder %s70, %s71
    %p83 = scmp.eq.s32.totalorder %s19, 1
    %p84 = por %p82, %p83
    %p86 = scmp.ne.s32.totalorder %s71, %s85
    %p87 = scmp.eq.s32.totalorder %s19, 0
    %p88 = por %p86, %p87
    %s90 = sadd.s32 %s89, 1
    %p93 = scmp.eq.s32.totalorder %s13, 1
    %p94 = scmp.ne.s32.totalorder %s89, %s91
    %p95 = scmp.eq.s32.totalorder %s13, 0
    %p96 = por %p94, %p95
    %p97 = scmp.ne.s32.totalorder %s89, %s91
    %p98 = scmp.eq.s32.totalorder %s18, 1
    %p99 = por %p97, %p98
    %p100 = scmp.ne.s32.totalorder %s91, %s92
    %p101 = scmp.eq.s32.totalorder %s18, 0
    %p102 = por %p100, %p101
    %p103 = scmp.ne.s32.totalorder %s91, %s92
    %p104 = scmp.eq.s32.totalorder %s19, 1
    %p105 = por %p103, %p104
    %p107 = scmp.ne.s32.totalorder %s92, %s106
    %p108 = scmp.eq.s32.totalorder %s19, 0
    %p109 = por %p107, %p108
    %s110 = ssub.s32 %s13, %s20
    %p111 = scmp.eq.s32.totalorder %s110, 0
    %s113 = sadd.s32 %s112, 1
    %s114 = scalar_select %p111, %s112, %s113
    %p117 = pneg %p111
    %p118 = scmp.eq.s32.totalorder %s13, 1
    %p119 = por %p117, %p118
    %p120 = scmp.ne.s32.totalorder %s112, %s115
    %p121 = scmp.eq.s32.totalorder %s13, 0
    %p122 = por %p120, %p121
    %p123 = scmp.ne.s32.totalorder %s112, %s115
    %p124 = scmp.eq.s32.totalorder %s18, 1
    %p125 = por %p123, %p124
    %p126 = scmp.ne.s32.totalorder %s115, %s116
    %p127 = scmp.eq.s32.totalorder %s18, 0
    %p128 = por %p126, %p127
    %p129 = scmp.ne.s32.totalorder %s115, %s116
    %p130 = scmp.eq.s32.totalorder %s19, 1
    %p131 = por %p129, %p130
    %p133 = scmp.ne.s32.totalorder %s116, %s132
    %p134 = scmp.eq.s32.totalorder %s19, 0
    %p135 = por %p133, %p134
    %s137 = sadd.s32 %s136, 1
    %p140 = scmp.eq.s32.totalorder %s13, 1
    %p141 = scmp.ne.s32.totalorder %s136, %s138
    %p142 = scmp.eq.s32.totalorder %s13, 0
    %p143 = por %p141, %p142
    %p144 = scmp.ne.s32.totalorder %s136, %s138
    %p145 = scmp.eq.s32.totalorder %s18, 1
    %p146 = por %p144, %p145
    %p147 = scmp.ne.s32.totalorder %s138, %s139
    %p148 = scmp.eq.s32.totalorder %s18, 0
    %p149 = por %p147, %p148
    %p150 = scmp.ne.s32.totalorder %s138, %s139
    %p151 = scmp.eq.s32.totalorder %s19, 1
    %p152 = por %p150, %p151
    %p154 = scmp.ne.s32.totalorder %s139, %s153
    %p155 = scmp.eq.s32.totalorder %s19, 0
    %p156 = por %p154, %p155
    %s158 = sadd.s32 %s157, 1
    %p161 = scmp.eq.s32.totalorder %s13, 1
    %p162 = scmp.ne.s32.totalorder %s157, %s159
    %p163 = scmp.eq.s32.totalorder %s13, 0
    %p164 = por %p162, %p163
    %p165 = scmp.ne.s32.totalorder %s157, %s159
    %p166 = scmp.eq.s32.totalorder %s18, 1
    %p167 = por %p165, %p166
    %p168 = scmp.ne.s32.totalorder %s159, %s160
    %p169 = scmp.eq.s32.totalorder %s18, 0
    %p170 = por %p168, %p169
    %p171 = scmp.ne.s32.totalorder %s159, %s160
    %p172 = scmp.eq.s32.totalorder %s19, 1
    %p173 = por %p171, %p172
    %p175 = scmp.ne.s32.totalorder %s160, %s174
    %p176 = scmp.eq.s32.totalorder %s19, 0
    %p177 = por %p175, %p176
    %p178 = scmp.le.s32.totalorder 1, %s13
    %p179 = scmp.lt.s32.totalorder %s13, 3
    %p180 = pnand %p178, %p179
    %p181 = pneg %p180
    // Predicated region
    $region9: #{dense_layer_forward.2} parent=5 // pred_check
      _
    $region10: #{dense_layer_forward.2} parent=5 // pred_check_branch
      %183 = sbr.rel (%p180) target = $region12
    $region11: #{dense_layer_forward.2} parent=5 // pred_region
      %s184 = ssub.s32 %s13, 1
      // Predicated region
      $region13: #{dense_layer_forward.2} parent=11 // pred_check
        %p185 = pneg %p60
      $region14: #{dense_layer_forward.2} parent=11 // pred_check_branch
        %187 = sbr.rel (%p185) target = $region16
      $region15: #{dense_layer_forward.2} parent=11 // pred_region
        _
      $region16: #{dense_layer_forward.2} parent=11 // pred_fallthru
        _
      // Predicated region
      $region17: #{dense_layer_forward.2} parent=11 // pred_check
        %p188 = pneg %p81
      $region18: #{dense_layer_forward.2} parent=11 // pred_check_branch
        %190 = sbr.rel (%p188) target = $region20
      $region19: #{dense_layer_forward.2} parent=11 // pred_region
        _
      $region20: #{dense_layer_forward.2} parent=11 // pred_fallthru
        _
      // Predicated region
      $region21: #{dense_layer_forward.2} parent=11 // pred_check
        %p191 = pneg %p102
      $region22: #{dense_layer_forward.2} parent=11 // pred_check_branch
        %193 = sbr.rel (%p191) target = $region24
      $region23: #{dense_layer_forward.2} parent=11 // pred_region
        _
      $region24: #{dense_layer_forward.2} parent=11 // pred_fallthru
        _
    $region12: #{dense_layer_forward.2} parent=5 // pred_fallthru
      _
    %p194 = scmp.lt.s32.totalorder %s13, 2
    // Predicated region
    $region25: #{dense_layer_forward.2} parent=5 // pred_check
      %p195 = pneg %p194
    $region26: #{dense_layer_forward.2} parent=5 // pred_check_branch
      %197 = sbr.rel (%p195) target = $region28
    $region27: #{dense_layer_forward.2} parent=5 // pred_region
      // Predicated region
      $region29: #{dense_layer_forward.2} parent=27 // pred_check
        %p198 = pneg %p33
      $region30: #{dense_layer_forward.2} parent=27 // pred_check_branch
        %200 = sbr.rel (%p198) target = $region32
      $region31: #{dense_layer_forward.2} parent=27 // pred_region
        %s201 = smul.u32 32, %s13
        %p202 = scmp.lt.s32.totalorder %s201, 63
        %s203 = scalar_select %p202, %s201, 63
        %s204 = smul.addr %s203, 8
        %s205 = scalar_lea.vmem %s0, %s204
        %s206 = smul.u32 32, %s13
      $region32: #{dense_layer_forward.2} parent=27 // pred_fallthru
        _
    $region28: #{dense_layer_forward.2} parent=5 // pred_fallthru
      _
    %p207 = scmp.le.s32.totalorder 1, %s13
    %p208 = scmp.lt.s32.totalorder %s13, 3
    %p209 = pnand %p207, %p208
    %p210 = pneg %p209
    // Predicated region
    $region33: #{dense_layer_forward.2} parent=5 // pred_check
      _
    $region34: #{dense_layer_forward.2} parent=5 // pred_check_branch
      %212 = sbr.rel (%p209) target = $region36
    $region35: #{dense_layer_forward.2} parent=5 // pred_region
      %s213 = ssub.s32 %s13, 1
      %s214 = smul.u32 32, %s18
      %p215 = scmp.lt.s32.totalorder %s214, 63
      %s216 = scalar_select %p215, %s214, 63
      %s217 = smul.addr %s216, 8
      %s218 = scalar_lea.vmem %s0, %s217
      %p219 = pneg %p39
      %p220 = pneg %p36
      %p221 = pneg %p60
      %p222 = pneg %p57
      %p223 = pneg %p81
      %p224 = pneg %p78
      %p225 = pneg %p102
      %p226 = pneg %p99
      %p227 = pneg %p128
      %p228 = pneg %p125
      %s229 = smul.u32 32, %s18
      %p230 = scmp.lt.s32.totalorder %s229, 63
      %s231 = scalar_select %p230, %s229, 63
      %s232 = smul.addr %s231, 8
      %s233 = scalar_lea.vmem %s4, %s232
      %p234 = pneg %p149
      %p235 = pneg %p146
      %p236 = pneg %p170
      %p237 = pneg %p167
      %s238 = smul.u32 32, %s18
      %p239 = scmp.lt.s32.totalorder %s238, 63
      %s240 = scalar_select %p239, %s238, 63
      %s241 = smul.addr %s240, 8
      %s242 = scalar_lea.vmem %s0, %s241
      %s243 = smul.u32 32, %s18
      %s244 = smul.u32 32, %s18
      %p245 = scmp.lt.s32.totalorder %s244, 63
      %s246 = scalar_select %p245, %s244, 63
      %s247 = smul.addr %s246, 8
      %s248 = scalar_lea.vmem %s4, %s247
      %s249 = smul.u32 32, %s18
      %v250 = vld [vmem:[%s242] sm:$0xff]
      %v251 = vld [vmem:[%s242 + $0x8] sm:$0xff]
      %v252 = vld [vmem:[%s242 + $0x10] sm:$0xff]
      %v253 = vld [vmem:[%s242 + $0x18] sm:$0xff]
      %v254 = vld [vmem:[%s242 + $0x20] sm:$0xff]
      %v255 = vld [vmem:[%s242 + $0x28] sm:$0xff]
      %v256 = vld [vmem:[%s242 + $0x30] sm:$0xff]
      %v257 = vld [vmem:[%s242 + $0x38] sm:$0xff]
      %v258 = vld [vmem:[%s242 + $0x40] sm:$0xff]
      %v259 = vld [vmem:[%s242 + $0x48] sm:$0xff]
      %v260 = vld [vmem:[%s242 + $0x50] sm:$0xff]
      %v261 = vld [vmem:[%s242 + $0x58] sm:$0xff]
      %v262 = vld [vmem:[%s242 + $0x60] sm:$0xff]
      %v263 = vld [vmem:[%s242 + $0x68] sm:$0xff]
      %v264 = vld [vmem:[%s242 + $0x70] sm:$0xff]
      %v265 = vld [vmem:[%s242 + $0x78] sm:$0xff]
      %v266 = vld [vmem:[%s242 + $0x80] sm:$0xff]
      %v267 = vld [vmem:[%s242 + $0x88] sm:$0xff]
      %v268 = vld [vmem:[%s242 + $0x90] sm:$0xff]
      %v269 = vld [vmem:[%s242 + $0x98] sm:$0xff]
      %v270 = vld [vmem:[%s242 + $0xa0] sm:$0xff]
      %v271 = vld [vmem:[%s242 + $0xa8] sm:$0xff]
      %v272 = vld [vmem:[%s242 + $0xb0] sm:$0xff]
      %v273 = vld [vmem:[%s242 + $0xb8] sm:$0xff]
      %v274 = vld [vmem:[%s242 + $0xc0] sm:$0xff]
      %v275 = vld [vmem:[%s242 + $0xc8] sm:$0xff]
      %v276 = vld [vmem:[%s242 + $0xd0] sm:$0xff]
      %v277 = vld [vmem:[%s242 + $0xd8] sm:$0xff]
      %v278 = vld [vmem:[%s242 + $0xe0] sm:$0xff]
      %v279 = vld [vmem:[%s242 + $0xe8] sm:$0xff]
      %v280 = vld [vmem:[%s242 + $0xf0] sm:$0xff]
      %v281 = vld [vmem:[%s242 + $0xf8] sm:$0xff]
      %v282 = vld [vmem:[%s1] sm:$0x1]
      %v284 = vlaneseq
      %v285 = vshrl.u32 %v284, 7
      %v286 = vsub.s32 0, %v285
      %v287 = vrot.slane %v282, %v286
      %v289 = vmul.f32 %v250, %v287
      %v290 = vmul.f32 %v251, %v287
      %v291 = vmul.f32 %v252, %v287
      %v292 = vmul.f32 %v253, %v287
      %v293 = vmul.f32 %v254, %v287
      %v294 = vmul.f32 %v255, %v287
      %v295 = vmul.f32 %v256, %v287
      %v296 = vmul.f32 %v257, %v287
      %v297 = vmul.f32 %v258, %v287
      %v298 = vmul.f32 %v259, %v287
      %v299 = vmul.f32 %v260, %v287
      %v300 = vmul.f32 %v261, %v287
      %v301 = vmul.f32 %v262, %v287
      %v302 = vmul.f32 %v263, %v287
      %v303 = vmul.f32 %v264, %v287
      %v304 = vmul.f32 %v265, %v287
      %v305 = vmul.f32 %v266, %v287
      %v306 = vmul.f32 %v267, %v287
      %v307 = vmul.f32 %v268, %v287
      %v308 = vmul.f32 %v269, %v287
      %v309 = vmul.f32 %v270, %v287
      %v310 = vmul.f32 %v271, %v287
      %v311 = vmul.f32 %v272, %v287
      %v312 = vmul.f32 %v273, %v287
      %v313 = vmul.f32 %v274, %v287
      %v314 = vmul.f32 %v275, %v287
      %v315 = vmul.f32 %v276, %v287
      %v316 = vmul.f32 %v277, %v287
      %v317 = vmul.f32 %v278, %v287
      %v318 = vmul.f32 %v279, %v287
      %v319 = vmul.f32 %v280, %v287
      %v320 = vmul.f32 %v281, %v287
      %v321 = vld [vmem:[%s2] sm:$0x1]
      %v323 = vlaneseq
      %v324 = vshrl.u32 %v323, 7
      %v325 = vsub.s32 0, %v324
      %v326 = vrot.slane %v321, %v325
      %v328 = vadd.f32 %v289, %v326
      %v329 = vadd.f32 %v290, %v326
      %v330 = vadd.f32 %v291, %v326
      %v331 = vadd.f32 %v292, %v326
      %v332 = vadd.f32 %v293, %v326
      %v333 = vadd.f32 %v294, %v326
      %v334 = vadd.f32 %v295, %v326
      %v335 = vadd.f32 %v296, %v326
      %v336 = vadd.f32 %v297, %v326
      %v337 = vadd.f32 %v298, %v326
      %v338 = vadd.f32 %v299, %v326
      %v339 = vadd.f32 %v300, %v326
      %v340 = vadd.f32 %v301, %v326
      %v341 = vadd.f32 %v302, %v326
      %v342 = vadd.f32 %v303, %v326
      %v343 = vadd.f32 %v304, %v326
      %v344 = vadd.f32 %v305, %v326
      %v345 = vadd.f32 %v306, %v326
      %v346 = vadd.f32 %v307, %v326
      %v347 = vadd.f32 %v308, %v326
      %v348 = vadd.f32 %v309, %v326
      %v349 = vadd.f32 %v310, %v326
      %v350 = vadd.f32 %v311, %v326
      %v351 = vadd.f32 %v312, %v326
      %v352 = vadd.f32 %v313, %v326
      %v353 = vadd.f32 %v314, %v326
      %v354 = vadd.f32 %v315, %v326
      %v355 = vadd.f32 %v316, %v326
      %v356 = vadd.f32 %v317, %v326
      %v357 = vadd.f32 %v318, %v326
      %v358 = vadd.f32 %v319, %v326
      %v359 = vadd.f32 %v320, %v326
      %v360 = vmax.f32 %v328, 0.0
      %v361 = vmax.f32 %v329, 0.0
      %v362 = vmax.f32 %v330, 0.0
      %v363 = vmax.f32 %v331, 0.0
      %v364 = vmax.f32 %v332, 0.0
      %v365 = vmax.f32 %v333, 0.0
      %v366 = vmax.f32 %v334, 0.0
      %v367 = vmax.f32 %v335, 0.0
      %v368 = vmax.f32 %v336, 0.0
      %v369 = vmax.f32 %v337, 0.0
      %v370 = vmax.f32 %v338, 0.0
      %v371 = vmax.f32 %v339, 0.0
      %v372 = vmax.f32 %v340, 0.0
      %v373 = vmax.f32 %v341, 0.0
      %v374 = vmax.f32 %v342, 0.0
      %v375 = vmax.f32 %v343, 0.0
      %v376 = vmax.f32 %v344, 0.0
      %v377 = vmax.f32 %v345, 0.0
      %v378 = vmax.f32 %v346, 0.0
      %v379 = vmax.f32 %v347, 0.0
      %v380 = vmax.f32 %v348, 0.0
      %v381 = vmax.f32 %v349, 0.0
      %v382 = vmax.f32 %v350, 0.0
      %v383 = vmax.f32 %v351, 0.0
      %v384 = vmax.f32 %v352, 0.0
      %v385 = vmax.f32 %v353, 0.0
      %v386 = vmax.f32 %v354, 0.0
      %v387 = vmax.f32 %v355, 0.0
      %v388 = vmax.f32 %v356, 0.0
      %v389 = vmax.f32 %v357, 0.0
      %v390 = vmax.f32 %v358, 0.0
      %v391 = vmax.f32 %v359, 0.0
      %v392 = vld [vmem:[%s3] sm:$0xf]
      %vm393 = vcmask 31744
      %v395 = vsel %vm393, %v360, 0
      %v398 = vsel %vm393, %v361, 0
      %v401 = vsel %vm393, %v362, 0
      %v404 = vsel %vm393, %v363, 0
      %v407 = vsel %vm393, %v364, 0
      %v410 = vsel %vm393, %v365, 0
      %v413 = vsel %vm393, %v366, 0
      %v416 = vsel %vm393, %v367, 0
      %v419 = vsel %vm393, %v368, 0
      %v422 = vsel %vm393, %v369, 0
      %v425 = vsel %vm393, %v370, 0
      %v428 = vsel %vm393, %v371, 0
      %v431 = vsel %vm393, %v372, 0
      %v434 = vsel %vm393, %v373, 0
      %v437 = vsel %vm393, %v374, 0
      %v440 = vsel %vm393, %v375, 0
      %v443 = vsel %vm393, %v376, 0
      %v446 = vsel %vm393, %v377, 0
      %v449 = vsel %vm393, %v378, 0
      %v452 = vsel %vm393, %v379, 0
      %v455 = vsel %vm393, %v380, 0
      %v458 = vsel %vm393, %v381, 0
      %v461 = vsel %vm393, %v382, 0
      %v464 = vsel %vm393, %v383, 0
      %v467 = vsel %vm393, %v384, 0
      %v470 = vsel %vm393, %v385, 0
      %v473 = vsel %vm393, %v386, 0
      %v476 = vsel %vm393, %v387, 0
      %v479 = vsel %vm393, %v388, 0
      %v482 = vsel %vm393, %v389, 0
      %v485 = vsel %vm393, %v390, 0
      %v488 = vsel %vm393, %v391, 0
      %vm490 = vcmask 1043456
      %v492 = vsel %vm490, %v392, 0
      %494 = vmatprep.subr.mxu0 0.0
      %495 = vmatpush1.msra.mxu0 0.0
      %496 = vmatprep.subr.mxu0 0.0
      %497 = vmatpush1.msra.mxu0 0.0
      %498 = vmatprep.subr.mxu0 0.0
      %499 = vmatpush1.msra.mxu0 0.0
      %500 = vmatprep.subr.mxu0 0.0
      %501 = vmatpush1.msra.mxu0 0.0
      %502 = vmatprep.subr.mxu0 0.0
      %503 = vmatpush1.msra.mxu0 0.0
      %504 = vmatprep.subr.mxu0 0.0
      %505 = vmatpush1.msra.mxu0 0.0
      %506 = vmatprep.subr.mxu0 0.0
      %507 = vmatpush1.msra.mxu0 0.0
      %508 = vmatprep.subr.mxu0 0.0
      %509 = vmatpush1.msra.mxu0 0.0
      %510 = vmatprep.subr.mxu0 0.0
      %511 = vmatpush1.msra.mxu0 0.0
      %512 = vmatprep.subr.mxu0 0.0
      %513 = vmatpush1.msra.mxu0 0.0
      %514 = vmatprep.subr.mxu0 0.0
      %515 = vmatpush1.msra.mxu0 0.0
      %516 = vmatprep.subr.mxu0 0.0
      %517 = vmatpush1.msra.mxu0 0.0
      %518 = vmatprep.subr.mxu0 0.0
      %519 = vmatpush1.msra.mxu0 0.0
      %520 = vmatprep.subr.mxu0 0.0
      %521 = vmatpush1.msra.mxu0 0.0
      %522 = vmatprep.subr.mxu0 0.0
      %523 = vmatpush1.msra.mxu0 0.0
      %524 = vmatprep.subr.mxu0 0.0
      %525 = vmatpush1.msra.mxu0 %v492
      %526 = vmatprep.subr.mxu0 0.0
      %527 = vmatpush2.msra.mxu0 0.0
      %528 = vmatprep.subr.mxu0 0.0
      %529 = vmatpush2.msra.mxu0 0.0
      %530 = vmatprep.subr.mxu0 0.0
      %531 = vmatpush2.msra.mxu0 0.0
      %532 = vmatprep.subr.mxu0 0.0
      %533 = vmatpush2.msra.mxu0 0.0
      %534 = vmatprep.subr.mxu0 0.0
      %535 = vmatpush2.msra.mxu0 0.0
      %536 = vmatprep.subr.mxu0 0.0
      %537 = vmatpush2.msra.mxu0 0.0
      %538 = vmatprep.subr.mxu0 0.0
      %539 = vmatpush2.msra.mxu0 0.0
      %540 = vmatprep.subr.mxu0 0.0
      %541 = vmatpush2.msra.mxu0 0.0
      %542 = vmatprep.subr.mxu0 0.0
      %543 = vmatpush2.msra.mxu0 0.0
      %544 = vmatprep.subr.mxu0 0.0
      %545 = vmatpush2.msra.mxu0 0.0
      %546 = vmatprep.subr.mxu0 0.0
      %547 = vmatpush2.msra.mxu0 0.0
      %548 = vmatprep.subr.mxu0 0.0
      %549 = vmatpush2.msra.mxu0 0.0
      %550 = vmatprep.subr.mxu0 0.0
      %551 = vmatpush2.msra.mxu0 0.0
      %552 = vmatprep.subr.mxu0 0.0
      %553 = vmatpush2.msra.mxu0 0.0
      %554 = vmatprep.subr.mxu0 0.0
      %555 = vmatpush2.msra.mxu0 0.0
      %556 = vmatprep.subr.mxu0 0.0
      %557 = vmatpush2.msra.mxu0 0.0
      %558 = vmatprep.mubr.f32.mxu0 0.0
      %559 = vmatmul.mubr.f32.gmra.mxu0 %v395
      %v560 = vpop.f32.mrf.mxu0
      %v561 = vadd.f32 0.0, %v560
      %v562 = vpop.f32.mrf.mxu0
      %563 = vmatprep.mubr.f32.mxu0 0.0
      %564 = vmatmul.mubr.f32.gmra.mxu0 %v398
      %v565 = vpop.f32.mrf.mxu0
      %v566 = vadd.f32 0.0, %v565
      %v567 = vpop.f32.mrf.mxu0
      %568 = vmatprep.mubr.f32.mxu0 0.0
      %569 = vmatmul.mubr.f32.gmra.mxu0 %v401
      %v570 = vpop.f32.mrf.mxu0
      %v571 = vadd.f32 0.0, %v570
      %v572 = vpop.f32.mrf.mxu0
      %573 = vmatprep.mubr.f32.mxu0 0.0
      %574 = vmatmul.mubr.f32.gmra.mxu0 %v404
      %v575 = vpop.f32.mrf.mxu0
      %v576 = vadd.f32 0.0, %v575
      %v577 = vpop.f32.mrf.mxu0
      %578 = vmatprep.mubr.f32.mxu0 0.0
      %579 = vmatmul.mubr.f32.gmra.mxu0 %v407
      %v580 = vpop.f32.mrf.mxu0
      %v581 = vadd.f32 0.0, %v580
      %v582 = vpop.f32.mrf.mxu0
      %583 = vmatprep.mubr.f32.mxu0 0.0
      %584 = vmatmul.mubr.f32.gmra.mxu0 %v410
      %v585 = vpop.f32.mrf.mxu0
      %v586 = vadd.f32 0.0, %v585
      %v587 = vpop.f32.mrf.mxu0
      %588 = vmatprep.mubr.f32.mxu0 0.0
      %589 = vmatmul.mubr.f32.gmra.mxu0 %v413
      %v590 = vpop.f32.mrf.mxu0
      %v591 = vadd.f32 0.0, %v590
      %v592 = vpop.f32.mrf.mxu0
      %593 = vmatprep.mubr.f32.mxu0 0.0
      %594 = vmatmul.mubr.f32.gmra.mxu0 %v416
      %v595 = vpop.f32.mrf.mxu0
      %v596 = vadd.f32 0.0, %v595
      %v597 = vpop.f32.mrf.mxu0
      %598 = vmatprep.mubr.f32.mxu0 0.0
      %599 = vmatmul.mubr.f32.gmra.mxu0 %v419
      %v600 = vpop.f32.mrf.mxu0
      %v601 = vadd.f32 0.0, %v600
      %v602 = vpop.f32.mrf.mxu0
      %603 = vmatprep.mubr.f32.mxu0 0.0
      %604 = vmatmul.mubr.f32.gmra.mxu0 %v422
      %v605 = vpop.f32.mrf.mxu0
      %v606 = vadd.f32 0.0, %v605
      %v607 = vpop.f32.mrf.mxu0
      %608 = vmatprep.mubr.f32.mxu0 0.0
      %609 = vmatmul.mubr.f32.gmra.mxu0 %v425
      %v610 = vpop.f32.mrf.mxu0
      %v611 = vadd.f32 0.0, %v610
      %v612 = vpop.f32.mrf.mxu0
      %613 = vmatprep.mubr.f32.mxu0 0.0
      %614 = vmatmul.mubr.f32.gmra.mxu0 %v428
      %v615 = vpop.f32.mrf.mxu0
      %v616 = vadd.f32 0.0, %v615
      %v617 = vpop.f32.mrf.mxu0
      %618 = vmatprep.mubr.f32.mxu0 0.0
      %619 = vmatmul.mubr.f32.gmra.mxu0 %v431
      %v620 = vpop.f32.mrf.mxu0
      %v621 = vadd.f32 0.0, %v620
      %v622 = vpop.f32.mrf.mxu0
      %623 = vmatprep.mubr.f32.mxu0 0.0
      %624 = vmatmul.mubr.f32.gmra.mxu0 %v434
      %v625 = vpop.f32.mrf.mxu0
      %v626 = vadd.f32 0.0, %v625
      %v627 = vpop.f32.mrf.mxu0
      %628 = vmatprep.mubr.f32.mxu0 0.0
      %629 = vmatmul.mubr.f32.gmra.mxu0 %v437
      %v630 = vpop.f32.mrf.mxu0
      %v631 = vadd.f32 0.0, %v630
      %v632 = vpop.f32.mrf.mxu0
      %633 = vmatprep.mubr.f32.mxu0 0.0
      %634 = vmatmul.mubr.f32.gmra.mxu0 %v440
      %v635 = vpop.f32.mrf.mxu0
      %v636 = vadd.f32 0.0, %v635
      %v637 = vpop.f32.mrf.mxu0
      %638 = vmatprep.mubr.f32.mxu0 0.0
      %639 = vmatmul.mubr.f32.gmra.mxu0 %v443
      %v640 = vpop.f32.mrf.mxu0
      %v641 = vadd.f32 0.0, %v640
      %v642 = vpop.f32.mrf.mxu0
      %643 = vmatprep.mubr.f32.mxu0 0.0
      %644 = vmatmul.mubr.f32.gmra.mxu0 %v446
      %v645 = vpop.f32.mrf.mxu0
      %v646 = vadd.f32 0.0, %v645
      %v647 = vpop.f32.mrf.mxu0
      %648 = vmatprep.mubr.f32.mxu0 0.0
      %649 = vmatmul.mubr.f32.gmra.mxu0 %v449
      %v650 = vpop.f32.mrf.mxu0
      %v651 = vadd.f32 0.0, %v650
      %v652 = vpop.f32.mrf.mxu0
      %653 = vmatprep.mubr.f32.mxu0 0.0
      %654 = vmatmul.mubr.f32.gmra.mxu0 %v452
      %v655 = vpop.f32.mrf.mxu0
      %v656 = vadd.f32 0.0, %v655
      %v657 = vpop.f32.mrf.mxu0
      %658 = vmatprep.mubr.f32.mxu0 0.0
      %659 = vmatmul.mubr.f32.gmra.mxu0 %v455
      %v660 = vpop.f32.mrf.mxu0
      %v661 = vadd.f32 0.0, %v660
      %v662 = vpop.f32.mrf.mxu0
      %663 = vmatprep.mubr.f32.mxu0 0.0
      %664 = vmatmul.mubr.f32.gmra.mxu0 %v458
      %v665 = vpop.f32.mrf.mxu0
      %v666 = vadd.f32 0.0, %v665
      %v667 = vpop.f32.mrf.mxu0
      %668 = vmatprep.mubr.f32.mxu0 0.0
      %669 = vmatmul.mubr.f32.gmra.mxu0 %v461
      %v670 = vpop.f32.mrf.mxu0
      %v671 = vadd.f32 0.0, %v670
      %v672 = vpop.f32.mrf.mxu0
      %673 = vmatprep.mubr.f32.mxu0 0.0
      %674 = vmatmul.mubr.f32.gmra.mxu0 %v464
      %v675 = vpop.f32.mrf.mxu0
      %v676 = vadd.f32 0.0, %v675
      %v677 = vpop.f32.mrf.mxu0
      %678 = vmatprep.mubr.f32.mxu0 0.0
      %679 = vmatmul.mubr.f32.gmra.mxu0 %v467
      %v680 = vpop.f32.mrf.mxu0
      %v681 = vadd.f32 0.0, %v680
      %v682 = vpop.f32.mrf.mxu0
      %683 = vmatprep.mubr.f32.mxu0 0.0
      %684 = vmatmul.mubr.f32.gmra.mxu0 %v470
      %v685 = vpop.f32.mrf.mxu0
      %v686 = vadd.f32 0.0, %v685
      %v687 = vpop.f32.mrf.mxu0
      %688 = vmatprep.mubr.f32.mxu0 0.0
      %689 = vmatmul.mubr.f32.gmra.mxu0 %v473
      %v690 = vpop.f32.mrf.mxu0
      %v691 = vadd.f32 0.0, %v690
      %v692 = vpop.f32.mrf.mxu0
      %693 = vmatprep.mubr.f32.mxu0 0.0
      %694 = vmatmul.mubr.f32.gmra.mxu0 %v476
      %v695 = vpop.f32.mrf.mxu0
      %v696 = vadd.f32 0.0, %v695
      %v697 = vpop.f32.mrf.mxu0
      %698 = vmatprep.mubr.f32.mxu0 0.0
      %699 = vmatmul.mubr.f32.gmra.mxu0 %v479
      %v700 = vpop.f32.mrf.mxu0
      %v701 = vadd.f32 0.0, %v700
      %v702 = vpop.f32.mrf.mxu0
      %703 = vmatprep.mubr.f32.mxu0 0.0
      %704 = vmatmul.mubr.f32.gmra.mxu0 %v482
      %v705 = vpop.f32.mrf.mxu0
      %v706 = vadd.f32 0.0, %v705
      %v707 = vpop.f32.mrf.mxu0
      %708 = vmatprep.mubr.f32.mxu0 0.0
      %709 = vmatmul.mubr.f32.gmra.mxu0 %v485
      %v710 = vpop.f32.mrf.mxu0
      %v711 = vadd.f32 0.0, %v710
      %v712 = vpop.f32.mrf.mxu0
      %713 = vmatprep.mubr.f32.mxu0 0.0
      %714 = vmatmul.mubr.f32.gmra.mxu0 %v488
      %v715 = vpop.f32.mrf.mxu0
      %v716 = vadd.f32 0.0, %v715
      %v717 = vpop.f32.mrf.mxu0
      %718 = vdwg.mxu0
      %719 = vst [vmem:[%s248] sm:$0xff] %v561
      %720 = vst [vmem:[%s248 + $0x8] sm:$0xff] %v566
      %721 = vst [vmem:[%s248 + $0x10] sm:$0xff] %v571
      %722 = vst [vmem:[%s248 + $0x18] sm:$0xff] %v576
      %723 = vst [vmem:[%s248 + $0x20] sm:$0xff] %v581
      %724 = vst [vmem:[%s248 + $0x28] sm:$0xff] %v586
      %725 = vst [vmem:[%s248 + $0x30] sm:$0xff] %v591
      %726 = vst [vmem:[%s248 + $0x38] sm:$0xff] %v596
      %727 = vst [vmem:[%s248 + $0x40] sm:$0xff] %v601
      %728 = vst [vmem:[%s248 + $0x48] sm:$0xff] %v606
      %729 = vst [vmem:[%s248 + $0x50] sm:$0xff] %v611
      %730 = vst [vmem:[%s248 + $0x58] sm:$0xff] %v616
      %731 = vst [vmem:[%s248 + $0x60] sm:$0xff] %v621
      %732 = vst [vmem:[%s248 + $0x68] sm:$0xff] %v626
      %733 = vst [vmem:[%s248 + $0x70] sm:$0xff] %v631
      %734 = vst [vmem:[%s248 + $0x78] sm:$0xff] %v636
      %735 = vst [vmem:[%s248 + $0x80] sm:$0xff] %v641
      %736 = vst [vmem:[%s248 + $0x88] sm:$0xff] %v646
      %737 = vst [vmem:[%s248 + $0x90] sm:$0xff] %v651
      %738 = vst [vmem:[%s248 + $0x98] sm:$0xff] %v656
      %739 = vst [vmem:[%s248 + $0xa0] sm:$0xff] %v661
      %740 = vst [vmem:[%s248 + $0xa8] sm:$0xff] %v666
      %741 = vst [vmem:[%s248 + $0xb0] sm:$0xff] %v671
      %742 = vst [vmem:[%s248 + $0xb8] sm:$0xff] %v676
      %743 = vst [vmem:[%s248 + $0xc0] sm:$0xff] %v681
      %744 = vst [vmem:[%s248 + $0xc8] sm:$0xff] %v686
      %745 = vst [vmem:[%s248 + $0xd0] sm:$0xff] %v691
      %746 = vst [vmem:[%s248 + $0xd8] sm:$0xff] %v696
      %747 = vst [vmem:[%s248 + $0xe0] sm:$0xff] %v701
      %748 = vst [vmem:[%s248 + $0xe8] sm:$0xff] %v706
      %749 = vst [vmem:[%s248 + $0xf0] sm:$0xff] %v711
      %750 = vst [vmem:[%s248 + $0xf8] sm:$0xff] %v716
      %p751 = scmp.eq.s32.totalorder %s18, 0
      // Predicated region
      $region37: #{dense_layer_forward.2} parent=35 // pred_check
        %p752 = pneg %p751
      $region38: #{dense_layer_forward.2} parent=35 // pred_check_branch
        %754 = sbr.rel (%p752) target = $region40
      $region39: #{dense_layer_forward.2} parent=35 // pred_region
        %755 = vst [vmem:[%s5] sm:$0x1] 0.0
        %756 = vst [vmem:[%s6] sm:$0x1] 0.0
      $region40: #{dense_layer_forward.2} parent=35 // pred_fallthru
        _
      %v757 = vld [vmem:[%s5] sm:$0x1]
      %v758 = vadd.f32 %v561, %v566
      %v759 = vadd.f32 %v758, %v571
      %v760 = vadd.f32 %v759, %v576
      %v761 = vadd.f32 %v760, %v581
      %v762 = vadd.f32 %v761, %v586
      %v763 = vadd.f32 %v762, %v591
      %v764 = vadd.f32 %v763, %v596
      %v765 = vadd.f32 %v764, %v601
      %v766 = vadd.f32 %v765, %v606
      %v767 = vadd.f32 %v766, %v611
      %v768 = vadd.f32 %v767, %v616
      %v769 = vadd.f32 %v768, %v621
      %v770 = vadd.f32 %v769, %v626
      %v771 = vadd.f32 %v770, %v631
      %v772 = vadd.f32 %v771, %v636
      %v773 = vadd.f32 %v772, %v641
      %v774 = vadd.f32 %v773, %v646
      %v775 = vadd.f32 %v774, %v651
      %v776 = vadd.f32 %v775, %v656
      %v777 = vadd.f32 %v776, %v661
      %v778 = vadd.f32 %v777, %v666
      %v779 = vadd.f32 %v778, %v671
      %v780 = vadd.f32 %v779, %v676
      %v781 = vadd.f32 %v780, %v681
      %v782 = vadd.f32 %v781, %v686
      %v783 = vadd.f32 %v782, %v691
      %v784 = vadd.f32 %v783, %v696
      %v785 = vadd.f32 %v784, %v701
      %v786 = vadd.f32 %v785, %v706
      %v787 = vadd.f32 %v786, %v711
      %v788 = vadd.f32 %v787, %v716
      %v789 = vrot.slane %v788, 4
      %v790 = vadd.f32 %v788, %v789
      %v791 = vrot.slane %v790, 2
      %v792 = vadd.f32 %v790, %v791
      %v793 = vrot.slane %v792, 1
      %v794 = vadd.f32 %v792, %v793
      %v795 = vadd.f32 %v757, %v794
      %796 = vst [vmem:[%s5] sm:$0x1] %v795
      %v797 = vld [vmem:[%s6] sm:$0x1]
      %v798 = vmul.f32 %v561, %v561
      %v799 = vmul.f32 %v566, %v566
      %v800 = vmul.f32 %v571, %v571
      %v801 = vmul.f32 %v576, %v576
      %v802 = vmul.f32 %v581, %v581
      %v803 = vmul.f32 %v586, %v586
      %v804 = vmul.f32 %v591, %v591
      %v805 = vmul.f32 %v596, %v596
      %v806 = vmul.f32 %v601, %v601
      %v807 = vmul.f32 %v606, %v606
      %v808 = vmul.f32 %v611, %v611
      %v809 = vmul.f32 %v616, %v616
      %v810 = vmul.f32 %v621, %v621
      %v811 = vmul.f32 %v626, %v626
      %v812 = vmul.f32 %v631, %v631
      %v813 = vmul.f32 %v636, %v636
      %v814 = vmul.f32 %v641, %v641
      %v815 = vmul.f32 %v646, %v646
      %v816 = vmul.f32 %v651, %v651
      %v817 = vmul.f32 %v656, %v656
      %v818 = vmul.f32 %v661, %v661
      %v819 = vmul.f32 %v666, %v666
      %v820 = vmul.f32 %v671, %v671
      %v821 = vmul.f32 %v676, %v676
      %v822 = vmul.f32 %v681, %v681
      %v823 = vmul.f32 %v686, %v686
      %v824 = vmul.f32 %v691, %v691
      %v825 = vmul.f32 %v696, %v696
      %v826 = vmul.f32 %v701, %v701
      %v827 = vmul.f32 %v706, %v706
      %v828 = vmul.f32 %v711, %v711
      %v829 = vmul.f32 %v716, %v716
      %v830 = vadd.f32 %v798, %v799
      %v831 = vadd.f32 %v830, %v800
      %v832 = vadd.f32 %v831, %v801
      %v833 = vadd.f32 %v832, %v802
      %v834 = vadd.f32 %v833, %v803
      %v835 = vadd.f32 %v834, %v804
      %v836 = vadd.f32 %v835, %v805
      %v837 = vadd.f32 %v836, %v806
      %v838 = vadd.f32 %v837, %v807
      %v839 = vadd.f32 %v838, %v808
      %v840 = vadd.f32 %v839, %v809
      %v841 = vadd.f32 %v840, %v810
      %v842 = vadd.f32 %v841, %v811
      %v843 = vadd.f32 %v842, %v812
      %v844 = vadd.f32 %v843, %v813
      %v845 = vadd.f32 %v844, %v814
      %v846 = vadd.f32 %v845, %v815
      %v847 = vadd.f32 %v846, %v816
      %v848 = vadd.f32 %v847, %v817
      %v849 = vadd.f32 %v848, %v818
      %v850 = vadd.f32 %v849, %v819
      %v851 = vadd.f32 %v850, %v820
      %v852 = vadd.f32 %v851, %v821
      %v853 = vadd.f32 %v852, %v822
      %v854 = vadd.f32 %v853, %v823
      %v855 = vadd.f32 %v854, %v824
      %v856 = vadd.f32 %v855, %v825
      %v857 = vadd.f32 %v856, %v826
      %v858 = vadd.f32 %v857, %v827
      %v859 = vadd.f32 %v858, %v828
      %v860 = vadd.f32 %v859, %v829
      %v861 = vrot.slane %v860, 4
      %v862 = vadd.f32 %v860, %v861
      %v863 = vrot.slane %v862, 2
      %v864 = vadd.f32 %v862, %v863
      %v865 = vrot.slane %v864, 1
      %v866 = vadd.f32 %v864, %v865
      %v867 = vadd.f32 %v797, %v866
      %868 = vst [vmem:[%s6] sm:$0x1] %v867
      %s869 = smul.u32 32, %s18
      %p870 = scmp.lt.s32.totalorder %s869, 63
      %s871 = scalar_select %p870, %s869, 63
      %s872 = smul.addr %s871, 8
      %s873 = scalar_lea.vmem %s4, %s872
      // Predicated region
      $region41: #{dense_layer_forward.2} parent=35 // pred_check
        %p874 = pneg %p125
      $region42: #{dense_layer_forward.2} parent=35 // pred_check_branch
        %876 = sbr.rel (%p874) target = $region44
      $region43: #{dense_layer_forward.2} parent=35 // pred_region
        %s877 = smul.u32 32, %s18
      $region44: #{dense_layer_forward.2} parent=35 // pred_fallthru
        _
      // Predicated region
      $region45: #{dense_layer_forward.2} parent=35 // pred_check
        %p878 = pneg %p146
      $region46: #{dense_layer_forward.2} parent=35 // pred_check_branch
        %880 = sbr.rel (%p878) target = $region48
      $region47: #{dense_layer_forward.2} parent=35 // pred_region
        _
      $region48: #{dense_layer_forward.2} parent=35 // pred_fallthru
        _
      // Predicated region
      $region49: #{dense_layer_forward.2} parent=35 // pred_check
        %p881 = pneg %p167
      $region50: #{dense_layer_forward.2} parent=35 // pred_check_branch
        %883 = sbr.rel (%p881) target = $region52
      $region51: #{dense_layer_forward.2} parent=35 // pred_region
        _
      $region52: #{dense_layer_forward.2} parent=35 // pred_fallthru
        _
      // Predicated region
      $region53: #{dense_layer_forward.2} parent=35 // pred_check
        %p884 = pneg %p146
      $region54: #{dense_layer_forward.2} parent=35 // pred_check_branch
        %886 = sbr.rel (%p884) target = $region56
      $region55: #{dense_layer_forward.2} parent=35 // pred_region
        _
      $region56: #{dense_layer_forward.2} parent=35 // pred_fallthru
        _
      // Predicated region
      $region57: #{dense_layer_forward.2} parent=35 // pred_check
        %p887 = pneg %p167
      $region58: #{dense_layer_forward.2} parent=35 // pred_check_branch
        %889 = sbr.rel (%p887) target = $region60
      $region59: #{dense_layer_forward.2} parent=35 // pred_region
        _
      $region60: #{dense_layer_forward.2} parent=35 // pred_fallthru
        _
    $region36: #{dense_layer_forward.2} parent=5 // pred_fallthru
      _
    %p890 = scmp.le.s32.totalorder 2, %s13
    // Predicated region
    $region61: #{dense_layer_forward.2} parent=5 // pred_check
      %p891 = pneg %p890
    $region62: #{dense_layer_forward.2} parent=5 // pred_check_branch
      %893 = sbr.rel (%p891) target = $region64
    $region63: #{dense_layer_forward.2} parent=5 // pred_region
      %s894 = ssub.s32 %s13, 2
      // Predicated region
      $region65: #{dense_layer_forward.2} parent=63 // pred_check
        %p895 = pneg %p131
      $region66: #{dense_layer_forward.2} parent=63 // pred_check_branch
        %897 = sbr.rel (%p895) target = $region68
      $region67: #{dense_layer_forward.2} parent=63 // pred_region
        %s898 = smul.u32 32, %s19
        %p899 = scmp.lt.s32.totalorder %s898, 63
        %s900 = scalar_select %p899, %s898, 63
        %s901 = smul.addr %s900, 8
        %s902 = scalar_lea.vmem %s4, %s901
      $region68: #{dense_layer_forward.2} parent=63 // pred_fallthru
        _
    $region64: #{dense_layer_forward.2} parent=5 // pred_fallthru
      _
  $region6: #{dense_layer_forward.2} parent=0 // loop_footer
    %s17 = sadd.s32 1, %s13
  $region7: #{dense_layer_forward.2} parent=0 // loop_footer_branch
    %12 = sbr.rel target = $region3
  $region8: #{dense_layer_forward.2} parent=0 // loop_exit
    _

// kernel: dense_layer_forward.3
$region0: #{dense_layer_forward.3}
  #allocation0 [shape = 'u32[]', space=smem, size = 0x4, offset = 0x4, fixed_abs, tag = 'smem constant byte address 0x4 - core index']
  #allocation1 [shape = 'u32[144,128]{1,0:T(1,128)}', space=vmem, size = 0x12000, scoped, tag = 'internal scratch']
  #allocation2 [shape = 'f32[512,1152]{1,0:T(8,128)}', space=vmem, size = 0x240000, scoped, tag = 'scratch operand']
  %s0 = inlined_call_operand.vmem [shape: f32[512,128], index: 0, kind: input, shape index: {}]
  %s1 = inlined_call_operand.vmem [shape: f32[1,128], index: 1, kind: input, shape index: {}]
  %s2 = inlined_call_operand.vmem [shape: f32[1,128], index: 2, kind: input, shape index: {}]
  %s3 = inlined_call_operand.vmem [shape: f32[1152,128], index: 3, kind: input, shape index: {}]
  %s4 = inlined_call_operand.vmem [shape: s32[512,1], index: 4, kind: input, shape index: {}]
  %s5 = inlined_call_operand.vmem [shape: s32[512,1], index: 5, kind: input, shape index: {}]
  %s6 = inlined_call_operand.vmem [shape: f32[512,128], index: 6, kind: output, shape index: {}]
  %s7 = sld [smem:[#allocation0]]
  $region34: #{dense_layer_forward.3} parent=0
    _
  %s9 = ssub.s32 1, %s7
  %s10 = scalar_select 0, %s9, %s7
  // Predicated region
  $region2: #{dense_layer_forward.3} parent=0 // pred_check
    _
  $region3: #{dense_layer_forward.3} parent=0 // pred_check_branch
    %12 = sbr.rel (0) target = $region5
  $region4: #{dense_layer_forward.3} parent=0 // pred_region
    _
  $region5: #{dense_layer_forward.3} parent=0 // pred_fallthru
    _
  // Predicated region
  $region6: #{dense_layer_forward.3} parent=0 // pred_check
    _
  $region7: #{dense_layer_forward.3} parent=0 // pred_check_branch
    %14 = sbr.rel (0) target = $region9
  $region8: #{dense_layer_forward.3} parent=0 // pred_region
    _
  $region9: #{dense_layer_forward.3} parent=0 // pred_fallthru
    _
  // Predicated region
  $region10: #{dense_layer_forward.3} parent=0 // pred_check
    _
  $region11: #{dense_layer_forward.3} parent=0 // pred_check_branch
    %16 = sbr.rel (0) target = $region13
  $region12: #{dense_layer_forward.3} parent=0 // pred_region
    _
  $region13: #{dense_layer_forward.3} parent=0 // pred_fallthru
    _
  // Predicated region
  $region14: #{dense_layer_forward.3} parent=0 // pred_check
    _
  $region15: #{dense_layer_forward.3} parent=0 // pred_check_branch
    %18 = sbr.rel (0) target = $region17
  $region16: #{dense_layer_forward.3} parent=0 // pred_region
    _
  $region17: #{dense_layer_forward.3} parent=0 // pred_fallthru
    _
  // Predicated region
  $region18: #{dense_layer_forward.3} parent=0 // pred_check
    _
  $region19: #{dense_layer_forward.3} parent=0 // pred_check_branch
    %20 = sbr.rel (0) target = $region21
  $region20: #{dense_layer_forward.3} parent=0 // pred_region
    _
  $region21: #{dense_layer_forward.3} parent=0 // pred_fallthru
    _
  // Predicated region
  $region22: #{dense_layer_forward.3} parent=0 // pred_check
    _
  $region23: #{dense_layer_forward.3} parent=0 // pred_check_branch
    %22 = sbr.rel (0) target = $region25
  $region24: #{dense_layer_forward.3} parent=0 // pred_region
    _
  $region25: #{dense_layer_forward.3} parent=0 // pred_fallthru
    _
  %v23 = vld [vmem:[%s0] sm:$0xff]
  %v24 = vld [vmem:[%s0 + $0x8] sm:$0xff]
  %v25 = vld [vmem:[%s0 + $0x10] sm:$0xff]
  %v26 = vld [vmem:[%s0 + $0x18] sm:$0xff]
  %v27 = vld [vmem:[%s0 + $0x20] sm:$0xff]
  %v28 = vld [vmem:[%s0 + $0x28] sm:$0xff]
  %v29 = vld [vmem:[%s0 + $0x30] sm:$0xff]
  %v30 = vld [vmem:[%s0 + $0x38] sm:$0xff]
  %v31 = vld [vmem:[%s0 + $0x40] sm:$0xff]
  %v32 = vld [vmem:[%s0 + $0x48] sm:$0xff]
  %v33 = vld [vmem:[%s0 + $0x50] sm:$0xff]
  %v34 = vld [vmem:[%s0 + $0x58] sm:$0xff]
  %v35 = vld [vmem:[%s0 + $0x60] sm:$0xff]
  %v36 = vld [vmem:[%s0 + $0x68] sm:$0xff]
  %v37 = vld [vmem:[%s0 + $0x70] sm:$0xff]
  %v38 = vld [vmem:[%s0 + $0x78] sm:$0xff]
  %v39 = vld [vmem:[%s0 + $0x80] sm:$0xff]
  %v40 = vld [vmem:[%s0 + $0x88] sm:$0xff]
  %v41 = vld [vmem:[%s0 + $0x90] sm:$0xff]
  %v42 = vld [vmem:[%s0 + $0x98] sm:$0xff]
  %v43 = vld [vmem:[%s0 + $0xa0] sm:$0xff]
  %v44 = vld [vmem:[%s0 + $0xa8] sm:$0xff]
  %v45 = vld [vmem:[%s0 + $0xb0] sm:$0xff]
  %v46 = vld [vmem:[%s0 + $0xb8] sm:$0xff]
  %v47 = vld [vmem:[%s0 + $0xc0] sm:$0xff]
  %v48 = vld [vmem:[%s0 + $0xc8] sm:$0xff]
  %v49 = vld [vmem:[%s0 + $0xd0] sm:$0xff]
  %v50 = vld [vmem:[%s0 + $0xd8] sm:$0xff]
  %v51 = vld [vmem:[%s0 + $0xe0] sm:$0xff]
  %v52 = vld [vmem:[%s0 + $0xe8] sm:$0xff]
  %v53 = vld [vmem:[%s0 + $0xf0] sm:$0xff]
  %v54 = vld [vmem:[%s0 + $0xf8] sm:$0xff]
  %v55 = vld [vmem:[%s0 + $0x100] sm:$0xff]
  %v56 = vld [vmem:[%s0 + $0x108] sm:$0xff]
  %v57 = vld [vmem:[%s0 + $0x110] sm:$0xff]
  %v58 = vld [vmem:[%s0 + $0x118] sm:$0xff]
  %v59 = vld [vmem:[%s0 + $0x120] sm:$0xff]
  %v60 = vld [vmem:[%s0 + $0x128] sm:$0xff]
  %v61 = vld [vmem:[%s0 + $0x130] sm:$0xff]
  %v62 = vld [vmem:[%s0 + $0x138] sm:$0xff]
  %v63 = vld [vmem:[%s0 + $0x140] sm:$0xff]
  %v64 = vld [vmem:[%s0 + $0x148] sm:$0xff]
  %v65 = vld [vmem:[%s0 + $0x150] sm:$0xff]
  %v66 = vld [vmem:[%s0 + $0x158] sm:$0xff]
  %v67 = vld [vmem:[%s0 + $0x160] sm:$0xff]
  %v68 = vld [vmem:[%s0 + $0x168] sm:$0xff]
  %v69 = vld [vmem:[%s0 + $0x170] sm:$0xff]
  %v70 = vld [vmem:[%s0 + $0x178] sm:$0xff]
  %v71 = vld [vmem:[%s0 + $0x180] sm:$0xff]
  %v72 = vld [vmem:[%s0 + $0x188] sm:$0xff]
  %v73 = vld [vmem:[%s0 + $0x190] sm:$0xff]
  %v74 = vld [vmem:[%s0 + $0x198] sm:$0xff]
  %v75 = vld [vmem:[%s0 + $0x1a0] sm:$0xff]
  %v76 = vld [vmem:[%s0 + $0x1a8] sm:$0xff]
  %v77 = vld [vmem:[%s0 + $0x1b0] sm:$0xff]
  %v78 = vld [vmem:[%s0 + $0x1b8] sm:$0xff]
  %v79 = vld [vmem:[%s0 + $0x1c0] sm:$0xff]
  %v80 = vld [vmem:[%s0 + $0x1c8] sm:$0xff]
  %v81 = vld [vmem:[%s0 + $0x1d0] sm:$0xff]
  %v82 = vld [vmem:[%s0 + $0x1d8] sm:$0xff]
  %v83 = vld [vmem:[%s0 + $0x1e0] sm:$0xff]
  %v84 = vld [vmem:[%s0 + $0x1e8] sm:$0xff]
  %v85 = vld [vmem:[%s0 + $0x1f0] sm:$0xff]
  %v86 = vld [vmem:[%s0 + $0x1f8] sm:$0xff]
  %v87 = vld [vmem:[%s1] sm:$0x1]
  %v89 = vlaneseq
  %v90 = vshrl.u32 %v89, 7
  %v91 = vsub.s32 0, %v90
  %v92 = vrot.slane %v87, %v91
  %v94 = vmul.f32 %v23, %v92
  %v95 = vmul.f32 %v24, %v92
  %v96 = vmul.f32 %v25, %v92
  %v97 = vmul.f32 %v26, %v92
  %v98 = vmul.f32 %v27, %v92
  %v99 = vmul.f32 %v28, %v92
  %v100 = vmul.f32 %v29, %v92
  %v101 = vmul.f32 %v30, %v92
  %v102 = vmul.f32 %v31, %v92
  %v103 = vmul.f32 %v32, %v92
  %v104 = vmul.f32 %v33, %v92
  %v105 = vmul.f32 %v34, %v92
  %v106 = vmul.f32 %v35, %v92
  %v107 = vmul.f32 %v36, %v92
  %v108 = vmul.f32 %v37, %v92
  %v109 = vmul.f32 %v38, %v92
  %v110 = vmul.f32 %v39, %v92
  %v111 = vmul.f32 %v40, %v92
  %v112 = vmul.f32 %v41, %v92
  %v113 = vmul.f32 %v42, %v92
  %v114 = vmul.f32 %v43, %v92
  %v115 = vmul.f32 %v44, %v92
  %v116 = vmul.f32 %v45, %v92
  %v117 = vmul.f32 %v46, %v92
  %v118 = vmul.f32 %v47, %v92
  %v119 = vmul.f32 %v48, %v92
  %v120 = vmul.f32 %v49, %v92
  %v121 = vmul.f32 %v50, %v92
  %v122 = vmul.f32 %v51, %v92
  %v123 = vmul.f32 %v52, %v92
  %v124 = vmul.f32 %v53, %v92
  %v125 = vmul.f32 %v54, %v92
  %v126 = vmul.f32 %v55, %v92
  %v127 = vmul.f32 %v56, %v92
  %v128 = vmul.f32 %v57, %v92
  %v129 = vmul.f32 %v58, %v92
  %v130 = vmul.f32 %v59, %v92
  %v131 = vmul.f32 %v60, %v92
  %v132 = vmul.f32 %v61, %v92
  %v133 = vmul.f32 %v62, %v92
  %v134 = vmul.f32 %v63, %v92
  %v135 = vmul.f32 %v64, %v92
  %v136 = vmul.f32 %v65, %v92
  %v137 = vmul.f32 %v66, %v92
  %v138 = vmul.f32 %v67, %v92
  %v139 = vmul.f32 %v68, %v92
  %v140 = vmul.f32 %v69, %v92
  %v141 = vmul.f32 %v70, %v92
  %v142 = vmul.f32 %v71, %v92
  %v143 = vmul.f32 %v72, %v92
  %v144 = vmul.f32 %v73, %v92
  %v145 = vmul.f32 %v74, %v92
  %v146 = vmul.f32 %v75, %v92
  %v147 = vmul.f32 %v76, %v92
  %v148 = vmul.f32 %v77, %v92
  %v149 = vmul.f32 %v78, %v92
  %v150 = vmul.f32 %v79, %v92
  %v151 = vmul.f32 %v80, %v92
  %v152 = vmul.f32 %v81, %v92
  %v153 = vmul.f32 %v82, %v92
  %v154 = vmul.f32 %v83, %v92
  %v155 = vmul.f32 %v84, %v92
  %v156 = vmul.f32 %v85, %v92
  %v157 = vmul.f32 %v86, %v92
  %v158 = vld [vmem:[%s2] sm:$0x1]
  %v160 = vlaneseq
  %v161 = vshrl.u32 %v160, 7
  %v162 = vsub.s32 0, %v161
  %v163 = vrot.slane %v158, %v162
  %v165 = vadd.f32 %v94, %v163
  %v166 = vadd.f32 %v95, %v163
  %v167 = vadd.f32 %v96, %v163
  %v168 = vadd.f32 %v97, %v163
  %v169 = vadd.f32 %v98, %v163
  %v170 = vadd.f32 %v99, %v163
  %v171 = vadd.f32 %v100, %v163
  %v172 = vadd.f32 %v101, %v163
  %v173 = vadd.f32 %v102, %v163
  %v174 = vadd.f32 %v103, %v163
  %v175 = vadd.f32 %v104, %v163
  %v176 = vadd.f32 %v105, %v163
  %v177 = vadd.f32 %v106, %v163
  %v178 = vadd.f32 %v107, %v163
  %v179 = vadd.f32 %v108, %v163
  %v180 = vadd.f32 %v109, %v163
  %v181 = vadd.f32 %v110, %v163
  %v182 = vadd.f32 %v111, %v163
  %v183 = vadd.f32 %v112, %v163
  %v184 = vadd.f32 %v113, %v163
  %v185 = vadd.f32 %v114, %v163
  %v186 = vadd.f32 %v115, %v163
  %v187 = vadd.f32 %v116, %v163
  %v188 = vadd.f32 %v117, %v163
  %v189 = vadd.f32 %v118, %v163
  %v190 = vadd.f32 %v119, %v163
  %v191 = vadd.f32 %v120, %v163
  %v192 = vadd.f32 %v121, %v163
  %v193 = vadd.f32 %v122, %v163
  %v194 = vadd.f32 %v123, %v163
  %v195 = vadd.f32 %v124, %v163
  %v196 = vadd.f32 %v125, %v163
  %v197 = vadd.f32 %v126, %v163
  %v198 = vadd.f32 %v127, %v163
  %v199 = vadd.f32 %v128, %v163
  %v200 = vadd.f32 %v129, %v163
  %v201 = vadd.f32 %v130, %v163
  %v202 = vadd.f32 %v131, %v163
  %v203 = vadd.f32 %v132, %v163
  %v204 = vadd.f32 %v133, %v163
  %v205 = vadd.f32 %v134, %v163
  %v206 = vadd.f32 %v135, %v163
  %v207 = vadd.f32 %v136, %v163
  %v208 = vadd.f32 %v137, %v163
  %v209 = vadd.f32 %v138, %v163
  %v210 = vadd.f32 %v139, %v163
  %v211 = vadd.f32 %v140, %v163
  %v212 = vadd.f32 %v141, %v163
  %v213 = vadd.f32 %v142, %v163
  %v214 = vadd.f32 %v143, %v163
  %v215 = vadd.f32 %v144, %v163
  %v216 = vadd.f32 %v145, %v163
  %v217 = vadd.f32 %v146, %v163
  %v218 = vadd.f32 %v147, %v163
  %v219 = vadd.f32 %v148, %v163
  %v220 = vadd.f32 %v149, %v163
  %v221 = vadd.f32 %v150, %v163
  %v222 = vadd.f32 %v151, %v163
  %v223 = vadd.f32 %v152, %v163
  %v224 = vadd.f32 %v153, %v163
  %v225 = vadd.f32 %v154, %v163
  %v226 = vadd.f32 %v155, %v163
  %v227 = vadd.f32 %v156, %v163
  %v228 = vadd.f32 %v157, %v163
  %v229 = vmax.f32 %v165, 0.0
  %v230 = vmax.f32 %v166, 0.0
  %v231 = vmax.f32 %v167, 0.0
  %v232 = vmax.f32 %v168, 0.0
  %v233 = vmax.f32 %v169, 0.0
  %v234 = vmax.f32 %v170, 0.0
  %v235 = vmax.f32 %v171, 0.0
  %v236 = vmax.f32 %v172, 0.0
  %v237 = vmax.f32 %v173, 0.0
  %v238 = vmax.f32 %v174, 0.0
  %v239 = vmax.f32 %v175, 0.0
  %v240 = vmax.f32 %v176, 0.0
  %v241 = vmax.f32 %v177, 0.0
  %v242 = vmax.f32 %v178, 0.0
  %v243 = vmax.f32 %v179, 0.0
  %v244 = vmax.f32 %v180, 0.0
  %v245 = vmax.f32 %v181, 0.0
  %v246 = vmax.f32 %v182, 0.0
  %v247 = vmax.f32 %v183, 0.0
  %v248 = vmax.f32 %v184, 0.0
  %v249 = vmax.f32 %v185, 0.0
  %v250 = vmax.f32 %v186, 0.0
  %v251 = vmax.f32 %v187, 0.0
  %v252 = vmax.f32 %v188, 0.0
  %v253 = vmax.f32 %v189, 0.0
  %v254 = vmax.f32 %v190, 0.0
  %v255 = vmax.f32 %v191, 0.0
  %v256 = vmax.f32 %v192, 0.0
  %v257 = vmax.f32 %v193, 0.0
  %v258 = vmax.f32 %v194, 0.0
  %v259 = vmax.f32 %v195, 0.0
  %v260 = vmax.f32 %v196, 0.0
  %v261 = vmax.f32 %v197, 0.0
  %v262 = vmax.f32 %v198, 0.0
  %v263 = vmax.f32 %v199, 0.0
  %v264 = vmax.f32 %v200, 0.0
  %v265 = vmax.f32 %v201, 0.0
  %v266 = vmax.f32 %v202, 0.0
  %v267 = vmax.f32 %v203, 0.0
  %v268 = vmax.f32 %v204, 0.0
  %v269 = vmax.f32 %v205, 0.0
  %v270 = vmax.f32 %v206, 0.0
  %v271 = vmax.f32 %v207, 0.0
  %v272 = vmax.f32 %v208, 0.0
  %v273 = vmax.f32 %v209, 0.0
  %v274 = vmax.f32 %v210, 0.0
  %v275 = vmax.f32 %v211, 0.0
  %v276 = vmax.f32 %v212, 0.0
  %v277 = vmax.f32 %v213, 0.0
  %v278 = vmax.f32 %v214, 0.0
  %v279 = vmax.f32 %v215, 0.0
  %v280 = vmax.f32 %v216, 0.0
  %v281 = vmax.f32 %v217, 0.0
  %v282 = vmax.f32 %v218, 0.0
  %v283 = vmax.f32 %v219, 0.0
  %v284 = vmax.f32 %v220, 0.0
  %v285 = vmax.f32 %v221, 0.0
  %v286 = vmax.f32 %v222, 0.0
  %v287 = vmax.f32 %v223, 0.0
  %v288 = vmax.f32 %v224, 0.0
  %v289 = vmax.f32 %v225, 0.0
  %v290 = vmax.f32 %v226, 0.0
  %v291 = vmax.f32 %v227, 0.0
  %v292 = vmax.f32 %v228, 0.0
  %v293 = vld [vmem:[%s4] sm:$0xff]
  %v294 = vld [vmem:[%s4 + $0x8] sm:$0xff]
  %v295 = vld [vmem:[%s4 + $0x10] sm:$0xff]
  %v296 = vld [vmem:[%s4 + $0x18] sm:$0xff]
  %v297 = vld [vmem:[%s4 + $0x20] sm:$0xff]
  %v298 = vld [vmem:[%s4 + $0x28] sm:$0xff]
  %v299 = vld [vmem:[%s4 + $0x30] sm:$0xff]
  %v300 = vld [vmem:[%s4 + $0x38] sm:$0xff]
  %v301 = vld [vmem:[%s4 + $0x40] sm:$0xff]
  %v302 = vld [vmem:[%s4 + $0x48] sm:$0xff]
  %v303 = vld [vmem:[%s4 + $0x50] sm:$0xff]
  %v304 = vld [vmem:[%s4 + $0x58] sm:$0xff]
  %v305 = vld [vmem:[%s4 + $0x60] sm:$0xff]
  %v306 = vld [vmem:[%s4 + $0x68] sm:$0xff]
  %v307 = vld [vmem:[%s4 + $0x70] sm:$0xff]
  %v308 = vld [vmem:[%s4 + $0x78] sm:$0xff]
  %v309 = vld [vmem:[%s4 + $0x80] sm:$0xff]
  %v310 = vld [vmem:[%s4 + $0x88] sm:$0xff]
  %v311 = vld [vmem:[%s4 + $0x90] sm:$0xff]
  %v312 = vld [vmem:[%s4 + $0x98] sm:$0xff]
  %v313 = vld [vmem:[%s4 + $0xa0] sm:$0xff]
  %v314 = vld [vmem:[%s4 + $0xa8] sm:$0xff]
  %v315 = vld [vmem:[%s4 + $0xb0] sm:$0xff]
  %v316 = vld [vmem:[%s4 + $0xb8] sm:$0xff]
  %v317 = vld [vmem:[%s4 + $0xc0] sm:$0xff]
  %v318 = vld [vmem:[%s4 + $0xc8] sm:$0xff]
  %v319 = vld [vmem:[%s4 + $0xd0] sm:$0xff]
  %v320 = vld [vmem:[%s4 + $0xd8] sm:$0xff]
  %v321 = vld [vmem:[%s4 + $0xe0] sm:$0xff]
  %v322 = vld [vmem:[%s4 + $0xe8] sm:$0xff]
  %v323 = vld [vmem:[%s4 + $0xf0] sm:$0xff]
  %v324 = vld [vmem:[%s4 + $0xf8] sm:$0xff]
  %v325 = vld [vmem:[%s4 + $0x100] sm:$0xff]
  %v326 = vld [vmem:[%s4 + $0x108] sm:$0xff]
  %v327 = vld [vmem:[%s4 + $0x110] sm:$0xff]
  %v328 = vld [vmem:[%s4 + $0x118] sm:$0xff]
  %v329 = vld [vmem:[%s4 + $0x120] sm:$0xff]
  %v330 = vld [vmem:[%s4 + $0x128] sm:$0xff]
  %v331 = vld [vmem:[%s4 + $0x130] sm:$0xff]
  %v332 = vld [vmem:[%s4 + $0x138] sm:$0xff]
  %v333 = vld [vmem:[%s4 + $0x140] sm:$0xff]
  %v334 = vld [vmem:[%s4 + $0x148] sm:$0xff]
  %v335 = vld [vmem:[%s4 + $0x150] sm:$0xff]
  %v336 = vld [vmem:[%s4 + $0x158] sm:$0xff]
  %v337 = vld [vmem:[%s4 + $0x160] sm:$0xff]
  %v338 = vld [vmem:[%s4 + $0x168] sm:$0xff]
  %v339 = vld [vmem:[%s4 + $0x170] sm:$0xff]
  %v340 = vld [vmem:[%s4 + $0x178] sm:$0xff]
  %v341 = vld [vmem:[%s4 + $0x180] sm:$0xff]
  %v342 = vld [vmem:[%s4 + $0x188] sm:$0xff]
  %v343 = vld [vmem:[%s4 + $0x190] sm:$0xff]
  %v344 = vld [vmem:[%s4 + $0x198] sm:$0xff]
  %v345 = vld [vmem:[%s4 + $0x1a0] sm:$0xff]
  %v346 = vld [vmem:[%s4 + $0x1a8] sm:$0xff]
  %v347 = vld [vmem:[%s4 + $0x1b0] sm:$0xff]
  %v348 = vld [vmem:[%s4 + $0x1b8] sm:$0xff]
  %v349 = vld [vmem:[%s4 + $0x1c0] sm:$0xff]
  %v350 = vld [vmem:[%s4 + $0x1c8] sm:$0xff]
  %v351 = vld [vmem:[%s4 + $0x1d0] sm:$0xff]
  %v352 = vld [vmem:[%s4 + $0x1d8] sm:$0xff]
  %v353 = vld [vmem:[%s4 + $0x1e0] sm:$0xff]
  %v354 = vld [vmem:[%s4 + $0x1e8] sm:$0xff]
  %v355 = vld [vmem:[%s4 + $0x1f0] sm:$0xff]
  %v356 = vld [vmem:[%s4 + $0x1f8] sm:$0xff]
  %v357 = vld [vmem:[%s5] sm:$0xff]
  %v358 = vld [vmem:[%s5 + $0x8] sm:$0xff]
  %v359 = vld [vmem:[%s5 + $0x10] sm:$0xff]
  %v360 = vld [vmem:[%s5 + $0x18] sm:$0xff]
  %v361 = vld [vmem:[%s5 + $0x20] sm:$0xff]
  %v362 = vld [vmem:[%s5 + $0x28] sm:$0xff]
  %v363 = vld [vmem:[%s5 + $0x30] sm:$0xff]
  %v364 = vld [vmem:[%s5 + $0x38] sm:$0xff]
  %v365 = vld [vmem:[%s5 + $0x40] sm:$0xff]
  %v366 = vld [vmem:[%s5 + $0x48] sm:$0xff]
  %v367 = vld [vmem:[%s5 + $0x50] sm:$0xff]
  %v368 = vld [vmem:[%s5 + $0x58] sm:$0xff]
  %v369 = vld [vmem:[%s5 + $0x60] sm:$0xff]
  %v370 = vld [vmem:[%s5 + $0x68] sm:$0xff]
  %v371 = vld [vmem:[%s5 + $0x70] sm:$0xff]
  %v372 = vld [vmem:[%s5 + $0x78] sm:$0xff]
  %v373 = vld [vmem:[%s5 + $0x80] sm:$0xff]
  %v374 = vld [vmem:[%s5 + $0x88] sm:$0xff]
  %v375 = vld [vmem:[%s5 + $0x90] sm:$0xff]
  %v376 = vld [vmem:[%s5 + $0x98] sm:$0xff]
  %v377 = vld [vmem:[%s5 + $0xa0] sm:$0xff]
  %v378 = vld [vmem:[%s5 + $0xa8] sm:$0xff]
  %v379 = vld [vmem:[%s5 + $0xb0] sm:$0xff]
  %v380 = vld [vmem:[%s5 + $0xb8] sm:$0xff]
  %v381 = vld [vmem:[%s5 + $0xc0] sm:$0xff]
  %v382 = vld [vmem:[%s5 + $0xc8] sm:$0xff]
  %v383 = vld [vmem:[%s5 + $0xd0] sm:$0xff]
  %v384 = vld [vmem:[%s5 + $0xd8] sm:$0xff]
  %v385 = vld [vmem:[%s5 + $0xe0] sm:$0xff]
  %v386 = vld [vmem:[%s5 + $0xe8] sm:$0xff]
  %v387 = vld [vmem:[%s5 + $0xf0] sm:$0xff]
  %v388 = vld [vmem:[%s5 + $0xf8] sm:$0xff]
  %v389 = vld [vmem:[%s5 + $0x100] sm:$0xff]
  %v390 = vld [vmem:[%s5 + $0x108] sm:$0xff]
  %v391 = vld [vmem:[%s5 + $0x110] sm:$0xff]
  %v392 = vld [vmem:[%s5 + $0x118] sm:$0xff]
  %v393 = vld [vmem:[%s5 + $0x120] sm:$0xff]
  %v394 = vld [vmem:[%s5 + $0x128] sm:$0xff]
  %v395 = vld [vmem:[%s5 + $0x130] sm:$0xff]
  %v396 = vld [vmem:[%s5 + $0x138] sm:$0xff]
  %v397 = vld [vmem:[%s5 + $0x140] sm:$0xff]
  %v398 = vld [vmem:[%s5 + $0x148] sm:$0xff]
  %v399 = vld [vmem:[%s5 + $0x150] sm:$0xff]
  %v400 = vld [vmem:[%s5 + $0x158] sm:$0xff]
  %v401 = vld [vmem:[%s5 + $0x160] sm:$0xff]
  %v402 = vld [vmem:[%s5 + $0x168] sm:$0xff]
  %v403 = vld [vmem:[%s5 + $0x170] sm:$0xff]
  %v404 = vld [vmem:[%s5 + $0x178] sm:$0xff]
  %v405 = vld [vmem:[%s5 + $0x180] sm:$0xff]
  %v406 = vld [vmem:[%s5 + $0x188] sm:$0xff]
  %v407 = vld [vmem:[%s5 + $0x190] sm:$0xff]
  %v408 = vld [vmem:[%s5 + $0x198] sm:$0xff]
  %v409 = vld [vmem:[%s5 + $0x1a0] sm:$0xff]
  %v410 = vld [vmem:[%s5 + $0x1a8] sm:$0xff]
  %v411 = vld [vmem:[%s5 + $0x1b0] sm:$0xff]
  %v412 = vld [vmem:[%s5 + $0x1b8] sm:$0xff]
  %v413 = vld [vmem:[%s5 + $0x1c0] sm:$0xff]
  %v414 = vld [vmem:[%s5 + $0x1c8] sm:$0xff]
  %v415 = vld [vmem:[%s5 + $0x1d0] sm:$0xff]
  %v416 = vld [vmem:[%s5 + $0x1d8] sm:$0xff]
  %v417 = vld [vmem:[%s5 + $0x1e0] sm:$0xff]
  %v418 = vld [vmem:[%s5 + $0x1e8] sm:$0xff]
  %v419 = vld [vmem:[%s5 + $0x1f0] sm:$0xff]
  %v420 = vld [vmem:[%s5 + $0x1f8] sm:$0xff]
  %v421 = vrot.slane %v229, 7
  %v422 = vrot.slane %v230, 7
  %v423 = vrot.slane %v231, 7
  %v424 = vrot.slane %v232, 7
  %v425 = vrot.slane %v233, 7
  %v426 = vrot.slane %v234, 7
  %v427 = vrot.slane %v235, 7
  %v428 = vrot.slane %v236, 7
  %v429 = vrot.slane %v237, 7
  %v430 = vrot.slane %v238, 7
  %v431 = vrot.slane %v239, 7
  %v432 = vrot.slane %v240, 7
  %v433 = vrot.slane %v241, 7
  %v434 = vrot.slane %v242, 7
  %v435 = vrot.slane %v243, 7
  %v436 = vrot.slane %v244, 7
  %v437 = vrot.slane %v245, 7
  %v438 = vrot.slane %v246, 7
  %v439 = vrot.slane %v247, 7
  %v440 = vrot.slane %v248, 7
  %v441 = vrot.slane %v249, 7
  %v442 = vrot.slane %v250, 7
  %v443 = vrot.slane %v251, 7
  %v444 = vrot.slane %v252, 7
  %v445 = vrot.slane %v253, 7
  %v446 = vrot.slane %v254, 7
  %v447 = vrot.slane %v255, 7
  %v448 = vrot.slane %v256, 7
  %v449 = vrot.slane %v257, 7
  %v450 = vrot.slane %v258, 7
  %v451 = vrot.slane %v259, 7
  %v452 = vrot.slane %v260, 7
  %v453 = vrot.slane %v261, 7
  %v454 = vrot.slane %v262, 7
  %v455 = vrot.slane %v263, 7
  %v456 = vrot.slane %v264, 7
  %v457 = vrot.slane %v265, 7
  %v458 = vrot.slane %v266, 7
  %v459 = vrot.slane %v267, 7
  %v460 = vrot.slane %v268, 7
  %v461 = vrot.slane %v269, 7
  %v462 = vrot.slane %v270, 7
  %v463 = vrot.slane %v271, 7
  %v464 = vrot.slane %v272, 7
  %v465 = vrot.slane %v273, 7
  %v466 = vrot.slane %v274, 7
  %v467 = vrot.slane %v275, 7
  %v468 = vrot.slane %v276, 7
  %v469 = vrot.slane %v277, 7
  %v470 = vrot.slane %v278, 7
  %v471 = vrot.slane %v279, 7
  %v472 = vrot.slane %v280, 7
  %v473 = vrot.slane %v281, 7
  %v474 = vrot.slane %v282, 7
  %v475 = vrot.slane %v283, 7
  %v476 = vrot.slane %v284, 7
  %v477 = vrot.slane %v285, 7
  %v478 = vrot.slane %v286, 7
  %v479 = vrot.slane %v287, 7
  %v480 = vrot.slane %v288, 7
  %v481 = vrot.slane %v289, 7
  %v482 = vrot.slane %v290, 7
  %v483 = vrot.slane %v291, 7
  %v484 = vrot.slane %v292, 7
  %v485 = vlaneseq
  %v486 = vshrl.u32 %v485, 7
  %vm487 = vcmp.lt.s32.totalorder %v486, 1
  %v488 = vsel %vm487, %v483, %v484
  %v489 = vsel %vm487, %v482, %v483
  %v490 = vsel %vm487, %v481, %v482
  %v491 = vsel %vm487, %v480, %v481
  %v492 = vsel %vm487, %v479, %v480
  %v493 = vsel %vm487, %v478, %v479
  %v494 = vsel %vm487, %v477, %v478
  %v495 = vsel %vm487, %v476, %v477
  %v496 = vsel %vm487, %v475, %v476
  %v497 = vsel %vm487, %v474, %v475
  %v498 = vsel %vm487, %v473, %v474
  %v499 = vsel %vm487, %v472, %v473
  %v500 = vsel %vm487, %v471, %v472
  %v501 = vsel %vm487, %v470, %v471
  %v502 = vsel %vm487, %v469, %v470
  %v503 = vsel %vm487, %v468, %v469
  %v504 = vsel %vm487, %v467, %v468
  %v505 = vsel %vm487, %v466, %v467
  %v506 = vsel %vm487, %v465, %v466
  %v507 = vsel %vm487, %v464, %v465
  %v508 = vsel %vm487, %v463, %v464
  %v509 = vsel %vm487, %v462, %v463
  %v510 = vsel %vm487, %v461, %v462
  %v511 = vsel %vm487, %v460, %v461
  %v512 = vsel %vm487, %v459, %v460
  %v513 = vsel %vm487, %v458, %v459
  %v514 = vsel %vm487, %v457, %v458
  %v515 = vsel %vm487, %v456, %v457
  %v516 = vsel %vm487, %v455, %v456
  %v517 = vsel %vm487, %v454, %v455
  %v518 = vsel %vm487, %v453, %v454
  %v519 = vsel %vm487, %v452, %v453
  %v520 = vsel %vm487, %v451, %v452
  %v521 = vsel %vm487, %v450, %v451
  %v522 = vsel %vm487, %v449, %v450
  %v523 = vsel %vm487, %v448, %v449
  %v524 = vsel %vm487, %v447, %v448
  %v525 = vsel %vm487, %v446, %v447
  %v526 = vsel %vm487, %v445, %v446
  %v527 = vsel %vm487, %v444, %v445
  %v528 = vsel %vm487, %v443, %v444
  %v529 = vsel %vm487, %v442, %v443
  %v530 = vsel %vm487, %v441, %v442
  %v531 = vsel %vm487, %v440, %v441
  %v532 = vsel %vm487, %v439, %v440
  %v533 = vsel %vm487, %v438, %v439
  %v534 = vsel %vm487, %v437, %v438
  %v535 = vsel %vm487, %v436, %v437
  %v536 = vsel %vm487, %v435, %v436
  %v537 = vsel %vm487, %v434, %v435
  %v538 = vsel %vm487, %v433, %v434
  %v539 = vsel %vm487, %v432, %v433
  %v540 = vsel %vm487, %v431, %v432
  %v541 = vsel %vm487, %v430, %v431
  %v542 = vsel %vm487, %v429, %v430
  %v543 = vsel %vm487, %v428, %v429
  %v544 = vsel %vm487, %v427, %v428
  %v545 = vsel %vm487, %v426, %v427
  %v546 = vsel %vm487, %v425, %v426
  %v547 = vsel %vm487, %v424, %v425
  %v548 = vsel %vm487, %v423, %v424
  %v549 = vsel %vm487, %v422, %v423
  %v550 = vsel %vm487, %v421, %v422
  %v551 = vsel %vm487, %v484, %v421
  %v552 = vadd.s32 %v293, 4294967295
  %v553 = vadd.s32 %v294, 4294967295
  %v554 = vadd.s32 %v295, 4294967295
  %v555 = vadd.s32 %v296, 4294967295
  %v556 = vadd.s32 %v297, 4294967295
  %v557 = vadd.s32 %v298, 4294967295
  %v558 = vadd.s32 %v299, 4294967295
  %v559 = vadd.s32 %v300, 4294967295
  %v560 = vadd.s32 %v301, 4294967295
  %v561 = vadd.s32 %v302, 4294967295
  %v562 = vadd.s32 %v303, 4294967295
  %v563 = vadd.s32 %v304, 4294967295
  %v564 = vadd.s32 %v305, 4294967295
  %v565 = vadd.s32 %v306, 4294967295
  %v566 = vadd.s32 %v307, 4294967295
  %v567 = vadd.s32 %v308, 4294967295
  %v568 = vadd.s32 %v309, 4294967295
  %v569 = vadd.s32 %v310, 4294967295
  %v570 = vadd.s32 %v311, 4294967295
  %v571 = vadd.s32 %v312, 4294967295
  %v572 = vadd.s32 %v313, 4294967295
  %v573 = vadd.s32 %v314, 4294967295
  %v574 = vadd.s32 %v315, 4294967295
  %v575 = vadd.s32 %v316, 4294967295
  %v576 = vadd.s32 %v317, 4294967295
  %v577 = vadd.s32 %v318, 4294967295
  %v578 = vadd.s32 %v319, 4294967295
  %v579 = vadd.s32 %v320, 4294967295
  %v580 = vadd.s32 %v321, 4294967295
  %v581 = vadd.s32 %v322, 4294967295
  %v582 = vadd.s32 %v323, 4294967295
  %v583 = vadd.s32 %v324, 4294967295
  %v584 = vadd.s32 %v325, 4294967295
  %v585 = vadd.s32 %v326, 4294967295
  %v586 = vadd.s32 %v327, 4294967295
  %v587 = vadd.s32 %v328, 4294967295
  %v588 = vadd.s32 %v329, 4294967295
  %v589 = vadd.s32 %v330, 4294967295
  %v590 = vadd.s32 %v331, 4294967295
  %v591 = vadd.s32 %v332, 4294967295
  %v592 = vadd.s32 %v333, 4294967295
  %v593 = vadd.s32 %v334, 4294967295
  %v594 = vadd.s32 %v335, 4294967295
  %v595 = vadd.s32 %v336, 4294967295
  %v596 = vadd.s32 %v337, 4294967295
  %v597 = vadd.s32 %v338, 4294967295
  %v598 = vadd.s32 %v339, 4294967295
  %v599 = vadd.s32 %v340, 4294967295
  %v600 = vadd.s32 %v341, 4294967295
  %v601 = vadd.s32 %v342, 4294967295
  %v602 = vadd.s32 %v343, 4294967295
  %v603 = vadd.s32 %v344, 4294967295
  %v604 = vadd.s32 %v345, 4294967295
  %v605 = vadd.s32 %v346, 4294967295
  %v606 = vadd.s32 %v347, 4294967295
  %v607 = vadd.s32 %v348, 4294967295
  %v608 = vadd.s32 %v349, 4294967295
  %v609 = vadd.s32 %v350, 4294967295
  %v610 = vadd.s32 %v351, 4294967295
  %v611 = vadd.s32 %v352, 4294967295
  %v612 = vadd.s32 %v353, 4294967295
  %v613 = vadd.s32 %v354, 4294967295
  %v614 = vadd.s32 %v355, 4294967295
  %v615 = vadd.s32 %v356, 4294967295
  %vm616 = vcmp.ge.s32.totalorder %v552, 0
  %vm617 = vcmp.ge.s32.totalorder %v553, 0
  %vm618 = vcmp.ge.s32.totalorder %v554, 0
  %vm619 = vcmp.ge.s32.totalorder %v555, 0
  %vm620 = vcmp.ge.s32.totalorder %v556, 0
  %vm621 = vcmp.ge.s32.totalorder %v557, 0
  %vm622 = vcmp.ge.s32.totalorder %v558, 0
  %vm623 = vcmp.ge.s32.totalorder %v559, 0
  %vm624 = vcmp.ge.s32.totalorder %v560, 0
  %vm625 = vcmp.ge.s32.totalorder %v561, 0
  %vm626 = vcmp.ge.s32.totalorder %v562, 0
  %vm627 = vcmp.ge.s32.totalorder %v563, 0
  %vm628 = vcmp.ge.s32.totalorder %v564, 0
  %vm629 = vcmp.ge.s32.totalorder %v565, 0
  %vm630 = vcmp.ge.s32.totalorder %v566, 0
  %vm631 = vcmp.ge.s32.totalorder %v567, 0
  %vm632 = vcmp.ge.s32.totalorder %v568, 0
  %vm633 = vcmp.ge.s32.totalorder %v569, 0
  %vm634 = vcmp.ge.s32.totalorder %v570, 0
  %vm635 = vcmp.ge.s32.totalorder %v571, 0
  %vm636 = vcmp.ge.s32.totalorder %v572, 0
  %vm637 = vcmp.ge.s32.totalorder %v573, 0
  %vm638 = vcmp.ge.s32.totalorder %v574, 0
  %vm639 = vcmp.ge.s32.totalorder %v575, 0
  %vm640 = vcmp.ge.s32.totalorder %v576, 0
  %vm641 = vcmp.ge.s32.totalorder %v577, 0
  %vm642 = vcmp.ge.s32.totalorder %v578, 0
  %vm643 = vcmp.ge.s32.totalorder %v579, 0
  %vm644 = vcmp.ge.s32.totalorder %v580, 0
  %vm645 = vcmp.ge.s32.totalorder %v581, 0
  %vm646 = vcmp.ge.s32.totalorder %v582, 0
  %vm647 = vcmp.ge.s32.totalorder %v583, 0
  %vm648 = vcmp.ge.s32.totalorder %v584, 0
  %vm649 = vcmp.ge.s32.totalorder %v585, 0
  %vm650 = vcmp.ge.s32.totalorder %v586, 0
  %vm651 = vcmp.ge.s32.totalorder %v587, 0
  %vm652 = vcmp.ge.s32.totalorder %v588, 0
  %vm653 = vcmp.ge.s32.totalorder %v589, 0
  %vm654 = vcmp.ge.s32.totalorder %v590, 0
  %vm655 = vcmp.ge.s32.totalorder %v591, 0
  %vm656 = vcmp.ge.s32.totalorder %v592, 0
  %vm657 = vcmp.ge.s32.totalorder %v593, 0
  %vm658 = vcmp.ge.s32.totalorder %v594, 0
  %vm659 = vcmp.ge.s32.totalorder %v595, 0
  %vm660 = vcmp.ge.s32.totalorder %v596, 0
  %vm661 = vcmp.ge.s32.totalorder %v597, 0
  %vm662 = vcmp.ge.s32.totalorder %v598, 0
  %vm663 = vcmp.ge.s32.totalorder %v599, 0
  %vm664 = vcmp.ge.s32.totalorder %v600, 0
  %vm665 = vcmp.ge.s32.totalorder %v601, 0
  %vm666 = vcmp.ge.s32.totalorder %v602, 0
  %vm667 = vcmp.ge.s32.totalorder %v603, 0
  %vm668 = vcmp.ge.s32.totalorder %v604, 0
  %vm669 = vcmp.ge.s32.totalorder %v605, 0
  %vm670 = vcmp.ge.s32.totalorder %v606, 0
  %vm671 = vcmp.ge.s32.totalorder %v607, 0
  %vm672 = vcmp.ge.s32.totalorder %v608, 0
  %vm673 = vcmp.ge.s32.totalorder %v609, 0
  %vm674 = vcmp.ge.s32.totalorder %v610, 0
  %vm675 = vcmp.ge.s32.totalorder %v611, 0
  %vm676 = vcmp.ge.s32.totalorder %v612, 0
  %vm677 = vcmp.ge.s32.totalorder %v613, 0
  %vm678 = vcmp.ge.s32.totalorder %v614, 0
  %vm679 = vcmp.ge.s32.totalorder %v615, 0
  %vm680 = vcmp.lt.s32.totalorder %v552, 16
  %vm681 = vcmp.lt.s32.totalorder %v553, 16
  %vm682 = vcmp.lt.s32.totalorder %v554, 16
  %vm683 = vcmp.lt.s32.totalorder %v555, 16
  %vm684 = vcmp.lt.s32.totalorder %v556, 16
  %vm685 = vcmp.lt.s32.totalorder %v557, 16
  %vm686 = vcmp.lt.s32.totalorder %v558, 16
  %vm687 = vcmp.lt.s32.totalorder %v559, 16
  %vm688 = vcmp.lt.s32.totalorder %v560, 16
  %vm689 = vcmp.lt.s32.totalorder %v561, 16
  %vm690 = vcmp.lt.s32.totalorder %v562, 16
  %vm691 = vcmp.lt.s32.totalorder %v563, 16
  %vm692 = vcmp.lt.s32.totalorder %v564, 16
  %vm693 = vcmp.lt.s32.totalorder %v565, 16
  %vm694 = vcmp.lt.s32.totalorder %v566, 16
  %vm695 = vcmp.lt.s32.totalorder %v567, 16
  %vm696 = vcmp.lt.s32.totalorder %v568, 16
  %vm697 = vcmp.lt.s32.totalorder %v569, 16
  %vm698 = vcmp.lt.s32.totalorder %v570, 16
  %vm699 = vcmp.lt.s32.totalorder %v571, 16
  %vm700 = vcmp.lt.s32.totalorder %v572, 16
  %vm701 = vcmp.lt.s32.totalorder %v573, 16
  %vm702 = vcmp.lt.s32.totalorder %v574, 16
  %vm703 = vcmp.lt.s32.totalorder %v575, 16
  %vm704 = vcmp.lt.s32.totalorder %v576, 16
  %vm705 = vcmp.lt.s32.totalorder %v577, 16
  %vm706 = vcmp.lt.s32.totalorder %v578, 16
  %vm707 = vcmp.lt.s32.totalorder %v579, 16
  %vm708 = vcmp.lt.s32.totalorder %v580, 16
  %vm709 = vcmp.lt.s32.totalorder %v581, 16
  %vm710 = vcmp.lt.s32.totalorder %v582, 16
  %vm711 = vcmp.lt.s32.totalorder %v583, 16
  %vm712 = vcmp.lt.s32.totalorder %v584, 16
  %vm713 = vcmp.lt.s32.totalorder %v585, 16
  %vm714 = vcmp.lt.s32.totalorder %v586, 16
  %vm715 = vcmp.lt.s32.totalorder %v587, 16
  %vm716 = vcmp.lt.s32.totalorder %v588, 16
  %vm717 = vcmp.lt.s32.totalorder %v589, 16
  %vm718 = vcmp.lt.s32.totalorder %v590, 16
  %vm719 = vcmp.lt.s32.totalorder %v591, 16
  %vm720 = vcmp.lt.s32.totalorder %v592, 16
  %vm721 = vcmp.lt.s32.totalorder %v593, 16
  %vm722 = vcmp.lt.s32.totalorder %v594, 16
  %vm723 = vcmp.lt.s32.totalorder %v595, 16
  %vm724 = vcmp.lt.s32.totalorder %v596, 16
  %vm725 = vcmp.lt.s32.totalorder %v597, 16
  %vm726 = vcmp.lt.s32.totalorder %v598, 16
  %vm727 = vcmp.lt.s32.totalorder %v599, 16
  %vm728 = vcmp.lt.s32.totalorder %v600, 16
  %vm729 = vcmp.lt.s32.totalorder %v601, 16
  %vm730 = vcmp.lt.s32.totalorder %v602, 16
  %vm731 = vcmp.lt.s32.totalorder %v603, 16
  %vm732 = vcmp.lt.s32.totalorder %v604, 16
  %vm733 = vcmp.lt.s32.totalorder %v605, 16
  %vm734 = vcmp.lt.s32.totalorder %v606, 16
  %vm735 = vcmp.lt.s32.totalorder %v607, 16
  %vm736 = vcmp.lt.s32.totalorder %v608, 16
  %vm737 = vcmp.lt.s32.totalorder %v609, 16
  %vm738 = vcmp.lt.s32.totalorder %v610, 16
  %vm739 = vcmp.lt.s32.totalorder %v611, 16
  %vm740 = vcmp.lt.s32.totalorder %v612, 16
  %vm741 = vcmp.lt.s32.totalorder %v613, 16
  %vm742 = vcmp.lt.s32.totalorder %v614, 16
  %vm743 = vcmp.lt.s32.totalorder %v615, 16
  %vm744 = vmand %vm616, %vm680
  %vm745 = vmand %vm617, %vm681
  %vm746 = vmand %vm618, %vm682
  %vm747 = vmand %vm619, %vm683
  %vm748 = vmand %vm620, %vm684
  %vm749 = vmand %vm621, %vm685
  %vm750 = vmand %vm622, %vm686
  %vm751 = vmand %vm623, %vm687
  %vm752 = vmand %vm624, %vm688
  %vm753 = vmand %vm625, %vm689
  %vm754 = vmand %vm626, %vm690
  %vm755 = vmand %vm627, %vm691
  %vm756 = vmand %vm628, %vm692
  %vm757 = vmand %vm629, %vm693
  %vm758 = vmand %vm630, %vm694
  %vm759 = vmand %vm631, %vm695
  %vm760 = vmand %vm632, %vm696
  %vm761 = vmand %vm633, %vm697
  %vm762 = vmand %vm634, %vm698
  %vm763 = vmand %vm635, %vm699
  %vm764 = vmand %vm636, %vm700
  %vm765 = vmand %vm637, %vm701
  %vm766 = vmand %vm638, %vm702
  %vm767 = vmand %vm639, %vm703
  %vm768 = vmand %vm640, %vm704
  %vm769 = vmand %vm641, %vm705
  %vm770 = vmand %vm642, %vm706
  %vm771 = vmand %vm643, %vm707
  %vm772 = vmand %vm644, %vm708
  %vm773 = vmand %vm645, %vm709
  %vm774 = vmand %vm646, %vm710
  %vm775 = vmand %vm647, %vm711
  %vm776 = vmand %vm648, %vm712
  %vm777 = vmand %vm649, %vm713
  %vm778 = vmand %vm650, %vm714
  %vm779 = vmand %vm651, %vm715
  %vm780 = vmand %vm652, %vm716
  %vm781 = vmand %vm653, %vm717
  %vm782 = vmand %vm654, %vm718
  %vm783 = vmand %vm655, %vm719
  %vm784 = vmand %vm656, %vm720
  %vm785 = vmand %vm657, %vm721
  %vm786 = vmand %vm658, %vm722
  %vm787 = vmand %vm659, %vm723
  %vm788 = vmand %vm660, %vm724
  %vm789 = vmand %vm661, %vm725
  %vm790 = vmand %vm662, %vm726
  %vm791 = vmand %vm663, %vm727
  %vm792 = vmand %vm664, %vm728
  %vm793 = vmand %vm665, %vm729
  %vm794 = vmand %vm666, %vm730
  %vm795 = vmand %vm667, %vm731
  %vm796 = vmand %vm668, %vm732
  %vm797 = vmand %vm669, %vm733
  %vm798 = vmand %vm670, %vm734
  %vm799 = vmand %vm671, %vm735
  %vm800 = vmand %vm672, %vm736
  %vm801 = vmand %vm673, %vm737
  %vm802 = vmand %vm674, %vm738
  %vm803 = vmand %vm675, %vm739
  %vm804 = vmand %vm676, %vm740
  %vm805 = vmand %vm677, %vm741
  %vm806 = vmand %vm678, %vm742
  %vm807 = vmand %vm679, %vm743
  %v808 = vadd.s32 %v357, 4294967295
  %v809 = vadd.s32 %v358, 4294967295
  %v810 = vadd.s32 %v359, 4294967295
  %v811 = vadd.s32 %v360, 4294967295
  %v812 = vadd.s32 %v361, 4294967295
  %v813 = vadd.s32 %v362, 4294967295
  %v814 = vadd.s32 %v363, 4294967295
  %v815 = vadd.s32 %v364, 4294967295
  %v816 = vadd.s32 %v365, 4294967295
  %v817 = vadd.s32 %v366, 4294967295
  %v818 = vadd.s32 %v367, 4294967295
  %v819 = vadd.s32 %v368, 4294967295
  %v820 = vadd.s32 %v369, 4294967295
  %v821 = vadd.s32 %v370, 4294967295
  %v822 = vadd.s32 %v371, 4294967295
  %v823 = vadd.s32 %v372, 4294967295
  %v824 = vadd.s32 %v373, 4294967295
  %v825 = vadd.s32 %v374, 4294967295
  %v826 = vadd.s32 %v375, 4294967295
  %v827 = vadd.s32 %v376, 4294967295
  %v828 = vadd.s32 %v377, 4294967295
  %v829 = vadd.s32 %v378, 4294967295
  %v830 = vadd.s32 %v379, 4294967295
  %v831 = vadd.s32 %v380, 4294967295
  %v832 = vadd.s32 %v381, 4294967295
  %v833 = vadd.s32 %v382, 4294967295
  %v834 = vadd.s32 %v383, 4294967295
  %v835 = vadd.s32 %v384, 4294967295
  %v836 = vadd.s32 %v385, 4294967295
  %v837 = vadd.s32 %v386, 4294967295
  %v838 = vadd.s32 %v387, 4294967295
  %v839 = vadd.s32 %v388, 4294967295
  %v840 = vadd.s32 %v389, 4294967295
  %v841 = vadd.s32 %v390, 4294967295
  %v842 = vadd.s32 %v391, 4294967295
  %v843 = vadd.s32 %v392, 4294967295
  %v844 = vadd.s32 %v393, 4294967295
  %v845 = vadd.s32 %v394, 4294967295
  %v846 = vadd.s32 %v395, 4294967295
  %v847 = vadd.s32 %v396, 4294967295
  %v848 = vadd.s32 %v397, 4294967295
  %v849 = vadd.s32 %v398, 4294967295
  %v850 = vadd.s32 %v399, 4294967295
  %v851 = vadd.s32 %v400, 4294967295
  %v852 = vadd.s32 %v401, 4294967295
  %v853 = vadd.s32 %v402, 4294967295
  %v854 = vadd.s32 %v403, 4294967295
  %v855 = vadd.s32 %v404, 4294967295
  %v856 = vadd.s32 %v405, 4294967295
  %v857 = vadd.s32 %v406, 4294967295
  %v858 = vadd.s32 %v407, 4294967295
  %v859 = vadd.s32 %v408, 4294967295
  %v860 = vadd.s32 %v409, 4294967295
  %v861 = vadd.s32 %v410, 4294967295
  %v862 = vadd.s32 %v411, 4294967295
  %v863 = vadd.s32 %v412, 4294967295
  %v864 = vadd.s32 %v413, 4294967295
  %v865 = vadd.s32 %v414, 4294967295
  %v866 = vadd.s32 %v415, 4294967295
  %v867 = vadd.s32 %v416, 4294967295
  %v868 = vadd.s32 %v417, 4294967295
  %v869 = vadd.s32 %v418, 4294967295
  %v870 = vadd.s32 %v419, 4294967295
  %v871 = vadd.s32 %v420, 4294967295
  %vm872 = vcmp.ge.s32.totalorder %v808, 0
  %vm873 = vcmp.ge.s32.totalorder %v809, 0
  %vm874 = vcmp.ge.s32.totalorder %v810, 0
  %vm875 = vcmp.ge.s32.totalorder %v811, 0
  %vm876 = vcmp.ge.s32.totalorder %v812, 0
  %vm877 = vcmp.ge.s32.totalorder %v813, 0
  %vm878 = vcmp.ge.s32.totalorder %v814, 0
  %vm879 = vcmp.ge.s32.totalorder %v815, 0
  %vm880 = vcmp.ge.s32.totalorder %v816, 0
  %vm881 = vcmp.ge.s32.totalorder %v817, 0
  %vm882 = vcmp.ge.s32.totalorder %v818, 0
  %vm883 = vcmp.ge.s32.totalorder %v819, 0
  %vm884 = vcmp.ge.s32.totalorder %v820, 0
  %vm885 = vcmp.ge.s32.totalorder %v821, 0
  %vm886 = vcmp.ge.s32.totalorder %v822, 0
  %vm887 = vcmp.ge.s32.totalorder %v823, 0
  %vm888 = vcmp.ge.s32.totalorder %v824, 0
  %vm889 = vcmp.ge.s32.totalorder %v825, 0
  %vm890 = vcmp.ge.s32.totalorder %v826, 0
  %vm891 = vcmp.ge.s32.totalorder %v827, 0
  %vm892 = vcmp.ge.s32.totalorder %v828, 0
  %vm893 = vcmp.ge.s32.totalorder %v829, 0
  %vm894 = vcmp.ge.s32.totalorder %v830, 0
  %vm895 = vcmp.ge.s32.totalorder %v831, 0
  %vm896 = vcmp.ge.s32.totalorder %v832, 0
  %vm897 = vcmp.ge.s32.totalorder %v833, 0
  %vm898 = vcmp.ge.s32.totalorder %v834, 0
  %vm899 = vcmp.ge.s32.totalorder %v835, 0
  %vm900 = vcmp.ge.s32.totalorder %v836, 0
  %vm901 = vcmp.ge.s32.totalorder %v837, 0
  %vm902 = vcmp.ge.s32.totalorder %v838, 0
  %vm903 = vcmp.ge.s32.totalorder %v839, 0
  %vm904 = vcmp.ge.s32.totalorder %v840, 0
  %vm905 = vcmp.ge.s32.totalorder %v841, 0
  %vm906 = vcmp.ge.s32.totalorder %v842, 0
  %vm907 = vcmp.ge.s32.totalorder %v843, 0
  %vm908 = vcmp.ge.s32.totalorder %v844, 0
  %vm909 = vcmp.ge.s32.totalorder %v845, 0
  %vm910 = vcmp.ge.s32.totalorder %v846, 0
  %vm911 = vcmp.ge.s32.totalorder %v847, 0
  %vm912 = vcmp.ge.s32.totalorder %v848, 0
  %vm913 = vcmp.ge.s32.totalorder %v849, 0
  %vm914 = vcmp.ge.s32.totalorder %v850, 0
  %vm915 = vcmp.ge.s32.totalorder %v851, 0
  %vm916 = vcmp.ge.s32.totalorder %v852, 0
  %vm917 = vcmp.ge.s32.totalorder %v853, 0
  %vm918 = vcmp.ge.s32.totalorder %v854, 0
  %vm919 = vcmp.ge.s32.totalorder %v855, 0
  %vm920 = vcmp.ge.s32.totalorder %v856, 0
  %vm921 = vcmp.ge.s32.totalorder %v857, 0
  %vm922 = vcmp.ge.s32.totalorder %v858, 0
  %vm923 = vcmp.ge.s32.totalorder %v859, 0
  %vm924 = vcmp.ge.s32.totalorder %v860, 0
  %vm925 = vcmp.ge.s32.totalorder %v861, 0
  %vm926 = vcmp.ge.s32.totalorder %v862, 0
  %vm927 = vcmp.ge.s32.totalorder %v863, 0
  %vm928 = vcmp.ge.s32.totalorder %v864, 0
  %vm929 = vcmp.ge.s32.totalorder %v865, 0
  %vm930 = vcmp.ge.s32.totalorder %v866, 0
  %vm931 = vcmp.ge.s32.totalorder %v867, 0
  %vm932 = vcmp.ge.s32.totalorder %v868, 0
  %vm933 = vcmp.ge.s32.totalorder %v869, 0
  %vm934 = vcmp.ge.s32.totalorder %v870, 0
  %vm935 = vcmp.ge.s32.totalorder %v871, 0
  %vm936 = vmand %vm744, %vm872
  %vm937 = vmand %vm745, %vm873
  %vm938 = vmand %vm746, %vm874
  %vm939 = vmand %vm747, %vm875
  %vm940 = vmand %vm748, %vm876
  %vm941 = vmand %vm749, %vm877
  %vm942 = vmand %vm750, %vm878
  %vm943 = vmand %vm751, %vm879
  %vm944 = vmand %vm752, %vm880
  %vm945 = vmand %vm753, %vm881
  %vm946 = vmand %vm754, %vm882
  %vm947 = vmand %vm755, %vm883
  %vm948 = vmand %vm756, %vm884
  %vm949 = vmand %vm757, %vm885
  %vm950 = vmand %vm758, %vm886
  %vm951 = vmand %vm759, %vm887
  %vm952 = vmand %vm760, %vm888
  %vm953 = vmand %vm761, %vm889
  %vm954 = vmand %vm762, %vm890
  %vm955 = vmand %vm763, %vm891
  %vm956 = vmand %vm764, %vm892
  %vm957 = vmand %vm765, %vm893
  %vm958 = vmand %vm766, %vm894
  %vm959 = vmand %vm767, %vm895
  %vm960 = vmand %vm768, %vm896
  %vm961 = vmand %vm769, %vm897
  %vm962 = vmand %vm770, %vm898
  %vm963 = vmand %vm771, %vm899
  %vm964 = vmand %vm772, %vm900
  %vm965 = vmand %vm773, %vm901
  %vm966 = vmand %vm774, %vm902
  %vm967 = vmand %vm775, %vm903
  %vm968 = vmand %vm776, %vm904
  %vm969 = vmand %vm777, %vm905
  %vm970 = vmand %vm778, %vm906
  %vm971 = vmand %vm779, %vm907
  %vm972 = vmand %vm780, %vm908
  %vm973 = vmand %vm781, %vm909
  %vm974 = vmand %vm782, %vm910
  %vm975 = vmand %vm783, %vm911
  %vm976 = vmand %vm784, %vm912
  %vm977 = vmand %vm785, %vm913
  %vm978 = vmand %vm786, %vm914
  %vm979 = vmand %vm787, %vm915
  %vm980 = vmand %vm788, %vm916
  %vm981 = vmand %vm789, %vm917
  %vm982 = vmand %vm790, %vm918
  %vm983 = vmand %vm791, %vm919
  %vm984 = vmand %vm792, %vm920
  %vm985 = vmand %vm793, %vm921
  %vm986 = vmand %vm794, %vm922
  %vm987 = vmand %vm795, %vm923
  %vm988 = vmand %vm796, %vm924
  %vm989 = vmand %vm797, %vm925
  %vm990 = vmand %vm798, %vm926
  %vm991 = vmand %vm799, %vm927
  %vm992 = vmand %vm800, %vm928
  %vm993 = vmand %vm801, %vm929
  %vm994 = vmand %vm802, %vm930
  %vm995 = vmand %vm803, %vm931
  %vm996 = vmand %vm804, %vm932
  %vm997 = vmand %vm805, %vm933
  %vm998 = vmand %vm806, %vm934
  %vm999 = vmand %vm807, %vm935
  %vm1000 = vcmp.lt.s32.totalorder %v808, 16
  %vm1001 = vcmp.lt.s32.totalorder %v809, 16
  %vm1002 = vcmp.lt.s32.totalorder %v810, 16
  %vm1003 = vcmp.lt.s32.totalorder %v811, 16
  %vm1004 = vcmp.lt.s32.totalorder %v812, 16
  %vm1005 = vcmp.lt.s32.totalorder %v813, 16
  %vm1006 = vcmp.lt.s32.totalorder %v814, 16
  %vm1007 = vcmp.lt.s32.totalorder %v815, 16
  %vm1008 = vcmp.lt.s32.totalorder %v816, 16
  %vm1009 = vcmp.lt.s32.totalorder %v817, 16
  %vm1010 = vcmp.lt.s32.totalorder %v818, 16
  %vm1011 = vcmp.lt.s32.totalorder %v819, 16
  %vm1012 = vcmp.lt.s32.totalorder %v820, 16
  %vm1013 = vcmp.lt.s32.totalorder %v821, 16
  %vm1014 = vcmp.lt.s32.totalorder %v822, 16
  %vm1015 = vcmp.lt.s32.totalorder %v823, 16
  %vm1016 = vcmp.lt.s32.totalorder %v824, 16
  %vm1017 = vcmp.lt.s32.totalorder %v825, 16
  %vm1018 = vcmp.lt.s32.totalorder %v826, 16
  %vm1019 = vcmp.lt.s32.totalorder %v827, 16
  %vm1020 = vcmp.lt.s32.totalorder %v828, 16
  %vm1021 = vcmp.lt.s32.totalorder %v829, 16
  %vm1022 = vcmp.lt.s32.totalorder %v830, 16
  %vm1023 = vcmp.lt.s32.totalorder %v831, 16
  %vm1024 = vcmp.lt.s32.totalorder %v832, 16
  %vm1025 = vcmp.lt.s32.totalorder %v833, 16
  %vm1026 = vcmp.lt.s32.totalorder %v834, 16
  %vm1027 = vcmp.lt.s32.totalorder %v835, 16
  %vm1028 = vcmp.lt.s32.totalorder %v836, 16
  %vm1029 = vcmp.lt.s32.totalorder %v837, 16
  %vm1030 = vcmp.lt.s32.totalorder %v838, 16
  %vm1031 = vcmp.lt.s32.totalorder %v839, 16
  %vm1032 = vcmp.lt.s32.totalorder %v840, 16
  %vm1033 = vcmp.lt.s32.totalorder %v841, 16
  %vm1034 = vcmp.lt.s32.totalorder %v842, 16
  %vm1035 = vcmp.lt.s32.totalorder %v843, 16
  %vm1036 = vcmp.lt.s32.totalorder %v844, 16
  %vm1037 = vcmp.lt.s32.totalorder %v845, 16
  %vm1038 = vcmp.lt.s32.totalorder %v846, 16
  %vm1039 = vcmp.lt.s32.totalorder %v847, 16
  %vm1040 = vcmp.lt.s32.totalorder %v848, 16
  %vm1041 = vcmp.lt.s32.totalorder %v849, 16
  %vm1042 = vcmp.lt.s32.totalorder %v850, 16
  %vm1043 = vcmp.lt.s32.totalorder %v851, 16
  %vm1044 = vcmp.lt.s32.totalorder %v852, 16
  %vm1045 = vcmp.lt.s32.totalorder %v853, 16
  %vm1046 = vcmp.lt.s32.totalorder %v854, 16
  %vm1047 = vcmp.lt.s32.totalorder %v855, 16
  %vm1048 = vcmp.lt.s32.totalorder %v856, 16
  %vm1049 = vcmp.lt.s32.totalorder %v857, 16
  %vm1050 = vcmp.lt.s32.totalorder %v858, 16
  %vm1051 = vcmp.lt.s32.totalorder %v859, 16
  %vm1052 = vcmp.lt.s32.totalorder %v860, 16
  %vm1053 = vcmp.lt.s32.totalorder %v861, 16
  %vm1054 = vcmp.lt.s32.totalorder %v862, 16
  %vm1055 = vcmp.lt.s32.totalorder %v863, 16
  %vm1056 = vcmp.lt.s32.totalorder %v864, 16
  %vm1057 = vcmp.lt.s32.totalorder %v865, 16
  %vm1058 = vcmp.lt.s32.totalorder %v866, 16
  %vm1059 = vcmp.lt.s32.totalorder %v867, 16
  %vm1060 = vcmp.lt.s32.totalorder %v868, 16
  %vm1061 = vcmp.lt.s32.totalorder %v869, 16
  %vm1062 = vcmp.lt.s32.totalorder %v870, 16
  %vm1063 = vcmp.lt.s32.totalorder %v871, 16
  %vm1064 = vmand %vm936, %vm1000
  %vm1065 = vmand %vm937, %vm1001
  %vm1066 = vmand %vm938, %vm1002
  %vm1067 = vmand %vm939, %vm1003
  %vm1068 = vmand %vm940, %vm1004
  %vm1069 = vmand %vm941, %vm1005
  %vm1070 = vmand %vm942, %vm1006
  %vm1071 = vmand %vm943, %vm1007
  %vm1072 = vmand %vm944, %vm1008
  %vm1073 = vmand %vm945, %vm1009
  %vm1074 = vmand %vm946, %vm1010
  %vm1075 = vmand %vm947, %vm1011
  %vm1076 = vmand %vm948, %vm1012
  %vm1077 = vmand %vm949, %vm1013
  %vm1078 = vmand %vm950, %vm1014
  %vm1079 = vmand %vm951, %vm1015
  %vm1080 = vmand %vm952, %vm1016
  %vm1081 = vmand %vm953, %vm1017
  %vm1082 = vmand %vm954, %vm1018
  %vm1083 = vmand %vm955, %vm1019
  %vm1084 = vmand %vm956, %vm1020
  %vm1085 = vmand %vm957, %vm1021
  %vm1086 = vmand %vm958, %vm1022
  %vm1087 = vmand %vm959, %vm1023
  %vm1088 = vmand %vm960, %vm1024
  %vm1089 = vmand %vm961, %vm1025
  %vm1090 = vmand %vm962, %vm1026
  %vm1091 = vmand %vm963, %vm1027
  %vm1092 = vmand %vm964, %vm1028
  %vm1093 = vmand %vm965, %vm1029
  %vm1094 = vmand %vm966, %vm1030
  %vm1095 = vmand %vm967, %vm1031
  %vm1096 = vmand %vm968, %vm1032
  %vm1097 = vmand %vm969, %vm1033
  %vm1098 = vmand %vm970, %vm1034
  %vm1099 = vmand %vm971, %vm1035
  %vm1100 = vmand %vm972, %vm1036
  %vm1101 = vmand %vm973, %vm1037
  %vm1102 = vmand %vm974, %vm1038
  %vm1103 = vmand %vm975, %vm1039
  %vm1104 = vmand %vm976, %vm1040
  %vm1105 = vmand %vm977, %vm1041
  %vm1106 = vmand %vm978, %vm1042
  %vm1107 = vmand %vm979, %vm1043
  %vm1108 = vmand %vm980, %vm1044
  %vm1109 = vmand %vm981, %vm1045
  %vm1110 = vmand %vm982, %vm1046
  %vm1111 = vmand %vm983, %vm1047
  %vm1112 = vmand %vm984, %vm1048
  %vm1113 = vmand %vm985, %vm1049
  %vm1114 = vmand %vm986, %vm1050
  %vm1115 = vmand %vm987, %vm1051
  %vm1116 = vmand %vm988, %vm1052
  %vm1117 = vmand %vm989, %vm1053
  %vm1118 = vmand %vm990, %vm1054
  %vm1119 = vmand %vm991, %vm1055
  %vm1120 = vmand %vm992, %vm1056
  %vm1121 = vmand %vm993, %vm1057
  %vm1122 = vmand %vm994, %vm1058
  %vm1123 = vmand %vm995, %vm1059
  %vm1124 = vmand %vm996, %vm1060
  %vm1125 = vmand %vm997, %vm1061
  %vm1126 = vmand %vm998, %vm1062
  %vm1127 = vmand %vm999, %vm1063
  %v1128 = vsel %vm1064, 1, 0
  %v1129 = vsel %vm1065, 1, 0
  %v1130 = vsel %vm1066, 1, 0
  %v1131 = vsel %vm1067, 1, 0
  %v1132 = vsel %vm1068, 1, 0
  %v1133 = vsel %vm1069, 1, 0
  %v1134 = vsel %vm1070, 1, 0
  %v1135 = vsel %vm1071, 1, 0
  %v1136 = vsel %vm1072, 1, 0
  %v1137 = vsel %vm1073, 1, 0
  %v1138 = vsel %vm1074, 1, 0
  %v1139 = vsel %vm1075, 1, 0
  %v1140 = vsel %vm1076, 1, 0
  %v1141 = vsel %vm1077, 1, 0
  %v1142 = vsel %vm1078, 1, 0
  %v1143 = vsel %vm1079, 1, 0
  %v1144 = vsel %vm1080, 1, 0
  %v1145 = vsel %vm1081, 1, 0
  %v1146 = vsel %vm1082, 1, 0
  %v1147 = vsel %vm1083, 1, 0
  %v1148 = vsel %vm1084, 1, 0
  %v1149 = vsel %vm1085, 1, 0
  %v1150 = vsel %vm1086, 1, 0
  %v1151 = vsel %vm1087, 1, 0
  %v1152 = vsel %vm1088, 1, 0
  %v1153 = vsel %vm1089, 1, 0
  %v1154 = vsel %vm1090, 1, 0
  %v1155 = vsel %vm1091, 1, 0
  %v1156 = vsel %vm1092, 1, 0
  %v1157 = vsel %vm1093, 1, 0
  %v1158 = vsel %vm1094, 1, 0
  %v1159 = vsel %vm1095, 1, 0
  %v1160 = vsel %vm1096, 1, 0
  %v1161 = vsel %vm1097, 1, 0
  %v1162 = vsel %vm1098, 1, 0
  %v1163 = vsel %vm1099, 1, 0
  %v1164 = vsel %vm1100, 1, 0
  %v1165 = vsel %vm1101, 1, 0
  %v1166 = vsel %vm1102, 1, 0
  %v1167 = vsel %vm1103, 1, 0
  %v1168 = vsel %vm1104, 1, 0
  %v1169 = vsel %vm1105, 1, 0
  %v1170 = vsel %vm1106, 1, 0
  %v1171 = vsel %vm1107, 1, 0
  %v1172 = vsel %vm1108, 1, 0
  %v1173 = vsel %vm1109, 1, 0
  %v1174 = vsel %vm1110, 1, 0
  %v1175 = vsel %vm1111, 1, 0
  %v1176 = vsel %vm1112, 1, 0
  %v1177 = vsel %vm1113, 1, 0
  %v1178 = vsel %vm1114, 1, 0
  %v1179 = vsel %vm1115, 1, 0
  %v1180 = vsel %vm1116, 1, 0
  %v1181 = vsel %vm1117, 1, 0
  %v1182 = vsel %vm1118, 1, 0
  %v1183 = vsel %vm1119, 1, 0
  %v1184 = vsel %vm1120, 1, 0
  %v1185 = vsel %vm1121, 1, 0
  %v1186 = vsel %vm1122, 1, 0
  %v1187 = vsel %vm1123, 1, 0
  %v1188 = vsel %vm1124, 1, 0
  %v1189 = vsel %vm1125, 1, 0
  %v1190 = vsel %vm1126, 1, 0
  %v1191 = vsel %vm1127, 1, 0
  %1192 = vset.pattern.permute.xlu0 0
  %1193 = vperm.xlu0 %1192, %v1128
  %v1194 = vpop.permute.xlu0 %1193
  %1195 = vset.pattern.permute.xlu0 0
  %1196 = vperm.xlu0 %1195, %v1129
  %v1197 = vpop.permute.xlu0 %1196
  %1198 = vset.pattern.permute.xlu0 0
  %1199 = vperm.xlu0 %1198, %v1130
  %v1200 = vpop.permute.xlu0 %1199
  %1201 = vset.pattern.permute.xlu0 0
  %1202 = vperm.xlu0 %1201, %v1131
  %v1203 = vpop.permute.xlu0 %1202
  %1204 = vset.pattern.permute.xlu0 0
  %1205 = vperm.xlu0 %1204, %v1132
  %v1206 = vpop.permute.xlu0 %1205
  %1207 = vset.pattern.permute.xlu0 0
  %1208 = vperm.xlu0 %1207, %v1133
  %v1209 = vpop.permute.xlu0 %1208
  %1210 = vset.pattern.permute.xlu0 0
  %1211 = vperm.xlu0 %1210, %v1134
  %v1212 = vpop.permute.xlu0 %1211
  %1213 = vset.pattern.permute.xlu0 0
  %1214 = vperm.xlu0 %1213, %v1135
  %v1215 = vpop.permute.xlu0 %1214
  %1216 = vset.pattern.permute.xlu0 0
  %1217 = vperm.xlu0 %1216, %v1136
  %v1218 = vpop.permute.xlu0 %1217
  %1219 = vset.pattern.permute.xlu0 0
  %1220 = vperm.xlu0 %1219, %v1137
  %v1221 = vpop.permute.xlu0 %1220
  %1222 = vset.pattern.permute.xlu0 0
  %1223 = vperm.xlu0 %1222, %v1138
  %v1224 = vpop.permute.xlu0 %1223
  %1225 = vset.pattern.permute.xlu0 0
  %1226 = vperm.xlu0 %1225, %v1139
  %v1227 = vpop.permute.xlu0 %1226
  %1228 = vset.pattern.permute.xlu0 0
  %1229 = vperm.xlu0 %1228, %v1140
  %v1230 = vpop.permute.xlu0 %1229
  %1231 = vset.pattern.permute.xlu0 0
  %1232 = vperm.xlu0 %1231, %v1141
  %v1233 = vpop.permute.xlu0 %1232
  %1234 = vset.pattern.permute.xlu0 0
  %1235 = vperm.xlu0 %1234, %v1142
  %v1236 = vpop.permute.xlu0 %1235
  %1237 = vset.pattern.permute.xlu0 0
  %1238 = vperm.xlu0 %1237, %v1143
  %v1239 = vpop.permute.xlu0 %1238
  %1240 = vset.pattern.permute.xlu0 0
  %1241 = vperm.xlu0 %1240, %v1144
  %v1242 = vpop.permute.xlu0 %1241
  %1243 = vset.pattern.permute.xlu0 0
  %1244 = vperm.xlu0 %1243, %v1145
  %v1245 = vpop.permute.xlu0 %1244
  %1246 = vset.pattern.permute.xlu0 0
  %1247 = vperm.xlu0 %1246, %v1146
  %v1248 = vpop.permute.xlu0 %1247
  %1249 = vset.pattern.permute.xlu0 0
  %1250 = vperm.xlu0 %1249, %v1147
  %v1251 = vpop.permute.xlu0 %1250
  %1252 = vset.pattern.permute.xlu0 0
  %1253 = vperm.xlu0 %1252, %v1148
  %v1254 = vpop.permute.xlu0 %1253
  %1255 = vset.pattern.permute.xlu0 0
  %1256 = vperm.xlu0 %1255, %v1149
  %v1257 = vpop.permute.xlu0 %1256
  %1258 = vset.pattern.permute.xlu0 0
  %1259 = vperm.xlu0 %1258, %v1150
  %v1260 = vpop.permute.xlu0 %1259
  %1261 = vset.pattern.permute.xlu0 0
  %1262 = vperm.xlu0 %1261, %v1151
  %v1263 = vpop.permute.xlu0 %1262
  %1264 = vset.pattern.permute.xlu0 0
  %1265 = vperm.xlu0 %1264, %v1152
  %v1266 = vpop.permute.xlu0 %1265
  %1267 = vset.pattern.permute.xlu0 0
  %1268 = vperm.xlu0 %1267, %v1153
  %v1269 = vpop.permute.xlu0 %1268
  %1270 = vset.pattern.permute.xlu0 0
  %1271 = vperm.xlu0 %1270, %v1154
  %v1272 = vpop.permute.xlu0 %1271
  %1273 = vset.pattern.permute.xlu0 0
  %1274 = vperm.xlu0 %1273, %v1155
  %v1275 = vpop.permute.xlu0 %1274
  %1276 = vset.pattern.permute.xlu0 0
  %1277 = vperm.xlu0 %1276, %v1156
  %v1278 = vpop.permute.xlu0 %1277
  %1279 = vset.pattern.permute.xlu0 0
  %1280 = vperm.xlu0 %1279, %v1157
  %v1281 = vpop.permute.xlu0 %1280
  %1282 = vset.pattern.permute.xlu0 0
  %1283 = vperm.xlu0 %1282, %v1158
  %v1284 = vpop.permute.xlu0 %1283
  %1285 = vset.pattern.permute.xlu0 0
  %1286 = vperm.xlu0 %1285, %v1159
  %v1287 = vpop.permute.xlu0 %1286
  %1288 = vset.pattern.permute.xlu0 0
  %1289 = vperm.xlu0 %1288, %v1160
  %v1290 = vpop.permute.xlu0 %1289
  %1291 = vset.pattern.permute.xlu0 0
  %1292 = vperm.xlu0 %1291, %v1161
  %v1293 = vpop.permute.xlu0 %1292
  %1294 = vset.pattern.permute.xlu0 0
  %1295 = vperm.xlu0 %1294, %v1162
  %v1296 = vpop.permute.xlu0 %1295
  %1297 = vset.pattern.permute.xlu0 0
  %1298 = vperm.xlu0 %1297, %v1163
  %v1299 = vpop.permute.xlu0 %1298
  %1300 = vset.pattern.permute.xlu0 0
  %1301 = vperm.xlu0 %1300, %v1164
  %v1302 = vpop.permute.xlu0 %1301
  %1303 = vset.pattern.permute.xlu0 0
  %1304 = vperm.xlu0 %1303, %v1165
  %v1305 = vpop.permute.xlu0 %1304
  %1306 = vset.pattern.permute.xlu0 0
  %1307 = vperm.xlu0 %1306, %v1166
  %v1308 = vpop.permute.xlu0 %1307
  %1309 = vset.pattern.permute.xlu0 0
  %1310 = vperm.xlu0 %1309, %v1167
  %v1311 = vpop.permute.xlu0 %1310
  %1312 = vset.pattern.permute.xlu0 0
  %1313 = vperm.xlu0 %1312, %v1168
  %v1314 = vpop.permute.xlu0 %1313
  %1315 = vset.pattern.permute.xlu0 0
  %1316 = vperm.xlu0 %1315, %v1169
  %v1317 = vpop.permute.xlu0 %1316
  %1318 = vset.pattern.permute.xlu0 0
  %1319 = vperm.xlu0 %1318, %v1170
  %v1320 = vpop.permute.xlu0 %1319
  %1321 = vset.pattern.permute.xlu0 0
  %1322 = vperm.xlu0 %1321, %v1171
  %v1323 = vpop.permute.xlu0 %1322
  %1324 = vset.pattern.permute.xlu0 0
  %1325 = vperm.xlu0 %1324, %v1172
  %v1326 = vpop.permute.xlu0 %1325
  %1327 = vset.pattern.permute.xlu0 0
  %1328 = vperm.xlu0 %1327, %v1173
  %v1329 = vpop.permute.xlu0 %1328
  %1330 = vset.pattern.permute.xlu0 0
  %1331 = vperm.xlu0 %1330, %v1174
  %v1332 = vpop.permute.xlu0 %1331
  %1333 = vset.pattern.permute.xlu0 0
  %1334 = vperm.xlu0 %1333, %v1175
  %v1335 = vpop.permute.xlu0 %1334
  %1336 = vset.pattern.permute.xlu0 0
  %1337 = vperm.xlu0 %1336, %v1176
  %v1338 = vpop.permute.xlu0 %1337
  %1339 = vset.pattern.permute.xlu0 0
  %1340 = vperm.xlu0 %1339, %v1177
  %v1341 = vpop.permute.xlu0 %1340
  %1342 = vset.pattern.permute.xlu0 0
  %1343 = vperm.xlu0 %1342, %v1178
  %v1344 = vpop.permute.xlu0 %1343
  %1345 = vset.pattern.permute.xlu0 0
  %1346 = vperm.xlu0 %1345, %v1179
  %v1347 = vpop.permute.xlu0 %1346
  %1348 = vset.pattern.permute.xlu0 0
  %1349 = vperm.xlu0 %1348, %v1180
  %v1350 = vpop.permute.xlu0 %1349
  %1351 = vset.pattern.permute.xlu0 0
  %1352 = vperm.xlu0 %1351, %v1181
  %v1353 = vpop.permute.xlu0 %1352
  %1354 = vset.pattern.permute.xlu0 0
  %1355 = vperm.xlu0 %1354, %v1182
  %v1356 = vpop.permute.xlu0 %1355
  %1357 = vset.pattern.permute.xlu0 0
  %1358 = vperm.xlu0 %1357, %v1183
  %v1359 = vpop.permute.xlu0 %1358
  %1360 = vset.pattern.permute.xlu0 0
  %1361 = vperm.xlu0 %1360, %v1184
  %v1362 = vpop.permute.xlu0 %1361
  %1363 = vset.pattern.permute.xlu0 0
  %1364 = vperm.xlu0 %1363, %v1185
  %v1365 = vpop.permute.xlu0 %1364
  %1366 = vset.pattern.permute.xlu0 0
  %1367 = vperm.xlu0 %1366, %v1186
  %v1368 = vpop.permute.xlu0 %1367
  %1369 = vset.pattern.permute.xlu0 0
  %1370 = vperm.xlu0 %1369, %v1187
  %v1371 = vpop.permute.xlu0 %1370
  %1372 = vset.pattern.permute.xlu0 0
  %1373 = vperm.xlu0 %1372, %v1188
  %v1374 = vpop.permute.xlu0 %1373
  %1375 = vset.pattern.permute.xlu0 0
  %1376 = vperm.xlu0 %1375, %v1189
  %v1377 = vpop.permute.xlu0 %1376
  %1378 = vset.pattern.permute.xlu0 0
  %1379 = vperm.xlu0 %1378, %v1190
  %v1380 = vpop.permute.xlu0 %1379
  %1381 = vset.pattern.permute.xlu0 0
  %1382 = vperm.xlu0 %1381, %v1191
  %v1383 = vpop.permute.xlu0 %1382
  %vm1384 = vcmp.eq.s32.totalorder %v1194, 1
  %vm1385 = vcmp.eq.s32.totalorder %v1197, 1
  %vm1386 = vcmp.eq.s32.totalorder %v1200, 1
  %vm1387 = vcmp.eq.s32.totalorder %v1203, 1
  %vm1388 = vcmp.eq.s32.totalorder %v1206, 1
  %vm1389 = vcmp.eq.s32.totalorder %v1209, 1
  %vm1390 = vcmp.eq.s32.totalorder %v1212, 1
  %vm1391 = vcmp.eq.s32.totalorder %v1215, 1
  %vm1392 = vcmp.eq.s32.totalorder %v1218, 1
  %vm1393 = vcmp.eq.s32.totalorder %v1221, 1
  %vm1394 = vcmp.eq.s32.totalorder %v1224, 1
  %vm1395 = vcmp.eq.s32.totalorder %v1227, 1
  %vm1396 = vcmp.eq.s32.totalorder %v1230, 1
  %vm1397 = vcmp.eq.s32.totalorder %v1233, 1
  %vm1398 = vcmp.eq.s32.totalorder %v1236, 1
  %vm1399 = vcmp.eq.s32.totalorder %v1239, 1
  %vm1400 = vcmp.eq.s32.totalorder %v1242, 1
  %vm1401 = vcmp.eq.s32.totalorder %v1245, 1
  %vm1402 = vcmp.eq.s32.totalorder %v1248, 1
  %vm1403 = vcmp.eq.s32.totalorder %v1251, 1
  %vm1404 = vcmp.eq.s32.totalorder %v1254, 1
  %vm1405 = vcmp.eq.s32.totalorder %v1257, 1
  %vm1406 = vcmp.eq.s32.totalorder %v1260, 1
  %vm1407 = vcmp.eq.s32.totalorder %v1263, 1
  %vm1408 = vcmp.eq.s32.totalorder %v1266, 1
  %vm1409 = vcmp.eq.s32.totalorder %v1269, 1
  %vm1410 = vcmp.eq.s32.totalorder %v1272, 1
  %vm1411 = vcmp.eq.s32.totalorder %v1275, 1
  %vm1412 = vcmp.eq.s32.totalorder %v1278, 1
  %vm1413 = vcmp.eq.s32.totalorder %v1281, 1
  %vm1414 = vcmp.eq.s32.totalorder %v1284, 1
  %vm1415 = vcmp.eq.s32.totalorder %v1287, 1
  %vm1416 = vcmp.eq.s32.totalorder %v1290, 1
  %vm1417 = vcmp.eq.s32.totalorder %v1293, 1
  %vm1418 = vcmp.eq.s32.totalorder %v1296, 1
  %vm1419 = vcmp.eq.s32.totalorder %v1299, 1
  %vm1420 = vcmp.eq.s32.totalorder %v1302, 1
  %vm1421 = vcmp.eq.s32.totalorder %v1305, 1
  %vm1422 = vcmp.eq.s32.totalorder %v1308, 1
  %vm1423 = vcmp.eq.s32.totalorder %v1311, 1
  %vm1424 = vcmp.eq.s32.totalorder %v1314, 1
  %vm1425 = vcmp.eq.s32.totalorder %v1317, 1
  %vm1426 = vcmp.eq.s32.totalorder %v1320, 1
  %vm1427 = vcmp.eq.s32.totalorder %v1323, 1
  %vm1428 = vcmp.eq.s32.totalorder %v1326, 1
  %vm1429 = vcmp.eq.s32.totalorder %v1329, 1
  %vm1430 = vcmp.eq.s32.totalorder %v1332, 1
  %vm1431 = vcmp.eq.s32.totalorder %v1335, 1
  %vm1432 = vcmp.eq.s32.totalorder %v1338, 1
  %vm1433 = vcmp.eq.s32.totalorder %v1341, 1
  %vm1434 = vcmp.eq.s32.totalorder %v1344, 1
  %vm1435 = vcmp.eq.s32.totalorder %v1347, 1
  %vm1436 = vcmp.eq.s32.totalorder %v1350, 1
  %vm1437 = vcmp.eq.s32.totalorder %v1353, 1
  %vm1438 = vcmp.eq.s32.totalorder %v1356, 1
  %vm1439 = vcmp.eq.s32.totalorder %v1359, 1
  %vm1440 = vcmp.eq.s32.totalorder %v1362, 1
  %vm1441 = vcmp.eq.s32.totalorder %v1365, 1
  %vm1442 = vcmp.eq.s32.totalorder %v1368, 1
  %vm1443 = vcmp.eq.s32.totalorder %v1371, 1
  %vm1444 = vcmp.eq.s32.totalorder %v1374, 1
  %vm1445 = vcmp.eq.s32.totalorder %v1377, 1
  %vm1446 = vcmp.eq.s32.totalorder %v1380, 1
  %vm1447 = vcmp.eq.s32.totalorder %v1383, 1
  %v1448 = vsel %vm1384, %v489, 0.0
  %v1449 = vsel %vm1385, %v488, 0.0
  %v1450 = vsel %vm1386, %v551, 0.0
  %v1451 = vsel %vm1387, %v550, 0.0
  %v1452 = vsel %vm1388, %v549, 0.0
  %v1453 = vsel %vm1389, %v548, 0.0
  %v1454 = vsel %vm1390, %v547, 0.0
  %v1455 = vsel %vm1391, %v546, 0.0
  %v1456 = vsel %vm1392, %v545, 0.0
  %v1457 = vsel %vm1393, %v544, 0.0
  %v1458 = vsel %vm1394, %v543, 0.0
  %v1459 = vsel %vm1395, %v542, 0.0
  %v1460 = vsel %vm1396, %v541, 0.0
  %v1461 = vsel %vm1397, %v540, 0.0
  %v1462 = vsel %vm1398, %v539, 0.0
  %v1463 = vsel %vm1399, %v538, 0.0
  %v1464 = vsel %vm1400, %v537, 0.0
  %v1465 = vsel %vm1401, %v536, 0.0
  %v1466 = vsel %vm1402, %v535, 0.0
  %v1467 = vsel %vm1403, %v534, 0.0
  %v1468 = vsel %vm1404, %v533, 0.0
  %v1469 = vsel %vm1405, %v532, 0.0
  %v1470 = vsel %vm1406, %v531, 0.0
  %v1471 = vsel %vm1407, %v530, 0.0
  %v1472 = vsel %vm1408, %v529, 0.0
  %v1473 = vsel %vm1409, %v528, 0.0
  %v1474 = vsel %vm1410, %v527, 0.0
  %v1475 = vsel %vm1411, %v526, 0.0
  %v1476 = vsel %vm1412, %v525, 0.0
  %v1477 = vsel %vm1413, %v524, 0.0
  %v1478 = vsel %vm1414, %v523, 0.0
  %v1479 = vsel %vm1415, %v522, 0.0
  %v1480 = vsel %vm1416, %v521, 0.0
  %v1481 = vsel %vm1417, %v520, 0.0
  %v1482 = vsel %vm1418, %v519, 0.0
  %v1483 = vsel %vm1419, %v518, 0.0
  %v1484 = vsel %vm1420, %v517, 0.0
  %v1485 = vsel %vm1421, %v516, 0.0
  %v1486 = vsel %vm1422, %v515, 0.0
  %v1487 = vsel %vm1423, %v514, 0.0
  %v1488 = vsel %vm1424, %v513, 0.0
  %v1489 = vsel %vm1425, %v512, 0.0
  %v1490 = vsel %vm1426, %v511, 0.0
  %v1491 = vsel %vm1427, %v510, 0.0
  %v1492 = vsel %vm1428, %v509, 0.0
  %v1493 = vsel %vm1429, %v508, 0.0
  %v1494 = vsel %vm1430, %v507, 0.0
  %v1495 = vsel %vm1431, %v506, 0.0
  %v1496 = vsel %vm1432, %v505, 0.0
  %v1497 = vsel %vm1433, %v504, 0.0
  %v1498 = vsel %vm1434, %v503, 0.0
  %v1499 = vsel %vm1435, %v502, 0.0
  %v1500 = vsel %vm1436, %v501, 0.0
  %v1501 = vsel %vm1437, %v500, 0.0
  %v1502 = vsel %vm1438, %v499, 0.0
  %v1503 = vsel %vm1439, %v498, 0.0
  %v1504 = vsel %vm1440, %v497, 0.0
  %v1505 = vsel %vm1441, %v496, 0.0
  %v1506 = vsel %vm1442, %v495, 0.0
  %v1507 = vsel %vm1443, %v494, 0.0
  %v1508 = vsel %vm1444, %v493, 0.0
  %v1509 = vsel %vm1445, %v492, 0.0
  %v1510 = vsel %vm1446, %v491, 0.0
  %v1511 = vsel %vm1447, %v490, 0.0
  %1512 = vst [vmem:[#allocation2] sm:$0xff] %v1448
  %1513 = vst [vmem:[#allocation2 + $0x48] sm:$0xff] %v1449
  %1514 = vst [vmem:[#allocation2 + $0x90] sm:$0xff] %v1450
  %1515 = vst [vmem:[#allocation2 + $0xd8] sm:$0xff] %v1451
  %1516 = vst [vmem:[#allocation2 + $0x120] sm:$0xff] %v1452
  %1517 = vst [vmem:[#allocation2 + $0x168] sm:$0xff] %v1453
  %1518 = vst [vmem:[#allocation2 + $0x1b0] sm:$0xff] %v1454
  %1519 = vst [vmem:[#allocation2 + $0x1f8] sm:$0xff] %v1455
  %1520 = vst [vmem:[#allocation2 + $0x240] sm:$0xff] %v1456
  %1521 = vst [vmem:[#allocation2 + $0x288] sm:$0xff] %v1457
  %1522 = vst [vmem:[#allocation2 + $0x2d0] sm:$0xff] %v1458
  %1523 = vst [vmem:[#allocation2 + $0x318] sm:$0xff] %v1459
  %1524 = vst [vmem:[#allocation2 + $0x360] sm:$0xff] %v1460
  %1525 = vst [vmem:[#allocation2 + $0x3a8] sm:$0xff] %v1461
  %1526 = vst [vmem:[#allocation2 + $0x3f0] sm:$0xff] %v1462
  %1527 = vst [vmem:[#allocation2 + $0x438] sm:$0xff] %v1463
  %1528 = vst [vmem:[#allocation2 + $0x480] sm:$0xff] %v1464
  %1529 = vst [vmem:[#allocation2 + $0x4c8] sm:$0xff] %v1465
  %1530 = vst [vmem:[#allocation2 + $0x510] sm:$0xff] %v1466
  %1531 = vst [vmem:[#allocation2 + $0x558] sm:$0xff] %v1467
  %1532 = vst [vmem:[#allocation2 + $0x5a0] sm:$0xff] %v1468
  %1533 = vst [vmem:[#allocation2 + $0x5e8] sm:$0xff] %v1469
  %1534 = vst [vmem:[#allocation2 + $0x630] sm:$0xff] %v1470
  %1535 = vst [vmem:[#allocation2 + $0x678] sm:$0xff] %v1471
  %1536 = vst [vmem:[#allocation2 + $0x6c0] sm:$0xff] %v1472
  %1537 = vst [vmem:[#allocation2 + $0x708] sm:$0xff] %v1473
  %1538 = vst [vmem:[#allocation2 + $0x750] sm:$0xff] %v1474
  %1539 = vst [vmem:[#allocation2 + $0x798] sm:$0xff] %v1475
  %1540 = vst [vmem:[#allocation2 + $0x7e0] sm:$0xff] %v1476
  %1541 = vst [vmem:[#allocation2 + $0x828] sm:$0xff] %v1477
  %1542 = vst [vmem:[#allocation2 + $0x870] sm:$0xff] %v1478
  %1543 = vst [vmem:[#allocation2 + $0x8b8] sm:$0xff] %v1479
  %1544 = vst [vmem:[#allocation2 + $0x900] sm:$0xff] %v1480
  %1545 = vst [vmem:[#allocation2 + $0x948] sm:$0xff] %v1481
  %1546 = vst [vmem:[#allocation2 + $0x990] sm:$0xff] %v1482
  %1547 = vst [vmem:[#allocation2 + $0x9d8] sm:$0xff] %v1483
  %1548 = vst [vmem:[#allocation2 + $0xa20] sm:$0xff] %v1484
  %1549 = vst [vmem:[#allocation2 + $0xa68] sm:$0xff] %v1485
  %1550 = vst [vmem:[#allocation2 + $0xab0] sm:$0xff] %v1486
  %1551 = vst [vmem:[#allocation2 + $0xaf8] sm:$0xff] %v1487
  %1552 = vst [vmem:[#allocation2 + $0xb40] sm:$0xff] %v1488
  %1553 = vst [vmem:[#allocation2 + $0xb88] sm:$0xff] %v1489
  %1554 = vst [vmem:[#allocation2 + $0xbd0] sm:$0xff] %v1490
  %1555 = vst [vmem:[#allocation2 + $0xc18] sm:$0xff] %v1491
  %1556 = vst [vmem:[#allocation2 + $0xc60] sm:$0xff] %v1492
  %1557 = vst [vmem:[#allocation2 + $0xca8] sm:$0xff] %v1493
  %1558 = vst [vmem:[#allocation2 + $0xcf0] sm:$0xff] %v1494
  %1559 = vst [vmem:[#allocation2 + $0xd38] sm:$0xff] %v1495
  %1560 = vst [vmem:[#allocation2 + $0xd80] sm:$0xff] %v1496
  %1561 = vst [vmem:[#allocation2 + $0xdc8] sm:$0xff] %v1497
  %1562 = vst [vmem:[#allocation2 + $0xe10] sm:$0xff] %v1498
  %1563 = vst [vmem:[#allocation2 + $0xe58] sm:$0xff] %v1499
  %1564 = vst [vmem:[#allocation2 + $0xea0] sm:$0xff] %v1500
  %1565 = vst [vmem:[#allocation2 + $0xee8] sm:$0xff] %v1501
  %1566 = vst [vmem:[#allocation2 + $0xf30] sm:$0xff] %v1502
  %1567 = vst [vmem:[#allocation2 + $0xf78] sm:$0xff] %v1503
  %1568 = vst [vmem:[#allocation2 + $0xfc0] sm:$0xff] %v1504
  %1569 = vst [vmem:[#allocation2 + $0x1008] sm:$0xff] %v1505
  %1570 = vst [vmem:[#allocation2 + $0x1050] sm:$0xff] %v1506
  %1571 = vst [vmem:[#allocation2 + $0x1098] sm:$0xff] %v1507
  %1572 = vst [vmem:[#allocation2 + $0x10e0] sm:$0xff] %v1508
  %1573 = vst [vmem:[#allocation2 + $0x1128] sm:$0xff] %v1509
  %1574 = vst [vmem:[#allocation2 + $0x1170] sm:$0xff] %v1510
  %1575 = vst [vmem:[#allocation2 + $0x11b8] sm:$0xff] %v1511
  %vm1576 = vcmp.ge.s32.totalorder %v357, 0
  %vm1577 = vcmp.ge.s32.totalorder %v358, 0
  %vm1578 = vcmp.ge.s32.totalorder %v359, 0
  %vm1579 = vcmp.ge.s32.totalorder %v360, 0
  %vm1580 = vcmp.ge.s32.totalorder %v361, 0
  %vm1581 = vcmp.ge.s32.totalorder %v362, 0
  %vm1582 = vcmp.ge.s32.totalorder %v363, 0
  %vm1583 = vcmp.ge.s32.totalorder %v364, 0
  %vm1584 = vcmp.ge.s32.totalorder %v365, 0
  %vm1585 = vcmp.ge.s32.totalorder %v366, 0
  %vm1586 = vcmp.ge.s32.totalorder %v367, 0
  %vm1587 = vcmp.ge.s32.totalorder %v368, 0
  %vm1588 = vcmp.ge.s32.totalorder %v369, 0
  %vm1589 = vcmp.ge.s32.totalorder %v370, 0
  %vm1590 = vcmp.ge.s32.totalorder %v371, 0
  %vm1591 = vcmp.ge.s32.totalorder %v372, 0
  %vm1592 = vcmp.ge.s32.totalorder %v373, 0
  %vm1593 = vcmp.ge.s32.totalorder %v374, 0
  %vm1594 = vcmp.ge.s32.totalorder %v375, 0
  %vm1595 = vcmp.ge.s32.totalorder %v376, 0
  %vm1596 = vcmp.ge.s32.totalorder %v377, 0
  %vm1597 = vcmp.ge.s32.totalorder %v378, 0
  %vm1598 = vcmp.ge.s32.totalorder %v379, 0
  %vm1599 = vcmp.ge.s32.totalorder %v380, 0
  %vm1600 = vcmp.ge.s32.totalorder %v381, 0
  %vm1601 = vcmp.ge.s32.totalorder %v382, 0
  %vm1602 = vcmp.ge.s32.totalorder %v383, 0
  %vm1603 = vcmp.ge.s32.totalorder %v384, 0
  %vm1604 = vcmp.ge.s32.totalorder %v385, 0
  %vm1605 = vcmp.ge.s32.totalorder %v386, 0
  %vm1606 = vcmp.ge.s32.totalorder %v387, 0
  %vm1607 = vcmp.ge.s32.totalorder %v388, 0
  %vm1608 = vcmp.ge.s32.totalorder %v389, 0
  %vm1609 = vcmp.ge.s32.totalorder %v390, 0
  %vm1610 = vcmp.ge.s32.totalorder %v391, 0
  %vm1611 = vcmp.ge.s32.totalorder %v392, 0
  %vm1612 = vcmp.ge.s32.totalorder %v393, 0
  %vm1613 = vcmp.ge.s32.totalorder %v394, 0
  %vm1614 = vcmp.ge.s32.totalorder %v395, 0
  %vm1615 = vcmp.ge.s32.totalorder %v396, 0
  %vm1616 = vcmp.ge.s32.totalorder %v397, 0
  %vm1617 = vcmp.ge.s32.totalorder %v398, 0
  %vm1618 = vcmp.ge.s32.totalorder %v399, 0
  %vm1619 = vcmp.ge.s32.totalorder %v400, 0
  %vm1620 = vcmp.ge.s32.totalorder %v401, 0
  %vm1621 = vcmp.ge.s32.totalorder %v402, 0
  %vm1622 = vcmp.ge.s32.totalorder %v403, 0
  %vm1623 = vcmp.ge.s32.totalorder %v404, 0
  %vm1624 = vcmp.ge.s32.totalorder %v405, 0
  %vm1625 = vcmp.ge.s32.totalorder %v406, 0
  %vm1626 = vcmp.ge.s32.totalorder %v407, 0
  %vm1627 = vcmp.ge.s32.totalorder %v408, 0
  %vm1628 = vcmp.ge.s32.totalorder %v409, 0
  %vm1629 = vcmp.ge.s32.totalorder %v410, 0
  %vm1630 = vcmp.ge.s32.totalorder %v411, 0
  %vm1631 = vcmp.ge.s32.totalorder %v412, 0
  %vm1632 = vcmp.ge.s32.totalorder %v413, 0
  %vm1633 = vcmp.ge.s32.totalorder %v414, 0
  %vm1634 = vcmp.ge.s32.totalorder %v415, 0
  %vm1635 = vcmp.ge.s32.totalorder %v416, 0
  %vm1636 = vcmp.ge.s32.totalorder %v417, 0
  %vm1637 = vcmp.ge.s32.totalorder %v418, 0
  %vm1638 = vcmp.ge.s32.totalorder %v419, 0
  %vm1639 = vcmp.ge.s32.totalorder %v420, 0
  %vm1640 = vmand %vm744, %vm1576
  %vm1641 = vmand %vm745, %vm1577
  %vm1642 = vmand %vm746, %vm1578
  %vm1643 = vmand %vm747, %vm1579
  %vm1644 = vmand %vm748, %vm1580
  %vm1645 = vmand %vm749, %vm1581
  %vm1646 = vmand %vm750, %vm1582
  %vm1647 = vmand %vm751, %vm1583
  %vm1648 = vmand %vm752, %vm1584
  %vm1649 = vmand %vm753, %vm1585
  %vm1650 = vmand %vm754, %vm1586
  %vm1651 = vmand %vm755, %vm1587
  %vm1652 = vmand %vm756, %vm1588
  %vm1653 = vmand %vm757, %vm1589
  %vm1654 = vmand %vm758, %vm1590
  %vm1655 = vmand %vm759, %vm1591
  %vm1656 = vmand %vm760, %vm1592
  %vm1657 = vmand %vm761, %vm1593
  %vm1658 = vmand %vm762, %vm1594
  %vm1659 = vmand %vm763, %vm1595
  %vm1660 = vmand %vm764, %vm1596
  %vm1661 = vmand %vm765, %vm1597
  %vm1662 = vmand %vm766, %vm1598
  %vm1663 = vmand %vm767, %vm1599
  %vm1664 = vmand %vm768, %vm1600
  %vm1665 = vmand %vm769, %vm1601
  %vm1666 = vmand %vm770, %vm1602
  %vm1667 = vmand %vm771, %vm1603
  %vm1668 = vmand %vm772, %vm1604
  %vm1669 = vmand %vm773, %vm1605
  %vm1670 = vmand %vm774, %vm1606
  %vm1671 = vmand %vm775, %vm1607
  %vm1672 = vmand %vm776, %vm1608
  %vm1673 = vmand %vm777, %vm1609
  %vm1674 = vmand %vm778, %vm1610
  %vm1675 = vmand %vm779, %vm1611
  %vm1676 = vmand %vm780, %vm1612
  %vm1677 = vmand %vm781, %vm1613
  %vm1678 = vmand %vm782, %vm1614
  %vm1679 = vmand %vm783, %vm1615
  %vm1680 = vmand %vm784, %vm1616
  %vm1681 = vmand %vm785, %vm1617
  %vm1682 = vmand %vm786, %vm1618
  %vm1683 = vmand %vm787, %vm1619
  %vm1684 = vmand %vm788, %vm1620
  %vm1685 = vmand %vm789, %vm1621
  %vm1686 = vmand %vm790, %vm1622
  %vm1687 = vmand %vm791, %vm1623
  %vm1688 = vmand %vm792, %vm1624
  %vm1689 = vmand %vm793, %vm1625
  %vm1690 = vmand %vm794, %vm1626
  %vm1691 = vmand %vm795, %vm1627
  %vm1692 = vmand %vm796, %vm1628
  %vm1693 = vmand %vm797, %vm1629
  %vm1694 = vmand %vm798, %vm1630
  %vm1695 = vmand %vm799, %vm1631
  %vm1696 = vmand %vm800, %vm1632
  %vm1697 = vmand %vm801, %vm1633
  %vm1698 = vmand %vm802, %vm1634
  %vm1699 = vmand %vm803, %vm1635
  %vm1700 = vmand %vm804, %vm1636
  %vm1701 = vmand %vm805, %vm1637
  %vm1702 = vmand %vm806, %vm1638
  %vm1703 = vmand %vm807, %vm1639
  %vm1704 = vcmp.lt.s32.totalorder %v357, 16
  %vm1705 = vcmp.lt.s32.totalorder %v358, 16
  %vm1706 = vcmp.lt.s32.totalorder %v359, 16
  %vm1707 = vcmp.lt.s32.totalorder %v360, 16
  %vm1708 = vcmp.lt.s32.totalorder %v361, 16
  %vm1709 = vcmp.lt.s32.totalorder %v362, 16
  %vm1710 = vcmp.lt.s32.totalorder %v363, 16
  %vm1711 = vcmp.lt.s32.totalorder %v364, 16
  %vm1712 = vcmp.lt.s32.totalorder %v365, 16
  %vm1713 = vcmp.lt.s32.totalorder %v366, 16
  %vm1714 = vcmp.lt.s32.totalorder %v367, 16
  %vm1715 = vcmp.lt.s32.totalorder %v368, 16
  %vm1716 = vcmp.lt.s32.totalorder %v369, 16
  %vm1717 = vcmp.lt.s32.totalorder %v370, 16
  %vm1718 = vcmp.lt.s32.totalorder %v371, 16
  %vm1719 = vcmp.lt.s32.totalorder %v372, 16
  %vm1720 = vcmp.lt.s32.totalorder %v373, 16
  %vm1721 = vcmp.lt.s32.totalorder %v374, 16
  %vm1722 = vcmp.lt.s32.totalorder %v375, 16
  %vm1723 = vcmp.lt.s32.totalorder %v376, 16
  %vm1724 = vcmp.lt.s32.totalorder %v377, 16
  %vm1725 = vcmp.lt.s32.totalorder %v378, 16
  %vm1726 = vcmp.lt.s32.totalorder %v379, 16
  %vm1727 = vcmp.lt.s32.totalorder %v380, 16
  %vm1728 = vcmp.lt.s32.totalorder %v381, 16
  %vm1729 = vcmp.lt.s32.totalorder %v382, 16
  %vm1730 = vcmp.lt.s32.totalorder %v383, 16
  %vm1731 = vcmp.lt.s32.totalorder %v384, 16
  %vm1732 = vcmp.lt.s32.totalorder %v385, 16
  %vm1733 = vcmp.lt.s32.totalorder %v386, 16
  %vm1734 = vcmp.lt.s32.totalorder %v387, 16
  %vm1735 = vcmp.lt.s32.totalorder %v388, 16
  %vm1736 = vcmp.lt.s32.totalorder %v389, 16
  %vm1737 = vcmp.lt.s32.totalorder %v390, 16
  %vm1738 = vcmp.lt.s32.totalorder %v391, 16
  %vm1739 = vcmp.lt.s32.totalorder %v392, 16
  %vm1740 = vcmp.lt.s32.totalorder %v393, 16
  %vm1741 = vcmp.lt.s32.totalorder %v394, 16
  %vm1742 = vcmp.lt.s32.totalorder %v395, 16
  %vm1743 = vcmp.lt.s32.totalorder %v396, 16
  %vm1744 = vcmp.lt.s32.totalorder %v397, 16
  %vm1745 = vcmp.lt.s32.totalorder %v398, 16
  %vm1746 = vcmp.lt.s32.totalorder %v399, 16
  %vm1747 = vcmp.lt.s32.totalorder %v400, 16
  %vm1748 = vcmp.lt.s32.totalorder %v401, 16
  %vm1749 = vcmp.lt.s32.totalorder %v402, 16
  %vm1750 = vcmp.lt.s32.totalorder %v403, 16
  %vm1751 = vcmp.lt.s32.totalorder %v404, 16
  %vm1752 = vcmp.lt.s32.totalorder %v405, 16
  %vm1753 = vcmp.lt.s32.totalorder %v406, 16
  %vm1754 = vcmp.lt.s32.totalorder %v407, 16
  %vm1755 = vcmp.lt.s32.totalorder %v408, 16
  %vm1756 = vcmp.lt.s32.totalorder %v409, 16
  %vm1757 = vcmp.lt.s32.totalorder %v410, 16
  %vm1758 = vcmp.lt.s32.totalorder %v411, 16
  %vm1759 = vcmp.lt.s32.totalorder %v412, 16
  %vm1760 = vcmp.lt.s32.totalorder %v413, 16
  %vm1761 = vcmp.lt.s32.totalorder %v414, 16
  %vm1762 = vcmp.lt.s32.totalorder %v415, 16
  %vm1763 = vcmp.lt.s32.totalorder %v416, 16
  %vm1764 = vcmp.lt.s32.totalorder %v417, 16
  %vm1765 = vcmp.lt.s32.totalorder %v418, 16
  %vm1766 = vcmp.lt.s32.totalorder %v419, 16
  %vm1767 = vcmp.lt.s32.totalorder %v420, 16
  %vm1768 = vmand %vm1640, %vm1704
  %vm1769 = vmand %vm1641, %vm1705
  %vm1770 = vmand %vm1642, %vm1706
  %vm1771 = vmand %vm1643, %vm1707
  %vm1772 = vmand %vm1644, %vm1708
  %vm1773 = vmand %vm1645, %vm1709
  %vm1774 = vmand %vm1646, %vm1710
  %vm1775 = vmand %vm1647, %vm1711
  %vm1776 = vmand %vm1648, %vm1712
  %vm1777 = vmand %vm1649, %vm1713
  %vm1778 = vmand %vm1650, %vm1714
  %vm1779 = vmand %vm1651, %vm1715
  %vm1780 = vmand %vm1652, %vm1716
  %vm1781 = vmand %vm1653, %vm1717
  %vm1782 = vmand %vm1654, %vm1718
  %vm1783 = vmand %vm1655, %vm1719
  %vm1784 = vmand %vm1656, %vm1720
  %vm1785 = vmand %vm1657, %vm1721
  %vm1786 = vmand %vm1658, %vm1722
  %vm1787 = vmand %vm1659, %vm1723
  %vm1788 = vmand %vm1660, %vm1724
  %vm1789 = vmand %vm1661, %vm1725
  %vm1790 = vmand %vm1662, %vm1726
  %vm1791 = vmand %vm1663, %vm1727
  %vm1792 = vmand %vm1664, %vm1728
  %vm1793 = vmand %vm1665, %vm1729
  %vm1794 = vmand %vm1666, %vm1730
  %vm1795 = vmand %vm1667, %vm1731
  %vm1796 = vmand %vm1668, %vm1732
  %vm1797 = vmand %vm1669, %vm1733
  %vm1798 = vmand %vm1670, %vm1734
  %vm1799 = vmand %vm1671, %vm1735
  %vm1800 = vmand %vm1672, %vm1736
  %vm1801 = vmand %vm1673, %vm1737
  %vm1802 = vmand %vm1674, %vm1738
  %vm1803 = vmand %vm1675, %vm1739
  %vm1804 = vmand %vm1676, %vm1740
  %vm1805 = vmand %vm1677, %vm1741
  %vm1806 = vmand %vm1678, %vm1742
  %vm1807 = vmand %vm1679, %vm1743
  %vm1808 = vmand %vm1680, %vm1744
  %vm1809 = vmand %vm1681, %vm1745
  %vm1810 = vmand %vm1682, %vm1746
  %vm1811 = vmand %vm1683, %vm1747
  %vm1812 = vmand %vm1684, %vm1748
  %vm1813 = vmand %vm1685, %vm1749
  %vm1814 = vmand %vm1686, %vm1750
  %vm1815 = vmand %vm1687, %vm1751
  %vm1816 = vmand %vm1688, %vm1752
  %vm1817 = vmand %vm1689, %vm1753
  %vm1818 = vmand %vm1690, %vm1754
  %vm1819 = vmand %vm1691, %vm1755
  %vm1820 = vmand %vm1692, %vm1756
  %vm1821 = vmand %vm1693, %vm1757
  %vm1822 = vmand %vm1694, %vm1758
  %vm1823 = vmand %vm1695, %vm1759
  %vm1824 = vmand %vm1696, %vm1760
  %vm1825 = vmand %vm1697, %vm1761
  %vm1826 = vmand %vm1698, %vm1762
  %vm1827 = vmand %vm1699, %vm1763
  %vm1828 = vmand %vm1700, %vm1764
  %vm1829 = vmand %vm1701, %vm1765
  %vm1830 = vmand %vm1702, %vm1766
  %vm1831 = vmand %vm1703, %vm1767
  %v1832 = vsel %vm1768, 1, 0
  %v1833 = vsel %vm1769, 1, 0
  %v1834 = vsel %vm1770, 1, 0
  %v1835 = vsel %vm1771, 1, 0
  %v1836 = vsel %vm1772, 1, 0
  %v1837 = vsel %vm1773, 1, 0
  %v1838 = vsel %vm1774, 1, 0
  %v1839 = vsel %vm1775, 1, 0
  %v1840 = vsel %vm1776, 1, 0
  %v1841 = vsel %vm1777, 1, 0
  %v1842 = vsel %vm1778, 1, 0
  %v1843 = vsel %vm1779, 1, 0
  %v1844 = vsel %vm1780, 1, 0
  %v1845 = vsel %vm1781, 1, 0
  %v1846 = vsel %vm1782, 1, 0
  %v1847 = vsel %vm1783, 1, 0
  %v1848 = vsel %vm1784, 1, 0
  %v1849 = vsel %vm1785, 1, 0
  %v1850 = vsel %vm1786, 1, 0
  %v1851 = vsel %vm1787, 1, 0
  %v1852 = vsel %vm1788, 1, 0
  %v1853 = vsel %vm1789, 1, 0
  %v1854 = vsel %vm1790, 1, 0
  %v1855 = vsel %vm1791, 1, 0
  %v1856 = vsel %vm1792, 1, 0
  %v1857 = vsel %vm1793, 1, 0
  %v1858 = vsel %vm1794, 1, 0
  %v1859 = vsel %vm1795, 1, 0
  %v1860 = vsel %vm1796, 1, 0
  %v1861 = vsel %vm1797, 1, 0
  %v1862 = vsel %vm1798, 1, 0
  %v1863 = vsel %vm1799, 1, 0
  %v1864 = vsel %vm1800, 1, 0
  %v1865 = vsel %vm1801, 1, 0
  %v1866 = vsel %vm1802, 1, 0
  %v1867 = vsel %vm1803, 1, 0
  %v1868 = vsel %vm1804, 1, 0
  %v1869 = vsel %vm1805, 1, 0
  %v1870 = vsel %vm1806, 1, 0
  %v1871 = vsel %vm1807, 1, 0
  %v1872 = vsel %vm1808, 1, 0
  %v1873 = vsel %vm1809, 1, 0
  %v1874 = vsel %vm1810, 1, 0
  %v1875 = vsel %vm1811, 1, 0
  %v1876 = vsel %vm1812, 1, 0
  %v1877 = vsel %vm1813, 1, 0
  %v1878 = vsel %vm1814, 1, 0
  %v1879 = vsel %vm1815, 1, 0
  %v1880 = vsel %vm1816, 1, 0
  %v1881 = vsel %vm1817, 1, 0
  %v1882 = vsel %vm1818, 1, 0
  %v1883 = vsel %vm1819, 1, 0
  %v1884 = vsel %vm1820, 1, 0
  %v1885 = vsel %vm1821, 1, 0
  %v1886 = vsel %vm1822, 1, 0
  %v1887 = vsel %vm1823, 1, 0
  %v1888 = vsel %vm1824, 1, 0
  %v1889 = vsel %vm1825, 1, 0
  %v1890 = vsel %vm1826, 1, 0
  %v1891 = vsel %vm1827, 1, 0
  %v1892 = vsel %vm1828, 1, 0
  %v1893 = vsel %vm1829, 1, 0
  %v1894 = vsel %vm1830, 1, 0
  %v1895 = vsel %vm1831, 1, 0
  %1896 = vset.pattern.permute.xlu0 0
  %1897 = vperm.xlu0 %1896, %v1832
  %v1898 = vpop.permute.xlu0 %1897
  %1899 = vset.pattern.permute.xlu0 0
  %1900 = vperm.xlu0 %1899, %v1833
  %v1901 = vpop.permute.xlu0 %1900
  %1902 = vset.pattern.permute.xlu0 0
  %1903 = vperm.xlu0 %1902, %v1834
  %v1904 = vpop.permute.xlu0 %1903
  %1905 = vset.pattern.permute.xlu0 0
  %1906 = vperm.xlu0 %1905, %v1835
  %v1907 = vpop.permute.xlu0 %1906
  %1908 = vset.pattern.permute.xlu0 0
  %1909 = vperm.xlu0 %1908, %v1836
  %v1910 = vpop.permute.xlu0 %1909
  %1911 = vset.pattern.permute.xlu0 0
  %1912 = vperm.xlu0 %1911, %v1837
  %v1913 = vpop.permute.xlu0 %1912
  %1914 = vset.pattern.permute.xlu0 0
  %1915 = vperm.xlu0 %1914, %v1838
  %v1916 = vpop.permute.xlu0 %1915
  %1917 = vset.pattern.permute.xlu0 0
  %1918 = vperm.xlu0 %1917, %v1839
  %v1919 = vpop.permute.xlu0 %1918
  %1920 = vset.pattern.permute.xlu0 0
  %1921 = vperm.xlu0 %1920, %v1840
  %v1922 = vpop.permute.xlu0 %1921
  %1923 = vset.pattern.permute.xlu0 0
  %1924 = vperm.xlu0 %1923, %v1841
  %v1925 = vpop.permute.xlu0 %1924
  %1926 = vset.pattern.permute.xlu0 0
  %1927 = vperm.xlu0 %1926, %v1842
  %v1928 = vpop.permute.xlu0 %1927
  %1929 = vset.pattern.permute.xlu0 0
  %1930 = vperm.xlu0 %1929, %v1843
  %v1931 = vpop.permute.xlu0 %1930
  %1932 = vset.pattern.permute.xlu0 0
  %1933 = vperm.xlu0 %1932, %v1844
  %v1934 = vpop.permute.xlu0 %1933
  %1935 = vset.pattern.permute.xlu0 0
  %1936 = vperm.xlu0 %1935, %v1845
  %v1937 = vpop.permute.xlu0 %1936
  %1938 = vset.pattern.permute.xlu0 0
  %1939 = vperm.xlu0 %1938, %v1846
  %v1940 = vpop.permute.xlu0 %1939
  %1941 = vset.pattern.permute.xlu0 0
  %1942 = vperm.xlu0 %1941, %v1847
  %v1943 = vpop.permute.xlu0 %1942
  %1944 = vset.pattern.permute.xlu0 0
  %1945 = vperm.xlu0 %1944, %v1848
  %v1946 = vpop.permute.xlu0 %1945
  %1947 = vset.pattern.permute.xlu0 0
  %1948 = vperm.xlu0 %1947, %v1849
  %v1949 = vpop.permute.xlu0 %1948
  %1950 = vset.pattern.permute.xlu0 0
  %1951 = vperm.xlu0 %1950, %v1850
  %v1952 = vpop.permute.xlu0 %1951
  %1953 = vset.pattern.permute.xlu0 0
  %1954 = vperm.xlu0 %1953, %v1851
  %v1955 = vpop.permute.xlu0 %1954
  %1956 = vset.pattern.permute.xlu0 0
  %1957 = vperm.xlu0 %1956, %v1852
  %v1958 = vpop.permute.xlu0 %1957
  %1959 = vset.pattern.permute.xlu0 0
  %1960 = vperm.xlu0 %1959, %v1853
  %v1961 = vpop.permute.xlu0 %1960
  %1962 = vset.pattern.permute.xlu0 0
  %1963 = vperm.xlu0 %1962, %v1854
  %v1964 = vpop.permute.xlu0 %1963
  %1965 = vset.pattern.permute.xlu0 0
  %1966 = vperm.xlu0 %1965, %v1855
  %v1967 = vpop.permute.xlu0 %1966
  %1968 = vset.pattern.permute.xlu0 0
  %1969 = vperm.xlu0 %1968, %v1856
  %v1970 = vpop.permute.xlu0 %1969
  %1971 = vset.pattern.permute.xlu0 0
  %1972 = vperm.xlu0 %1971, %v1857
  %v1973 = vpop.permute.xlu0 %1972
  %1974 = vset.pattern.permute.xlu0 0
  %1975 = vperm.xlu0 %1974, %v1858
  %v1976 = vpop.permute.xlu0 %1975
  %1977 = vset.pattern.permute.xlu0 0
  %1978 = vperm.xlu0 %1977, %v1859
  %v1979 = vpop.permute.xlu0 %1978
  %1980 = vset.pattern.permute.xlu0 0
  %1981 = vperm.xlu0 %1980, %v1860
  %v1982 = vpop.permute.xlu0 %1981
  %1983 = vset.pattern.permute.xlu0 0
  %1984 = vperm.xlu0 %1983, %v1861
  %v1985 = vpop.permute.xlu0 %1984
  %1986 = vset.pattern.permute.xlu0 0
  %1987 = vperm.xlu0 %1986, %v1862
  %v1988 = vpop.permute.xlu0 %1987
  %1989 = vset.pattern.permute.xlu0 0
  %1990 = vperm.xlu0 %1989, %v1863
  %v1991 = vpop.permute.xlu0 %1990
  %1992 = vset.pattern.permute.xlu0 0
  %1993 = vperm.xlu0 %1992, %v1864
  %v1994 = vpop.permute.xlu0 %1993
  %1995 = vset.pattern.permute.xlu0 0
  %1996 = vperm.xlu0 %1995, %v1865
  %v1997 = vpop.permute.xlu0 %1996
  %1998 = vset.pattern.permute.xlu0 0
  %1999 = vperm.xlu0 %1998, %v1866
  %v2000 = vpop.permute.xlu0 %1999
  %2001 = vset.pattern.permute.xlu0 0
  %2002 = vperm.xlu0 %2001, %v1867
  %v2003 = vpop.permute.xlu0 %2002
  %2004 = vset.pattern.permute.xlu0 0
  %2005 = vperm.xlu0 %2004, %v1868
  %v2006 = vpop.permute.xlu0 %2005
  %2007 = vset.pattern.permute.xlu0 0
  %2008 = vperm.xlu0 %2007, %v1869
  %v2009 = vpop.permute.xlu0 %2008
  %2010 = vset.pattern.permute.xlu0 0
  %2011 = vperm.xlu0 %2010, %v1870
  %v2012 = vpop.permute.xlu0 %2011
  %2013 = vset.pattern.permute.xlu0 0
  %2014 = vperm.xlu0 %2013, %v1871
  %v2015 = vpop.permute.xlu0 %2014
  %2016 = vset.pattern.permute.xlu0 0
  %2017 = vperm.xlu0 %2016, %v1872
  %v2018 = vpop.permute.xlu0 %2017
  %2019 = vset.pattern.permute.xlu0 0
  %2020 = vperm.xlu0 %2019, %v1873
  %v2021 = vpop.permute.xlu0 %2020
  %2022 = vset.pattern.permute.xlu0 0
  %2023 = vperm.xlu0 %2022, %v1874
  %v2024 = vpop.permute.xlu0 %2023
  %2025 = vset.pattern.permute.xlu0 0
  %2026 = vperm.xlu0 %2025, %v1875
  %v2027 = vpop.permute.xlu0 %2026
  %2028 = vset.pattern.permute.xlu0 0
  %2029 = vperm.xlu0 %2028, %v1876
  %v2030 = vpop.permute.xlu0 %2029
  %2031 = vset.pattern.permute.xlu0 0
  %2032 = vperm.xlu0 %2031, %v1877
  %v2033 = vpop.permute.xlu0 %2032
  %2034 = vset.pattern.permute.xlu0 0
  %2035 = vperm.xlu0 %2034, %v1878
  %v2036 = vpop.permute.xlu0 %2035
  %2037 = vset.pattern.permute.xlu0 0
  %2038 = vperm.xlu0 %2037, %v1879
  %v2039 = vpop.permute.xlu0 %2038
  %2040 = vset.pattern.permute.xlu0 0
  %2041 = vperm.xlu0 %2040, %v1880
  %v2042 = vpop.permute.xlu0 %2041
  %2043 = vset.pattern.permute.xlu0 0
  %2044 = vperm.xlu0 %2043, %v1881
  %v2045 = vpop.permute.xlu0 %2044
  %2046 = vset.pattern.permute.xlu0 0
  %2047 = vperm.xlu0 %2046, %v1882
  %v2048 = vpop.permute.xlu0 %2047
  %2049 = vset.pattern.permute.xlu0 0
  %2050 = vperm.xlu0 %2049, %v1883
  %v2051 = vpop.permute.xlu0 %2050
  %2052 = vset.pattern.permute.xlu0 0
  %2053 = vperm.xlu0 %2052, %v1884
  %v2054 = vpop.permute.xlu0 %2053
  %2055 = vset.pattern.permute.xlu0 0
  %2056 = vperm.xlu0 %2055, %v1885
  %v2057 = vpop.permute.xlu0 %2056
  %2058 = vset.pattern.permute.xlu0 0
  %2059 = vperm.xlu0 %2058, %v1886
  %v2060 = vpop.permute.xlu0 %2059
  %2061 = vset.pattern.permute.xlu0 0
  %2062 = vperm.xlu0 %2061, %v1887
  %v2063 = vpop.permute.xlu0 %2062
  %2064 = vset.pattern.permute.xlu0 0
  %2065 = vperm.xlu0 %2064, %v1888
  %v2066 = vpop.permute.xlu0 %2065
  %2067 = vset.pattern.permute.xlu0 0
  %2068 = vperm.xlu0 %2067, %v1889
  %v2069 = vpop.permute.xlu0 %2068
  %2070 = vset.pattern.permute.xlu0 0
  %2071 = vperm.xlu0 %2070, %v1890
  %v2072 = vpop.permute.xlu0 %2071
  %2073 = vset.pattern.permute.xlu0 0
  %2074 = vperm.xlu0 %2073, %v1891
  %v2075 = vpop.permute.xlu0 %2074
  %2076 = vset.pattern.permute.xlu0 0
  %2077 = vperm.xlu0 %2076, %v1892
  %v2078 = vpop.permute.xlu0 %2077
  %2079 = vset.pattern.permute.xlu0 0
  %2080 = vperm.xlu0 %2079, %v1893
  %v2081 = vpop.permute.xlu0 %2080
  %2082 = vset.pattern.permute.xlu0 0
  %2083 = vperm.xlu0 %2082, %v1894
  %v2084 = vpop.permute.xlu0 %2083
  %2085 = vset.pattern.permute.xlu0 0
  %2086 = vperm.xlu0 %2085, %v1895
  %v2087 = vpop.permute.xlu0 %2086
  %vm2088 = vcmp.eq.s32.totalorder %v1898, 1
  %vm2089 = vcmp.eq.s32.totalorder %v1901, 1
  %vm2090 = vcmp.eq.s32.totalorder %v1904, 1
  %vm2091 = vcmp.eq.s32.totalorder %v1907, 1
  %vm2092 = vcmp.eq.s32.totalorder %v1910, 1
  %vm2093 = vcmp.eq.s32.totalorder %v1913, 1
  %vm2094 = vcmp.eq.s32.totalorder %v1916, 1
  %vm2095 = vcmp.eq.s32.totalorder %v1919, 1
  %vm2096 = vcmp.eq.s32.totalorder %v1922, 1
  %vm2097 = vcmp.eq.s32.totalorder %v1925, 1
  %vm2098 = vcmp.eq.s32.totalorder %v1928, 1
  %vm2099 = vcmp.eq.s32.totalorder %v1931, 1
  %vm2100 = vcmp.eq.s32.totalorder %v1934, 1
  %vm2101 = vcmp.eq.s32.totalorder %v1937, 1
  %vm2102 = vcmp.eq.s32.totalorder %v1940, 1
  %vm2103 = vcmp.eq.s32.totalorder %v1943, 1
  %vm2104 = vcmp.eq.s32.totalorder %v1946, 1
  %vm2105 = vcmp.eq.s32.totalorder %v1949, 1
  %vm2106 = vcmp.eq.s32.totalorder %v1952, 1
  %vm2107 = vcmp.eq.s32.totalorder %v1955, 1
  %vm2108 = vcmp.eq.s32.totalorder %v1958, 1
  %vm2109 = vcmp.eq.s32.totalorder %v1961, 1
  %vm2110 = vcmp.eq.s32.totalorder %v1964, 1
  %vm2111 = vcmp.eq.s32.totalorder %v1967, 1
  %vm2112 = vcmp.eq.s32.totalorder %v1970, 1
  %vm2113 = vcmp.eq.s32.totalorder %v1973, 1
  %vm2114 = vcmp.eq.s32.totalorder %v1976, 1
  %vm2115 = vcmp.eq.s32.totalorder %v1979, 1
  %vm2116 = vcmp.eq.s32.totalorder %v1982, 1
  %vm2117 = vcmp.eq.s32.totalorder %v1985, 1
  %vm2118 = vcmp.eq.s32.totalorder %v1988, 1
  %vm2119 = vcmp.eq.s32.totalorder %v1991, 1
  %vm2120 = vcmp.eq.s32.totalorder %v1994, 1
  %vm2121 = vcmp.eq.s32.totalorder %v1997, 1
  %vm2122 = vcmp.eq.s32.totalorder %v2000, 1
  %vm2123 = vcmp.eq.s32.totalorder %v2003, 1
  %vm2124 = vcmp.eq.s32.totalorder %v2006, 1
  %vm2125 = vcmp.eq.s32.totalorder %v2009, 1
  %vm2126 = vcmp.eq.s32.totalorder %v2012, 1
  %vm2127 = vcmp.eq.s32.totalorder %v2015, 1
  %vm2128 = vcmp.eq.s32.totalorder %v2018, 1
  %vm2129 = vcmp.eq.s32.totalorder %v2021, 1
  %vm2130 = vcmp.eq.s32.totalorder %v2024, 1
  %vm2131 = vcmp.eq.s32.totalorder %v2027, 1
  %vm2132 = vcmp.eq.s32.totalorder %v2030, 1
  %vm2133 = vcmp.eq.s32.totalorder %v2033, 1
  %vm2134 = vcmp.eq.s32.totalorder %v2036, 1
  %vm2135 = vcmp.eq.s32.totalorder %v2039, 1
  %vm2136 = vcmp.eq.s32.totalorder %v2042, 1
  %vm2137 = vcmp.eq.s32.totalorder %v2045, 1
  %vm2138 = vcmp.eq.s32.totalorder %v2048, 1
  %vm2139 = vcmp.eq.s32.totalorder %v2051, 1
  %vm2140 = vcmp.eq.s32.totalorder %v2054, 1
  %vm2141 = vcmp.eq.s32.totalorder %v2057, 1
  %vm2142 = vcmp.eq.s32.totalorder %v2060, 1
  %vm2143 = vcmp.eq.s32.totalorder %v2063, 1
  %vm2144 = vcmp.eq.s32.totalorder %v2066, 1
  %vm2145 = vcmp.eq.s32.totalorder %v2069, 1
  %vm2146 = vcmp.eq.s32.totalorder %v2072, 1
  %vm2147 = vcmp.eq.s32.totalorder %v2075, 1
  %vm2148 = vcmp.eq.s32.totalorder %v2078, 1
  %vm2149 = vcmp.eq.s32.totalorder %v2081, 1
  %vm2150 = vcmp.eq.s32.totalorder %v2084, 1
  %vm2151 = vcmp.eq.s32.totalorder %v2087, 1
  %v2152 = vsel %vm2088, %v291, 0.0
  %v2153 = vsel %vm2089, %v292, 0.0
  %v2154 = vsel %vm2090, %v229, 0.0
  %v2155 = vsel %vm2091, %v230, 0.0
  %v2156 = vsel %vm2092, %v231, 0.0
  %v2157 = vsel %vm2093, %v232, 0.0
  %v2158 = vsel %vm2094, %v233, 0.0
  %v2159 = vsel %vm2095, %v234, 0.0
  %v2160 = vsel %vm2096, %v235, 0.0
  %v2161 = vsel %vm2097, %v236, 0.0
  %v2162 = vsel %vm2098, %v237, 0.0
  %v2163 = vsel %vm2099, %v238, 0.0
  %v2164 = vsel %vm2100, %v239, 0.0
  %v2165 = vsel %vm2101, %v240, 0.0
  %v2166 = vsel %vm2102, %v241, 0.0
  %v2167 = vsel %vm2103, %v242, 0.0
  %v2168 = vsel %vm2104, %v243, 0.0
  %v2169 = vsel %vm2105, %v244, 0.0
  %v2170 = vsel %vm2106, %v245, 0.0
  %v2171 = vsel %vm2107, %v246, 0.0
  %v2172 = vsel %vm2108, %v247, 0.0
  %v2173 = vsel %vm2109, %v248, 0.0
  %v2174 = vsel %vm2110, %v249, 0.0
  %v2175 = vsel %vm2111, %v250, 0.0
  %v2176 = vsel %vm2112, %v251, 0.0
  %v2177 = vsel %vm2113, %v252, 0.0
  %v2178 = vsel %vm2114, %v253, 0.0
  %v2179 = vsel %vm2115, %v254, 0.0
  %v2180 = vsel %vm2116, %v255, 0.0
  %v2181 = vsel %vm2117, %v256, 0.0
  %v2182 = vsel %vm2118, %v257, 0.0
  %v2183 = vsel %vm2119, %v258, 0.0
  %v2184 = vsel %vm2120, %v259, 0.0
  %v2185 = vsel %vm2121, %v260, 0.0
  %v2186 = vsel %vm2122, %v261, 0.0
  %v2187 = vsel %vm2123, %v262, 0.0
  %v2188 = vsel %vm2124, %v263, 0.0
  %v2189 = vsel %vm2125, %v264, 0.0
  %v2190 = vsel %vm2126, %v265, 0.0
  %v2191 = vsel %vm2127, %v266, 0.0
  %v2192 = vsel %vm2128, %v267, 0.0
  %v2193 = vsel %vm2129, %v268, 0.0
  %v2194 = vsel %vm2130, %v269, 0.0
  %v2195 = vsel %vm2131, %v270, 0.0
  %v2196 = vsel %vm2132, %v271, 0.0
  %v2197 = vsel %vm2133, %v272, 0.0
  %v2198 = vsel %vm2134, %v273, 0.0
  %v2199 = vsel %vm2135, %v274, 0.0
  %v2200 = vsel %vm2136, %v275, 0.0
  %v2201 = vsel %vm2137, %v276, 0.0
  %v2202 = vsel %vm2138, %v277, 0.0
  %v2203 = vsel %vm2139, %v278, 0.0
  %v2204 = vsel %vm2140, %v279, 0.0
  %v2205 = vsel %vm2141, %v280, 0.0
  %v2206 = vsel %vm2142, %v281, 0.0
  %v2207 = vsel %vm2143, %v282, 0.0
  %v2208 = vsel %vm2144, %v283, 0.0
  %v2209 = vsel %vm2145, %v284, 0.0
  %v2210 = vsel %vm2146, %v285, 0.0
  %v2211 = vsel %vm2147, %v286, 0.0
  %v2212 = vsel %vm2148, %v287, 0.0
  %v2213 = vsel %vm2149, %v288, 0.0
  %v2214 = vsel %vm2150, %v289, 0.0
  %v2215 = vsel %vm2151, %v290, 0.0
  %2216 = vst [vmem:[#allocation2 + $0x8] sm:$0xff] %v2152
  %2217 = vst [vmem:[#allocation2 + $0x50] sm:$0xff] %v2153
  %2218 = vst [vmem:[#allocation2 + $0x98] sm:$0xff] %v2154
  %2219 = vst [vmem:[#allocation2 + $0xe0] sm:$0xff] %v2155
  %2220 = vst [vmem:[#allocation2 + $0x128] sm:$0xff] %v2156
  %2221 = vst [vmem:[#allocation2 + $0x170] sm:$0xff] %v2157
  %2222 = vst [vmem:[#allocation2 + $0x1b8] sm:$0xff] %v2158
  %2223 = vst [vmem:[#allocation2 + $0x200] sm:$0xff] %v2159
  %2224 = vst [vmem:[#allocation2 + $0x248] sm:$0xff] %v2160
  %2225 = vst [vmem:[#allocation2 + $0x290] sm:$0xff] %v2161
  %2226 = vst [vmem:[#allocation2 + $0x2d8] sm:$0xff] %v2162
  %2227 = vst [vmem:[#allocation2 + $0x320] sm:$0xff] %v2163
  %2228 = vst [vmem:[#allocation2 + $0x368] sm:$0xff] %v2164
  %2229 = vst [vmem:[#allocation2 + $0x3b0] sm:$0xff] %v2165
  %2230 = vst [vmem:[#allocation2 + $0x3f8] sm:$0xff] %v2166
  %2231 = vst [vmem:[#allocation2 + $0x440] sm:$0xff] %v2167
  %2232 = vst [vmem:[#allocation2 + $0x488] sm:$0xff] %v2168
  %2233 = vst [vmem:[#allocation2 + $0x4d0] sm:$0xff] %v2169
  %2234 = vst [vmem:[#allocation2 + $0x518] sm:$0xff] %v2170
  %2235 = vst [vmem:[#allocation2 + $0x560] sm:$0xff] %v2171
  %2236 = vst [vmem:[#allocation2 + $0x5a8] sm:$0xff] %v2172
  %2237 = vst [vmem:[#allocation2 + $0x5f0] sm:$0xff] %v2173
  %2238 = vst [vmem:[#allocation2 + $0x638] sm:$0xff] %v2174
  %2239 = vst [vmem:[#allocation2 + $0x680] sm:$0xff] %v2175
  %2240 = vst [vmem:[#allocation2 + $0x6c8] sm:$0xff] %v2176
  %2241 = vst [vmem:[#allocation2 + $0x710] sm:$0xff] %v2177
  %2242 = vst [vmem:[#allocation2 + $0x758] sm:$0xff] %v2178
  %2243 = vst [vmem:[#allocation2 + $0x7a0] sm:$0xff] %v2179
  %2244 = vst [vmem:[#allocation2 + $0x7e8] sm:$0xff] %v2180
  %2245 = vst [vmem:[#allocation2 + $0x830] sm:$0xff] %v2181
  %2246 = vst [vmem:[#allocation2 + $0x878] sm:$0xff] %v2182
  %2247 = vst [vmem:[#allocation2 + $0x8c0] sm:$0xff] %v2183
  %2248 = vst [vmem:[#allocation2 + $0x908] sm:$0xff] %v2184
  %2249 = vst [vmem:[#allocation2 + $0x950] sm:$0xff] %v2185
  %2250 = vst [vmem:[#allocation2 + $0x998] sm:$0xff] %v2186
  %2251 = vst [vmem:[#allocation2 + $0x9e0] sm:$0xff] %v2187
  %2252 = vst [vmem:[#allocation2 + $0xa28] sm:$0xff] %v2188
  %2253 = vst [vmem:[#allocation2 + $0xa70] sm:$0xff] %v2189
  %2254 = vst [vmem:[#allocation2 + $0xab8] sm:$0xff] %v2190
  %2255 = vst [vmem:[#allocation2 + $0xb00] sm:$0xff] %v2191
  %2256 = vst [vmem:[#allocation2 + $0xb48] sm:$0xff] %v2192
  %2257 = vst [vmem:[#allocation2 + $0xb90] sm:$0xff] %v2193
  %2258 = vst [vmem:[#allocation2 + $0xbd8] sm:$0xff] %v2194
  %2259 = vst [vmem:[#allocation2 + $0xc20] sm:$0xff] %v2195
  %2260 = vst [vmem:[#allocation2 + $0xc68] sm:$0xff] %v2196
  %2261 = vst [vmem:[#allocation2 + $0xcb0] sm:$0xff] %v2197
  %2262 = vst [vmem:[#allocation2 + $0xcf8] sm:$0xff] %v2198
  %2263 = vst [vmem:[#allocation2 + $0xd40] sm:$0xff] %v2199
  %2264 = vst [vmem:[#allocation2 + $0xd88] sm:$0xff] %v2200
  %2265 = vst [vmem:[#allocation2 + $0xdd0] sm:$0xff] %v2201
  %2266 = vst [vmem:[#allocation2 + $0xe18] sm:$0xff] %v2202
  %2267 = vst [vmem:[#allocation2 + $0xe60] sm:$0xff] %v2203
  %2268 = vst [vmem:[#allocation2 + $0xea8] sm:$0xff] %v2204
  %2269 = vst [vmem:[#allocation2 + $0xef0] sm:$0xff] %v2205
  %2270 = vst [vmem:[#allocation2 + $0xf38] sm:$0xff] %v2206
  %2271 = vst [vmem:[#allocation2 + $0xf80] sm:$0xff] %v2207
  %2272 = vst [vmem:[#allocation2 + $0xfc8] sm:$0xff] %v2208
  %2273 = vst [vmem:[#allocation2 + $0x1010] sm:$0xff] %v2209
  %2274 = vst [vmem:[#allocation2 + $0x1058] sm:$0xff] %v2210
  %2275 = vst [vmem:[#allocation2 + $0x10a0] sm:$0xff] %v2211
  %2276 = vst [vmem:[#allocation2 + $0x10e8] sm:$0xff] %v2212
  %2277 = vst [vmem:[#allocation2 + $0x1130] sm:$0xff] %v2213
  %2278 = vst [vmem:[#allocation2 + $0x1178] sm:$0xff] %v2214
  %2279 = vst [vmem:[#allocation2 + $0x11c0] sm:$0xff] %v2215
  %v2280 = vrot.slane %v229, 1
  %v2281 = vrot.slane %v230, 1
  %v2282 = vrot.slane %v231, 1
  %v2283 = vrot.slane %v232, 1
  %v2284 = vrot.slane %v233, 1
  %v2285 = vrot.slane %v234, 1
  %v2286 = vrot.slane %v235, 1
  %v2287 = vrot.slane %v236, 1
  %v2288 = vrot.slane %v237, 1
  %v2289 = vrot.slane %v238, 1
  %v2290 = vrot.slane %v239, 1
  %v2291 = vrot.slane %v240, 1
  %v2292 = vrot.slane %v241, 1
  %v2293 = vrot.slane %v242, 1
  %v2294 = vrot.slane %v243, 1
  %v2295 = vrot.slane %v244, 1
  %v2296 = vrot.slane %v245, 1
  %v2297 = vrot.slane %v246, 1
  %v2298 = vrot.slane %v247, 1
  %v2299 = vrot.slane %v248, 1
  %v2300 = vrot.slane %v249, 1
  %v2301 = vrot.slane %v250, 1
  %v2302 = vrot.slane %v251, 1
  %v2303 = vrot.slane %v252, 1
  %v2304 = vrot.slane %v253, 1
  %v2305 = vrot.slane %v254, 1
  %v2306 = vrot.slane %v255, 1
  %v2307 = vrot.slane %v256, 1
  %v2308 = vrot.slane %v257, 1
  %v2309 = vrot.slane %v258, 1
  %v2310 = vrot.slane %v259, 1
  %v2311 = vrot.slane %v260, 1
  %v2312 = vrot.slane %v261, 1
  %v2313 = vrot.slane %v262, 1
  %v2314 = vrot.slane %v263, 1
  %v2315 = vrot.slane %v264, 1
  %v2316 = vrot.slane %v265, 1
  %v2317 = vrot.slane %v266, 1
  %v2318 = vrot.slane %v267, 1
  %v2319 = vrot.slane %v268, 1
  %v2320 = vrot.slane %v269, 1
  %v2321 = vrot.slane %v270, 1
  %v2322 = vrot.slane %v271, 1
  %v2323 = vrot.slane %v272, 1
  %v2324 = vrot.slane %v273, 1
  %v2325 = vrot.slane %v274, 1
  %v2326 = vrot.slane %v275, 1
  %v2327 = vrot.slane %v276, 1
  %v2328 = vrot.slane %v277, 1
  %v2329 = vrot.slane %v278, 1
  %v2330 = vrot.slane %v279, 1
  %v2331 = vrot.slane %v280, 1
  %v2332 = vrot.slane %v281, 1
  %v2333 = vrot.slane %v282, 1
  %v2334 = vrot.slane %v283, 1
  %v2335 = vrot.slane %v284, 1
  %v2336 = vrot.slane %v285, 1
  %v2337 = vrot.slane %v286, 1
  %v2338 = vrot.slane %v287, 1
  %v2339 = vrot.slane %v288, 1
  %v2340 = vrot.slane %v289, 1
  %v2341 = vrot.slane %v290, 1
  %v2342 = vrot.slane %v291, 1
  %v2343 = vrot.slane %v292, 1
  %vm2344 = vcmp.lt.s32.totalorder %v486, 7
  %v2345 = vsel %vm2344, %v2342, %v2343
  %v2346 = vsel %vm2344, %v2341, %v2342
  %v2347 = vsel %vm2344, %v2340, %v2341
  %v2348 = vsel %vm2344, %v2339, %v2340
  %v2349 = vsel %vm2344, %v2338, %v2339
  %v2350 = vsel %vm2344, %v2337, %v2338
  %v2351 = vsel %vm2344, %v2336, %v2337
  %v2352 = vsel %vm2344, %v2335, %v2336
  %v2353 = vsel %vm2344, %v2334, %v2335
  %v2354 = vsel %vm2344, %v2333, %v2334
  %v2355 = vsel %vm2344, %v2332, %v2333
  %v2356 = vsel %vm2344, %v2331, %v2332
  %v2357 = vsel %vm2344, %v2330, %v2331
  %v2358 = vsel %vm2344, %v2329, %v2330
  %v2359 = vsel %vm2344, %v2328, %v2329
  %v2360 = vsel %vm2344, %v2327, %v2328
  %v2361 = vsel %vm2344, %v2326, %v2327
  %v2362 = vsel %vm2344, %v2325, %v2326
  %v2363 = vsel %vm2344, %v2324, %v2325
  %v2364 = vsel %vm2344, %v2323, %v2324
  %v2365 = vsel %vm2344, %v2322, %v2323
  %v2366 = vsel %vm2344, %v2321, %v2322
  %v2367 = vsel %vm2344, %v2320, %v2321
  %v2368 = vsel %vm2344, %v2319, %v2320
  %v2369 = vsel %vm2344, %v2318, %v2319
  %v2370 = vsel %vm2344, %v2317, %v2318
  %v2371 = vsel %vm2344, %v2316, %v2317
  %v2372 = vsel %vm2344, %v2315, %v2316
  %v2373 = vsel %vm2344, %v2314, %v2315
  %v2374 = vsel %vm2344, %v2313, %v2314
  %v2375 = vsel %vm2344, %v2312, %v2313
  %v2376 = vsel %vm2344, %v2311, %v2312
  %v2377 = vsel %vm2344, %v2310, %v2311
  %v2378 = vsel %vm2344, %v2309, %v2310
  %v2379 = vsel %vm2344, %v2308, %v2309
  %v2380 = vsel %vm2344, %v2307, %v2308
  %v2381 = vsel %vm2344, %v2306, %v2307
  %v2382 = vsel %vm2344, %v2305, %v2306
  %v2383 = vsel %vm2344, %v2304, %v2305
  %v2384 = vsel %vm2344, %v2303, %v2304
  %v2385 = vsel %vm2344, %v2302, %v2303
  %v2386 = vsel %vm2344, %v2301, %v2302
  %v2387 = vsel %vm2344, %v2300, %v2301
  %v2388 = vsel %vm2344, %v2299, %v2300
  %v2389 = vsel %vm2344, %v2298, %v2299
  %v2390 = vsel %vm2344, %v2297, %v2298
  %v2391 = vsel %vm2344, %v2296, %v2297
  %v2392 = vsel %vm2344, %v2295, %v2296
  %v2393 = vsel %vm2344, %v2294, %v2295
  %v2394 = vsel %vm2344, %v2293, %v2294
  %v2395 = vsel %vm2344, %v2292, %v2293
  %v2396 = vsel %vm2344, %v2291, %v2292
  %v2397 = vsel %vm2344, %v2290, %v2291
  %v2398 = vsel %vm2344, %v2289, %v2290
  %v2399 = vsel %vm2344, %v2288, %v2289
  %v2400 = vsel %vm2344, %v2287, %v2288
  %v2401 = vsel %vm2344, %v2286, %v2287
  %v2402 = vsel %vm2344, %v2285, %v2286
  %v2403 = vsel %vm2344, %v2284, %v2285
  %v2404 = vsel %vm2344, %v2283, %v2284
  %v2405 = vsel %vm2344, %v2282, %v2283
  %v2406 = vsel %vm2344, %v2281, %v2282
  %v2407 = vsel %vm2344, %v2280, %v2281
  %v2408 = vsel %vm2344, %v2343, %v2280
  %v2409 = vadd.s32 %v357, 1
  %v2410 = vadd.s32 %v358, 1
  %v2411 = vadd.s32 %v359, 1
  %v2412 = vadd.s32 %v360, 1
  %v2413 = vadd.s32 %v361, 1
  %v2414 = vadd.s32 %v362, 1
  %v2415 = vadd.s32 %v363, 1
  %v2416 = vadd.s32 %v364, 1
  %v2417 = vadd.s32 %v365, 1
  %v2418 = vadd.s32 %v366, 1
  %v2419 = vadd.s32 %v367, 1
  %v2420 = vadd.s32 %v368, 1
  %v2421 = vadd.s32 %v369, 1
  %v2422 = vadd.s32 %v370, 1
  %v2423 = vadd.s32 %v371, 1
  %v2424 = vadd.s32 %v372, 1
  %v2425 = vadd.s32 %v373, 1
  %v2426 = vadd.s32 %v374, 1
  %v2427 = vadd.s32 %v375, 1
  %v2428 = vadd.s32 %v376, 1
  %v2429 = vadd.s32 %v377, 1
  %v2430 = vadd.s32 %v378, 1
  %v2431 = vadd.s32 %v379, 1
  %v2432 = vadd.s32 %v380, 1
  %v2433 = vadd.s32 %v381, 1
  %v2434 = vadd.s32 %v382, 1
  %v2435 = vadd.s32 %v383, 1
  %v2436 = vadd.s32 %v384, 1
  %v2437 = vadd.s32 %v385, 1
  %v2438 = vadd.s32 %v386, 1
  %v2439 = vadd.s32 %v387, 1
  %v2440 = vadd.s32 %v388, 1
  %v2441 = vadd.s32 %v389, 1
  %v2442 = vadd.s32 %v390, 1
  %v2443 = vadd.s32 %v391, 1
  %v2444 = vadd.s32 %v392, 1
  %v2445 = vadd.s32 %v393, 1
  %v2446 = vadd.s32 %v394, 1
  %v2447 = vadd.s32 %v395, 1
  %v2448 = vadd.s32 %v396, 1
  %v2449 = vadd.s32 %v397, 1
  %v2450 = vadd.s32 %v398, 1
  %v2451 = vadd.s32 %v399, 1
  %v2452 = vadd.s32 %v400, 1
  %v2453 = vadd.s32 %v401, 1
  %v2454 = vadd.s32 %v402, 1
  %v2455 = vadd.s32 %v403, 1
  %v2456 = vadd.s32 %v404, 1
  %v2457 = vadd.s32 %v405, 1
  %v2458 = vadd.s32 %v406, 1
  %v2459 = vadd.s32 %v407, 1
  %v2460 = vadd.s32 %v408, 1
  %v2461 = vadd.s32 %v409, 1
  %v2462 = vadd.s32 %v410, 1
  %v2463 = vadd.s32 %v411, 1
  %v2464 = vadd.s32 %v412, 1
  %v2465 = vadd.s32 %v413, 1
  %v2466 = vadd.s32 %v414, 1
  %v2467 = vadd.s32 %v415, 1
  %v2468 = vadd.s32 %v416, 1
  %v2469 = vadd.s32 %v417, 1
  %v2470 = vadd.s32 %v418, 1
  %v2471 = vadd.s32 %v419, 1
  %v2472 = vadd.s32 %v420, 1
  %vm2473 = vcmp.ge.s32.totalorder %v2409, 0
  %vm2474 = vcmp.ge.s32.totalorder %v2410, 0
  %vm2475 = vcmp.ge.s32.totalorder %v2411, 0
  %vm2476 = vcmp.ge.s32.totalorder %v2412, 0
  %vm2477 = vcmp.ge.s32.totalorder %v2413, 0
  %vm2478 = vcmp.ge.s32.totalorder %v2414, 0
  %vm2479 = vcmp.ge.s32.totalorder %v2415, 0
  %vm2480 = vcmp.ge.s32.totalorder %v2416, 0
  %vm2481 = vcmp.ge.s32.totalorder %v2417, 0
  %vm2482 = vcmp.ge.s32.totalorder %v2418, 0
  %vm2483 = vcmp.ge.s32.totalorder %v2419, 0
  %vm2484 = vcmp.ge.s32.totalorder %v2420, 0
  %vm2485 = vcmp.ge.s32.totalorder %v2421, 0
  %vm2486 = vcmp.ge.s32.totalorder %v2422, 0
  %vm2487 = vcmp.ge.s32.totalorder %v2423, 0
  %vm2488 = vcmp.ge.s32.totalorder %v2424, 0
  %vm2489 = vcmp.ge.s32.totalorder %v2425, 0
  %vm2490 = vcmp.ge.s32.totalorder %v2426, 0
  %vm2491 = vcmp.ge.s32.totalorder %v2427, 0
  %vm2492 = vcmp.ge.s32.totalorder %v2428, 0
  %vm2493 = vcmp.ge.s32.totalorder %v2429, 0
  %vm2494 = vcmp.ge.s32.totalorder %v2430, 0
  %vm2495 = vcmp.ge.s32.totalorder %v2431, 0
  %vm2496 = vcmp.ge.s32.totalorder %v2432, 0
  %vm2497 = vcmp.ge.s32.totalorder %v2433, 0
  %vm2498 = vcmp.ge.s32.totalorder %v2434, 0
  %vm2499 = vcmp.ge.s32.totalorder %v2435, 0
  %vm2500 = vcmp.ge.s32.totalorder %v2436, 0
  %vm2501 = vcmp.ge.s32.totalorder %v2437, 0
  %vm2502 = vcmp.ge.s32.totalorder %v2438, 0
  %vm2503 = vcmp.ge.s32.totalorder %v2439, 0
  %vm2504 = vcmp.ge.s32.totalorder %v2440, 0
  %vm2505 = vcmp.ge.s32.totalorder %v2441, 0
  %vm2506 = vcmp.ge.s32.totalorder %v2442, 0
  %vm2507 = vcmp.ge.s32.totalorder %v2443, 0
  %vm2508 = vcmp.ge.s32.totalorder %v2444, 0
  %vm2509 = vcmp.ge.s32.totalorder %v2445, 0
  %vm2510 = vcmp.ge.s32.totalorder %v2446, 0
  %vm2511 = vcmp.ge.s32.totalorder %v2447, 0
  %vm2512 = vcmp.ge.s32.totalorder %v2448, 0
  %vm2513 = vcmp.ge.s32.totalorder %v2449, 0
  %vm2514 = vcmp.ge.s32.totalorder %v2450, 0
  %vm2515 = vcmp.ge.s32.totalorder %v2451, 0
  %vm2516 = vcmp.ge.s32.totalorder %v2452, 0
  %vm2517 = vcmp.ge.s32.totalorder %v2453, 0
  %vm2518 = vcmp.ge.s32.totalorder %v2454, 0
  %vm2519 = vcmp.ge.s32.totalorder %v2455, 0
  %vm2520 = vcmp.ge.s32.totalorder %v2456, 0
  %vm2521 = vcmp.ge.s32.totalorder %v2457, 0
  %vm2522 = vcmp.ge.s32.totalorder %v2458, 0
  %vm2523 = vcmp.ge.s32.totalorder %v2459, 0
  %vm2524 = vcmp.ge.s32.totalorder %v2460, 0
  %vm2525 = vcmp.ge.s32.totalorder %v2461, 0
  %vm2526 = vcmp.ge.s32.totalorder %v2462, 0
  %vm2527 = vcmp.ge.s32.totalorder %v2463, 0
  %vm2528 = vcmp.ge.s32.totalorder %v2464, 0
  %vm2529 = vcmp.ge.s32.totalorder %v2465, 0
  %vm2530 = vcmp.ge.s32.totalorder %v2466, 0
  %vm2531 = vcmp.ge.s32.totalorder %v2467, 0
  %vm2532 = vcmp.ge.s32.totalorder %v2468, 0
  %vm2533 = vcmp.ge.s32.totalorder %v2469, 0
  %vm2534 = vcmp.ge.s32.totalorder %v2470, 0
  %vm2535 = vcmp.ge.s32.totalorder %v2471, 0
  %vm2536 = vcmp.ge.s32.totalorder %v2472, 0
  %vm2537 = vmand %vm744, %vm2473
  %vm2538 = vmand %vm745, %vm2474
  %vm2539 = vmand %vm746, %vm2475
  %vm2540 = vmand %vm747, %vm2476
  %vm2541 = vmand %vm748, %vm2477
  %vm2542 = vmand %vm749, %vm2478
  %vm2543 = vmand %vm750, %vm2479
  %vm2544 = vmand %vm751, %vm2480
  %vm2545 = vmand %vm752, %vm2481
  %vm2546 = vmand %vm753, %vm2482
  %vm2547 = vmand %vm754, %vm2483
  %vm2548 = vmand %vm755, %vm2484
  %vm2549 = vmand %vm756, %vm2485
  %vm2550 = vmand %vm757, %vm2486
  %vm2551 = vmand %vm758, %vm2487
  %vm2552 = vmand %vm759, %vm2488
  %vm2553 = vmand %vm760, %vm2489
  %vm2554 = vmand %vm761, %vm2490
  %vm2555 = vmand %vm762, %vm2491
  %vm2556 = vmand %vm763, %vm2492
  %vm2557 = vmand %vm764, %vm2493
  %vm2558 = vmand %vm765, %vm2494
  %vm2559 = vmand %vm766, %vm2495
  %vm2560 = vmand %vm767, %vm2496
  %vm2561 = vmand %vm768, %vm2497
  %vm2562 = vmand %vm769, %vm2498
  %vm2563 = vmand %vm770, %vm2499
  %vm2564 = vmand %vm771, %vm2500
  %vm2565 = vmand %vm772, %vm2501
  %vm2566 = vmand %vm773, %vm2502
  %vm2567 = vmand %vm774, %vm2503
  %vm2568 = vmand %vm775, %vm2504
  %vm2569 = vmand %vm776, %vm2505
  %vm2570 = vmand %vm777, %vm2506
  %vm2571 = vmand %vm778, %vm2507
  %vm2572 = vmand %vm779, %vm2508
  %vm2573 = vmand %vm780, %vm2509
  %vm2574 = vmand %vm781, %vm2510
  %vm2575 = vmand %vm782, %vm2511
  %vm2576 = vmand %vm783, %vm2512
  %vm2577 = vmand %vm784, %vm2513
  %vm2578 = vmand %vm785, %vm2514
  %vm2579 = vmand %vm786, %vm2515
  %vm2580 = vmand %vm787, %vm2516
  %vm2581 = vmand %vm788, %vm2517
  %vm2582 = vmand %vm789, %vm2518
  %vm2583 = vmand %vm790, %vm2519
  %vm2584 = vmand %vm791, %vm2520
  %vm2585 = vmand %vm792, %vm2521
  %vm2586 = vmand %vm793, %vm2522
  %vm2587 = vmand %vm794, %vm2523
  %vm2588 = vmand %vm795, %vm2524
  %vm2589 = vmand %vm796, %vm2525
  %vm2590 = vmand %vm797, %vm2526
  %vm2591 = vmand %vm798, %vm2527
  %vm2592 = vmand %vm799, %vm2528
  %vm2593 = vmand %vm800, %vm2529
  %vm2594 = vmand %vm801, %vm2530
  %vm2595 = vmand %vm802, %vm2531
  %vm2596 = vmand %vm803, %vm2532
  %vm2597 = vmand %vm804, %vm2533
  %vm2598 = vmand %vm805, %vm2534
  %vm2599 = vmand %vm806, %vm2535
  %vm2600 = vmand %vm807, %vm2536
  %vm2601 = vcmp.lt.s32.totalorder %v2409, 16
  %vm2602 = vcmp.lt.s32.totalorder %v2410, 16
  %vm2603 = vcmp.lt.s32.totalorder %v2411, 16
  %vm2604 = vcmp.lt.s32.totalorder %v2412, 16
  %vm2605 = vcmp.lt.s32.totalorder %v2413, 16
  %vm2606 = vcmp.lt.s32.totalorder %v2414, 16
  %vm2607 = vcmp.lt.s32.totalorder %v2415, 16
  %vm2608 = vcmp.lt.s32.totalorder %v2416, 16
  %vm2609 = vcmp.lt.s32.totalorder %v2417, 16
  %vm2610 = vcmp.lt.s32.totalorder %v2418, 16
  %vm2611 = vcmp.lt.s32.totalorder %v2419, 16
  %vm2612 = vcmp.lt.s32.totalorder %v2420, 16
  %vm2613 = vcmp.lt.s32.totalorder %v2421, 16
  %vm2614 = vcmp.lt.s32.totalorder %v2422, 16
  %vm2615 = vcmp.lt.s32.totalorder %v2423, 16
  %vm2616 = vcmp.lt.s32.totalorder %v2424, 16
  %vm2617 = vcmp.lt.s32.totalorder %v2425, 16
  %vm2618 = vcmp.lt.s32.totalorder %v2426, 16
  %vm2619 = vcmp.lt.s32.totalorder %v2427, 16
  %vm2620 = vcmp.lt.s32.totalorder %v2428, 16
  %vm2621 = vcmp.lt.s32.totalorder %v2429, 16
  %vm2622 = vcmp.lt.s32.totalorder %v2430, 16
  %vm2623 = vcmp.lt.s32.totalorder %v2431, 16
  %vm2624 = vcmp.lt.s32.totalorder %v2432, 16
  %vm2625 = vcmp.lt.s32.totalorder %v2433, 16
  %vm2626 = vcmp.lt.s32.totalorder %v2434, 16
  %vm2627 = vcmp.lt.s32.totalorder %v2435, 16
  %vm2628 = vcmp.lt.s32.totalorder %v2436, 16
  %vm2629 = vcmp.lt.s32.totalorder %v2437, 16
  %vm2630 = vcmp.lt.s32.totalorder %v2438, 16
  %vm2631 = vcmp.lt.s32.totalorder %v2439, 16
  %vm2632 = vcmp.lt.s32.totalorder %v2440, 16
  %vm2633 = vcmp.lt.s32.totalorder %v2441, 16
  %vm2634 = vcmp.lt.s32.totalorder %v2442, 16
  %vm2635 = vcmp.lt.s32.totalorder %v2443, 16
  %vm2636 = vcmp.lt.s32.totalorder %v2444, 16
  %vm2637 = vcmp.lt.s32.totalorder %v2445, 16
  %vm2638 = vcmp.lt.s32.totalorder %v2446, 16
  %vm2639 = vcmp.lt.s32.totalorder %v2447, 16
  %vm2640 = vcmp.lt.s32.totalorder %v2448, 16
  %vm2641 = vcmp.lt.s32.totalorder %v2449, 16
  %vm2642 = vcmp.lt.s32.totalorder %v2450, 16
  %vm2643 = vcmp.lt.s32.totalorder %v2451, 16
  %vm2644 = vcmp.lt.s32.totalorder %v2452, 16
  %vm2645 = vcmp.lt.s32.totalorder %v2453, 16
  %vm2646 = vcmp.lt.s32.totalorder %v2454, 16
  %vm2647 = vcmp.lt.s32.totalorder %v2455, 16
  %vm2648 = vcmp.lt.s32.totalorder %v2456, 16
  %vm2649 = vcmp.lt.s32.totalorder %v2457, 16
  %vm2650 = vcmp.lt.s32.totalorder %v2458, 16
  %vm2651 = vcmp.lt.s32.totalorder %v2459, 16
  %vm2652 = vcmp.lt.s32.totalorder %v2460, 16
  %vm2653 = vcmp.lt.s32.totalorder %v2461, 16
  %vm2654 = vcmp.lt.s32.totalorder %v2462, 16
  %vm2655 = vcmp.lt.s32.totalorder %v2463, 16
  %vm2656 = vcmp.lt.s32.totalorder %v2464, 16
  %vm2657 = vcmp.lt.s32.totalorder %v2465, 16
  %vm2658 = vcmp.lt.s32.totalorder %v2466, 16
  %vm2659 = vcmp.lt.s32.totalorder %v2467, 16
  %vm2660 = vcmp.lt.s32.totalorder %v2468, 16
  %vm2661 = vcmp.lt.s32.totalorder %v2469, 16
  %vm2662 = vcmp.lt.s32.totalorder %v2470, 16
  %vm2663 = vcmp.lt.s32.totalorder %v2471, 16
  %vm2664 = vcmp.lt.s32.totalorder %v2472, 16
  %vm2665 = vmand %vm2537, %vm2601
  %vm2666 = vmand %vm2538, %vm2602
  %vm2667 = vmand %vm2539, %vm2603
  %vm2668 = vmand %vm2540, %vm2604
  %vm2669 = vmand %vm2541, %vm2605
  %vm2670 = vmand %vm2542, %vm2606
  %vm2671 = vmand %vm2543, %vm2607
  %vm2672 = vmand %vm2544, %vm2608
  %vm2673 = vmand %vm2545, %vm2609
  %vm2674 = vmand %vm2546, %vm2610
  %vm2675 = vmand %vm2547, %vm2611
  %vm2676 = vmand %vm2548, %vm2612
  %vm2677 = vmand %vm2549, %vm2613
  %vm2678 = vmand %vm2550, %vm2614
  %vm2679 = vmand %vm2551, %vm2615
  %vm2680 = vmand %vm2552, %vm2616
  %vm2681 = vmand %vm2553, %vm2617
  %vm2682 = vmand %vm2554, %vm2618
  %vm2683 = vmand %vm2555, %vm2619
  %vm2684 = vmand %vm2556, %vm2620
  %vm2685 = vmand %vm2557, %vm2621
  %vm2686 = vmand %vm2558, %vm2622
  %vm2687 = vmand %vm2559, %vm2623
  %vm2688 = vmand %vm2560, %vm2624
  %vm2689 = vmand %vm2561, %vm2625
  %vm2690 = vmand %vm2562, %vm2626
  %vm2691 = vmand %vm2563, %vm2627
  %vm2692 = vmand %vm2564, %vm2628
  %vm2693 = vmand %vm2565, %vm2629
  %vm2694 = vmand %vm2566, %vm2630
  %vm2695 = vmand %vm2567, %vm2631
  %vm2696 = vmand %vm2568, %vm2632
  %vm2697 = vmand %vm2569, %vm2633
  %vm2698 = vmand %vm2570, %vm2634
  %vm2699 = vmand %vm2571, %vm2635
  %vm2700 = vmand %vm2572, %vm2636
  %vm2701 = vmand %vm2573, %vm2637
  %vm2702 = vmand %vm2574, %vm2638
  %vm2703 = vmand %vm2575, %vm2639
  %vm2704 = vmand %vm2576, %vm2640
  %vm2705 = vmand %vm2577, %vm2641
  %vm2706 = vmand %vm2578, %vm2642
  %vm2707 = vmand %vm2579, %vm2643
  %vm2708 = vmand %vm2580, %vm2644
  %vm2709 = vmand %vm2581, %vm2645
  %vm2710 = vmand %vm2582, %vm2646
  %vm2711 = vmand %vm2583, %vm2647
  %vm2712 = vmand %vm2584, %vm2648
  %vm2713 = vmand %vm2585, %vm2649
  %vm2714 = vmand %vm2586, %vm2650
  %vm2715 = vmand %vm2587, %vm2651
  %vm2716 = vmand %vm2588, %vm2652
  %vm2717 = vmand %vm2589, %vm2653
  %vm2718 = vmand %vm2590, %vm2654
  %vm2719 = vmand %vm2591, %vm2655
  %vm2720 = vmand %vm2592, %vm2656
  %vm2721 = vmand %vm2593, %vm2657
  %vm2722 = vmand %vm2594, %vm2658
  %vm2723 = vmand %vm2595, %vm2659
  %vm2724 = vmand %vm2596, %vm2660
  %vm2725 = vmand %vm2597, %vm2661
  %vm2726 = vmand %vm2598, %vm2662
  %vm2727 = vmand %vm2599, %vm2663
  %vm2728 = vmand %vm2600, %vm2664
  %v2729 = vsel %vm2665, 1, 0
  %v2730 = vsel %vm2666, 1, 0
  %v2731 = vsel %vm2667, 1, 0
  %v2732 = vsel %vm2668, 1, 0
  %v2733 = vsel %vm2669, 1, 0
  %v2734 = vsel %vm2670, 1, 0
  %v2735 = vsel %vm2671, 1, 0
  %v2736 = vsel %vm2672, 1, 0
  %v2737 = vsel %vm2673, 1, 0
  %v2738 = vsel %vm2674, 1, 0
  %v2739 = vsel %vm2675, 1, 0
  %v2740 = vsel %vm2676, 1, 0
  %v2741 = vsel %vm2677, 1, 0
  %v2742 = vsel %vm2678, 1, 0
  %v2743 = vsel %vm2679, 1, 0
  %v2744 = vsel %vm2680, 1, 0
  %v2745 = vsel %vm2681, 1, 0
  %v2746 = vsel %vm2682, 1, 0
  %v2747 = vsel %vm2683, 1, 0
  %v2748 = vsel %vm2684, 1, 0
  %v2749 = vsel %vm2685, 1, 0
  %v2750 = vsel %vm2686, 1, 0
  %v2751 = vsel %vm2687, 1, 0
  %v2752 = vsel %vm2688, 1, 0
  %v2753 = vsel %vm2689, 1, 0
  %v2754 = vsel %vm2690, 1, 0
  %v2755 = vsel %vm2691, 1, 0
  %v2756 = vsel %vm2692, 1, 0
  %v2757 = vsel %vm2693, 1, 0
  %v2758 = vsel %vm2694, 1, 0
  %v2759 = vsel %vm2695, 1, 0
  %v2760 = vsel %vm2696, 1, 0
  %v2761 = vsel %vm2697, 1, 0
  %v2762 = vsel %vm2698, 1, 0
  %v2763 = vsel %vm2699, 1, 0
  %v2764 = vsel %vm2700, 1, 0
  %v2765 = vsel %vm2701, 1, 0
  %v2766 = vsel %vm2702, 1, 0
  %v2767 = vsel %vm2703, 1, 0
  %v2768 = vsel %vm2704, 1, 0
  %v2769 = vsel %vm2705, 1, 0
  %v2770 = vsel %vm2706, 1, 0
  %v2771 = vsel %vm2707, 1, 0
  %v2772 = vsel %vm2708, 1, 0
  %v2773 = vsel %vm2709, 1, 0
  %v2774 = vsel %vm2710, 1, 0
  %v2775 = vsel %vm2711, 1, 0
  %v2776 = vsel %vm2712, 1, 0
  %v2777 = vsel %vm2713, 1, 0
  %v2778 = vsel %vm2714, 1, 0
  %v2779 = vsel %vm2715, 1, 0
  %v2780 = vsel %vm2716, 1, 0
  %v2781 = vsel %vm2717, 1, 0
  %v2782 = vsel %vm2718, 1, 0
  %v2783 = vsel %vm2719, 1, 0
  %v2784 = vsel %vm2720, 1, 0
  %v2785 = vsel %vm2721, 1, 0
  %v2786 = vsel %vm2722, 1, 0
  %v2787 = vsel %vm2723, 1, 0
  %v2788 = vsel %vm2724, 1, 0
  %v2789 = vsel %vm2725, 1, 0
  %v2790 = vsel %vm2726, 1, 0
  %v2791 = vsel %vm2727, 1, 0
  %v2792 = vsel %vm2728, 1, 0
  %2793 = vset.pattern.permute.xlu0 0
  %2794 = vperm.xlu0 %2793, %v2729
  %v2795 = vpop.permute.xlu0 %2794
  %2796 = vset.pattern.permute.xlu0 0
  %2797 = vperm.xlu0 %2796, %v2730
  %v2798 = vpop.permute.xlu0 %2797
  %2799 = vset.pattern.permute.xlu0 0
  %2800 = vperm.xlu0 %2799, %v2731
  %v2801 = vpop.permute.xlu0 %2800
  %2802 = vset.pattern.permute.xlu0 0
  %2803 = vperm.xlu0 %2802, %v2732
  %v2804 = vpop.permute.xlu0 %2803
  %2805 = vset.pattern.permute.xlu0 0
  %2806 = vperm.xlu0 %2805, %v2733
  %v2807 = vpop.permute.xlu0 %2806
  %2808 = vset.pattern.permute.xlu0 0
  %2809 = vperm.xlu0 %2808, %v2734
  %v2810 = vpop.permute.xlu0 %2809
  %2811 = vset.pattern.permute.xlu0 0
  %2812 = vperm.xlu0 %2811, %v2735
  %v2813 = vpop.permute.xlu0 %2812
  %2814 = vset.pattern.permute.xlu0 0
  %2815 = vperm.xlu0 %2814, %v2736
  %v2816 = vpop.permute.xlu0 %2815
  %2817 = vset.pattern.permute.xlu0 0
  %2818 = vperm.xlu0 %2817, %v2737
  %v2819 = vpop.permute.xlu0 %2818
  %2820 = vset.pattern.permute.xlu0 0
  %2821 = vperm.xlu0 %2820, %v2738
  %v2822 = vpop.permute.xlu0 %2821
  %2823 = vset.pattern.permute.xlu0 0
  %2824 = vperm.xlu0 %2823, %v2739
  %v2825 = vpop.permute.xlu0 %2824
  %2826 = vset.pattern.permute.xlu0 0
  %2827 = vperm.xlu0 %2826, %v2740
  %v2828 = vpop.permute.xlu0 %2827
  %2829 = vset.pattern.permute.xlu0 0
  %2830 = vperm.xlu0 %2829, %v2741
  %v2831 = vpop.permute.xlu0 %2830
  %2832 = vset.pattern.permute.xlu0 0
  %2833 = vperm.xlu0 %2832, %v2742
  %v2834 = vpop.permute.xlu0 %2833
  %2835 = vset.pattern.permute.xlu0 0
  %2836 = vperm.xlu0 %2835, %v2743
  %v2837 = vpop.permute.xlu0 %2836
  %2838 = vset.pattern.permute.xlu0 0
  %2839 = vperm.xlu0 %2838, %v2744
  %v2840 = vpop.permute.xlu0 %2839
  %2841 = vset.pattern.permute.xlu0 0
  %2842 = vperm.xlu0 %2841, %v2745
  %v2843 = vpop.permute.xlu0 %2842
  %2844 = vset.pattern.permute.xlu0 0
  %2845 = vperm.xlu0 %2844, %v2746
  %v2846 = vpop.permute.xlu0 %2845
  %2847 = vset.pattern.permute.xlu0 0
  %2848 = vperm.xlu0 %2847, %v2747
  %v2849 = vpop.permute.xlu0 %2848
  %2850 = vset.pattern.permute.xlu0 0
  %2851 = vperm.xlu0 %2850, %v2748
  %v2852 = vpop.permute.xlu0 %2851
  %2853 = vset.pattern.permute.xlu0 0
  %2854 = vperm.xlu0 %2853, %v2749
  %v2855 = vpop.permute.xlu0 %2854
  %2856 = vset.pattern.permute.xlu0 0
  %2857 = vperm.xlu0 %2856, %v2750
  %v2858 = vpop.permute.xlu0 %2857
  %2859 = vset.pattern.permute.xlu0 0
  %2860 = vperm.xlu0 %2859, %v2751
  %v2861 = vpop.permute.xlu0 %2860
  %2862 = vset.pattern.permute.xlu0 0
  %2863 = vperm.xlu0 %2862, %v2752
  %v2864 = vpop.permute.xlu0 %2863
  %2865 = vset.pattern.permute.xlu0 0
  %2866 = vperm.xlu0 %2865, %v2753
  %v2867 = vpop.permute.xlu0 %2866
  %2868 = vset.pattern.permute.xlu0 0
  %2869 = vperm.xlu0 %2868, %v2754
  %v2870 = vpop.permute.xlu0 %2869
  %2871 = vset.pattern.permute.xlu0 0
  %2872 = vperm.xlu0 %2871, %v2755
  %v2873 = vpop.permute.xlu0 %2872
  %2874 = vset.pattern.permute.xlu0 0
  %2875 = vperm.xlu0 %2874, %v2756
  %v2876 = vpop.permute.xlu0 %2875
  %2877 = vset.pattern.permute.xlu0 0
  %2878 = vperm.xlu0 %2877, %v2757
  %v2879 = vpop.permute.xlu0 %2878
  %2880 = vset.pattern.permute.xlu0 0
  %2881 = vperm.xlu0 %2880, %v2758
  %v2882 = vpop.permute.xlu0 %2881
  %2883 = vset.pattern.permute.xlu0 0
  %2884 = vperm.xlu0 %2883, %v2759
  %v2885 = vpop.permute.xlu0 %2884
  %2886 = vset.pattern.permute.xlu0 0
  %2887 = vperm.xlu0 %2886, %v2760
  %v2888 = vpop.permute.xlu0 %2887
  %2889 = vset.pattern.permute.xlu0 0
  %2890 = vperm.xlu0 %2889, %v2761
  %v2891 = vpop.permute.xlu0 %2890
  %2892 = vset.pattern.permute.xlu0 0
  %2893 = vperm.xlu0 %2892, %v2762
  %v2894 = vpop.permute.xlu0 %2893
  %2895 = vset.pattern.permute.xlu0 0
  %2896 = vperm.xlu0 %2895, %v2763
  %v2897 = vpop.permute.xlu0 %2896
  %2898 = vset.pattern.permute.xlu0 0
  %2899 = vperm.xlu0 %2898, %v2764
  %v2900 = vpop.permute.xlu0 %2899
  %2901 = vset.pattern.permute.xlu0 0
  %2902 = vperm.xlu0 %2901, %v2765
  %v2903 = vpop.permute.xlu0 %2902
  %2904 = vset.pattern.permute.xlu0 0
  %2905 = vperm.xlu0 %2904, %v2766
  %v2906 = vpop.permute.xlu0 %2905
  %2907 = vset.pattern.permute.xlu0 0
  %2908 = vperm.xlu0 %2907, %v2767
  %v2909 = vpop.permute.xlu0 %2908
  %2910 = vset.pattern.permute.xlu0 0
  %2911 = vperm.xlu0 %2910, %v2768
  %v2912 = vpop.permute.xlu0 %2911
  %2913 = vset.pattern.permute.xlu0 0
  %2914 = vperm.xlu0 %2913, %v2769
  %v2915 = vpop.permute.xlu0 %2914
  %2916 = vset.pattern.permute.xlu0 0
  %2917 = vperm.xlu0 %2916, %v2770
  %v2918 = vpop.permute.xlu0 %2917
  %2919 = vset.pattern.permute.xlu0 0
  %2920 = vperm.xlu0 %2919, %v2771
  %v2921 = vpop.permute.xlu0 %2920
  %2922 = vset.pattern.permute.xlu0 0
  %2923 = vperm.xlu0 %2922, %v2772
  %v2924 = vpop.permute.xlu0 %2923
  %2925 = vset.pattern.permute.xlu0 0
  %2926 = vperm.xlu0 %2925, %v2773
  %v2927 = vpop.permute.xlu0 %2926
  %2928 = vset.pattern.permute.xlu0 0
  %2929 = vperm.xlu0 %2928, %v2774
  %v2930 = vpop.permute.xlu0 %2929
  %2931 = vset.pattern.permute.xlu0 0
  %2932 = vperm.xlu0 %2931, %v2775
  %v2933 = vpop.permute.xlu0 %2932
  %2934 = vset.pattern.permute.xlu0 0
  %2935 = vperm.xlu0 %2934, %v2776
  %v2936 = vpop.permute.xlu0 %2935
  %2937 = vset.pattern.permute.xlu0 0
  %2938 = vperm.xlu0 %2937, %v2777
  %v2939 = vpop.permute.xlu0 %2938
  %2940 = vset.pattern.permute.xlu0 0
  %2941 = vperm.xlu0 %2940, %v2778
  %v2942 = vpop.permute.xlu0 %2941
  %2943 = vset.pattern.permute.xlu0 0
  %2944 = vperm.xlu0 %2943, %v2779
  %v2945 = vpop.permute.xlu0 %2944
  %2946 = vset.pattern.permute.xlu0 0
  %2947 = vperm.xlu0 %2946, %v2780
  %v2948 = vpop.permute.xlu0 %2947
  %2949 = vset.pattern.permute.xlu0 0
  %2950 = vperm.xlu0 %2949, %v2781
  %v2951 = vpop.permute.xlu0 %2950
  %2952 = vset.pattern.permute.xlu0 0
  %2953 = vperm.xlu0 %2952, %v2782
  %v2954 = vpop.permute.xlu0 %2953
  %2955 = vset.pattern.permute.xlu0 0
  %2956 = vperm.xlu0 %2955, %v2783
  %v2957 = vpop.permute.xlu0 %2956
  %2958 = vset.pattern.permute.xlu0 0
  %2959 = vperm.xlu0 %2958, %v2784
  %v2960 = vpop.permute.xlu0 %2959
  %2961 = vset.pattern.permute.xlu0 0
  %2962 = vperm.xlu0 %2961, %v2785
  %v2963 = vpop.permute.xlu0 %2962
  %2964 = vset.pattern.permute.xlu0 0
  %2965 = vperm.xlu0 %2964, %v2786
  %v2966 = vpop.permute.xlu0 %2965
  %2967 = vset.pattern.permute.xlu0 0
  %2968 = vperm.xlu0 %2967, %v2787
  %v2969 = vpop.permute.xlu0 %2968
  %2970 = vset.pattern.permute.xlu0 0
  %2971 = vperm.xlu0 %2970, %v2788
  %v2972 = vpop.permute.xlu0 %2971
  %2973 = vset.pattern.permute.xlu0 0
  %2974 = vperm.xlu0 %2973, %v2789
  %v2975 = vpop.permute.xlu0 %2974
  %2976 = vset.pattern.permute.xlu0 0
  %2977 = vperm.xlu0 %2976, %v2790
  %v2978 = vpop.permute.xlu0 %2977
  %2979 = vset.pattern.permute.xlu0 0
  %2980 = vperm.xlu0 %2979, %v2791
  %v2981 = vpop.permute.xlu0 %2980
  %2982 = vset.pattern.permute.xlu0 0
  %2983 = vperm.xlu0 %2982, %v2792
  %v2984 = vpop.permute.xlu0 %2983
  %vm2985 = vcmp.eq.s32.totalorder %v2795, 1
  %vm2986 = vcmp.eq.s32.totalorder %v2798, 1
  %vm2987 = vcmp.eq.s32.totalorder %v2801, 1
  %vm2988 = vcmp.eq.s32.totalorder %v2804, 1
  %vm2989 = vcmp.eq.s32.totalorder %v2807, 1
  %vm2990 = vcmp.eq.s32.totalorder %v2810, 1
  %vm2991 = vcmp.eq.s32.totalorder %v2813, 1
  %vm2992 = vcmp.eq.s32.totalorder %v2816, 1
  %vm2993 = vcmp.eq.s32.totalorder %v2819, 1
  %vm2994 = vcmp.eq.s32.totalorder %v2822, 1
  %vm2995 = vcmp.eq.s32.totalorder %v2825, 1
  %vm2996 = vcmp.eq.s32.totalorder %v2828, 1
  %vm2997 = vcmp.eq.s32.totalorder %v2831, 1
  %vm2998 = vcmp.eq.s32.totalorder %v2834, 1
  %vm2999 = vcmp.eq.s32.totalorder %v2837, 1
  %vm3000 = vcmp.eq.s32.totalorder %v2840, 1
  %vm3001 = vcmp.eq.s32.totalorder %v2843, 1
  %vm3002 = vcmp.eq.s32.totalorder %v2846, 1
  %vm3003 = vcmp.eq.s32.totalorder %v2849, 1
  %vm3004 = vcmp.eq.s32.totalorder %v2852, 1
  %vm3005 = vcmp.eq.s32.totalorder %v2855, 1
  %vm3006 = vcmp.eq.s32.totalorder %v2858, 1
  %vm3007 = vcmp.eq.s32.totalorder %v2861, 1
  %vm3008 = vcmp.eq.s32.totalorder %v2864, 1
  %vm3009 = vcmp.eq.s32.totalorder %v2867, 1
  %vm3010 = vcmp.eq.s32.totalorder %v2870, 1
  %vm3011 = vcmp.eq.s32.totalorder %v2873, 1
  %vm3012 = vcmp.eq.s32.totalorder %v2876, 1
  %vm3013 = vcmp.eq.s32.totalorder %v2879, 1
  %vm3014 = vcmp.eq.s32.totalorder %v2882, 1
  %vm3015 = vcmp.eq.s32.totalorder %v2885, 1
  %vm3016 = vcmp.eq.s32.totalorder %v2888, 1
  %vm3017 = vcmp.eq.s32.totalorder %v2891, 1
  %vm3018 = vcmp.eq.s32.totalorder %v2894, 1
  %vm3019 = vcmp.eq.s32.totalorder %v2897, 1
  %vm3020 = vcmp.eq.s32.totalorder %v2900, 1
  %vm3021 = vcmp.eq.s32.totalorder %v2903, 1
  %vm3022 = vcmp.eq.s32.totalorder %v2906, 1
  %vm3023 = vcmp.eq.s32.totalorder %v2909, 1
  %vm3024 = vcmp.eq.s32.totalorder %v2912, 1
  %vm3025 = vcmp.eq.s32.totalorder %v2915, 1
  %vm3026 = vcmp.eq.s32.totalorder %v2918, 1
  %vm3027 = vcmp.eq.s32.totalorder %v2921, 1
  %vm3028 = vcmp.eq.s32.totalorder %v2924, 1
  %vm3029 = vcmp.eq.s32.totalorder %v2927, 1
  %vm3030 = vcmp.eq.s32.totalorder %v2930, 1
  %vm3031 = vcmp.eq.s32.totalorder %v2933, 1
  %vm3032 = vcmp.eq.s32.totalorder %v2936, 1
  %vm3033 = vcmp.eq.s32.totalorder %v2939, 1
  %vm3034 = vcmp.eq.s32.totalorder %v2942, 1
  %vm3035 = vcmp.eq.s32.totalorder %v2945, 1
  %vm3036 = vcmp.eq.s32.totalorder %v2948, 1
  %vm3037 = vcmp.eq.s32.totalorder %v2951, 1
  %vm3038 = vcmp.eq.s32.totalorder %v2954, 1
  %vm3039 = vcmp.eq.s32.totalorder %v2957, 1
  %vm3040 = vcmp.eq.s32.totalorder %v2960, 1
  %vm3041 = vcmp.eq.s32.totalorder %v2963, 1
  %vm3042 = vcmp.eq.s32.totalorder %v2966, 1
  %vm3043 = vcmp.eq.s32.totalorder %v2969, 1
  %vm3044 = vcmp.eq.s32.totalorder %v2972, 1
  %vm3045 = vcmp.eq.s32.totalorder %v2975, 1
  %vm3046 = vcmp.eq.s32.totalorder %v2978, 1
  %vm3047 = vcmp.eq.s32.totalorder %v2981, 1
  %vm3048 = vcmp.eq.s32.totalorder %v2984, 1
  %v3049 = vsel %vm2985, %v2345, 0.0
  %v3050 = vsel %vm2986, %v2408, 0.0
  %v3051 = vsel %vm2987, %v2407, 0.0
  %v3052 = vsel %vm2988, %v2406, 0.0
  %v3053 = vsel %vm2989, %v2405, 0.0
  %v3054 = vsel %vm2990, %v2404, 0.0
  %v3055 = vsel %vm2991, %v2403, 0.0
  %v3056 = vsel %vm2992, %v2402, 0.0
  %v3057 = vsel %vm2993, %v2401, 0.0
  %v3058 = vsel %vm2994, %v2400, 0.0
  %v3059 = vsel %vm2995, %v2399, 0.0
  %v3060 = vsel %vm2996, %v2398, 0.0
  %v3061 = vsel %vm2997, %v2397, 0.0
  %v3062 = vsel %vm2998, %v2396, 0.0
  %v3063 = vsel %vm2999, %v2395, 0.0
  %v3064 = vsel %vm3000, %v2394, 0.0
  %v3065 = vsel %vm3001, %v2393, 0.0
  %v3066 = vsel %vm3002, %v2392, 0.0
  %v3067 = vsel %vm3003, %v2391, 0.0
  %v3068 = vsel %vm3004, %v2390, 0.0
  %v3069 = vsel %vm3005, %v2389, 0.0
  %v3070 = vsel %vm3006, %v2388, 0.0
  %v3071 = vsel %vm3007, %v2387, 0.0
  %v3072 = vsel %vm3008, %v2386, 0.0
  %v3073 = vsel %vm3009, %v2385, 0.0
  %v3074 = vsel %vm3010, %v2384, 0.0
  %v3075 = vsel %vm3011, %v2383, 0.0
  %v3076 = vsel %vm3012, %v2382, 0.0
  %v3077 = vsel %vm3013, %v2381, 0.0
  %v3078 = vsel %vm3014, %v2380, 0.0
  %v3079 = vsel %vm3015, %v2379, 0.0
  %v3080 = vsel %vm3016, %v2378, 0.0
  %v3081 = vsel %vm3017, %v2377, 0.0
  %v3082 = vsel %vm3018, %v2376, 0.0
  %v3083 = vsel %vm3019, %v2375, 0.0
  %v3084 = vsel %vm3020, %v2374, 0.0
  %v3085 = vsel %vm3021, %v2373, 0.0
  %v3086 = vsel %vm3022, %v2372, 0.0
  %v3087 = vsel %vm3023, %v2371, 0.0
  %v3088 = vsel %vm3024, %v2370, 0.0
  %v3089 = vsel %vm3025, %v2369, 0.0
  %v3090 = vsel %vm3026, %v2368, 0.0
  %v3091 = vsel %vm3027, %v2367, 0.0
  %v3092 = vsel %vm3028, %v2366, 0.0
  %v3093 = vsel %vm3029, %v2365, 0.0
  %v3094 = vsel %vm3030, %v2364, 0.0
  %v3095 = vsel %vm3031, %v2363, 0.0
  %v3096 = vsel %vm3032, %v2362, 0.0
  %v3097 = vsel %vm3033, %v2361, 0.0
  %v3098 = vsel %vm3034, %v2360, 0.0
  %v3099 = vsel %vm3035, %v2359, 0.0
  %v3100 = vsel %vm3036, %v2358, 0.0
  %v3101 = vsel %vm3037, %v2357, 0.0
  %v3102 = vsel %vm3038, %v2356, 0.0
  %v3103 = vsel %vm3039, %v2355, 0.0
  %v3104 = vsel %vm3040, %v2354, 0.0
  %v3105 = vsel %vm3041, %v2353, 0.0
  %v3106 = vsel %vm3042, %v2352, 0.0
  %v3107 = vsel %vm3043, %v2351, 0.0
  %v3108 = vsel %vm3044, %v2350, 0.0
  %v3109 = vsel %vm3045, %v2349, 0.0
  %v3110 = vsel %vm3046, %v2348, 0.0
  %v3111 = vsel %vm3047, %v2347, 0.0
  %v3112 = vsel %vm3048, %v2346, 0.0
  %3113 = vst [vmem:[#allocation2 + $0x10] sm:$0xff] %v3049
  %3114 = vst [vmem:[#allocation2 + $0x58] sm:$0xff] %v3050
  %3115 = vst [vmem:[#allocation2 + $0xa0] sm:$0xff] %v3051
  %3116 = vst [vmem:[#allocation2 + $0xe8] sm:$0xff] %v3052
  %3117 = vst [vmem:[#allocation2 + $0x130] sm:$0xff] %v3053
  %3118 = vst [vmem:[#allocation2 + $0x178] sm:$0xff] %v3054
  %3119 = vst [vmem:[#allocation2 + $0x1c0] sm:$0xff] %v3055
  %3120 = vst [vmem:[#allocation2 + $0x208] sm:$0xff] %v3056
  %3121 = vst [vmem:[#allocation2 + $0x250] sm:$0xff] %v3057
  %3122 = vst [vmem:[#allocation2 + $0x298] sm:$0xff] %v3058
  %3123 = vst [vmem:[#allocation2 + $0x2e0] sm:$0xff] %v3059
  %3124 = vst [vmem:[#allocation2 + $0x328] sm:$0xff] %v3060
  %3125 = vst [vmem:[#allocation2 + $0x370] sm:$0xff] %v3061
  %3126 = vst [vmem:[#allocation2 + $0x3b8] sm:$0xff] %v3062
  %3127 = vst [vmem:[#allocation2 + $0x400] sm:$0xff] %v3063
  %3128 = vst [vmem:[#allocation2 + $0x448] sm:$0xff] %v3064
  %3129 = vst [vmem:[#allocation2 + $0x490] sm:$0xff] %v3065
  %3130 = vst [vmem:[#allocation2 + $0x4d8] sm:$0xff] %v3066
  %3131 = vst [vmem:[#allocation2 + $0x520] sm:$0xff] %v3067
  %3132 = vst [vmem:[#allocation2 + $0x568] sm:$0xff] %v3068
  %3133 = vst [vmem:[#allocation2 + $0x5b0] sm:$0xff] %v3069
  %3134 = vst [vmem:[#allocation2 + $0x5f8] sm:$0xff] %v3070
  %3135 = vst [vmem:[#allocation2 + $0x640] sm:$0xff] %v3071
  %3136 = vst [vmem:[#allocation2 + $0x688] sm:$0xff] %v3072
  %3137 = vst [vmem:[#allocation2 + $0x6d0] sm:$0xff] %v3073
  %3138 = vst [vmem:[#allocation2 + $0x718] sm:$0xff] %v3074
  %3139 = vst [vmem:[#allocation2 + $0x760] sm:$0xff] %v3075
  %3140 = vst [vmem:[#allocation2 + $0x7a8] sm:$0xff] %v3076
  %3141 = vst [vmem:[#allocation2 + $0x7f0] sm:$0xff] %v3077
  %3142 = vst [vmem:[#allocation2 + $0x838] sm:$0xff] %v3078
  %3143 = vst [vmem:[#allocation2 + $0x880] sm:$0xff] %v3079
  %3144 = vst [vmem:[#allocation2 + $0x8c8] sm:$0xff] %v3080
  %3145 = vst [vmem:[#allocation2 + $0x910] sm:$0xff] %v3081
  %3146 = vst [vmem:[#allocation2 + $0x958] sm:$0xff] %v3082
  %3147 = vst [vmem:[#allocation2 + $0x9a0] sm:$0xff] %v3083
  %3148 = vst [vmem:[#allocation2 + $0x9e8] sm:$0xff] %v3084
  %3149 = vst [vmem:[#allocation2 + $0xa30] sm:$0xff] %v3085
  %3150 = vst [vmem:[#allocation2 + $0xa78] sm:$0xff] %v3086
  %3151 = vst [vmem:[#allocation2 + $0xac0] sm:$0xff] %v3087
  %3152 = vst [vmem:[#allocation2 + $0xb08] sm:$0xff] %v3088
  %3153 = vst [vmem:[#allocation2 + $0xb50] sm:$0xff] %v3089
  %3154 = vst [vmem:[#allocation2 + $0xb98] sm:$0xff] %v3090
  %3155 = vst [vmem:[#allocation2 + $0xbe0] sm:$0xff] %v3091
  %3156 = vst [vmem:[#allocation2 + $0xc28] sm:$0xff] %v3092
  %3157 = vst [vmem:[#allocation2 + $0xc70] sm:$0xff] %v3093
  %3158 = vst [vmem:[#allocation2 + $0xcb8] sm:$0xff] %v3094
  %3159 = vst [vmem:[#allocation2 + $0xd00] sm:$0xff] %v3095
  %3160 = vst [vmem:[#allocation2 + $0xd48] sm:$0xff] %v3096
  %3161 = vst [vmem:[#allocation2 + $0xd90] sm:$0xff] %v3097
  %3162 = vst [vmem:[#allocation2 + $0xdd8] sm:$0xff] %v3098
  %3163 = vst [vmem:[#allocation2 + $0xe20] sm:$0xff] %v3099
  %3164 = vst [vmem:[#allocation2 + $0xe68] sm:$0xff] %v3100
  %3165 = vst [vmem:[#allocation2 + $0xeb0] sm:$0xff] %v3101
  %3166 = vst [vmem:[#allocation2 + $0xef8] sm:$0xff] %v3102
  %3167 = vst [vmem:[#allocation2 + $0xf40] sm:$0xff] %v3103
  %3168 = vst [vmem:[#allocation2 + $0xf88] sm:$0xff] %v3104
  %3169 = vst [vmem:[#allocation2 + $0xfd0] sm:$0xff] %v3105
  %3170 = vst [vmem:[#allocation2 + $0x1018] sm:$0xff] %v3106
  %3171 = vst [vmem:[#allocation2 + $0x1060] sm:$0xff] %v3107
  %3172 = vst [vmem:[#allocation2 + $0x10a8] sm:$0xff] %v3108
  %3173 = vst [vmem:[#allocation2 + $0x10f0] sm:$0xff] %v3109
  %3174 = vst [vmem:[#allocation2 + $0x1138] sm:$0xff] %v3110
  %3175 = vst [vmem:[#allocation2 + $0x1180] sm:$0xff] %v3111
  %3176 = vst [vmem:[#allocation2 + $0x11c8] sm:$0xff] %v3112
  %vm3177 = vcmp.ge.s32.totalorder %v293, 0
  %vm3178 = vcmp.ge.s32.totalorder %v294, 0
  %vm3179 = vcmp.ge.s32.totalorder %v295, 0
  %vm3180 = vcmp.ge.s32.totalorder %v296, 0
  %vm3181 = vcmp.ge.s32.totalorder %v297, 0
  %vm3182 = vcmp.ge.s32.totalorder %v298, 0
  %vm3183 = vcmp.ge.s32.totalorder %v299, 0
  %vm3184 = vcmp.ge.s32.totalorder %v300, 0
  %vm3185 = vcmp.ge.s32.totalorder %v301, 0
  %vm3186 = vcmp.ge.s32.totalorder %v302, 0
  %vm3187 = vcmp.ge.s32.totalorder %v303, 0
  %vm3188 = vcmp.ge.s32.totalorder %v304, 0
  %vm3189 = vcmp.ge.s32.totalorder %v305, 0
  %vm3190 = vcmp.ge.s32.totalorder %v306, 0
  %vm3191 = vcmp.ge.s32.totalorder %v307, 0
  %vm3192 = vcmp.ge.s32.totalorder %v308, 0
  %vm3193 = vcmp.ge.s32.totalorder %v309, 0
  %vm3194 = vcmp.ge.s32.totalorder %v310, 0
  %vm3195 = vcmp.ge.s32.totalorder %v311, 0
  %vm3196 = vcmp.ge.s32.totalorder %v312, 0
  %vm3197 = vcmp.ge.s32.totalorder %v313, 0
  %vm3198 = vcmp.ge.s32.totalorder %v314, 0
  %vm3199 = vcmp.ge.s32.totalorder %v315, 0
  %vm3200 = vcmp.ge.s32.totalorder %v316, 0
  %vm3201 = vcmp.ge.s32.totalorder %v317, 0
  %vm3202 = vcmp.ge.s32.totalorder %v318, 0
  %vm3203 = vcmp.ge.s32.totalorder %v319, 0
  %vm3204 = vcmp.ge.s32.totalorder %v320, 0
  %vm3205 = vcmp.ge.s32.totalorder %v321, 0
  %vm3206 = vcmp.ge.s32.totalorder %v322, 0
  %vm3207 = vcmp.ge.s32.totalorder %v323, 0
  %vm3208 = vcmp.ge.s32.totalorder %v324, 0
  %vm3209 = vcmp.ge.s32.totalorder %v325, 0
  %vm3210 = vcmp.ge.s32.totalorder %v326, 0
  %vm3211 = vcmp.ge.s32.totalorder %v327, 0
  %vm3212 = vcmp.ge.s32.totalorder %v328, 0
  %vm3213 = vcmp.ge.s32.totalorder %v329, 0
  %vm3214 = vcmp.ge.s32.totalorder %v330, 0
  %vm3215 = vcmp.ge.s32.totalorder %v331, 0
  %vm3216 = vcmp.ge.s32.totalorder %v332, 0
  %vm3217 = vcmp.ge.s32.totalorder %v333, 0
  %vm3218 = vcmp.ge.s32.totalorder %v334, 0
  %vm3219 = vcmp.ge.s32.totalorder %v335, 0
  %vm3220 = vcmp.ge.s32.totalorder %v336, 0
  %vm3221 = vcmp.ge.s32.totalorder %v337, 0
  %vm3222 = vcmp.ge.s32.totalorder %v338, 0
  %vm3223 = vcmp.ge.s32.totalorder %v339, 0
  %vm3224 = vcmp.ge.s32.totalorder %v340, 0
  %vm3225 = vcmp.ge.s32.totalorder %v341, 0
  %vm3226 = vcmp.ge.s32.totalorder %v342, 0
  %vm3227 = vcmp.ge.s32.totalorder %v343, 0
  %vm3228 = vcmp.ge.s32.totalorder %v344, 0
  %vm3229 = vcmp.ge.s32.totalorder %v345, 0
  %vm3230 = vcmp.ge.s32.totalorder %v346, 0
  %vm3231 = vcmp.ge.s32.totalorder %v347, 0
  %vm3232 = vcmp.ge.s32.totalorder %v348, 0
  %vm3233 = vcmp.ge.s32.totalorder %v349, 0
  %vm3234 = vcmp.ge.s32.totalorder %v350, 0
  %vm3235 = vcmp.ge.s32.totalorder %v351, 0
  %vm3236 = vcmp.ge.s32.totalorder %v352, 0
  %vm3237 = vcmp.ge.s32.totalorder %v353, 0
  %vm3238 = vcmp.ge.s32.totalorder %v354, 0
  %vm3239 = vcmp.ge.s32.totalorder %v355, 0
  %vm3240 = vcmp.ge.s32.totalorder %v356, 0
  %vm3241 = vcmp.lt.s32.totalorder %v293, 16
  %vm3242 = vcmp.lt.s32.totalorder %v294, 16
  %vm3243 = vcmp.lt.s32.totalorder %v295, 16
  %vm3244 = vcmp.lt.s32.totalorder %v296, 16
  %vm3245 = vcmp.lt.s32.totalorder %v297, 16
  %vm3246 = vcmp.lt.s32.totalorder %v298, 16
  %vm3247 = vcmp.lt.s32.totalorder %v299, 16
  %vm3248 = vcmp.lt.s32.totalorder %v300, 16
  %vm3249 = vcmp.lt.s32.totalorder %v301, 16
  %vm3250 = vcmp.lt.s32.totalorder %v302, 16
  %vm3251 = vcmp.lt.s32.totalorder %v303, 16
  %vm3252 = vcmp.lt.s32.totalorder %v304, 16
  %vm3253 = vcmp.lt.s32.totalorder %v305, 16
  %vm3254 = vcmp.lt.s32.totalorder %v306, 16
  %vm3255 = vcmp.lt.s32.totalorder %v307, 16
  %vm3256 = vcmp.lt.s32.totalorder %v308, 16
  %vm3257 = vcmp.lt.s32.totalorder %v309, 16
  %vm3258 = vcmp.lt.s32.totalorder %v310, 16
  %vm3259 = vcmp.lt.s32.totalorder %v311, 16
  %vm3260 = vcmp.lt.s32.totalorder %v312, 16
  %vm3261 = vcmp.lt.s32.totalorder %v313, 16
  %vm3262 = vcmp.lt.s32.totalorder %v314, 16
  %vm3263 = vcmp.lt.s32.totalorder %v315, 16
  %vm3264 = vcmp.lt.s32.totalorder %v316, 16
  %vm3265 = vcmp.lt.s32.totalorder %v317, 16
  %vm3266 = vcmp.lt.s32.totalorder %v318, 16
  %vm3267 = vcmp.lt.s32.totalorder %v319, 16
  %vm3268 = vcmp.lt.s32.totalorder %v320, 16
  %vm3269 = vcmp.lt.s32.totalorder %v321, 16
  %vm3270 = vcmp.lt.s32.totalorder %v322, 16
  %vm3271 = vcmp.lt.s32.totalorder %v323, 16
  %vm3272 = vcmp.lt.s32.totalorder %v324, 16
  %vm3273 = vcmp.lt.s32.totalorder %v325, 16
  %vm3274 = vcmp.lt.s32.totalorder %v326, 16
  %vm3275 = vcmp.lt.s32.totalorder %v327, 16
  %vm3276 = vcmp.lt.s32.totalorder %v328, 16
  %vm3277 = vcmp.lt.s32.totalorder %v329, 16
  %vm3278 = vcmp.lt.s32.totalorder %v330, 16
  %vm3279 = vcmp.lt.s32.totalorder %v331, 16
  %vm3280 = vcmp.lt.s32.totalorder %v332, 16
  %vm3281 = vcmp.lt.s32.totalorder %v333, 16
  %vm3282 = vcmp.lt.s32.totalorder %v334, 16
  %vm3283 = vcmp.lt.s32.totalorder %v335, 16
  %vm3284 = vcmp.lt.s32.totalorder %v336, 16
  %vm3285 = vcmp.lt.s32.totalorder %v337, 16
  %vm3286 = vcmp.lt.s32.totalorder %v338, 16
  %vm3287 = vcmp.lt.s32.totalorder %v339, 16
  %vm3288 = vcmp.lt.s32.totalorder %v340, 16
  %vm3289 = vcmp.lt.s32.totalorder %v341, 16
  %vm3290 = vcmp.lt.s32.totalorder %v342, 16
  %vm3291 = vcmp.lt.s32.totalorder %v343, 16
  %vm3292 = vcmp.lt.s32.totalorder %v344, 16
  %vm3293 = vcmp.lt.s32.totalorder %v345, 16
  %vm3294 = vcmp.lt.s32.totalorder %v346, 16
  %vm3295 = vcmp.lt.s32.totalorder %v347, 16
  %vm3296 = vcmp.lt.s32.totalorder %v348, 16
  %vm3297 = vcmp.lt.s32.totalorder %v349, 16
  %vm3298 = vcmp.lt.s32.totalorder %v350, 16
  %vm3299 = vcmp.lt.s32.totalorder %v351, 16
  %vm3300 = vcmp.lt.s32.totalorder %v352, 16
  %vm3301 = vcmp.lt.s32.totalorder %v353, 16
  %vm3302 = vcmp.lt.s32.totalorder %v354, 16
  %vm3303 = vcmp.lt.s32.totalorder %v355, 16
  %vm3304 = vcmp.lt.s32.totalorder %v356, 16
  %vm3305 = vmand %vm3177, %vm3241
  %vm3306 = vmand %vm3178, %vm3242
  %vm3307 = vmand %vm3179, %vm3243
  %vm3308 = vmand %vm3180, %vm3244
  %vm3309 = vmand %vm3181, %vm3245
  %vm3310 = vmand %vm3182, %vm3246
  %vm3311 = vmand %vm3183, %vm3247
  %vm3312 = vmand %vm3184, %vm3248
  %vm3313 = vmand %vm3185, %vm3249
  %vm3314 = vmand %vm3186, %vm3250
  %vm3315 = vmand %vm3187, %vm3251
  %vm3316 = vmand %vm3188, %vm3252
  %vm3317 = vmand %vm3189, %vm3253
  %vm3318 = vmand %vm3190, %vm3254
  %vm3319 = vmand %vm3191, %vm3255
  %vm3320 = vmand %vm3192, %vm3256
  %vm3321 = vmand %vm3193, %vm3257
  %vm3322 = vmand %vm3194, %vm3258
  %vm3323 = vmand %vm3195, %vm3259
  %vm3324 = vmand %vm3196, %vm3260
  %vm3325 = vmand %vm3197, %vm3261
  %vm3326 = vmand %vm3198, %vm3262
  %vm3327 = vmand %vm3199, %vm3263
  %vm3328 = vmand %vm3200, %vm3264
  %vm3329 = vmand %vm3201, %vm3265
  %vm3330 = vmand %vm3202, %vm3266
  %vm3331 = vmand %vm3203, %vm3267
  %vm3332 = vmand %vm3204, %vm3268
  %vm3333 = vmand %vm3205, %vm3269
  %vm3334 = vmand %vm3206, %vm3270
  %vm3335 = vmand %vm3207, %vm3271
  %vm3336 = vmand %vm3208, %vm3272
  %vm3337 = vmand %vm3209, %vm3273
  %vm3338 = vmand %vm3210, %vm3274
  %vm3339 = vmand %vm3211, %vm3275
  %vm3340 = vmand %vm3212, %vm3276
  %vm3341 = vmand %vm3213, %vm3277
  %vm3342 = vmand %vm3214, %vm3278
  %vm3343 = vmand %vm3215, %vm3279
  %vm3344 = vmand %vm3216, %vm3280
  %vm3345 = vmand %vm3217, %vm3281
  %vm3346 = vmand %vm3218, %vm3282
  %vm3347 = vmand %vm3219, %vm3283
  %vm3348 = vmand %vm3220, %vm3284
  %vm3349 = vmand %vm3221, %vm3285
  %vm3350 = vmand %vm3222, %vm3286
  %vm3351 = vmand %vm3223, %vm3287
  %vm3352 = vmand %vm3224, %vm3288
  %vm3353 = vmand %vm3225, %vm3289
  %vm3354 = vmand %vm3226, %vm3290
  %vm3355 = vmand %vm3227, %vm3291
  %vm3356 = vmand %vm3228, %vm3292
  %vm3357 = vmand %vm3229, %vm3293
  %vm3358 = vmand %vm3230, %vm3294
  %vm3359 = vmand %vm3231, %vm3295
  %vm3360 = vmand %vm3232, %vm3296
  %vm3361 = vmand %vm3233, %vm3297
  %vm3362 = vmand %vm3234, %vm3298
  %vm3363 = vmand %vm3235, %vm3299
  %vm3364 = vmand %vm3236, %vm3300
  %vm3365 = vmand %vm3237, %vm3301
  %vm3366 = vmand %vm3238, %vm3302
  %vm3367 = vmand %vm3239, %vm3303
  %vm3368 = vmand %vm3240, %vm3304
  %vm3369 = vmand %vm3305, %vm872
  %vm3370 = vmand %vm3306, %vm873
  %vm3371 = vmand %vm3307, %vm874
  %vm3372 = vmand %vm3308, %vm875
  %vm3373 = vmand %vm3309, %vm876
  %vm3374 = vmand %vm3310, %vm877
  %vm3375 = vmand %vm3311, %vm878
  %vm3376 = vmand %vm3312, %vm879
  %vm3377 = vmand %vm3313, %vm880
  %vm3378 = vmand %vm3314, %vm881
  %vm3379 = vmand %vm3315, %vm882
  %vm3380 = vmand %vm3316, %vm883
  %vm3381 = vmand %vm3317, %vm884
  %vm3382 = vmand %vm3318, %vm885
  %vm3383 = vmand %vm3319, %vm886
  %vm3384 = vmand %vm3320, %vm887
  %vm3385 = vmand %vm3321, %vm888
  %vm3386 = vmand %vm3322, %vm889
  %vm3387 = vmand %vm3323, %vm890
  %vm3388 = vmand %vm3324, %vm891
  %vm3389 = vmand %vm3325, %vm892
  %vm3390 = vmand %vm3326, %vm893
  %vm3391 = vmand %vm3327, %vm894
  %vm3392 = vmand %vm3328, %vm895
  %vm3393 = vmand %vm3329, %vm896
  %vm3394 = vmand %vm3330, %vm897
  %vm3395 = vmand %vm3331, %vm898
  %vm3396 = vmand %vm3332, %vm899
  %vm3397 = vmand %vm3333, %vm900
  %vm3398 = vmand %vm3334, %vm901
  %vm3399 = vmand %vm3335, %vm902
  %vm3400 = vmand %vm3336, %vm903
  %vm3401 = vmand %vm3337, %vm904
  %vm3402 = vmand %vm3338, %vm905
  %vm3403 = vmand %vm3339, %vm906
  %vm3404 = vmand %vm3340, %vm907
  %vm3405 = vmand %vm3341, %vm908
  %vm3406 = vmand %vm3342, %vm909
  %vm3407 = vmand %vm3343, %vm910
  %vm3408 = vmand %vm3344, %vm911
  %vm3409 = vmand %vm3345, %vm912
  %vm3410 = vmand %vm3346, %vm913
  %vm3411 = vmand %vm3347, %vm914
  %vm3412 = vmand %vm3348, %vm915
  %vm3413 = vmand %vm3349, %vm916
  %vm3414 = vmand %vm3350, %vm917
  %vm3415 = vmand %vm3351, %vm918
  %vm3416 = vmand %vm3352, %vm919
  %vm3417 = vmand %vm3353, %vm920
  %vm3418 = vmand %vm3354, %vm921
  %vm3419 = vmand %vm3355, %vm922
  %vm3420 = vmand %vm3356, %vm923
  %vm3421 = vmand %vm3357, %vm924
  %vm3422 = vmand %vm3358, %vm925
  %vm3423 = vmand %vm3359, %vm926
  %vm3424 = vmand %vm3360, %vm927
  %vm3425 = vmand %vm3361, %vm928
  %vm3426 = vmand %vm3362, %vm929
  %vm3427 = vmand %vm3363, %vm930
  %vm3428 = vmand %vm3364, %vm931
  %vm3429 = vmand %vm3365, %vm932
  %vm3430 = vmand %vm3366, %vm933
  %vm3431 = vmand %vm3367, %vm934
  %vm3432 = vmand %vm3368, %vm935
  %vm3433 = vmand %vm3369, %vm1000
  %vm3434 = vmand %vm3370, %vm1001
  %vm3435 = vmand %vm3371, %vm1002
  %vm3436 = vmand %vm3372, %vm1003
  %vm3437 = vmand %vm3373, %vm1004
  %vm3438 = vmand %vm3374, %vm1005
  %vm3439 = vmand %vm3375, %vm1006
  %vm3440 = vmand %vm3376, %vm1007
  %vm3441 = vmand %vm3377, %vm1008
  %vm3442 = vmand %vm3378, %vm1009
  %vm3443 = vmand %vm3379, %vm1010
  %vm3444 = vmand %vm3380, %vm1011
  %vm3445 = vmand %vm3381, %vm1012
  %vm3446 = vmand %vm3382, %vm1013
  %vm3447 = vmand %vm3383, %vm1014
  %vm3448 = vmand %vm3384, %vm1015
  %vm3449 = vmand %vm3385, %vm1016
  %vm3450 = vmand %vm3386, %vm1017
  %vm3451 = vmand %vm3387, %vm1018
  %vm3452 = vmand %vm3388, %vm1019
  %vm3453 = vmand %vm3389, %vm1020
  %vm3454 = vmand %vm3390, %vm1021
  %vm3455 = vmand %vm3391, %vm1022
  %vm3456 = vmand %vm3392, %vm1023
  %vm3457 = vmand %vm3393, %vm1024
  %vm3458 = vmand %vm3394, %vm1025
  %vm3459 = vmand %vm3395, %vm1026
  %vm3460 = vmand %vm3396, %vm1027
  %vm3461 = vmand %vm3397, %vm1028
  %vm3462 = vmand %vm3398, %vm1029
  %vm3463 = vmand %vm3399, %vm1030
  %vm3464 = vmand %vm3400, %vm1031
  %vm3465 = vmand %vm3401, %vm1032
  %vm3466 = vmand %vm3402, %vm1033
  %vm3467 = vmand %vm3403, %vm1034
  %vm3468 = vmand %vm3404, %vm1035
  %vm3469 = vmand %vm3405, %vm1036
  %vm3470 = vmand %vm3406, %vm1037
  %vm3471 = vmand %vm3407, %vm1038
  %vm3472 = vmand %vm3408, %vm1039
  %vm3473 = vmand %vm3409, %vm1040
  %vm3474 = vmand %vm3410, %vm1041
  %vm3475 = vmand %vm3411, %vm1042
  %vm3476 = vmand %vm3412, %vm1043
  %vm3477 = vmand %vm3413, %vm1044
  %vm3478 = vmand %vm3414, %vm1045
  %vm3479 = vmand %vm3415, %vm1046
  %vm3480 = vmand %vm3416, %vm1047
  %vm3481 = vmand %vm3417, %vm1048
  %vm3482 = vmand %vm3418, %vm1049
  %vm3483 = vmand %vm3419, %vm1050
  %vm3484 = vmand %vm3420, %vm1051
  %vm3485 = vmand %vm3421, %vm1052
  %vm3486 = vmand %vm3422, %vm1053
  %vm3487 = vmand %vm3423, %vm1054
  %vm3488 = vmand %vm3424, %vm1055
  %vm3489 = vmand %vm3425, %vm1056
  %vm3490 = vmand %vm3426, %vm1057
  %vm3491 = vmand %vm3427, %vm1058
  %vm3492 = vmand %vm3428, %vm1059
  %vm3493 = vmand %vm3429, %vm1060
  %vm3494 = vmand %vm3430, %vm1061
  %vm3495 = vmand %vm3431, %vm1062
  %vm3496 = vmand %vm3432, %vm1063
  %v3497 = vsel %vm3433, 1, 0
  %v3498 = vsel %vm3434, 1, 0
  %v3499 = vsel %vm3435, 1, 0
  %v3500 = vsel %vm3436, 1, 0
  %v3501 = vsel %vm3437, 1, 0
  %v3502 = vsel %vm3438, 1, 0
  %v3503 = vsel %vm3439, 1, 0
  %v3504 = vsel %vm3440, 1, 0
  %v3505 = vsel %vm3441, 1, 0
  %v3506 = vsel %vm3442, 1, 0
  %v3507 = vsel %vm3443, 1, 0
  %v3508 = vsel %vm3444, 1, 0
  %v3509 = vsel %vm3445, 1, 0
  %v3510 = vsel %vm3446, 1, 0
  %v3511 = vsel %vm3447, 1, 0
  %v3512 = vsel %vm3448, 1, 0
  %v3513 = vsel %vm3449, 1, 0
  %v3514 = vsel %vm3450, 1, 0
  %v3515 = vsel %vm3451, 1, 0
  %v3516 = vsel %vm3452, 1, 0
  %v3517 = vsel %vm3453, 1, 0
  %v3518 = vsel %vm3454, 1, 0
  %v3519 = vsel %vm3455, 1, 0
  %v3520 = vsel %vm3456, 1, 0
  %v3521 = vsel %vm3457, 1, 0
  %v3522 = vsel %vm3458, 1, 0
  %v3523 = vsel %vm3459, 1, 0
  %v3524 = vsel %vm3460, 1, 0
  %v3525 = vsel %vm3461, 1, 0
  %v3526 = vsel %vm3462, 1, 0
  %v3527 = vsel %vm3463, 1, 0
  %v3528 = vsel %vm3464, 1, 0
  %v3529 = vsel %vm3465, 1, 0
  %v3530 = vsel %vm3466, 1, 0
  %v3531 = vsel %vm3467, 1, 0
  %v3532 = vsel %vm3468, 1, 0
  %v3533 = vsel %vm3469, 1, 0
  %v3534 = vsel %vm3470, 1, 0
  %v3535 = vsel %vm3471, 1, 0
  %v3536 = vsel %vm3472, 1, 0
  %v3537 = vsel %vm3473, 1, 0
  %v3538 = vsel %vm3474, 1, 0
  %v3539 = vsel %vm3475, 1, 0
  %v3540 = vsel %vm3476, 1, 0
  %v3541 = vsel %vm3477, 1, 0
  %v3542 = vsel %vm3478, 1, 0
  %v3543 = vsel %vm3479, 1, 0
  %v3544 = vsel %vm3480, 1, 0
  %v3545 = vsel %vm3481, 1, 0
  %v3546 = vsel %vm3482, 1, 0
  %v3547 = vsel %vm3483, 1, 0
  %v3548 = vsel %vm3484, 1, 0
  %v3549 = vsel %vm3485, 1, 0
  %v3550 = vsel %vm3486, 1, 0
  %v3551 = vsel %vm3487, 1, 0
  %v3552 = vsel %vm3488, 1, 0
  %v3553 = vsel %vm3489, 1, 0
  %v3554 = vsel %vm3490, 1, 0
  %v3555 = vsel %vm3491, 1, 0
  %v3556 = vsel %vm3492, 1, 0
  %v3557 = vsel %vm3493, 1, 0
  %v3558 = vsel %vm3494, 1, 0
  %v3559 = vsel %vm3495, 1, 0
  %v3560 = vsel %vm3496, 1, 0
  %3561 = vset.pattern.permute.xlu0 0
  %3562 = vperm.xlu0 %3561, %v3497
  %v3563 = vpop.permute.xlu0 %3562
  %3564 = vset.pattern.permute.xlu0 0
  %3565 = vperm.xlu0 %3564, %v3498
  %v3566 = vpop.permute.xlu0 %3565
  %3567 = vset.pattern.permute.xlu0 0
  %3568 = vperm.xlu0 %3567, %v3499
  %v3569 = vpop.permute.xlu0 %3568
  %3570 = vset.pattern.permute.xlu0 0
  %3571 = vperm.xlu0 %3570, %v3500
  %v3572 = vpop.permute.xlu0 %3571
  %3573 = vset.pattern.permute.xlu0 0
  %3574 = vperm.xlu0 %3573, %v3501
  %v3575 = vpop.permute.xlu0 %3574
  %3576 = vset.pattern.permute.xlu0 0
  %3577 = vperm.xlu0 %3576, %v3502
  %v3578 = vpop.permute.xlu0 %3577
  %3579 = vset.pattern.permute.xlu0 0
  %3580 = vperm.xlu0 %3579, %v3503
  %v3581 = vpop.permute.xlu0 %3580
  %3582 = vset.pattern.permute.xlu0 0
  %3583 = vperm.xlu0 %3582, %v3504
  %v3584 = vpop.permute.xlu0 %3583
  %3585 = vset.pattern.permute.xlu0 0
  %3586 = vperm.xlu0 %3585, %v3505
  %v3587 = vpop.permute.xlu0 %3586
  %3588 = vset.pattern.permute.xlu0 0
  %3589 = vperm.xlu0 %3588, %v3506
  %v3590 = vpop.permute.xlu0 %3589
  %3591 = vset.pattern.permute.xlu0 0
  %3592 = vperm.xlu0 %3591, %v3507
  %v3593 = vpop.permute.xlu0 %3592
  %3594 = vset.pattern.permute.xlu0 0
  %3595 = vperm.xlu0 %3594, %v3508
  %v3596 = vpop.permute.xlu0 %3595
  %3597 = vset.pattern.permute.xlu0 0
  %3598 = vperm.xlu0 %3597, %v3509
  %v3599 = vpop.permute.xlu0 %3598
  %3600 = vset.pattern.permute.xlu0 0
  %3601 = vperm.xlu0 %3600, %v3510
  %v3602 = vpop.permute.xlu0 %3601
  %3603 = vset.pattern.permute.xlu0 0
  %3604 = vperm.xlu0 %3603, %v3511
  %v3605 = vpop.permute.xlu0 %3604
  %3606 = vset.pattern.permute.xlu0 0
  %3607 = vperm.xlu0 %3606, %v3512
  %v3608 = vpop.permute.xlu0 %3607
  %3609 = vset.pattern.permute.xlu0 0
  %3610 = vperm.xlu0 %3609, %v3513
  %v3611 = vpop.permute.xlu0 %3610
  %3612 = vset.pattern.permute.xlu0 0
  %3613 = vperm.xlu0 %3612, %v3514
  %v3614 = vpop.permute.xlu0 %3613
  %3615 = vset.pattern.permute.xlu0 0
  %3616 = vperm.xlu0 %3615, %v3515
  %v3617 = vpop.permute.xlu0 %3616
  %3618 = vset.pattern.permute.xlu0 0
  %3619 = vperm.xlu0 %3618, %v3516
  %v3620 = vpop.permute.xlu0 %3619
  %3621 = vset.pattern.permute.xlu0 0
  %3622 = vperm.xlu0 %3621, %v3517
  %v3623 = vpop.permute.xlu0 %3622
  %3624 = vset.pattern.permute.xlu0 0
  %3625 = vperm.xlu0 %3624, %v3518
  %v3626 = vpop.permute.xlu0 %3625
  %3627 = vset.pattern.permute.xlu0 0
  %3628 = vperm.xlu0 %3627, %v3519
  %v3629 = vpop.permute.xlu0 %3628
  %3630 = vset.pattern.permute.xlu0 0
  %3631 = vperm.xlu0 %3630, %v3520
  %v3632 = vpop.permute.xlu0 %3631
  %3633 = vset.pattern.permute.xlu0 0
  %3634 = vperm.xlu0 %3633, %v3521
  %v3635 = vpop.permute.xlu0 %3634
  %3636 = vset.pattern.permute.xlu0 0
  %3637 = vperm.xlu0 %3636, %v3522
  %v3638 = vpop.permute.xlu0 %3637
  %3639 = vset.pattern.permute.xlu0 0
  %3640 = vperm.xlu0 %3639, %v3523
  %v3641 = vpop.permute.xlu0 %3640
  %3642 = vset.pattern.permute.xlu0 0
  %3643 = vperm.xlu0 %3642, %v3524
  %v3644 = vpop.permute.xlu0 %3643
  %3645 = vset.pattern.permute.xlu0 0
  %3646 = vperm.xlu0 %3645, %v3525
  %v3647 = vpop.permute.xlu0 %3646
  %3648 = vset.pattern.permute.xlu0 0
  %3649 = vperm.xlu0 %3648, %v3526
  %v3650 = vpop.permute.xlu0 %3649
  %3651 = vset.pattern.permute.xlu0 0
  %3652 = vperm.xlu0 %3651, %v3527
  %v3653 = vpop.permute.xlu0 %3652
  %3654 = vset.pattern.permute.xlu0 0
  %3655 = vperm.xlu0 %3654, %v3528
  %v3656 = vpop.permute.xlu0 %3655
  %3657 = vset.pattern.permute.xlu0 0
  %3658 = vperm.xlu0 %3657, %v3529
  %v3659 = vpop.permute.xlu0 %3658
  %3660 = vset.pattern.permute.xlu0 0
  %3661 = vperm.xlu0 %3660, %v3530
  %v3662 = vpop.permute.xlu0 %3661
  %3663 = vset.pattern.permute.xlu0 0
  %3664 = vperm.xlu0 %3663, %v3531
  %v3665 = vpop.permute.xlu0 %3664
  %3666 = vset.pattern.permute.xlu0 0
  %3667 = vperm.xlu0 %3666, %v3532
  %v3668 = vpop.permute.xlu0 %3667
  %3669 = vset.pattern.permute.xlu0 0
  %3670 = vperm.xlu0 %3669, %v3533
  %v3671 = vpop.permute.xlu0 %3670
  %3672 = vset.pattern.permute.xlu0 0
  %3673 = vperm.xlu0 %3672, %v3534
  %v3674 = vpop.permute.xlu0 %3673
  %3675 = vset.pattern.permute.xlu0 0
  %3676 = vperm.xlu0 %3675, %v3535
  %v3677 = vpop.permute.xlu0 %3676
  %3678 = vset.pattern.permute.xlu0 0
  %3679 = vperm.xlu0 %3678, %v3536
  %v3680 = vpop.permute.xlu0 %3679
  %3681 = vset.pattern.permute.xlu0 0
  %3682 = vperm.xlu0 %3681, %v3537
  %v3683 = vpop.permute.xlu0 %3682
  %3684 = vset.pattern.permute.xlu0 0
  %3685 = vperm.xlu0 %3684, %v3538
  %v3686 = vpop.permute.xlu0 %3685
  %3687 = vset.pattern.permute.xlu0 0
  %3688 = vperm.xlu0 %3687, %v3539
  %v3689 = vpop.permute.xlu0 %3688
  %3690 = vset.pattern.permute.xlu0 0
  %3691 = vperm.xlu0 %3690, %v3540
  %v3692 = vpop.permute.xlu0 %3691
  %3693 = vset.pattern.permute.xlu0 0
  %3694 = vperm.xlu0 %3693, %v3541
  %v3695 = vpop.permute.xlu0 %3694
  %3696 = vset.pattern.permute.xlu0 0
  %3697 = vperm.xlu0 %3696, %v3542
  %v3698 = vpop.permute.xlu0 %3697
  %3699 = vset.pattern.permute.xlu0 0
  %3700 = vperm.xlu0 %3699, %v3543
  %v3701 = vpop.permute.xlu0 %3700
  %3702 = vset.pattern.permute.xlu0 0
  %3703 = vperm.xlu0 %3702, %v3544
  %v3704 = vpop.permute.xlu0 %3703
  %3705 = vset.pattern.permute.xlu0 0
  %3706 = vperm.xlu0 %3705, %v3545
  %v3707 = vpop.permute.xlu0 %3706
  %3708 = vset.pattern.permute.xlu0 0
  %3709 = vperm.xlu0 %3708, %v3546
  %v3710 = vpop.permute.xlu0 %3709
  %3711 = vset.pattern.permute.xlu0 0
  %3712 = vperm.xlu0 %3711, %v3547
  %v3713 = vpop.permute.xlu0 %3712
  %3714 = vset.pattern.permute.xlu0 0
  %3715 = vperm.xlu0 %3714, %v3548
  %v3716 = vpop.permute.xlu0 %3715
  %3717 = vset.pattern.permute.xlu0 0
  %3718 = vperm.xlu0 %3717, %v3549
  %v3719 = vpop.permute.xlu0 %3718
  %3720 = vset.pattern.permute.xlu0 0
  %3721 = vperm.xlu0 %3720, %v3550
  %v3722 = vpop.permute.xlu0 %3721
  %3723 = vset.pattern.permute.xlu0 0
  %3724 = vperm.xlu0 %3723, %v3551
  %v3725 = vpop.permute.xlu0 %3724
  %3726 = vset.pattern.permute.xlu0 0
  %3727 = vperm.xlu0 %3726, %v3552
  %v3728 = vpop.permute.xlu0 %3727
  %3729 = vset.pattern.permute.xlu0 0
  %3730 = vperm.xlu0 %3729, %v3553
  %v3731 = vpop.permute.xlu0 %3730
  %3732 = vset.pattern.permute.xlu0 0
  %3733 = vperm.xlu0 %3732, %v3554
  %v3734 = vpop.permute.xlu0 %3733
  %3735 = vset.pattern.permute.xlu0 0
  %3736 = vperm.xlu0 %3735, %v3555
  %v3737 = vpop.permute.xlu0 %3736
  %3738 = vset.pattern.permute.xlu0 0
  %3739 = vperm.xlu0 %3738, %v3556
  %v3740 = vpop.permute.xlu0 %3739
  %3741 = vset.pattern.permute.xlu0 0
  %3742 = vperm.xlu0 %3741, %v3557
  %v3743 = vpop.permute.xlu0 %3742
  %3744 = vset.pattern.permute.xlu0 0
  %3745 = vperm.xlu0 %3744, %v3558
  %v3746 = vpop.permute.xlu0 %3745
  %3747 = vset.pattern.permute.xlu0 0
  %3748 = vperm.xlu0 %3747, %v3559
  %v3749 = vpop.permute.xlu0 %3748
  %3750 = vset.pattern.permute.xlu0 0
  %3751 = vperm.xlu0 %3750, %v3560
  %v3752 = vpop.permute.xlu0 %3751
  %vm3753 = vcmp.eq.s32.totalorder %v3563, 1
  %vm3754 = vcmp.eq.s32.totalorder %v3566, 1
  %vm3755 = vcmp.eq.s32.totalorder %v3569, 1
  %vm3756 = vcmp.eq.s32.totalorder %v3572, 1
  %vm3757 = vcmp.eq.s32.totalorder %v3575, 1
  %vm3758 = vcmp.eq.s32.totalorder %v3578, 1
  %vm3759 = vcmp.eq.s32.totalorder %v3581, 1
  %vm3760 = vcmp.eq.s32.totalorder %v3584, 1
  %vm3761 = vcmp.eq.s32.totalorder %v3587, 1
  %vm3762 = vcmp.eq.s32.totalorder %v3590, 1
  %vm3763 = vcmp.eq.s32.totalorder %v3593, 1
  %vm3764 = vcmp.eq.s32.totalorder %v3596, 1
  %vm3765 = vcmp.eq.s32.totalorder %v3599, 1
  %vm3766 = vcmp.eq.s32.totalorder %v3602, 1
  %vm3767 = vcmp.eq.s32.totalorder %v3605, 1
  %vm3768 = vcmp.eq.s32.totalorder %v3608, 1
  %vm3769 = vcmp.eq.s32.totalorder %v3611, 1
  %vm3770 = vcmp.eq.s32.totalorder %v3614, 1
  %vm3771 = vcmp.eq.s32.totalorder %v3617, 1
  %vm3772 = vcmp.eq.s32.totalorder %v3620, 1
  %vm3773 = vcmp.eq.s32.totalorder %v3623, 1
  %vm3774 = vcmp.eq.s32.totalorder %v3626, 1
  %vm3775 = vcmp.eq.s32.totalorder %v3629, 1
  %vm3776 = vcmp.eq.s32.totalorder %v3632, 1
  %vm3777 = vcmp.eq.s32.totalorder %v3635, 1
  %vm3778 = vcmp.eq.s32.totalorder %v3638, 1
  %vm3779 = vcmp.eq.s32.totalorder %v3641, 1
  %vm3780 = vcmp.eq.s32.totalorder %v3644, 1
  %vm3781 = vcmp.eq.s32.totalorder %v3647, 1
  %vm3782 = vcmp.eq.s32.totalorder %v3650, 1
  %vm3783 = vcmp.eq.s32.totalorder %v3653, 1
  %vm3784 = vcmp.eq.s32.totalorder %v3656, 1
  %vm3785 = vcmp.eq.s32.totalorder %v3659, 1
  %vm3786 = vcmp.eq.s32.totalorder %v3662, 1
  %vm3787 = vcmp.eq.s32.totalorder %v3665, 1
  %vm3788 = vcmp.eq.s32.totalorder %v3668, 1
  %vm3789 = vcmp.eq.s32.totalorder %v3671, 1
  %vm3790 = vcmp.eq.s32.totalorder %v3674, 1
  %vm3791 = vcmp.eq.s32.totalorder %v3677, 1
  %vm3792 = vcmp.eq.s32.totalorder %v3680, 1
  %vm3793 = vcmp.eq.s32.totalorder %v3683, 1
  %vm3794 = vcmp.eq.s32.totalorder %v3686, 1
  %vm3795 = vcmp.eq.s32.totalorder %v3689, 1
  %vm3796 = vcmp.eq.s32.totalorder %v3692, 1
  %vm3797 = vcmp.eq.s32.totalorder %v3695, 1
  %vm3798 = vcmp.eq.s32.totalorder %v3698, 1
  %vm3799 = vcmp.eq.s32.totalorder %v3701, 1
  %vm3800 = vcmp.eq.s32.totalorder %v3704, 1
  %vm3801 = vcmp.eq.s32.totalorder %v3707, 1
  %vm3802 = vcmp.eq.s32.totalorder %v3710, 1
  %vm3803 = vcmp.eq.s32.totalorder %v3713, 1
  %vm3804 = vcmp.eq.s32.totalorder %v3716, 1
  %vm3805 = vcmp.eq.s32.totalorder %v3719, 1
  %vm3806 = vcmp.eq.s32.totalorder %v3722, 1
  %vm3807 = vcmp.eq.s32.totalorder %v3725, 1
  %vm3808 = vcmp.eq.s32.totalorder %v3728, 1
  %vm3809 = vcmp.eq.s32.totalorder %v3731, 1
  %vm3810 = vcmp.eq.s32.totalorder %v3734, 1
  %vm3811 = vcmp.eq.s32.totalorder %v3737, 1
  %vm3812 = vcmp.eq.s32.totalorder %v3740, 1
  %vm3813 = vcmp.eq.s32.totalorder %v3743, 1
  %vm3814 = vcmp.eq.s32.totalorder %v3746, 1
  %vm3815 = vcmp.eq.s32.totalorder %v3749, 1
  %vm3816 = vcmp.eq.s32.totalorder %v3752, 1
  %v3817 = vsel %vm3753, %v551, 0.0
  %v3818 = vsel %vm3754, %v550, 0.0
  %v3819 = vsel %vm3755, %v549, 0.0
  %v3820 = vsel %vm3756, %v548, 0.0
  %v3821 = vsel %vm3757, %v547, 0.0
  %v3822 = vsel %vm3758, %v546, 0.0
  %v3823 = vsel %vm3759, %v545, 0.0
  %v3824 = vsel %vm3760, %v544, 0.0
  %v3825 = vsel %vm3761, %v543, 0.0
  %v3826 = vsel %vm3762, %v542, 0.0
  %v3827 = vsel %vm3763, %v541, 0.0
  %v3828 = vsel %vm3764, %v540, 0.0
  %v3829 = vsel %vm3765, %v539, 0.0
  %v3830 = vsel %vm3766, %v538, 0.0
  %v3831 = vsel %vm3767, %v537, 0.0
  %v3832 = vsel %vm3768, %v536, 0.0
  %v3833 = vsel %vm3769, %v535, 0.0
  %v3834 = vsel %vm3770, %v534, 0.0
  %v3835 = vsel %vm3771, %v533, 0.0
  %v3836 = vsel %vm3772, %v532, 0.0
  %v3837 = vsel %vm3773, %v531, 0.0
  %v3838 = vsel %vm3774, %v530, 0.0
  %v3839 = vsel %vm3775, %v529, 0.0
  %v3840 = vsel %vm3776, %v528, 0.0
  %v3841 = vsel %vm3777, %v527, 0.0
  %v3842 = vsel %vm3778, %v526, 0.0
  %v3843 = vsel %vm3779, %v525, 0.0
  %v3844 = vsel %vm3780, %v524, 0.0
  %v3845 = vsel %vm3781, %v523, 0.0
  %v3846 = vsel %vm3782, %v522, 0.0
  %v3847 = vsel %vm3783, %v521, 0.0
  %v3848 = vsel %vm3784, %v520, 0.0
  %v3849 = vsel %vm3785, %v519, 0.0
  %v3850 = vsel %vm3786, %v518, 0.0
  %v3851 = vsel %vm3787, %v517, 0.0
  %v3852 = vsel %vm3788, %v516, 0.0
  %v3853 = vsel %vm3789, %v515, 0.0
  %v3854 = vsel %vm3790, %v514, 0.0
  %v3855 = vsel %vm3791, %v513, 0.0
  %v3856 = vsel %vm3792, %v512, 0.0
  %v3857 = vsel %vm3793, %v511, 0.0
  %v3858 = vsel %vm3794, %v510, 0.0
  %v3859 = vsel %vm3795, %v509, 0.0
  %v3860 = vsel %vm3796, %v508, 0.0
  %v3861 = vsel %vm3797, %v507, 0.0
  %v3862 = vsel %vm3798, %v506, 0.0
  %v3863 = vsel %vm3799, %v505, 0.0
  %v3864 = vsel %vm3800, %v504, 0.0
  %v3865 = vsel %vm3801, %v503, 0.0
  %v3866 = vsel %vm3802, %v502, 0.0
  %v3867 = vsel %vm3803, %v501, 0.0
  %v3868 = vsel %vm3804, %v500, 0.0
  %v3869 = vsel %vm3805, %v499, 0.0
  %v3870 = vsel %vm3806, %v498, 0.0
  %v3871 = vsel %vm3807, %v497, 0.0
  %v3872 = vsel %vm3808, %v496, 0.0
  %v3873 = vsel %vm3809, %v495, 0.0
  %v3874 = vsel %vm3810, %v494, 0.0
  %v3875 = vsel %vm3811, %v493, 0.0
  %v3876 = vsel %vm3812, %v492, 0.0
  %v3877 = vsel %vm3813, %v491, 0.0
  %v3878 = vsel %vm3814, %v490, 0.0
  %v3879 = vsel %vm3815, %v489, 0.0
  %v3880 = vsel %vm3816, %v488, 0.0
  %3881 = vst [vmem:[#allocation2 + $0x18] sm:$0xff] %v3817
  %3882 = vst [vmem:[#allocation2 + $0x60] sm:$0xff] %v3818
  %3883 = vst [vmem:[#allocation2 + $0xa8] sm:$0xff] %v3819
  %3884 = vst [vmem:[#allocation2 + $0xf0] sm:$0xff] %v3820
  %3885 = vst [vmem:[#allocation2 + $0x138] sm:$0xff] %v3821
  %3886 = vst [vmem:[#allocation2 + $0x180] sm:$0xff] %v3822
  %3887 = vst [vmem:[#allocation2 + $0x1c8] sm:$0xff] %v3823
  %3888 = vst [vmem:[#allocation2 + $0x210] sm:$0xff] %v3824
  %3889 = vst [vmem:[#allocation2 + $0x258] sm:$0xff] %v3825
  %3890 = vst [vmem:[#allocation2 + $0x2a0] sm:$0xff] %v3826
  %3891 = vst [vmem:[#allocation2 + $0x2e8] sm:$0xff] %v3827
  %3892 = vst [vmem:[#allocation2 + $0x330] sm:$0xff] %v3828
  %3893 = vst [vmem:[#allocation2 + $0x378] sm:$0xff] %v3829
  %3894 = vst [vmem:[#allocation2 + $0x3c0] sm:$0xff] %v3830
  %3895 = vst [vmem:[#allocation2 + $0x408] sm:$0xff] %v3831
  %3896 = vst [vmem:[#allocation2 + $0x450] sm:$0xff] %v3832
  %3897 = vst [vmem:[#allocation2 + $0x498] sm:$0xff] %v3833
  %3898 = vst [vmem:[#allocation2 + $0x4e0] sm:$0xff] %v3834
  %3899 = vst [vmem:[#allocation2 + $0x528] sm:$0xff] %v3835
  %3900 = vst [vmem:[#allocation2 + $0x570] sm:$0xff] %v3836
  %3901 = vst [vmem:[#allocation2 + $0x5b8] sm:$0xff] %v3837
  %3902 = vst [vmem:[#allocation2 + $0x600] sm:$0xff] %v3838
  %3903 = vst [vmem:[#allocation2 + $0x648] sm:$0xff] %v3839
  %3904 = vst [vmem:[#allocation2 + $0x690] sm:$0xff] %v3840
  %3905 = vst [vmem:[#allocation2 + $0x6d8] sm:$0xff] %v3841
  %3906 = vst [vmem:[#allocation2 + $0x720] sm:$0xff] %v3842
  %3907 = vst [vmem:[#allocation2 + $0x768] sm:$0xff] %v3843
  %3908 = vst [vmem:[#allocation2 + $0x7b0] sm:$0xff] %v3844
  %3909 = vst [vmem:[#allocation2 + $0x7f8] sm:$0xff] %v3845
  %3910 = vst [vmem:[#allocation2 + $0x840] sm:$0xff] %v3846
  %3911 = vst [vmem:[#allocation2 + $0x888] sm:$0xff] %v3847
  %3912 = vst [vmem:[#allocation2 + $0x8d0] sm:$0xff] %v3848
  %3913 = vst [vmem:[#allocation2 + $0x918] sm:$0xff] %v3849
  %3914 = vst [vmem:[#allocation2 + $0x960] sm:$0xff] %v3850
  %3915 = vst [vmem:[#allocation2 + $0x9a8] sm:$0xff] %v3851
  %3916 = vst [vmem:[#allocation2 + $0x9f0] sm:$0xff] %v3852
  %3917 = vst [vmem:[#allocation2 + $0xa38] sm:$0xff] %v3853
  %3918 = vst [vmem:[#allocation2 + $0xa80] sm:$0xff] %v3854
  %3919 = vst [vmem:[#allocation2 + $0xac8] sm:$0xff] %v3855
  %3920 = vst [vmem:[#allocation2 + $0xb10] sm:$0xff] %v3856
  %3921 = vst [vmem:[#allocation2 + $0xb58] sm:$0xff] %v3857
  %3922 = vst [vmem:[#allocation2 + $0xba0] sm:$0xff] %v3858
  %3923 = vst [vmem:[#allocation2 + $0xbe8] sm:$0xff] %v3859
  %3924 = vst [vmem:[#allocation2 + $0xc30] sm:$0xff] %v3860
  %3925 = vst [vmem:[#allocation2 + $0xc78] sm:$0xff] %v3861
  %3926 = vst [vmem:[#allocation2 + $0xcc0] sm:$0xff] %v3862
  %3927 = vst [vmem:[#allocation2 + $0xd08] sm:$0xff] %v3863
  %3928 = vst [vmem:[#allocation2 + $0xd50] sm:$0xff] %v3864
  %3929 = vst [vmem:[#allocation2 + $0xd98] sm:$0xff] %v3865
  %3930 = vst [vmem:[#allocation2 + $0xde0] sm:$0xff] %v3866
  %3931 = vst [vmem:[#allocation2 + $0xe28] sm:$0xff] %v3867
  %3932 = vst [vmem:[#allocation2 + $0xe70] sm:$0xff] %v3868
  %3933 = vst [vmem:[#allocation2 + $0xeb8] sm:$0xff] %v3869
  %3934 = vst [vmem:[#allocation2 + $0xf00] sm:$0xff] %v3870
  %3935 = vst [vmem:[#allocation2 + $0xf48] sm:$0xff] %v3871
  %3936 = vst [vmem:[#allocation2 + $0xf90] sm:$0xff] %v3872
  %3937 = vst [vmem:[#allocation2 + $0xfd8] sm:$0xff] %v3873
  %3938 = vst [vmem:[#allocation2 + $0x1020] sm:$0xff] %v3874
  %3939 = vst [vmem:[#allocation2 + $0x1068] sm:$0xff] %v3875
  %3940 = vst [vmem:[#allocation2 + $0x10b0] sm:$0xff] %v3876
  %3941 = vst [vmem:[#allocation2 + $0x10f8] sm:$0xff] %v3877
  %3942 = vst [vmem:[#allocation2 + $0x1140] sm:$0xff] %v3878
  %3943 = vst [vmem:[#allocation2 + $0x1188] sm:$0xff] %v3879
  %3944 = vst [vmem:[#allocation2 + $0x11d0] sm:$0xff] %v3880
  %vm3945 = vmand %vm3305, %vm1576
  %vm3946 = vmand %vm3306, %vm1577
  %vm3947 = vmand %vm3307, %vm1578
  %vm3948 = vmand %vm3308, %vm1579
  %vm3949 = vmand %vm3309, %vm1580
  %vm3950 = vmand %vm3310, %vm1581
  %vm3951 = vmand %vm3311, %vm1582
  %vm3952 = vmand %vm3312, %vm1583
  %vm3953 = vmand %vm3313, %vm1584
  %vm3954 = vmand %vm3314, %vm1585
  %vm3955 = vmand %vm3315, %vm1586
  %vm3956 = vmand %vm3316, %vm1587
  %vm3957 = vmand %vm3317, %vm1588
  %vm3958 = vmand %vm3318, %vm1589
  %vm3959 = vmand %vm3319, %vm1590
  %vm3960 = vmand %vm3320, %vm1591
  %vm3961 = vmand %vm3321, %vm1592
  %vm3962 = vmand %vm3322, %vm1593
  %vm3963 = vmand %vm3323, %vm1594
  %vm3964 = vmand %vm3324, %vm1595
  %vm3965 = vmand %vm3325, %vm1596
  %vm3966 = vmand %vm3326, %vm1597
  %vm3967 = vmand %vm3327, %vm1598
  %vm3968 = vmand %vm3328, %vm1599
  %vm3969 = vmand %vm3329, %vm1600
  %vm3970 = vmand %vm3330, %vm1601
  %vm3971 = vmand %vm3331, %vm1602
  %vm3972 = vmand %vm3332, %vm1603
  %vm3973 = vmand %vm3333, %vm1604
  %vm3974 = vmand %vm3334, %vm1605
  %vm3975 = vmand %vm3335, %vm1606
  %vm3976 = vmand %vm3336, %vm1607
  %vm3977 = vmand %vm3337, %vm1608
  %vm3978 = vmand %vm3338, %vm1609
  %vm3979 = vmand %vm3339, %vm1610
  %vm3980 = vmand %vm3340, %vm1611
  %vm3981 = vmand %vm3341, %vm1612
  %vm3982 = vmand %vm3342, %vm1613
  %vm3983 = vmand %vm3343, %vm1614
  %vm3984 = vmand %vm3344, %vm1615
  %vm3985 = vmand %vm3345, %vm1616
  %vm3986 = vmand %vm3346, %vm1617
  %vm3987 = vmand %vm3347, %vm1618
  %vm3988 = vmand %vm3348, %vm1619
  %vm3989 = vmand %vm3349, %vm1620
  %vm3990 = vmand %vm3350, %vm1621
  %vm3991 = vmand %vm3351, %vm1622
  %vm3992 = vmand %vm3352, %vm1623
  %vm3993 = vmand %vm3353, %vm1624
  %vm3994 = vmand %vm3354, %vm1625
  %vm3995 = vmand %vm3355, %vm1626
  %vm3996 = vmand %vm3356, %vm1627
  %vm3997 = vmand %vm3357, %vm1628
  %vm3998 = vmand %vm3358, %vm1629
  %vm3999 = vmand %vm3359, %vm1630
  %vm4000 = vmand %vm3360, %vm1631
  %vm4001 = vmand %vm3361, %vm1632
  %vm4002 = vmand %vm3362, %vm1633
  %vm4003 = vmand %vm3363, %vm1634
  %vm4004 = vmand %vm3364, %vm1635
  %vm4005 = vmand %vm3365, %vm1636
  %vm4006 = vmand %vm3366, %vm1637
  %vm4007 = vmand %vm3367, %vm1638
  %vm4008 = vmand %vm3368, %vm1639
  %vm4009 = vmand %vm3945, %vm1704
  %vm4010 = vmand %vm3946, %vm1705
  %vm4011 = vmand %vm3947, %vm1706
  %vm4012 = vmand %vm3948, %vm1707
  %vm4013 = vmand %vm3949, %vm1708
  %vm4014 = vmand %vm3950, %vm1709
  %vm4015 = vmand %vm3951, %vm1710
  %vm4016 = vmand %vm3952, %vm1711
  %vm4017 = vmand %vm3953, %vm1712
  %vm4018 = vmand %vm3954, %vm1713
  %vm4019 = vmand %vm3955, %vm1714
  %vm4020 = vmand %vm3956, %vm1715
  %vm4021 = vmand %vm3957, %vm1716
  %vm4022 = vmand %vm3958, %vm1717
  %vm4023 = vmand %vm3959, %vm1718
  %vm4024 = vmand %vm3960, %vm1719
  %vm4025 = vmand %vm3961, %vm1720
  %vm4026 = vmand %vm3962, %vm1721
  %vm4027 = vmand %vm3963, %vm1722
  %vm4028 = vmand %vm3964, %vm1723
  %vm4029 = vmand %vm3965, %vm1724
  %vm4030 = vmand %vm3966, %vm1725
  %vm4031 = vmand %vm3967, %vm1726
  %vm4032 = vmand %vm3968, %vm1727
  %vm4033 = vmand %vm3969, %vm1728
  %vm4034 = vmand %vm3970, %vm1729
  %vm4035 = vmand %vm3971, %vm1730
  %vm4036 = vmand %vm3972, %vm1731
  %vm4037 = vmand %vm3973, %vm1732
  %vm4038 = vmand %vm3974, %vm1733
  %vm4039 = vmand %vm3975, %vm1734
  %vm4040 = vmand %vm3976, %vm1735
  %vm4041 = vmand %vm3977, %vm1736
  %vm4042 = vmand %vm3978, %vm1737
  %vm4043 = vmand %vm3979, %vm1738
  %vm4044 = vmand %vm3980, %vm1739
  %vm4045 = vmand %vm3981, %vm1740
  %vm4046 = vmand %vm3982, %vm1741
  %vm4047 = vmand %vm3983, %vm1742
  %vm4048 = vmand %vm3984, %vm1743
  %vm4049 = vmand %vm3985, %vm1744
  %vm4050 = vmand %vm3986, %vm1745
  %vm4051 = vmand %vm3987, %vm1746
  %vm4052 = vmand %vm3988, %vm1747
  %vm4053 = vmand %vm3989, %vm1748
  %vm4054 = vmand %vm3990, %vm1749
  %vm4055 = vmand %vm3991, %vm1750
  %vm4056 = vmand %vm3992, %vm1751
  %vm4057 = vmand %vm3993, %vm1752
  %vm4058 = vmand %vm3994, %vm1753
  %vm4059 = vmand %vm3995, %vm1754
  %vm4060 = vmand %vm3996, %vm1755
  %vm4061 = vmand %vm3997, %vm1756
  %vm4062 = vmand %vm3998, %vm1757
  %vm4063 = vmand %vm3999, %vm1758
  %vm4064 = vmand %vm4000, %vm1759
  %vm4065 = vmand %vm4001, %vm1760
  %vm4066 = vmand %vm4002, %vm1761
  %vm4067 = vmand %vm4003, %vm1762
  %vm4068 = vmand %vm4004, %vm1763
  %vm4069 = vmand %vm4005, %vm1764
  %vm4070 = vmand %vm4006, %vm1765
  %vm4071 = vmand %vm4007, %vm1766
  %vm4072 = vmand %vm4008, %vm1767
  %v4073 = vsel %vm4009, 1, 0
  %v4074 = vsel %vm4010, 1, 0
  %v4075 = vsel %vm4011, 1, 0
  %v4076 = vsel %vm4012, 1, 0
  %v4077 = vsel %vm4013, 1, 0
  %v4078 = vsel %vm4014, 1, 0
  %v4079 = vsel %vm4015, 1, 0
  %v4080 = vsel %vm4016, 1, 0
  %v4081 = vsel %vm4017, 1, 0
  %v4082 = vsel %vm4018, 1, 0
  %v4083 = vsel %vm4019, 1, 0
  %v4084 = vsel %vm4020, 1, 0
  %v4085 = vsel %vm4021, 1, 0
  %v4086 = vsel %vm4022, 1, 0
  %v4087 = vsel %vm4023, 1, 0
  %v4088 = vsel %vm4024, 1, 0
  %v4089 = vsel %vm4025, 1, 0
  %v4090 = vsel %vm4026, 1, 0
  %v4091 = vsel %vm4027, 1, 0
  %v4092 = vsel %vm4028, 1, 0
  %v4093 = vsel %vm4029, 1, 0
  %v4094 = vsel %vm4030, 1, 0
  %v4095 = vsel %vm4031, 1, 0
  %v4096 = vsel %vm4032, 1, 0
  %v4097 = vsel %vm4033, 1, 0
  %v4098 = vsel %vm4034, 1, 0
  %v4099 = vsel %vm4035, 1, 0
  %v4100 = vsel %vm4036, 1, 0
  %v4101 = vsel %vm4037, 1, 0
  %v4102 = vsel %vm4038, 1, 0
  %v4103 = vsel %vm4039, 1, 0
  %v4104 = vsel %vm4040, 1, 0
  %v4105 = vsel %vm4041, 1, 0
  %v4106 = vsel %vm4042, 1, 0
  %v4107 = vsel %vm4043, 1, 0
  %v4108 = vsel %vm4044, 1, 0
  %v4109 = vsel %vm4045, 1, 0
  %v4110 = vsel %vm4046, 1, 0
  %v4111 = vsel %vm4047, 1, 0
  %v4112 = vsel %vm4048, 1, 0
  %v4113 = vsel %vm4049, 1, 0
  %v4114 = vsel %vm4050, 1, 0
  %v4115 = vsel %vm4051, 1, 0
  %v4116 = vsel %vm4052, 1, 0
  %v4117 = vsel %vm4053, 1, 0
  %v4118 = vsel %vm4054, 1, 0
  %v4119 = vsel %vm4055, 1, 0
  %v4120 = vsel %vm4056, 1, 0
  %v4121 = vsel %vm4057, 1, 0
  %v4122 = vsel %vm4058, 1, 0
  %v4123 = vsel %vm4059, 1, 0
  %v4124 = vsel %vm4060, 1, 0
  %v4125 = vsel %vm4061, 1, 0
  %v4126 = vsel %vm4062, 1, 0
  %v4127 = vsel %vm4063, 1, 0
  %v4128 = vsel %vm4064, 1, 0
  %v4129 = vsel %vm4065, 1, 0
  %v4130 = vsel %vm4066, 1, 0
  %v4131 = vsel %vm4067, 1, 0
  %v4132 = vsel %vm4068, 1, 0
  %v4133 = vsel %vm4069, 1, 0
  %v4134 = vsel %vm4070, 1, 0
  %v4135 = vsel %vm4071, 1, 0
  %v4136 = vsel %vm4072, 1, 0
  %4137 = vset.pattern.permute.xlu0 0
  %4138 = vperm.xlu0 %4137, %v4073
  %v4139 = vpop.permute.xlu0 %4138
  %4140 = vset.pattern.permute.xlu0 0
  %4141 = vperm.xlu0 %4140, %v4074
  %v4142 = vpop.permute.xlu0 %4141
  %4143 = vset.pattern.permute.xlu0 0
  %4144 = vperm.xlu0 %4143, %v4075
  %v4145 = vpop.permute.xlu0 %4144
  %4146 = vset.pattern.permute.xlu0 0
  %4147 = vperm.xlu0 %4146, %v4076
  %v4148 = vpop.permute.xlu0 %4147
  %4149 = vset.pattern.permute.xlu0 0
  %4150 = vperm.xlu0 %4149, %v4077
  %v4151 = vpop.permute.xlu0 %4150
  %4152 = vset.pattern.permute.xlu0 0
  %4153 = vperm.xlu0 %4152, %v4078
  %v4154 = vpop.permute.xlu0 %4153
  %4155 = vset.pattern.permute.xlu0 0
  %4156 = vperm.xlu0 %4155, %v4079
  %v4157 = vpop.permute.xlu0 %4156
  %4158 = vset.pattern.permute.xlu0 0
  %4159 = vperm.xlu0 %4158, %v4080
  %v4160 = vpop.permute.xlu0 %4159
  %4161 = vset.pattern.permute.xlu0 0
  %4162 = vperm.xlu0 %4161, %v4081
  %v4163 = vpop.permute.xlu0 %4162
  %4164 = vset.pattern.permute.xlu0 0
  %4165 = vperm.xlu0 %4164, %v4082
  %v4166 = vpop.permute.xlu0 %4165
  %4167 = vset.pattern.permute.xlu0 0
  %4168 = vperm.xlu0 %4167, %v4083
  %v4169 = vpop.permute.xlu0 %4168
  %4170 = vset.pattern.permute.xlu0 0
  %4171 = vperm.xlu0 %4170, %v4084
  %v4172 = vpop.permute.xlu0 %4171
  %4173 = vset.pattern.permute.xlu0 0
  %4174 = vperm.xlu0 %4173, %v4085
  %v4175 = vpop.permute.xlu0 %4174
  %4176 = vset.pattern.permute.xlu0 0
  %4177 = vperm.xlu0 %4176, %v4086
  %v4178 = vpop.permute.xlu0 %4177
  %4179 = vset.pattern.permute.xlu0 0
  %4180 = vperm.xlu0 %4179, %v4087
  %v4181 = vpop.permute.xlu0 %4180
  %4182 = vset.pattern.permute.xlu0 0
  %4183 = vperm.xlu0 %4182, %v4088
  %v4184 = vpop.permute.xlu0 %4183
  %4185 = vset.pattern.permute.xlu0 0
  %4186 = vperm.xlu0 %4185, %v4089
  %v4187 = vpop.permute.xlu0 %4186
  %4188 = vset.pattern.permute.xlu0 0
  %4189 = vperm.xlu0 %4188, %v4090
  %v4190 = vpop.permute.xlu0 %4189
  %4191 = vset.pattern.permute.xlu0 0
  %4192 = vperm.xlu0 %4191, %v4091
  %v4193 = vpop.permute.xlu0 %4192
  %4194 = vset.pattern.permute.xlu0 0
  %4195 = vperm.xlu0 %4194, %v4092
  %v4196 = vpop.permute.xlu0 %4195
  %4197 = vset.pattern.permute.xlu0 0
  %4198 = vperm.xlu0 %4197, %v4093
  %v4199 = vpop.permute.xlu0 %4198
  %4200 = vset.pattern.permute.xlu0 0
  %4201 = vperm.xlu0 %4200, %v4094
  %v4202 = vpop.permute.xlu0 %4201
  %4203 = vset.pattern.permute.xlu0 0
  %4204 = vperm.xlu0 %4203, %v4095
  %v4205 = vpop.permute.xlu0 %4204
  %4206 = vset.pattern.permute.xlu0 0
  %4207 = vperm.xlu0 %4206, %v4096
  %v4208 = vpop.permute.xlu0 %4207
  %4209 = vset.pattern.permute.xlu0 0
  %4210 = vperm.xlu0 %4209, %v4097
  %v4211 = vpop.permute.xlu0 %4210
  %4212 = vset.pattern.permute.xlu0 0
  %4213 = vperm.xlu0 %4212, %v4098
  %v4214 = vpop.permute.xlu0 %4213
  %4215 = vset.pattern.permute.xlu0 0
  %4216 = vperm.xlu0 %4215, %v4099
  %v4217 = vpop.permute.xlu0 %4216
  %4218 = vset.pattern.permute.xlu0 0
  %4219 = vperm.xlu0 %4218, %v4100
  %v4220 = vpop.permute.xlu0 %4219
  %4221 = vset.pattern.permute.xlu0 0
  %4222 = vperm.xlu0 %4221, %v4101
  %v4223 = vpop.permute.xlu0 %4222
  %4224 = vset.pattern.permute.xlu0 0
  %4225 = vperm.xlu0 %4224, %v4102
  %v4226 = vpop.permute.xlu0 %4225
  %4227 = vset.pattern.permute.xlu0 0
  %4228 = vperm.xlu0 %4227, %v4103
  %v4229 = vpop.permute.xlu0 %4228
  %4230 = vset.pattern.permute.xlu0 0
  %4231 = vperm.xlu0 %4230, %v4104
  %v4232 = vpop.permute.xlu0 %4231
  %4233 = vset.pattern.permute.xlu0 0
  %4234 = vperm.xlu0 %4233, %v4105
  %v4235 = vpop.permute.xlu0 %4234
  %4236 = vset.pattern.permute.xlu0 0
  %4237 = vperm.xlu0 %4236, %v4106
  %v4238 = vpop.permute.xlu0 %4237
  %4239 = vset.pattern.permute.xlu0 0
  %4240 = vperm.xlu0 %4239, %v4107
  %v4241 = vpop.permute.xlu0 %4240
  %4242 = vset.pattern.permute.xlu0 0
  %4243 = vperm.xlu0 %4242, %v4108
  %v4244 = vpop.permute.xlu0 %4243
  %4245 = vset.pattern.permute.xlu0 0
  %4246 = vperm.xlu0 %4245, %v4109
  %v4247 = vpop.permute.xlu0 %4246
  %4248 = vset.pattern.permute.xlu0 0
  %4249 = vperm.xlu0 %4248, %v4110
  %v4250 = vpop.permute.xlu0 %4249
  %4251 = vset.pattern.permute.xlu0 0
  %4252 = vperm.xlu0 %4251, %v4111
  %v4253 = vpop.permute.xlu0 %4252
  %4254 = vset.pattern.permute.xlu0 0
  %4255 = vperm.xlu0 %4254, %v4112
  %v4256 = vpop.permute.xlu0 %4255
  %4257 = vset.pattern.permute.xlu0 0
  %4258 = vperm.xlu0 %4257, %v4113
  %v4259 = vpop.permute.xlu0 %4258
  %4260 = vset.pattern.permute.xlu0 0
  %4261 = vperm.xlu0 %4260, %v4114
  %v4262 = vpop.permute.xlu0 %4261
  %4263 = vset.pattern.permute.xlu0 0
  %4264 = vperm.xlu0 %4263, %v4115
  %v4265 = vpop.permute.xlu0 %4264
  %4266 = vset.pattern.permute.xlu0 0
  %4267 = vperm.xlu0 %4266, %v4116
  %v4268 = vpop.permute.xlu0 %4267
  %4269 = vset.pattern.permute.xlu0 0
  %4270 = vperm.xlu0 %4269, %v4117
  %v4271 = vpop.permute.xlu0 %4270
  %4272 = vset.pattern.permute.xlu0 0
  %4273 = vperm.xlu0 %4272, %v4118
  %v4274 = vpop.permute.xlu0 %4273
  %4275 = vset.pattern.permute.xlu0 0
  %4276 = vperm.xlu0 %4275, %v4119
  %v4277 = vpop.permute.xlu0 %4276
  %4278 = vset.pattern.permute.xlu0 0
  %4279 = vperm.xlu0 %4278, %v4120
  %v4280 = vpop.permute.xlu0 %4279
  %4281 = vset.pattern.permute.xlu0 0
  %4282 = vperm.xlu0 %4281, %v4121
  %v4283 = vpop.permute.xlu0 %4282
  %4284 = vset.pattern.permute.xlu0 0
  %4285 = vperm.xlu0 %4284, %v4122
  %v4286 = vpop.permute.xlu0 %4285
  %4287 = vset.pattern.permute.xlu0 0
  %4288 = vperm.xlu0 %4287, %v4123
  %v4289 = vpop.permute.xlu0 %4288
  %4290 = vset.pattern.permute.xlu0 0
  %4291 = vperm.xlu0 %4290, %v4124
  %v4292 = vpop.permute.xlu0 %4291
  %4293 = vset.pattern.permute.xlu0 0
  %4294 = vperm.xlu0 %4293, %v4125
  %v4295 = vpop.permute.xlu0 %4294
  %4296 = vset.pattern.permute.xlu0 0
  %4297 = vperm.xlu0 %4296, %v4126
  %v4298 = vpop.permute.xlu0 %4297
  %4299 = vset.pattern.permute.xlu0 0
  %4300 = vperm.xlu0 %4299, %v4127
  %v4301 = vpop.permute.xlu0 %4300
  %4302 = vset.pattern.permute.xlu0 0
  %4303 = vperm.xlu0 %4302, %v4128
  %v4304 = vpop.permute.xlu0 %4303
  %4305 = vset.pattern.permute.xlu0 0
  %4306 = vperm.xlu0 %4305, %v4129
  %v4307 = vpop.permute.xlu0 %4306
  %4308 = vset.pattern.permute.xlu0 0
  %4309 = vperm.xlu0 %4308, %v4130
  %v4310 = vpop.permute.xlu0 %4309
  %4311 = vset.pattern.permute.xlu0 0
  %4312 = vperm.xlu0 %4311, %v4131
  %v4313 = vpop.permute.xlu0 %4312
  %4314 = vset.pattern.permute.xlu0 0
  %4315 = vperm.xlu0 %4314, %v4132
  %v4316 = vpop.permute.xlu0 %4315
  %4317 = vset.pattern.permute.xlu0 0
  %4318 = vperm.xlu0 %4317, %v4133
  %v4319 = vpop.permute.xlu0 %4318
  %4320 = vset.pattern.permute.xlu0 0
  %4321 = vperm.xlu0 %4320, %v4134
  %v4322 = vpop.permute.xlu0 %4321
  %4323 = vset.pattern.permute.xlu0 0
  %4324 = vperm.xlu0 %4323, %v4135
  %v4325 = vpop.permute.xlu0 %4324
  %4326 = vset.pattern.permute.xlu0 0
  %4327 = vperm.xlu0 %4326, %v4136
  %v4328 = vpop.permute.xlu0 %4327
  %vm4329 = vcmp.eq.s32.totalorder %v4139, 1
  %vm4330 = vcmp.eq.s32.totalorder %v4142, 1
  %vm4331 = vcmp.eq.s32.totalorder %v4145, 1
  %vm4332 = vcmp.eq.s32.totalorder %v4148, 1
  %vm4333 = vcmp.eq.s32.totalorder %v4151, 1
  %vm4334 = vcmp.eq.s32.totalorder %v4154, 1
  %vm4335 = vcmp.eq.s32.totalorder %v4157, 1
  %vm4336 = vcmp.eq.s32.totalorder %v4160, 1
  %vm4337 = vcmp.eq.s32.totalorder %v4163, 1
  %vm4338 = vcmp.eq.s32.totalorder %v4166, 1
  %vm4339 = vcmp.eq.s32.totalorder %v4169, 1
  %vm4340 = vcmp.eq.s32.totalorder %v4172, 1
  %vm4341 = vcmp.eq.s32.totalorder %v4175, 1
  %vm4342 = vcmp.eq.s32.totalorder %v4178, 1
  %vm4343 = vcmp.eq.s32.totalorder %v4181, 1
  %vm4344 = vcmp.eq.s32.totalorder %v4184, 1
  %vm4345 = vcmp.eq.s32.totalorder %v4187, 1
  %vm4346 = vcmp.eq.s32.totalorder %v4190, 1
  %vm4347 = vcmp.eq.s32.totalorder %v4193, 1
  %vm4348 = vcmp.eq.s32.totalorder %v4196, 1
  %vm4349 = vcmp.eq.s32.totalorder %v4199, 1
  %vm4350 = vcmp.eq.s32.totalorder %v4202, 1
  %vm4351 = vcmp.eq.s32.totalorder %v4205, 1
  %vm4352 = vcmp.eq.s32.totalorder %v4208, 1
  %vm4353 = vcmp.eq.s32.totalorder %v4211, 1
  %vm4354 = vcmp.eq.s32.totalorder %v4214, 1
  %vm4355 = vcmp.eq.s32.totalorder %v4217, 1
  %vm4356 = vcmp.eq.s32.totalorder %v4220, 1
  %vm4357 = vcmp.eq.s32.totalorder %v4223, 1
  %vm4358 = vcmp.eq.s32.totalorder %v4226, 1
  %vm4359 = vcmp.eq.s32.totalorder %v4229, 1
  %vm4360 = vcmp.eq.s32.totalorder %v4232, 1
  %vm4361 = vcmp.eq.s32.totalorder %v4235, 1
  %vm4362 = vcmp.eq.s32.totalorder %v4238, 1
  %vm4363 = vcmp.eq.s32.totalorder %v4241, 1
  %vm4364 = vcmp.eq.s32.totalorder %v4244, 1
  %vm4365 = vcmp.eq.s32.totalorder %v4247, 1
  %vm4366 = vcmp.eq.s32.totalorder %v4250, 1
  %vm4367 = vcmp.eq.s32.totalorder %v4253, 1
  %vm4368 = vcmp.eq.s32.totalorder %v4256, 1
  %vm4369 = vcmp.eq.s32.totalorder %v4259, 1
  %vm4370 = vcmp.eq.s32.totalorder %v4262, 1
  %vm4371 = vcmp.eq.s32.totalorder %v4265, 1
  %vm4372 = vcmp.eq.s32.totalorder %v4268, 1
  %vm4373 = vcmp.eq.s32.totalorder %v4271, 1
  %vm4374 = vcmp.eq.s32.totalorder %v4274, 1
  %vm4375 = vcmp.eq.s32.totalorder %v4277, 1
  %vm4376 = vcmp.eq.s32.totalorder %v4280, 1
  %vm4377 = vcmp.eq.s32.totalorder %v4283, 1
  %vm4378 = vcmp.eq.s32.totalorder %v4286, 1
  %vm4379 = vcmp.eq.s32.totalorder %v4289, 1
  %vm4380 = vcmp.eq.s32.totalorder %v4292, 1
  %vm4381 = vcmp.eq.s32.totalorder %v4295, 1
  %vm4382 = vcmp.eq.s32.totalorder %v4298, 1
  %vm4383 = vcmp.eq.s32.totalorder %v4301, 1
  %vm4384 = vcmp.eq.s32.totalorder %v4304, 1
  %vm4385 = vcmp.eq.s32.totalorder %v4307, 1
  %vm4386 = vcmp.eq.s32.totalorder %v4310, 1
  %vm4387 = vcmp.eq.s32.totalorder %v4313, 1
  %vm4388 = vcmp.eq.s32.totalorder %v4316, 1
  %vm4389 = vcmp.eq.s32.totalorder %v4319, 1
  %vm4390 = vcmp.eq.s32.totalorder %v4322, 1
  %vm4391 = vcmp.eq.s32.totalorder %v4325, 1
  %vm4392 = vcmp.eq.s32.totalorder %v4328, 1
  %v4393 = vsel %vm4329, %v229, 0.0
  %v4394 = vsel %vm4330, %v230, 0.0
  %v4395 = vsel %vm4331, %v231, 0.0
  %v4396 = vsel %vm4332, %v232, 0.0
  %v4397 = vsel %vm4333, %v233, 0.0
  %v4398 = vsel %vm4334, %v234, 0.0
  %v4399 = vsel %vm4335, %v235, 0.0
  %v4400 = vsel %vm4336, %v236, 0.0
  %v4401 = vsel %vm4337, %v237, 0.0
  %v4402 = vsel %vm4338, %v238, 0.0
  %v4403 = vsel %vm4339, %v239, 0.0
  %v4404 = vsel %vm4340, %v240, 0.0
  %v4405 = vsel %vm4341, %v241, 0.0
  %v4406 = vsel %vm4342, %v242, 0.0
  %v4407 = vsel %vm4343, %v243, 0.0
  %v4408 = vsel %vm4344, %v244, 0.0
  %v4409 = vsel %vm4345, %v245, 0.0
  %v4410 = vsel %vm4346, %v246, 0.0
  %v4411 = vsel %vm4347, %v247, 0.0
  %v4412 = vsel %vm4348, %v248, 0.0
  %v4413 = vsel %vm4349, %v249, 0.0
  %v4414 = vsel %vm4350, %v250, 0.0
  %v4415 = vsel %vm4351, %v251, 0.0
  %v4416 = vsel %vm4352, %v252, 0.0
  %v4417 = vsel %vm4353, %v253, 0.0
  %v4418 = vsel %vm4354, %v254, 0.0
  %v4419 = vsel %vm4355, %v255, 0.0
  %v4420 = vsel %vm4356, %v256, 0.0
  %v4421 = vsel %vm4357, %v257, 0.0
  %v4422 = vsel %vm4358, %v258, 0.0
  %v4423 = vsel %vm4359, %v259, 0.0
  %v4424 = vsel %vm4360, %v260, 0.0
  %v4425 = vsel %vm4361, %v261, 0.0
  %v4426 = vsel %vm4362, %v262, 0.0
  %v4427 = vsel %vm4363, %v263, 0.0
  %v4428 = vsel %vm4364, %v264, 0.0
  %v4429 = vsel %vm4365, %v265, 0.0
  %v4430 = vsel %vm4366, %v266, 0.0
  %v4431 = vsel %vm4367, %v267, 0.0
  %v4432 = vsel %vm4368, %v268, 0.0
  %v4433 = vsel %vm4369, %v269, 0.0
  %v4434 = vsel %vm4370, %v270, 0.0
  %v4435 = vsel %vm4371, %v271, 0.0
  %v4436 = vsel %vm4372, %v272, 0.0
  %v4437 = vsel %vm4373, %v273, 0.0
  %v4438 = vsel %vm4374, %v274, 0.0
  %v4439 = vsel %vm4375, %v275, 0.0
  %v4440 = vsel %vm4376, %v276, 0.0
  %v4441 = vsel %vm4377, %v277, 0.0
  %v4442 = vsel %vm4378, %v278, 0.0
  %v4443 = vsel %vm4379, %v279, 0.0
  %v4444 = vsel %vm4380, %v280, 0.0
  %v4445 = vsel %vm4381, %v281, 0.0
  %v4446 = vsel %vm4382, %v282, 0.0
  %v4447 = vsel %vm4383, %v283, 0.0
  %v4448 = vsel %vm4384, %v284, 0.0
  %v4449 = vsel %vm4385, %v285, 0.0
  %v4450 = vsel %vm4386, %v286, 0.0
  %v4451 = vsel %vm4387, %v287, 0.0
  %v4452 = vsel %vm4388, %v288, 0.0
  %v4453 = vsel %vm4389, %v289, 0.0
  %v4454 = vsel %vm4390, %v290, 0.0
  %v4455 = vsel %vm4391, %v291, 0.0
  %v4456 = vsel %vm4392, %v292, 0.0
  %4457 = vst [vmem:[#allocation2 + $0x20] sm:$0xff] %v4393
  %4458 = vst [vmem:[#allocation2 + $0x68] sm:$0xff] %v4394
  %4459 = vst [vmem:[#allocation2 + $0xb0] sm:$0xff] %v4395
  %4460 = vst [vmem:[#allocation2 + $0xf8] sm:$0xff] %v4396
  %4461 = vst [vmem:[#allocation2 + $0x140] sm:$0xff] %v4397
  %4462 = vst [vmem:[#allocation2 + $0x188] sm:$0xff] %v4398
  %4463 = vst [vmem:[#allocation2 + $0x1d0] sm:$0xff] %v4399
  %4464 = vst [vmem:[#allocation2 + $0x218] sm:$0xff] %v4400
  %4465 = vst [vmem:[#allocation2 + $0x260] sm:$0xff] %v4401
  %4466 = vst [vmem:[#allocation2 + $0x2a8] sm:$0xff] %v4402
  %4467 = vst [vmem:[#allocation2 + $0x2f0] sm:$0xff] %v4403
  %4468 = vst [vmem:[#allocation2 + $0x338] sm:$0xff] %v4404
  %4469 = vst [vmem:[#allocation2 + $0x380] sm:$0xff] %v4405
  %4470 = vst [vmem:[#allocation2 + $0x3c8] sm:$0xff] %v4406
  %4471 = vst [vmem:[#allocation2 + $0x410] sm:$0xff] %v4407
  %4472 = vst [vmem:[#allocation2 + $0x458] sm:$0xff] %v4408
  %4473 = vst [vmem:[#allocation2 + $0x4a0] sm:$0xff] %v4409
  %4474 = vst [vmem:[#allocation2 + $0x4e8] sm:$0xff] %v4410
  %4475 = vst [vmem:[#allocation2 + $0x530] sm:$0xff] %v4411
  %4476 = vst [vmem:[#allocation2 + $0x578] sm:$0xff] %v4412
  %4477 = vst [vmem:[#allocation2 + $0x5c0] sm:$0xff] %v4413
  %4478 = vst [vmem:[#allocation2 + $0x608] sm:$0xff] %v4414
  %4479 = vst [vmem:[#allocation2 + $0x650] sm:$0xff] %v4415
  %4480 = vst [vmem:[#allocation2 + $0x698] sm:$0xff] %v4416
  %4481 = vst [vmem:[#allocation2 + $0x6e0] sm:$0xff] %v4417
  %4482 = vst [vmem:[#allocation2 + $0x728] sm:$0xff] %v4418
  %4483 = vst [vmem:[#allocation2 + $0x770] sm:$0xff] %v4419
  %4484 = vst [vmem:[#allocation2 + $0x7b8] sm:$0xff] %v4420
  %4485 = vst [vmem:[#allocation2 + $0x800] sm:$0xff] %v4421
  %4486 = vst [vmem:[#allocation2 + $0x848] sm:$0xff] %v4422
  %4487 = vst [vmem:[#allocation2 + $0x890] sm:$0xff] %v4423
  %4488 = vst [vmem:[#allocation2 + $0x8d8] sm:$0xff] %v4424
  %4489 = vst [vmem:[#allocation2 + $0x920] sm:$0xff] %v4425
  %4490 = vst [vmem:[#allocation2 + $0x968] sm:$0xff] %v4426
  %4491 = vst [vmem:[#allocation2 + $0x9b0] sm:$0xff] %v4427
  %4492 = vst [vmem:[#allocation2 + $0x9f8] sm:$0xff] %v4428
  %4493 = vst [vmem:[#allocation2 + $0xa40] sm:$0xff] %v4429
  %4494 = vst [vmem:[#allocation2 + $0xa88] sm:$0xff] %v4430
  %4495 = vst [vmem:[#allocation2 + $0xad0] sm:$0xff] %v4431
  %4496 = vst [vmem:[#allocation2 + $0xb18] sm:$0xff] %v4432
  %4497 = vst [vmem:[#allocation2 + $0xb60] sm:$0xff] %v4433
  %4498 = vst [vmem:[#allocation2 + $0xba8] sm:$0xff] %v4434
  %4499 = vst [vmem:[#allocation2 + $0xbf0] sm:$0xff] %v4435
  %4500 = vst [vmem:[#allocation2 + $0xc38] sm:$0xff] %v4436
  %4501 = vst [vmem:[#allocation2 + $0xc80] sm:$0xff] %v4437
  %4502 = vst [vmem:[#allocation2 + $0xcc8] sm:$0xff] %v4438
  %4503 = vst [vmem:[#allocation2 + $0xd10] sm:$0xff] %v4439
  %4504 = vst [vmem:[#allocation2 + $0xd58] sm:$0xff] %v4440
  %4505 = vst [vmem:[#allocation2 + $0xda0] sm:$0xff] %v4441
  %4506 = vst [vmem:[#allocation2 + $0xde8] sm:$0xff] %v4442
  %4507 = vst [vmem:[#allocation2 + $0xe30] sm:$0xff] %v4443
  %4508 = vst [vmem:[#allocation2 + $0xe78] sm:$0xff] %v4444
  %4509 = vst [vmem:[#allocation2 + $0xec0] sm:$0xff] %v4445
  %4510 = vst [vmem:[#allocation2 + $0xf08] sm:$0xff] %v4446
  %4511 = vst [vmem:[#allocation2 + $0xf50] sm:$0xff] %v4447
  %4512 = vst [vmem:[#allocation2 + $0xf98] sm:$0xff] %v4448
  %4513 = vst [vmem:[#allocation2 + $0xfe0] sm:$0xff] %v4449
  %4514 = vst [vmem:[#allocation2 + $0x1028] sm:$0xff] %v4450
  %4515 = vst [vmem:[#allocation2 + $0x1070] sm:$0xff] %v4451
  %4516 = vst [vmem:[#allocation2 + $0x10b8] sm:$0xff] %v4452
  %4517 = vst [vmem:[#allocation2 + $0x1100] sm:$0xff] %v4453
  %4518 = vst [vmem:[#allocation2 + $0x1148] sm:$0xff] %v4454
  %4519 = vst [vmem:[#allocation2 + $0x1190] sm:$0xff] %v4455
  %4520 = vst [vmem:[#allocation2 + $0x11d8] sm:$0xff] %v4456
  %vm4521 = vmand %vm3305, %vm2473
  %vm4522 = vmand %vm3306, %vm2474
  %vm4523 = vmand %vm3307, %vm2475
  %vm4524 = vmand %vm3308, %vm2476
  %vm4525 = vmand %vm3309, %vm2477
  %vm4526 = vmand %vm3310, %vm2478
  %vm4527 = vmand %vm3311, %vm2479
  %vm4528 = vmand %vm3312, %vm2480
  %vm4529 = vmand %vm3313, %vm2481
  %vm4530 = vmand %vm3314, %vm2482
  %vm4531 = vmand %vm3315, %vm2483
  %vm4532 = vmand %vm3316, %vm2484
  %vm4533 = vmand %vm3317, %vm2485
  %vm4534 = vmand %vm3318, %vm2486
  %vm4535 = vmand %vm3319, %vm2487
  %vm4536 = vmand %vm3320, %vm2488
  %vm4537 = vmand %vm3321, %vm2489
  %vm4538 = vmand %vm3322, %vm2490
  %vm4539 = vmand %vm3323, %vm2491
  %vm4540 = vmand %vm3324, %vm2492
  %vm4541 = vmand %vm3325, %vm2493
  %vm4542 = vmand %vm3326, %vm2494
  %vm4543 = vmand %vm3327, %vm2495
  %vm4544 = vmand %vm3328, %vm2496
  %vm4545 = vmand %vm3329, %vm2497
  %vm4546 = vmand %vm3330, %vm2498
  %vm4547 = vmand %vm3331, %vm2499
  %vm4548 = vmand %vm3332, %vm2500
  %vm4549 = vmand %vm3333, %vm2501
  %vm4550 = vmand %vm3334, %vm2502
  %vm4551 = vmand %vm3335, %vm2503
  %vm4552 = vmand %vm3336, %vm2504
  %vm4553 = vmand %vm3337, %vm2505
  %vm4554 = vmand %vm3338, %vm2506
  %vm4555 = vmand %vm3339, %vm2507
  %vm4556 = vmand %vm3340, %vm2508
  %vm4557 = vmand %vm3341, %vm2509
  %vm4558 = vmand %vm3342, %vm2510
  %vm4559 = vmand %vm3343, %vm2511
  %vm4560 = vmand %vm3344, %vm2512
  %vm4561 = vmand %vm3345, %vm2513
  %vm4562 = vmand %vm3346, %vm2514
  %vm4563 = vmand %vm3347, %vm2515
  %vm4564 = vmand %vm3348, %vm2516
  %vm4565 = vmand %vm3349, %vm2517
  %vm4566 = vmand %vm3350, %vm2518
  %vm4567 = vmand %vm3351, %vm2519
  %vm4568 = vmand %vm3352, %vm2520
  %vm4569 = vmand %vm3353, %vm2521
  %vm4570 = vmand %vm3354, %vm2522
  %vm4571 = vmand %vm3355, %vm2523
  %vm4572 = vmand %vm3356, %vm2524
  %vm4573 = vmand %vm3357, %vm2525
  %vm4574 = vmand %vm3358, %vm2526
  %vm4575 = vmand %vm3359, %vm2527
  %vm4576 = vmand %vm3360, %vm2528
  %vm4577 = vmand %vm3361, %vm2529
  %vm4578 = vmand %vm3362, %vm2530
  %vm4579 = vmand %vm3363, %vm2531
  %vm4580 = vmand %vm3364, %vm2532
  %vm4581 = vmand %vm3365, %vm2533
  %vm4582 = vmand %vm3366, %vm2534
  %vm4583 = vmand %vm3367, %vm2535
  %vm4584 = vmand %vm3368, %vm2536
  %vm4585 = vmand %vm4521, %vm2601
  %vm4586 = vmand %vm4522, %vm2602
  %vm4587 = vmand %vm4523, %vm2603
  %vm4588 = vmand %vm4524, %vm2604
  %vm4589 = vmand %vm4525, %vm2605
  %vm4590 = vmand %vm4526, %vm2606
  %vm4591 = vmand %vm4527, %vm2607
  %vm4592 = vmand %vm4528, %vm2608
  %vm4593 = vmand %vm4529, %vm2609
  %vm4594 = vmand %vm4530, %vm2610
  %vm4595 = vmand %vm4531, %vm2611
  %vm4596 = vmand %vm4532, %vm2612
  %vm4597 = vmand %vm4533, %vm2613
  %vm4598 = vmand %vm4534, %vm2614
  %vm4599 = vmand %vm4535, %vm2615
  %vm4600 = vmand %vm4536, %vm2616
  %vm4601 = vmand %vm4537, %vm2617
  %vm4602 = vmand %vm4538, %vm2618
  %vm4603 = vmand %vm4539, %vm2619
  %vm4604 = vmand %vm4540, %vm2620
  %vm4605 = vmand %vm4541, %vm2621
  %vm4606 = vmand %vm4542, %vm2622
  %vm4607 = vmand %vm4543, %vm2623
  %vm4608 = vmand %vm4544, %vm2624
  %vm4609 = vmand %vm4545, %vm2625
  %vm4610 = vmand %vm4546, %vm2626
  %vm4611 = vmand %vm4547, %vm2627
  %vm4612 = vmand %vm4548, %vm2628
  %vm4613 = vmand %vm4549, %vm2629
  %vm4614 = vmand %vm4550, %vm2630
  %vm4615 = vmand %vm4551, %vm2631
  %vm4616 = vmand %vm4552, %vm2632
  %vm4617 = vmand %vm4553, %vm2633
  %vm4618 = vmand %vm4554, %vm2634
  %vm4619 = vmand %vm4555, %vm2635
  %vm4620 = vmand %vm4556, %vm2636
  %vm4621 = vmand %vm4557, %vm2637
  %vm4622 = vmand %vm4558, %vm2638
  %vm4623 = vmand %vm4559, %vm2639
  %vm4624 = vmand %vm4560, %vm2640
  %vm4625 = vmand %vm4561, %vm2641
  %vm4626 = vmand %vm4562, %vm2642
  %vm4627 = vmand %vm4563, %vm2643
  %vm4628 = vmand %vm4564, %vm2644
  %vm4629 = vmand %vm4565, %vm2645
  %vm4630 = vmand %vm4566, %vm2646
  %vm4631 = vmand %vm4567, %vm2647
  %vm4632 = vmand %vm4568, %vm2648
  %vm4633 = vmand %vm4569, %vm2649
  %vm4634 = vmand %vm4570, %vm2650
  %vm4635 = vmand %vm4571, %vm2651
  %vm4636 = vmand %vm4572, %vm2652
  %vm4637 = vmand %vm4573, %vm2653
  %vm4638 = vmand %vm4574, %vm2654
  %vm4639 = vmand %vm4575, %vm2655
  %vm4640 = vmand %vm4576, %vm2656
  %vm4641 = vmand %vm4577, %vm2657
  %vm4642 = vmand %vm4578, %vm2658
  %vm4643 = vmand %vm4579, %vm2659
  %vm4644 = vmand %vm4580, %vm2660
  %vm4645 = vmand %vm4581, %vm2661
  %vm4646 = vmand %vm4582, %vm2662
  %vm4647 = vmand %vm4583, %vm2663
  %vm4648 = vmand %vm4584, %vm2664
  %v4649 = vsel %vm4585, 1, 0
  %v4650 = vsel %vm4586, 1, 0
  %v4651 = vsel %vm4587, 1, 0
  %v4652 = vsel %vm4588, 1, 0
  %v4653 = vsel %vm4589, 1, 0
  %v4654 = vsel %vm4590, 1, 0
  %v4655 = vsel %vm4591, 1, 0
  %v4656 = vsel %vm4592, 1, 0
  %v4657 = vsel %vm4593, 1, 0
  %v4658 = vsel %vm4594, 1, 0
  %v4659 = vsel %vm4595, 1, 0
  %v4660 = vsel %vm4596, 1, 0
  %v4661 = vsel %vm4597, 1, 0
  %v4662 = vsel %vm4598, 1, 0
  %v4663 = vsel %vm4599, 1, 0
  %v4664 = vsel %vm4600, 1, 0
  %v4665 = vsel %vm4601, 1, 0
  %v4666 = vsel %vm4602, 1, 0
  %v4667 = vsel %vm4603, 1, 0
  %v4668 = vsel %vm4604, 1, 0
  %v4669 = vsel %vm4605, 1, 0
  %v4670 = vsel %vm4606, 1, 0
  %v4671 = vsel %vm4607, 1, 0
  %v4672 = vsel %vm4608, 1, 0
  %v4673 = vsel %vm4609, 1, 0
  %v4674 = vsel %vm4610, 1, 0
  %v4675 = vsel %vm4611, 1, 0
  %v4676 = vsel %vm4612, 1, 0
  %v4677 = vsel %vm4613, 1, 0
  %v4678 = vsel %vm4614, 1, 0
  %v4679 = vsel %vm4615, 1, 0
  %v4680 = vsel %vm4616, 1, 0
  %v4681 = vsel %vm4617, 1, 0
  %v4682 = vsel %vm4618, 1, 0
  %v4683 = vsel %vm4619, 1, 0
  %v4684 = vsel %vm4620, 1, 0
  %v4685 = vsel %vm4621, 1, 0
  %v4686 = vsel %vm4622, 1, 0
  %v4687 = vsel %vm4623, 1, 0
  %v4688 = vsel %vm4624, 1, 0
  %v4689 = vsel %vm4625, 1, 0
  %v4690 = vsel %vm4626, 1, 0
  %v4691 = vsel %vm4627, 1, 0
  %v4692 = vsel %vm4628, 1, 0
  %v4693 = vsel %vm4629, 1, 0
  %v4694 = vsel %vm4630, 1, 0
  %v4695 = vsel %vm4631, 1, 0
  %v4696 = vsel %vm4632, 1, 0
  %v4697 = vsel %vm4633, 1, 0
  %v4698 = vsel %vm4634, 1, 0
  %v4699 = vsel %vm4635, 1, 0
  %v4700 = vsel %vm4636, 1, 0
  %v4701 = vsel %vm4637, 1, 0
  %v4702 = vsel %vm4638, 1, 0
  %v4703 = vsel %vm4639, 1, 0
  %v4704 = vsel %vm4640, 1, 0
  %v4705 = vsel %vm4641, 1, 0
  %v4706 = vsel %vm4642, 1, 0
  %v4707 = vsel %vm4643, 1, 0
  %v4708 = vsel %vm4644, 1, 0
  %v4709 = vsel %vm4645, 1, 0
  %v4710 = vsel %vm4646, 1, 0
  %v4711 = vsel %vm4647, 1, 0
  %v4712 = vsel %vm4648, 1, 0
  %4713 = vset.pattern.permute.xlu0 0
  %4714 = vperm.xlu0 %4713, %v4649
  %v4715 = vpop.permute.xlu0 %4714
  %4716 = vset.pattern.permute.xlu0 0
  %4717 = vperm.xlu0 %4716, %v4650
  %v4718 = vpop.permute.xlu0 %4717
  %4719 = vset.pattern.permute.xlu0 0
  %4720 = vperm.xlu0 %4719, %v4651
  %v4721 = vpop.permute.xlu0 %4720
  %4722 = vset.pattern.permute.xlu0 0
  %4723 = vperm.xlu0 %4722, %v4652
  %v4724 = vpop.permute.xlu0 %4723
  %4725 = vset.pattern.permute.xlu0 0
  %4726 = vperm.xlu0 %4725, %v4653
  %v4727 = vpop.permute.xlu0 %4726
  %4728 = vset.pattern.permute.xlu0 0
  %4729 = vperm.xlu0 %4728, %v4654
  %v4730 = vpop.permute.xlu0 %4729
  %4731 = vset.pattern.permute.xlu0 0
  %4732 = vperm.xlu0 %4731, %v4655
  %v4733 = vpop.permute.xlu0 %4732
  %4734 = vset.pattern.permute.xlu0 0
  %4735 = vperm.xlu0 %4734, %v4656
  %v4736 = vpop.permute.xlu0 %4735
  %4737 = vset.pattern.permute.xlu0 0
  %4738 = vperm.xlu0 %4737, %v4657
  %v4739 = vpop.permute.xlu0 %4738
  %4740 = vset.pattern.permute.xlu0 0
  %4741 = vperm.xlu0 %4740, %v4658
  %v4742 = vpop.permute.xlu0 %4741
  %4743 = vset.pattern.permute.xlu0 0
  %4744 = vperm.xlu0 %4743, %v4659
  %v4745 = vpop.permute.xlu0 %4744
  %4746 = vset.pattern.permute.xlu0 0
  %4747 = vperm.xlu0 %4746, %v4660
  %v4748 = vpop.permute.xlu0 %4747
  %4749 = vset.pattern.permute.xlu0 0
  %4750 = vperm.xlu0 %4749, %v4661
  %v4751 = vpop.permute.xlu0 %4750
  %4752 = vset.pattern.permute.xlu0 0
  %4753 = vperm.xlu0 %4752, %v4662
  %v4754 = vpop.permute.xlu0 %4753
  %4755 = vset.pattern.permute.xlu0 0
  %4756 = vperm.xlu0 %4755, %v4663
  %v4757 = vpop.permute.xlu0 %4756
  %4758 = vset.pattern.permute.xlu0 0
  %4759 = vperm.xlu0 %4758, %v4664
  %v4760 = vpop.permute.xlu0 %4759
  %4761 = vset.pattern.permute.xlu0 0
  %4762 = vperm.xlu0 %4761, %v4665
  %v4763 = vpop.permute.xlu0 %4762
  %4764 = vset.pattern.permute.xlu0 0
  %4765 = vperm.xlu0 %4764, %v4666
  %v4766 = vpop.permute.xlu0 %4765
  %4767 = vset.pattern.permute.xlu0 0
  %4768 = vperm.xlu0 %4767, %v4667
  %v4769 = vpop.permute.xlu0 %4768
  %4770 = vset.pattern.permute.xlu0 0
  %4771 = vperm.xlu0 %4770, %v4668
  %v4772 = vpop.permute.xlu0 %4771
  %4773 = vset.pattern.permute.xlu0 0
  %4774 = vperm.xlu0 %4773, %v4669
  %v4775 = vpop.permute.xlu0 %4774
  %4776 = vset.pattern.permute.xlu0 0
  %4777 = vperm.xlu0 %4776, %v4670
  %v4778 = vpop.permute.xlu0 %4777
  %4779 = vset.pattern.permute.xlu0 0
  %4780 = vperm.xlu0 %4779, %v4671
  %v4781 = vpop.permute.xlu0 %4780
  %4782 = vset.pattern.permute.xlu0 0
  %4783 = vperm.xlu0 %4782, %v4672
  %v4784 = vpop.permute.xlu0 %4783
  %4785 = vset.pattern.permute.xlu0 0
  %4786 = vperm.xlu0 %4785, %v4673
  %v4787 = vpop.permute.xlu0 %4786
  %4788 = vset.pattern.permute.xlu0 0
  %4789 = vperm.xlu0 %4788, %v4674
  %v4790 = vpop.permute.xlu0 %4789
  %4791 = vset.pattern.permute.xlu0 0
  %4792 = vperm.xlu0 %4791, %v4675
  %v4793 = vpop.permute.xlu0 %4792
  %4794 = vset.pattern.permute.xlu0 0
  %4795 = vperm.xlu0 %4794, %v4676
  %v4796 = vpop.permute.xlu0 %4795
  %4797 = vset.pattern.permute.xlu0 0
  %4798 = vperm.xlu0 %4797, %v4677
  %v4799 = vpop.permute.xlu0 %4798
  %4800 = vset.pattern.permute.xlu0 0
  %4801 = vperm.xlu0 %4800, %v4678
  %v4802 = vpop.permute.xlu0 %4801
  %4803 = vset.pattern.permute.xlu0 0
  %4804 = vperm.xlu0 %4803, %v4679
  %v4805 = vpop.permute.xlu0 %4804
  %4806 = vset.pattern.permute.xlu0 0
  %4807 = vperm.xlu0 %4806, %v4680
  %v4808 = vpop.permute.xlu0 %4807
  %4809 = vset.pattern.permute.xlu0 0
  %4810 = vperm.xlu0 %4809, %v4681
  %v4811 = vpop.permute.xlu0 %4810
  %4812 = vset.pattern.permute.xlu0 0
  %4813 = vperm.xlu0 %4812, %v4682
  %v4814 = vpop.permute.xlu0 %4813
  %4815 = vset.pattern.permute.xlu0 0
  %4816 = vperm.xlu0 %4815, %v4683
  %v4817 = vpop.permute.xlu0 %4816
  %4818 = vset.pattern.permute.xlu0 0
  %4819 = vperm.xlu0 %4818, %v4684
  %v4820 = vpop.permute.xlu0 %4819
  %4821 = vset.pattern.permute.xlu0 0
  %4822 = vperm.xlu0 %4821, %v4685
  %v4823 = vpop.permute.xlu0 %4822
  %4824 = vset.pattern.permute.xlu0 0
  %4825 = vperm.xlu0 %4824, %v4686
  %v4826 = vpop.permute.xlu0 %4825
  %4827 = vset.pattern.permute.xlu0 0
  %4828 = vperm.xlu0 %4827, %v4687
  %v4829 = vpop.permute.xlu0 %4828
  %4830 = vset.pattern.permute.xlu0 0
  %4831 = vperm.xlu0 %4830, %v4688
  %v4832 = vpop.permute.xlu0 %4831
  %4833 = vset.pattern.permute.xlu0 0
  %4834 = vperm.xlu0 %4833, %v4689
  %v4835 = vpop.permute.xlu0 %4834
  %4836 = vset.pattern.permute.xlu0 0
  %4837 = vperm.xlu0 %4836, %v4690
  %v4838 = vpop.permute.xlu0 %4837
  %4839 = vset.pattern.permute.xlu0 0
  %4840 = vperm.xlu0 %4839, %v4691
  %v4841 = vpop.permute.xlu0 %4840
  %4842 = vset.pattern.permute.xlu0 0
  %4843 = vperm.xlu0 %4842, %v4692
  %v4844 = vpop.permute.xlu0 %4843
  %4845 = vset.pattern.permute.xlu0 0
  %4846 = vperm.xlu0 %4845, %v4693
  %v4847 = vpop.permute.xlu0 %4846
  %4848 = vset.pattern.permute.xlu0 0
  %4849 = vperm.xlu0 %4848, %v4694
  %v4850 = vpop.permute.xlu0 %4849
  %4851 = vset.pattern.permute.xlu0 0
  %4852 = vperm.xlu0 %4851, %v4695
  %v4853 = vpop.permute.xlu0 %4852
  %4854 = vset.pattern.permute.xlu0 0
  %4855 = vperm.xlu0 %4854, %v4696
  %v4856 = vpop.permute.xlu0 %4855
  %4857 = vset.pattern.permute.xlu0 0
  %4858 = vperm.xlu0 %4857, %v4697
  %v4859 = vpop.permute.xlu0 %4858
  %4860 = vset.pattern.permute.xlu0 0
  %4861 = vperm.xlu0 %4860, %v4698
  %v4862 = vpop.permute.xlu0 %4861
  %4863 = vset.pattern.permute.xlu0 0
  %4864 = vperm.xlu0 %4863, %v4699
  %v4865 = vpop.permute.xlu0 %4864
  %4866 = vset.pattern.permute.xlu0 0
  %4867 = vperm.xlu0 %4866, %v4700
  %v4868 = vpop.permute.xlu0 %4867
  %4869 = vset.pattern.permute.xlu0 0
  %4870 = vperm.xlu0 %4869, %v4701
  %v4871 = vpop.permute.xlu0 %4870
  %4872 = vset.pattern.permute.xlu0 0
  %4873 = vperm.xlu0 %4872, %v4702
  %v4874 = vpop.permute.xlu0 %4873
  %4875 = vset.pattern.permute.xlu0 0
  %4876 = vperm.xlu0 %4875, %v4703
  %v4877 = vpop.permute.xlu0 %4876
  %4878 = vset.pattern.permute.xlu0 0
  %4879 = vperm.xlu0 %4878, %v4704
  %v4880 = vpop.permute.xlu0 %4879
  %4881 = vset.pattern.permute.xlu0 0
  %4882 = vperm.xlu0 %4881, %v4705
  %v4883 = vpop.permute.xlu0 %4882
  %4884 = vset.pattern.permute.xlu0 0
  %4885 = vperm.xlu0 %4884, %v4706
  %v4886 = vpop.permute.xlu0 %4885
  %4887 = vset.pattern.permute.xlu0 0
  %4888 = vperm.xlu0 %4887, %v4707
  %v4889 = vpop.permute.xlu0 %4888
  %4890 = vset.pattern.permute.xlu0 0
  %4891 = vperm.xlu0 %4890, %v4708
  %v4892 = vpop.permute.xlu0 %4891
  %4893 = vset.pattern.permute.xlu0 0
  %4894 = vperm.xlu0 %4893, %v4709
  %v4895 = vpop.permute.xlu0 %4894
  %4896 = vset.pattern.permute.xlu0 0
  %4897 = vperm.xlu0 %4896, %v4710
  %v4898 = vpop.permute.xlu0 %4897
  %4899 = vset.pattern.permute.xlu0 0
  %4900 = vperm.xlu0 %4899, %v4711
  %v4901 = vpop.permute.xlu0 %4900
  %4902 = vset.pattern.permute.xlu0 0
  %4903 = vperm.xlu0 %4902, %v4712
  %v4904 = vpop.permute.xlu0 %4903
  %vm4905 = vcmp.eq.s32.totalorder %v4715, 1
  %vm4906 = vcmp.eq.s32.totalorder %v4718, 1
  %vm4907 = vcmp.eq.s32.totalorder %v4721, 1
  %vm4908 = vcmp.eq.s32.totalorder %v4724, 1
  %vm4909 = vcmp.eq.s32.totalorder %v4727, 1
  %vm4910 = vcmp.eq.s32.totalorder %v4730, 1
  %vm4911 = vcmp.eq.s32.totalorder %v4733, 1
  %vm4912 = vcmp.eq.s32.totalorder %v4736, 1
  %vm4913 = vcmp.eq.s32.totalorder %v4739, 1
  %vm4914 = vcmp.eq.s32.totalorder %v4742, 1
  %vm4915 = vcmp.eq.s32.totalorder %v4745, 1
  %vm4916 = vcmp.eq.s32.totalorder %v4748, 1
  %vm4917 = vcmp.eq.s32.totalorder %v4751, 1
  %vm4918 = vcmp.eq.s32.totalorder %v4754, 1
  %vm4919 = vcmp.eq.s32.totalorder %v4757, 1
  %vm4920 = vcmp.eq.s32.totalorder %v4760, 1
  %vm4921 = vcmp.eq.s32.totalorder %v4763, 1
  %vm4922 = vcmp.eq.s32.totalorder %v4766, 1
  %vm4923 = vcmp.eq.s32.totalorder %v4769, 1
  %vm4924 = vcmp.eq.s32.totalorder %v4772, 1
  %vm4925 = vcmp.eq.s32.totalorder %v4775, 1
  %vm4926 = vcmp.eq.s32.totalorder %v4778, 1
  %vm4927 = vcmp.eq.s32.totalorder %v4781, 1
  %vm4928 = vcmp.eq.s32.totalorder %v4784, 1
  %vm4929 = vcmp.eq.s32.totalorder %v4787, 1
  %vm4930 = vcmp.eq.s32.totalorder %v4790, 1
  %vm4931 = vcmp.eq.s32.totalorder %v4793, 1
  %vm4932 = vcmp.eq.s32.totalorder %v4796, 1
  %vm4933 = vcmp.eq.s32.totalorder %v4799, 1
  %vm4934 = vcmp.eq.s32.totalorder %v4802, 1
  %vm4935 = vcmp.eq.s32.totalorder %v4805, 1
  %vm4936 = vcmp.eq.s32.totalorder %v4808, 1
  %vm4937 = vcmp.eq.s32.totalorder %v4811, 1
  %vm4938 = vcmp.eq.s32.totalorder %v4814, 1
  %vm4939 = vcmp.eq.s32.totalorder %v4817, 1
  %vm4940 = vcmp.eq.s32.totalorder %v4820, 1
  %vm4941 = vcmp.eq.s32.totalorder %v4823, 1
  %vm4942 = vcmp.eq.s32.totalorder %v4826, 1
  %vm4943 = vcmp.eq.s32.totalorder %v4829, 1
  %vm4944 = vcmp.eq.s32.totalorder %v4832, 1
  %vm4945 = vcmp.eq.s32.totalorder %v4835, 1
  %vm4946 = vcmp.eq.s32.totalorder %v4838, 1
  %vm4947 = vcmp.eq.s32.totalorder %v4841, 1
  %vm4948 = vcmp.eq.s32.totalorder %v4844, 1
  %vm4949 = vcmp.eq.s32.totalorder %v4847, 1
  %vm4950 = vcmp.eq.s32.totalorder %v4850, 1
  %vm4951 = vcmp.eq.s32.totalorder %v4853, 1
  %vm4952 = vcmp.eq.s32.totalorder %v4856, 1
  %vm4953 = vcmp.eq.s32.totalorder %v4859, 1
  %vm4954 = vcmp.eq.s32.totalorder %v4862, 1
  %vm4955 = vcmp.eq.s32.totalorder %v4865, 1
  %vm4956 = vcmp.eq.s32.totalorder %v4868, 1
  %vm4957 = vcmp.eq.s32.totalorder %v4871, 1
  %vm4958 = vcmp.eq.s32.totalorder %v4874, 1
  %vm4959 = vcmp.eq.s32.totalorder %v4877, 1
  %vm4960 = vcmp.eq.s32.totalorder %v4880, 1
  %vm4961 = vcmp.eq.s32.totalorder %v4883, 1
  %vm4962 = vcmp.eq.s32.totalorder %v4886, 1
  %vm4963 = vcmp.eq.s32.totalorder %v4889, 1
  %vm4964 = vcmp.eq.s32.totalorder %v4892, 1
  %vm4965 = vcmp.eq.s32.totalorder %v4895, 1
  %vm4966 = vcmp.eq.s32.totalorder %v4898, 1
  %vm4967 = vcmp.eq.s32.totalorder %v4901, 1
  %vm4968 = vcmp.eq.s32.totalorder %v4904, 1
  %v4969 = vsel %vm4905, %v2407, 0.0
  %v4970 = vsel %vm4906, %v2406, 0.0
  %v4971 = vsel %vm4907, %v2405, 0.0
  %v4972 = vsel %vm4908, %v2404, 0.0
  %v4973 = vsel %vm4909, %v2403, 0.0
  %v4974 = vsel %vm4910, %v2402, 0.0
  %v4975 = vsel %vm4911, %v2401, 0.0
  %v4976 = vsel %vm4912, %v2400, 0.0
  %v4977 = vsel %vm4913, %v2399, 0.0
  %v4978 = vsel %vm4914, %v2398, 0.0
  %v4979 = vsel %vm4915, %v2397, 0.0
  %v4980 = vsel %vm4916, %v2396, 0.0
  %v4981 = vsel %vm4917, %v2395, 0.0
  %v4982 = vsel %vm4918, %v2394, 0.0
  %v4983 = vsel %vm4919, %v2393, 0.0
  %v4984 = vsel %vm4920, %v2392, 0.0
  %v4985 = vsel %vm4921, %v2391, 0.0
  %v4986 = vsel %vm4922, %v2390, 0.0
  %v4987 = vsel %vm4923, %v2389, 0.0
  %v4988 = vsel %vm4924, %v2388, 0.0
  %v4989 = vsel %vm4925, %v2387, 0.0
  %v4990 = vsel %vm4926, %v2386, 0.0
  %v4991 = vsel %vm4927, %v2385, 0.0
  %v4992 = vsel %vm4928, %v2384, 0.0
  %v4993 = vsel %vm4929, %v2383, 0.0
  %v4994 = vsel %vm4930, %v2382, 0.0
  %v4995 = vsel %vm4931, %v2381, 0.0
  %v4996 = vsel %vm4932, %v2380, 0.0
  %v4997 = vsel %vm4933, %v2379, 0.0
  %v4998 = vsel %vm4934, %v2378, 0.0
  %v4999 = vsel %vm4935, %v2377, 0.0
  %v5000 = vsel %vm4936, %v2376, 0.0
  %v5001 = vsel %vm4937, %v2375, 0.0
  %v5002 = vsel %vm4938, %v2374, 0.0
  %v5003 = vsel %vm4939, %v2373, 0.0
  %v5004 = vsel %vm4940, %v2372, 0.0
  %v5005 = vsel %vm4941, %v2371, 0.0
  %v5006 = vsel %vm4942, %v2370, 0.0
  %v5007 = vsel %vm4943, %v2369, 0.0
  %v5008 = vsel %vm4944, %v2368, 0.0
  %v5009 = vsel %vm4945, %v2367, 0.0
  %v5010 = vsel %vm4946, %v2366, 0.0
  %v5011 = vsel %vm4947, %v2365, 0.0
  %v5012 = vsel %vm4948, %v2364, 0.0
  %v5013 = vsel %vm4949, %v2363, 0.0
  %v5014 = vsel %vm4950, %v2362, 0.0
  %v5015 = vsel %vm4951, %v2361, 0.0
  %v5016 = vsel %vm4952, %v2360, 0.0
  %v5017 = vsel %vm4953, %v2359, 0.0
  %v5018 = vsel %vm4954, %v2358, 0.0
  %v5019 = vsel %vm4955, %v2357, 0.0
  %v5020 = vsel %vm4956, %v2356, 0.0
  %v5021 = vsel %vm4957, %v2355, 0.0
  %v5022 = vsel %vm4958, %v2354, 0.0
  %v5023 = vsel %vm4959, %v2353, 0.0
  %v5024 = vsel %vm4960, %v2352, 0.0
  %v5025 = vsel %vm4961, %v2351, 0.0
  %v5026 = vsel %vm4962, %v2350, 0.0
  %v5027 = vsel %vm4963, %v2349, 0.0
  %v5028 = vsel %vm4964, %v2348, 0.0
  %v5029 = vsel %vm4965, %v2347, 0.0
  %v5030 = vsel %vm4966, %v2346, 0.0
  %v5031 = vsel %vm4967, %v2345, 0.0
  %v5032 = vsel %vm4968, %v2408, 0.0
  %5033 = vst [vmem:[#allocation2 + $0x28] sm:$0xff] %v4969
  %5034 = vst [vmem:[#allocation2 + $0x70] sm:$0xff] %v4970
  %5035 = vst [vmem:[#allocation2 + $0xb8] sm:$0xff] %v4971
  %5036 = vst [vmem:[#allocation2 + $0x100] sm:$0xff] %v4972
  %5037 = vst [vmem:[#allocation2 + $0x148] sm:$0xff] %v4973
  %5038 = vst [vmem:[#allocation2 + $0x190] sm:$0xff] %v4974
  %5039 = vst [vmem:[#allocation2 + $0x1d8] sm:$0xff] %v4975
  %5040 = vst [vmem:[#allocation2 + $0x220] sm:$0xff] %v4976
  %5041 = vst [vmem:[#allocation2 + $0x268] sm:$0xff] %v4977
  %5042 = vst [vmem:[#allocation2 + $0x2b0] sm:$0xff] %v4978
  %5043 = vst [vmem:[#allocation2 + $0x2f8] sm:$0xff] %v4979
  %5044 = vst [vmem:[#allocation2 + $0x340] sm:$0xff] %v4980
  %5045 = vst [vmem:[#allocation2 + $0x388] sm:$0xff] %v4981
  %5046 = vst [vmem:[#allocation2 + $0x3d0] sm:$0xff] %v4982
  %5047 = vst [vmem:[#allocation2 + $0x418] sm:$0xff] %v4983
  %5048 = vst [vmem:[#allocation2 + $0x460] sm:$0xff] %v4984
  %5049 = vst [vmem:[#allocation2 + $0x4a8] sm:$0xff] %v4985
  %5050 = vst [vmem:[#allocation2 + $0x4f0] sm:$0xff] %v4986
  %5051 = vst [vmem:[#allocation2 + $0x538] sm:$0xff] %v4987
  %5052 = vst [vmem:[#allocation2 + $0x580] sm:$0xff] %v4988
  %5053 = vst [vmem:[#allocation2 + $0x5c8] sm:$0xff] %v4989
  %5054 = vst [vmem:[#allocation2 + $0x610] sm:$0xff] %v4990
  %5055 = vst [vmem:[#allocation2 + $0x658] sm:$0xff] %v4991
  %5056 = vst [vmem:[#allocation2 + $0x6a0] sm:$0xff] %v4992
  %5057 = vst [vmem:[#allocation2 + $0x6e8] sm:$0xff] %v4993
  %5058 = vst [vmem:[#allocation2 + $0x730] sm:$0xff] %v4994
  %5059 = vst [vmem:[#allocation2 + $0x778] sm:$0xff] %v4995
  %5060 = vst [vmem:[#allocation2 + $0x7c0] sm:$0xff] %v4996
  %5061 = vst [vmem:[#allocation2 + $0x808] sm:$0xff] %v4997
  %5062 = vst [vmem:[#allocation2 + $0x850] sm:$0xff] %v4998
  %5063 = vst [vmem:[#allocation2 + $0x898] sm:$0xff] %v4999
  %5064 = vst [vmem:[#allocation2 + $0x8e0] sm:$0xff] %v5000
  %5065 = vst [vmem:[#allocation2 + $0x928] sm:$0xff] %v5001
  %5066 = vst [vmem:[#allocation2 + $0x970] sm:$0xff] %v5002
  %5067 = vst [vmem:[#allocation2 + $0x9b8] sm:$0xff] %v5003
  %5068 = vst [vmem:[#allocation2 + $0xa00] sm:$0xff] %v5004
  %5069 = vst [vmem:[#allocation2 + $0xa48] sm:$0xff] %v5005
  %5070 = vst [vmem:[#allocation2 + $0xa90] sm:$0xff] %v5006
  %5071 = vst [vmem:[#allocation2 + $0xad8] sm:$0xff] %v5007
  %5072 = vst [vmem:[#allocation2 + $0xb20] sm:$0xff] %v5008
  %5073 = vst [vmem:[#allocation2 + $0xb68] sm:$0xff] %v5009
  %5074 = vst [vmem:[#allocation2 + $0xbb0] sm:$0xff] %v5010
  %5075 = vst [vmem:[#allocation2 + $0xbf8] sm:$0xff] %v5011
  %5076 = vst [vmem:[#allocation2 + $0xc40] sm:$0xff] %v5012
  %5077 = vst [vmem:[#allocation2 + $0xc88] sm:$0xff] %v5013
  %5078 = vst [vmem:[#allocation2 + $0xcd0] sm:$0xff] %v5014
  %5079 = vst [vmem:[#allocation2 + $0xd18] sm:$0xff] %v5015
  %5080 = vst [vmem:[#allocation2 + $0xd60] sm:$0xff] %v5016
  %5081 = vst [vmem:[#allocation2 + $0xda8] sm:$0xff] %v5017
  %5082 = vst [vmem:[#allocation2 + $0xdf0] sm:$0xff] %v5018
  %5083 = vst [vmem:[#allocation2 + $0xe38] sm:$0xff] %v5019
  %5084 = vst [vmem:[#allocation2 + $0xe80] sm:$0xff] %v5020
  %5085 = vst [vmem:[#allocation2 + $0xec8] sm:$0xff] %v5021
  %5086 = vst [vmem:[#allocation2 + $0xf10] sm:$0xff] %v5022
  %5087 = vst [vmem:[#allocation2 + $0xf58] sm:$0xff] %v5023
  %5088 = vst [vmem:[#allocation2 + $0xfa0] sm:$0xff] %v5024
  %5089 = vst [vmem:[#allocation2 + $0xfe8] sm:$0xff] %v5025
  %5090 = vst [vmem:[#allocation2 + $0x1030] sm:$0xff] %v5026
  %5091 = vst [vmem:[#allocation2 + $0x1078] sm:$0xff] %v5027
  %5092 = vst [vmem:[#allocation2 + $0x10c0] sm:$0xff] %v5028
  %5093 = vst [vmem:[#allocation2 + $0x1108] sm:$0xff] %v5029
  %5094 = vst [vmem:[#allocation2 + $0x1150] sm:$0xff] %v5030
  %5095 = vst [vmem:[#allocation2 + $0x1198] sm:$0xff] %v5031
  %5096 = vst [vmem:[#allocation2 + $0x11e0] sm:$0xff] %v5032
  %v5097 = vadd.s32 %v293, 1
  %v5098 = vadd.s32 %v294, 1
  %v5099 = vadd.s32 %v295, 1
  %v5100 = vadd.s32 %v296, 1
  %v5101 = vadd.s32 %v297, 1
  %v5102 = vadd.s32 %v298, 1
  %v5103 = vadd.s32 %v299, 1
  %v5104 = vadd.s32 %v300, 1
  %v5105 = vadd.s32 %v301, 1
  %v5106 = vadd.s32 %v302, 1
  %v5107 = vadd.s32 %v303, 1
  %v5108 = vadd.s32 %v304, 1
  %v5109 = vadd.s32 %v305, 1
  %v5110 = vadd.s32 %v306, 1
  %v5111 = vadd.s32 %v307, 1
  %v5112 = vadd.s32 %v308, 1
  %v5113 = vadd.s32 %v309, 1
  %v5114 = vadd.s32 %v310, 1
  %v5115 = vadd.s32 %v311, 1
  %v5116 = vadd.s32 %v312, 1
  %v5117 = vadd.s32 %v313, 1
  %v5118 = vadd.s32 %v314, 1
  %v5119 = vadd.s32 %v315, 1
  %v5120 = vadd.s32 %v316, 1
  %v5121 = vadd.s32 %v317, 1
  %v5122 = vadd.s32 %v318, 1
  %v5123 = vadd.s32 %v319, 1
  %v5124 = vadd.s32 %v320, 1
  %v5125 = vadd.s32 %v321, 1
  %v5126 = vadd.s32 %v322, 1
  %v5127 = vadd.s32 %v323, 1
  %v5128 = vadd.s32 %v324, 1
  %v5129 = vadd.s32 %v325, 1
  %v5130 = vadd.s32 %v326, 1
  %v5131 = vadd.s32 %v327, 1
  %v5132 = vadd.s32 %v328, 1
  %v5133 = vadd.s32 %v329, 1
  %v5134 = vadd.s32 %v330, 1
  %v5135 = vadd.s32 %v331, 1
  %v5136 = vadd.s32 %v332, 1
  %v5137 = vadd.s32 %v333, 1
  %v5138 = vadd.s32 %v334, 1
  %v5139 = vadd.s32 %v335, 1
  %v5140 = vadd.s32 %v336, 1
  %v5141 = vadd.s32 %v337, 1
  %v5142 = vadd.s32 %v338, 1
  %v5143 = vadd.s32 %v339, 1
  %v5144 = vadd.s32 %v340, 1
  %v5145 = vadd.s32 %v341, 1
  %v5146 = vadd.s32 %v342, 1
  %v5147 = vadd.s32 %v343, 1
  %v5148 = vadd.s32 %v344, 1
  %v5149 = vadd.s32 %v345, 1
  %v5150 = vadd.s32 %v346, 1
  %v5151 = vadd.s32 %v347, 1
  %v5152 = vadd.s32 %v348, 1
  %v5153 = vadd.s32 %v349, 1
  %v5154 = vadd.s32 %v350, 1
  %v5155 = vadd.s32 %v351, 1
  %v5156 = vadd.s32 %v352, 1
  %v5157 = vadd.s32 %v353, 1
  %v5158 = vadd.s32 %v354, 1
  %v5159 = vadd.s32 %v355, 1
  %v5160 = vadd.s32 %v356, 1
  %vm5161 = vcmp.ge.s32.totalorder %v5097, 0
  %vm5162 = vcmp.ge.s32.totalorder %v5098, 0
  %vm5163 = vcmp.ge.s32.totalorder %v5099, 0
  %vm5164 = vcmp.ge.s32.totalorder %v5100, 0
  %vm5165 = vcmp.ge.s32.totalorder %v5101, 0
  %vm5166 = vcmp.ge.s32.totalorder %v5102, 0
  %vm5167 = vcmp.ge.s32.totalorder %v5103, 0
  %vm5168 = vcmp.ge.s32.totalorder %v5104, 0
  %vm5169 = vcmp.ge.s32.totalorder %v5105, 0
  %vm5170 = vcmp.ge.s32.totalorder %v5106, 0
  %vm5171 = vcmp.ge.s32.totalorder %v5107, 0
  %vm5172 = vcmp.ge.s32.totalorder %v5108, 0
  %vm5173 = vcmp.ge.s32.totalorder %v5109, 0
  %vm5174 = vcmp.ge.s32.totalorder %v5110, 0
  %vm5175 = vcmp.ge.s32.totalorder %v5111, 0
  %vm5176 = vcmp.ge.s32.totalorder %v5112, 0
  %vm5177 = vcmp.ge.s32.totalorder %v5113, 0
  %vm5178 = vcmp.ge.s32.totalorder %v5114, 0
  %vm5179 = vcmp.ge.s32.totalorder %v5115, 0
  %vm5180 = vcmp.ge.s32.totalorder %v5116, 0
  %vm5181 = vcmp.ge.s32.totalorder %v5117, 0
  %vm5182 = vcmp.ge.s32.totalorder %v5118, 0
  %vm5183 = vcmp.ge.s32.totalorder %v5119, 0
  %vm5184 = vcmp.ge.s32.totalorder %v5120, 0
  %vm5185 = vcmp.ge.s32.totalorder %v5121, 0
  %vm5186 = vcmp.ge.s32.totalorder %v5122, 0
  %vm5187 = vcmp.ge.s32.totalorder %v5123, 0
  %vm5188 = vcmp.ge.s32.totalorder %v5124, 0
  %vm5189 = vcmp.ge.s32.totalorder %v5125, 0
  %vm5190 = vcmp.ge.s32.totalorder %v5126, 0
  %vm5191 = vcmp.ge.s32.totalorder %v5127, 0
  %vm5192 = vcmp.ge.s32.totalorder %v5128, 0
  %vm5193 = vcmp.ge.s32.totalorder %v5129, 0
  %vm5194 = vcmp.ge.s32.totalorder %v5130, 0
  %vm5195 = vcmp.ge.s32.totalorder %v5131, 0
  %vm5196 = vcmp.ge.s32.totalorder %v5132, 0
  %vm5197 = vcmp.ge.s32.totalorder %v5133, 0
  %vm5198 = vcmp.ge.s32.totalorder %v5134, 0
  %vm5199 = vcmp.ge.s32.totalorder %v5135, 0
  %vm5200 = vcmp.ge.s32.totalorder %v5136, 0
  %vm5201 = vcmp.ge.s32.totalorder %v5137, 0
  %vm5202 = vcmp.ge.s32.totalorder %v5138, 0
  %vm5203 = vcmp.ge.s32.totalorder %v5139, 0
  %vm5204 = vcmp.ge.s32.totalorder %v5140, 0
  %vm5205 = vcmp.ge.s32.totalorder %v5141, 0
  %vm5206 = vcmp.ge.s32.totalorder %v5142, 0
  %vm5207 = vcmp.ge.s32.totalorder %v5143, 0
  %vm5208 = vcmp.ge.s32.totalorder %v5144, 0
  %vm5209 = vcmp.ge.s32.totalorder %v5145, 0
  %vm5210 = vcmp.ge.s32.totalorder %v5146, 0
  %vm5211 = vcmp.ge.s32.totalorder %v5147, 0
  %vm5212 = vcmp.ge.s32.totalorder %v5148, 0
  %vm5213 = vcmp.ge.s32.totalorder %v5149, 0
  %vm5214 = vcmp.ge.s32.totalorder %v5150, 0
  %vm5215 = vcmp.ge.s32.totalorder %v5151, 0
  %vm5216 = vcmp.ge.s32.totalorder %v5152, 0
  %vm5217 = vcmp.ge.s32.totalorder %v5153, 0
  %vm5218 = vcmp.ge.s32.totalorder %v5154, 0
  %vm5219 = vcmp.ge.s32.totalorder %v5155, 0
  %vm5220 = vcmp.ge.s32.totalorder %v5156, 0
  %vm5221 = vcmp.ge.s32.totalorder %v5157, 0
  %vm5222 = vcmp.ge.s32.totalorder %v5158, 0
  %vm5223 = vcmp.ge.s32.totalorder %v5159, 0
  %vm5224 = vcmp.ge.s32.totalorder %v5160, 0
  %vm5225 = vcmp.lt.s32.totalorder %v5097, 16
  %vm5226 = vcmp.lt.s32.totalorder %v5098, 16
  %vm5227 = vcmp.lt.s32.totalorder %v5099, 16
  %vm5228 = vcmp.lt.s32.totalorder %v5100, 16
  %vm5229 = vcmp.lt.s32.totalorder %v5101, 16
  %vm5230 = vcmp.lt.s32.totalorder %v5102, 16
  %vm5231 = vcmp.lt.s32.totalorder %v5103, 16
  %vm5232 = vcmp.lt.s32.totalorder %v5104, 16
  %vm5233 = vcmp.lt.s32.totalorder %v5105, 16
  %vm5234 = vcmp.lt.s32.totalorder %v5106, 16
  %vm5235 = vcmp.lt.s32.totalorder %v5107, 16
  %vm5236 = vcmp.lt.s32.totalorder %v5108, 16
  %vm5237 = vcmp.lt.s32.totalorder %v5109, 16
  %vm5238 = vcmp.lt.s32.totalorder %v5110, 16
  %vm5239 = vcmp.lt.s32.totalorder %v5111, 16
  %vm5240 = vcmp.lt.s32.totalorder %v5112, 16
  %vm5241 = vcmp.lt.s32.totalorder %v5113, 16
  %vm5242 = vcmp.lt.s32.totalorder %v5114, 16
  %vm5243 = vcmp.lt.s32.totalorder %v5115, 16
  %vm5244 = vcmp.lt.s32.totalorder %v5116, 16
  %vm5245 = vcmp.lt.s32.totalorder %v5117, 16
  %vm5246 = vcmp.lt.s32.totalorder %v5118, 16
  %vm5247 = vcmp.lt.s32.totalorder %v5119, 16
  %vm5248 = vcmp.lt.s32.totalorder %v5120, 16
  %vm5249 = vcmp.lt.s32.totalorder %v5121, 16
  %vm5250 = vcmp.lt.s32.totalorder %v5122, 16
  %vm5251 = vcmp.lt.s32.totalorder %v5123, 16
  %vm5252 = vcmp.lt.s32.totalorder %v5124, 16
  %vm5253 = vcmp.lt.s32.totalorder %v5125, 16
  %vm5254 = vcmp.lt.s32.totalorder %v5126, 16
  %vm5255 = vcmp.lt.s32.totalorder %v5127, 16
  %vm5256 = vcmp.lt.s32.totalorder %v5128, 16
  %vm5257 = vcmp.lt.s32.totalorder %v5129, 16
  %vm5258 = vcmp.lt.s32.totalorder %v5130, 16
  %vm5259 = vcmp.lt.s32.totalorder %v5131, 16
  %vm5260 = vcmp.lt.s32.totalorder %v5132, 16
  %vm5261 = vcmp.lt.s32.totalorder %v5133, 16
  %vm5262 = vcmp.lt.s32.totalorder %v5134, 16
  %vm5263 = vcmp.lt.s32.totalorder %v5135, 16
  %vm5264 = vcmp.lt.s32.totalorder %v5136, 16
  %vm5265 = vcmp.lt.s32.totalorder %v5137, 16
  %vm5266 = vcmp.lt.s32.totalorder %v5138, 16
  %vm5267 = vcmp.lt.s32.totalorder %v5139, 16
  %vm5268 = vcmp.lt.s32.totalorder %v5140, 16
  %vm5269 = vcmp.lt.s32.totalorder %v5141, 16
  %vm5270 = vcmp.lt.s32.totalorder %v5142, 16
  %vm5271 = vcmp.lt.s32.totalorder %v5143, 16
  %vm5272 = vcmp.lt.s32.totalorder %v5144, 16
  %vm5273 = vcmp.lt.s32.totalorder %v5145, 16
  %vm5274 = vcmp.lt.s32.totalorder %v5146, 16
  %vm5275 = vcmp.lt.s32.totalorder %v5147, 16
  %vm5276 = vcmp.lt.s32.totalorder %v5148, 16
  %vm5277 = vcmp.lt.s32.totalorder %v5149, 16
  %vm5278 = vcmp.lt.s32.totalorder %v5150, 16
  %vm5279 = vcmp.lt.s32.totalorder %v5151, 16
  %vm5280 = vcmp.lt.s32.totalorder %v5152, 16
  %vm5281 = vcmp.lt.s32.totalorder %v5153, 16
  %vm5282 = vcmp.lt.s32.totalorder %v5154, 16
  %vm5283 = vcmp.lt.s32.totalorder %v5155, 16
  %vm5284 = vcmp.lt.s32.totalorder %v5156, 16
  %vm5285 = vcmp.lt.s32.totalorder %v5157, 16
  %vm5286 = vcmp.lt.s32.totalorder %v5158, 16
  %vm5287 = vcmp.lt.s32.totalorder %v5159, 16
  %vm5288 = vcmp.lt.s32.totalorder %v5160, 16
  %vm5289 = vmand %vm5161, %vm5225
  %vm5290 = vmand %vm5162, %vm5226
  %vm5291 = vmand %vm5163, %vm5227
  %vm5292 = vmand %vm5164, %vm5228
  %vm5293 = vmand %vm5165, %vm5229
  %vm5294 = vmand %vm5166, %vm5230
  %vm5295 = vmand %vm5167, %vm5231
  %vm5296 = vmand %vm5168, %vm5232
  %vm5297 = vmand %vm5169, %vm5233
  %vm5298 = vmand %vm5170, %vm5234
  %vm5299 = vmand %vm5171, %vm5235
  %vm5300 = vmand %vm5172, %vm5236
  %vm5301 = vmand %vm5173, %vm5237
  %vm5302 = vmand %vm5174, %vm5238
  %vm5303 = vmand %vm5175, %vm5239
  %vm5304 = vmand %vm5176, %vm5240
  %vm5305 = vmand %vm5177, %vm5241
  %vm5306 = vmand %vm5178, %vm5242
  %vm5307 = vmand %vm5179, %vm5243
  %vm5308 = vmand %vm5180, %vm5244
  %vm5309 = vmand %vm5181, %vm5245
  %vm5310 = vmand %vm5182, %vm5246
  %vm5311 = vmand %vm5183, %vm5247
  %vm5312 = vmand %vm5184, %vm5248
  %vm5313 = vmand %vm5185, %vm5249
  %vm5314 = vmand %vm5186, %vm5250
  %vm5315 = vmand %vm5187, %vm5251
  %vm5316 = vmand %vm5188, %vm5252
  %vm5317 = vmand %vm5189, %vm5253
  %vm5318 = vmand %vm5190, %vm5254
  %vm5319 = vmand %vm5191, %vm5255
  %vm5320 = vmand %vm5192, %vm5256
  %vm5321 = vmand %vm5193, %vm5257
  %vm5322 = vmand %vm5194, %vm5258
  %vm5323 = vmand %vm5195, %vm5259
  %vm5324 = vmand %vm5196, %vm5260
  %vm5325 = vmand %vm5197, %vm5261
  %vm5326 = vmand %vm5198, %vm5262
  %vm5327 = vmand %vm5199, %vm5263
  %vm5328 = vmand %vm5200, %vm5264
  %vm5329 = vmand %vm5201, %vm5265
  %vm5330 = vmand %vm5202, %vm5266
  %vm5331 = vmand %vm5203, %vm5267
  %vm5332 = vmand %vm5204, %vm5268
  %vm5333 = vmand %vm5205, %vm5269
  %vm5334 = vmand %vm5206, %vm5270
  %vm5335 = vmand %vm5207, %vm5271
  %vm5336 = vmand %vm5208, %vm5272
  %vm5337 = vmand %vm5209, %vm5273
  %vm5338 = vmand %vm5210, %vm5274
  %vm5339 = vmand %vm5211, %vm5275
  %vm5340 = vmand %vm5212, %vm5276
  %vm5341 = vmand %vm5213, %vm5277
  %vm5342 = vmand %vm5214, %vm5278
  %vm5343 = vmand %vm5215, %vm5279
  %vm5344 = vmand %vm5216, %vm5280
  %vm5345 = vmand %vm5217, %vm5281
  %vm5346 = vmand %vm5218, %vm5282
  %vm5347 = vmand %vm5219, %vm5283
  %vm5348 = vmand %vm5220, %vm5284
  %vm5349 = vmand %vm5221, %vm5285
  %vm5350 = vmand %vm5222, %vm5286
  %vm5351 = vmand %vm5223, %vm5287
  %vm5352 = vmand %vm5224, %vm5288
  %vm5353 = vmand %vm5289, %vm872
  %vm5354 = vmand %vm5290, %vm873
  %vm5355 = vmand %vm5291, %vm874
  %vm5356 = vmand %vm5292, %vm875
  %vm5357 = vmand %vm5293, %vm876
  %vm5358 = vmand %vm5294, %vm877
  %vm5359 = vmand %vm5295, %vm878
  %vm5360 = vmand %vm5296, %vm879
  %vm5361 = vmand %vm5297, %vm880
  %vm5362 = vmand %vm5298, %vm881
  %vm5363 = vmand %vm5299, %vm882
  %vm5364 = vmand %vm5300, %vm883
  %vm5365 = vmand %vm5301, %vm884
  %vm5366 = vmand %vm5302, %vm885
  %vm5367 = vmand %vm5303, %vm886
  %vm5368 = vmand %vm5304, %vm887
  %vm5369 = vmand %vm5305, %vm888
  %vm5370 = vmand %vm5306, %vm889
  %vm5371 = vmand %vm5307, %vm890
  %vm5372 = vmand %vm5308, %vm891
  %vm5373 = vmand %vm5309, %vm892
  %vm5374 = vmand %vm5310, %vm893
  %vm5375 = vmand %vm5311, %vm894
  %vm5376 = vmand %vm5312, %vm895
  %vm5377 = vmand %vm5313, %vm896
  %vm5378 = vmand %vm5314, %vm897
  %vm5379 = vmand %vm5315, %vm898
  %vm5380 = vmand %vm5316, %vm899
  %vm5381 = vmand %vm5317, %vm900
  %vm5382 = vmand %vm5318, %vm901
  %vm5383 = vmand %vm5319, %vm902
  %vm5384 = vmand %vm5320, %vm903
  %vm5385 = vmand %vm5321, %vm904
  %vm5386 = vmand %vm5322, %vm905
  %vm5387 = vmand %vm5323, %vm906
  %vm5388 = vmand %vm5324, %vm907
  %vm5389 = vmand %vm5325, %vm908
  %vm5390 = vmand %vm5326, %vm909
  %vm5391 = vmand %vm5327, %vm910
  %vm5392 = vmand %vm5328, %vm911
  %vm5393 = vmand %vm5329, %vm912
  %vm5394 = vmand %vm5330, %vm913
  %vm5395 = vmand %vm5331, %vm914
  %vm5396 = vmand %vm5332, %vm915
  %vm5397 = vmand %vm5333, %vm916
  %vm5398 = vmand %vm5334, %vm917
  %vm5399 = vmand %vm5335, %vm918
  %vm5400 = vmand %vm5336, %vm919
  %vm5401 = vmand %vm5337, %vm920
  %vm5402 = vmand %vm5338, %vm921
  %vm5403 = vmand %vm5339, %vm922
  %vm5404 = vmand %vm5340, %vm923
  %vm5405 = vmand %vm5341, %vm924
  %vm5406 = vmand %vm5342, %vm925
  %vm5407 = vmand %vm5343, %vm926
  %vm5408 = vmand %vm5344, %vm927
  %vm5409 = vmand %vm5345, %vm928
  %vm5410 = vmand %vm5346, %vm929
  %vm5411 = vmand %vm5347, %vm930
  %vm5412 = vmand %vm5348, %vm931
  %vm5413 = vmand %vm5349, %vm932
  %vm5414 = vmand %vm5350, %vm933
  %vm5415 = vmand %vm5351, %vm934
  %vm5416 = vmand %vm5352, %vm935
  %vm5417 = vmand %vm5353, %vm1000
  %vm5418 = vmand %vm5354, %vm1001
  %vm5419 = vmand %vm5355, %vm1002
  %vm5420 = vmand %vm5356, %vm1003
  %vm5421 = vmand %vm5357, %vm1004
  %vm5422 = vmand %vm5358, %vm1005
  %vm5423 = vmand %vm5359, %vm1006
  %vm5424 = vmand %vm5360, %vm1007
  %vm5425 = vmand %vm5361, %vm1008
  %vm5426 = vmand %vm5362, %vm1009
  %vm5427 = vmand %vm5363, %vm1010
  %vm5428 = vmand %vm5364, %vm1011
  %vm5429 = vmand %vm5365, %vm1012
  %vm5430 = vmand %vm5366, %vm1013
  %vm5431 = vmand %vm5367, %vm1014
  %vm5432 = vmand %vm5368, %vm1015
  %vm5433 = vmand %vm5369, %vm1016
  %vm5434 = vmand %vm5370, %vm1017
  %vm5435 = vmand %vm5371, %vm1018
  %vm5436 = vmand %vm5372, %vm1019
  %vm5437 = vmand %vm5373, %vm1020
  %vm5438 = vmand %vm5374, %vm1021
  %vm5439 = vmand %vm5375, %vm1022
  %vm5440 = vmand %vm5376, %vm1023
  %vm5441 = vmand %vm5377, %vm1024
  %vm5442 = vmand %vm5378, %vm1025
  %vm5443 = vmand %vm5379, %vm1026
  %vm5444 = vmand %vm5380, %vm1027
  %vm5445 = vmand %vm5381, %vm1028
  %vm5446 = vmand %vm5382, %vm1029
  %vm5447 = vmand %vm5383, %vm1030
  %vm5448 = vmand %vm5384, %vm1031
  %vm5449 = vmand %vm5385, %vm1032
  %vm5450 = vmand %vm5386, %vm1033
  %vm5451 = vmand %vm5387, %vm1034
  %vm5452 = vmand %vm5388, %vm1035
  %vm5453 = vmand %vm5389, %vm1036
  %vm5454 = vmand %vm5390, %vm1037
  %vm5455 = vmand %vm5391, %vm1038
  %vm5456 = vmand %vm5392, %vm1039
  %vm5457 = vmand %vm5393, %vm1040
  %vm5458 = vmand %vm5394, %vm1041
  %vm5459 = vmand %vm5395, %vm1042
  %vm5460 = vmand %vm5396, %vm1043
  %vm5461 = vmand %vm5397, %vm1044
  %vm5462 = vmand %vm5398, %vm1045
  %vm5463 = vmand %vm5399, %vm1046
  %vm5464 = vmand %vm5400, %vm1047
  %vm5465 = vmand %vm5401, %vm1048
  %vm5466 = vmand %vm5402, %vm1049
  %vm5467 = vmand %vm5403, %vm1050
  %vm5468 = vmand %vm5404, %vm1051
  %vm5469 = vmand %vm5405, %vm1052
  %vm5470 = vmand %vm5406, %vm1053
  %vm5471 = vmand %vm5407, %vm1054
  %vm5472 = vmand %vm5408, %vm1055
  %vm5473 = vmand %vm5409, %vm1056
  %vm5474 = vmand %vm5410, %vm1057
  %vm5475 = vmand %vm5411, %vm1058
  %vm5476 = vmand %vm5412, %vm1059
  %vm5477 = vmand %vm5413, %vm1060
  %vm5478 = vmand %vm5414, %vm1061
  %vm5479 = vmand %vm5415, %vm1062
  %vm5480 = vmand %vm5416, %vm1063
  %v5481 = vsel %vm5417, 1, 0
  %v5482 = vsel %vm5418, 1, 0
  %v5483 = vsel %vm5419, 1, 0
  %v5484 = vsel %vm5420, 1, 0
  %v5485 = vsel %vm5421, 1, 0
  %v5486 = vsel %vm5422, 1, 0
  %v5487 = vsel %vm5423, 1, 0
  %v5488 = vsel %vm5424, 1, 0
  %v5489 = vsel %vm5425, 1, 0
  %v5490 = vsel %vm5426, 1, 0
  %v5491 = vsel %vm5427, 1, 0
  %v5492 = vsel %vm5428, 1, 0
  %v5493 = vsel %vm5429, 1, 0
  %v5494 = vsel %vm5430, 1, 0
  %v5495 = vsel %vm5431, 1, 0
  %v5496 = vsel %vm5432, 1, 0
  %v5497 = vsel %vm5433, 1, 0
  %v5498 = vsel %vm5434, 1, 0
  %v5499 = vsel %vm5435, 1, 0
  %v5500 = vsel %vm5436, 1, 0
  %v5501 = vsel %vm5437, 1, 0
  %v5502 = vsel %vm5438, 1, 0
  %v5503 = vsel %vm5439, 1, 0
  %v5504 = vsel %vm5440, 1, 0
  %v5505 = vsel %vm5441, 1, 0
  %v5506 = vsel %vm5442, 1, 0
  %v5507 = vsel %vm5443, 1, 0
  %v5508 = vsel %vm5444, 1, 0
  %v5509 = vsel %vm5445, 1, 0
  %v5510 = vsel %vm5446, 1, 0
  %v5511 = vsel %vm5447, 1, 0
  %v5512 = vsel %vm5448, 1, 0
  %v5513 = vsel %vm5449, 1, 0
  %v5514 = vsel %vm5450, 1, 0
  %v5515 = vsel %vm5451, 1, 0
  %v5516 = vsel %vm5452, 1, 0
  %v5517 = vsel %vm5453, 1, 0
  %v5518 = vsel %vm5454, 1, 0
  %v5519 = vsel %vm5455, 1, 0
  %v5520 = vsel %vm5456, 1, 0
  %v5521 = vsel %vm5457, 1, 0
  %v5522 = vsel %vm5458, 1, 0
  %v5523 = vsel %vm5459, 1, 0
  %v5524 = vsel %vm5460, 1, 0
  %v5525 = vsel %vm5461, 1, 0
  %v5526 = vsel %vm5462, 1, 0
  %v5527 = vsel %vm5463, 1, 0
  %v5528 = vsel %vm5464, 1, 0
  %v5529 = vsel %vm5465, 1, 0
  %v5530 = vsel %vm5466, 1, 0
  %v5531 = vsel %vm5467, 1, 0
  %v5532 = vsel %vm5468, 1, 0
  %v5533 = vsel %vm5469, 1, 0
  %v5534 = vsel %vm5470, 1, 0
  %v5535 = vsel %vm5471, 1, 0
  %v5536 = vsel %vm5472, 1, 0
  %v5537 = vsel %vm5473, 1, 0
  %v5538 = vsel %vm5474, 1, 0
  %v5539 = vsel %vm5475, 1, 0
  %v5540 = vsel %vm5476, 1, 0
  %v5541 = vsel %vm5477, 1, 0
  %v5542 = vsel %vm5478, 1, 0
  %v5543 = vsel %vm5479, 1, 0
  %v5544 = vsel %vm5480, 1, 0
  %5545 = vset.pattern.permute.xlu0 0
  %5546 = vperm.xlu0 %5545, %v5481
  %v5547 = vpop.permute.xlu0 %5546
  %5548 = vset.pattern.permute.xlu0 0
  %5549 = vperm.xlu0 %5548, %v5482
  %v5550 = vpop.permute.xlu0 %5549
  %5551 = vset.pattern.permute.xlu0 0
  %5552 = vperm.xlu0 %5551, %v5483
  %v5553 = vpop.permute.xlu0 %5552
  %5554 = vset.pattern.permute.xlu0 0
  %5555 = vperm.xlu0 %5554, %v5484
  %v5556 = vpop.permute.xlu0 %5555
  %5557 = vset.pattern.permute.xlu0 0
  %5558 = vperm.xlu0 %5557, %v5485
  %v5559 = vpop.permute.xlu0 %5558
  %5560 = vset.pattern.permute.xlu0 0
  %5561 = vperm.xlu0 %5560, %v5486
  %v5562 = vpop.permute.xlu0 %5561
  %5563 = vset.pattern.permute.xlu0 0
  %5564 = vperm.xlu0 %5563, %v5487
  %v5565 = vpop.permute.xlu0 %5564
  %5566 = vset.pattern.permute.xlu0 0
  %5567 = vperm.xlu0 %5566, %v5488
  %v5568 = vpop.permute.xlu0 %5567
  %5569 = vset.pattern.permute.xlu0 0
  %5570 = vperm.xlu0 %5569, %v5489
  %v5571 = vpop.permute.xlu0 %5570
  %5572 = vset.pattern.permute.xlu0 0
  %5573 = vperm.xlu0 %5572, %v5490
  %v5574 = vpop.permute.xlu0 %5573
  %5575 = vset.pattern.permute.xlu0 0
  %5576 = vperm.xlu0 %5575, %v5491
  %v5577 = vpop.permute.xlu0 %5576
  %5578 = vset.pattern.permute.xlu0 0
  %5579 = vperm.xlu0 %5578, %v5492
  %v5580 = vpop.permute.xlu0 %5579
  %5581 = vset.pattern.permute.xlu0 0
  %5582 = vperm.xlu0 %5581, %v5493
  %v5583 = vpop.permute.xlu0 %5582
  %5584 = vset.pattern.permute.xlu0 0
  %5585 = vperm.xlu0 %5584, %v5494
  %v5586 = vpop.permute.xlu0 %5585
  %5587 = vset.pattern.permute.xlu0 0
  %5588 = vperm.xlu0 %5587, %v5495
  %v5589 = vpop.permute.xlu0 %5588
  %5590 = vset.pattern.permute.xlu0 0
  %5591 = vperm.xlu0 %5590, %v5496
  %v5592 = vpop.permute.xlu0 %5591
  %5593 = vset.pattern.permute.xlu0 0
  %5594 = vperm.xlu0 %5593, %v5497
  %v5595 = vpop.permute.xlu0 %5594
  %5596 = vset.pattern.permute.xlu0 0
  %5597 = vperm.xlu0 %5596, %v5498
  %v5598 = vpop.permute.xlu0 %5597
  %5599 = vset.pattern.permute.xlu0 0
  %5600 = vperm.xlu0 %5599, %v5499
  %v5601 = vpop.permute.xlu0 %5600
  %5602 = vset.pattern.permute.xlu0 0
  %5603 = vperm.xlu0 %5602, %v5500
  %v5604 = vpop.permute.xlu0 %5603
  %5605 = vset.pattern.permute.xlu0 0
  %5606 = vperm.xlu0 %5605, %v5501
  %v5607 = vpop.permute.xlu0 %5606
  %5608 = vset.pattern.permute.xlu0 0
  %5609 = vperm.xlu0 %5608, %v5502
  %v5610 = vpop.permute.xlu0 %5609
  %5611 = vset.pattern.permute.xlu0 0
  %5612 = vperm.xlu0 %5611, %v5503
  %v5613 = vpop.permute.xlu0 %5612
  %5614 = vset.pattern.permute.xlu0 0
  %5615 = vperm.xlu0 %5614, %v5504
  %v5616 = vpop.permute.xlu0 %5615
  %5617 = vset.pattern.permute.xlu0 0
  %5618 = vperm.xlu0 %5617, %v5505
  %v5619 = vpop.permute.xlu0 %5618
  %5620 = vset.pattern.permute.xlu0 0
  %5621 = vperm.xlu0 %5620, %v5506
  %v5622 = vpop.permute.xlu0 %5621
  %5623 = vset.pattern.permute.xlu0 0
  %5624 = vperm.xlu0 %5623, %v5507
  %v5625 = vpop.permute.xlu0 %5624
  %5626 = vset.pattern.permute.xlu0 0
  %5627 = vperm.xlu0 %5626, %v5508
  %v5628 = vpop.permute.xlu0 %5627
  %5629 = vset.pattern.permute.xlu0 0
  %5630 = vperm.xlu0 %5629, %v5509
  %v5631 = vpop.permute.xlu0 %5630
  %5632 = vset.pattern.permute.xlu0 0
  %5633 = vperm.xlu0 %5632, %v5510
  %v5634 = vpop.permute.xlu0 %5633
  %5635 = vset.pattern.permute.xlu0 0
  %5636 = vperm.xlu0 %5635, %v5511
  %v5637 = vpop.permute.xlu0 %5636
  %5638 = vset.pattern.permute.xlu0 0
  %5639 = vperm.xlu0 %5638, %v5512
  %v5640 = vpop.permute.xlu0 %5639
  %5641 = vset.pattern.permute.xlu0 0
  %5642 = vperm.xlu0 %5641, %v5513
  %v5643 = vpop.permute.xlu0 %5642
  %5644 = vset.pattern.permute.xlu0 0
  %5645 = vperm.xlu0 %5644, %v5514
  %v5646 = vpop.permute.xlu0 %5645
  %5647 = vset.pattern.permute.xlu0 0
  %5648 = vperm.xlu0 %5647, %v5515
  %v5649 = vpop.permute.xlu0 %5648
  %5650 = vset.pattern.permute.xlu0 0
  %5651 = vperm.xlu0 %5650, %v5516
  %v5652 = vpop.permute.xlu0 %5651
  %5653 = vset.pattern.permute.xlu0 0
  %5654 = vperm.xlu0 %5653, %v5517
  %v5655 = vpop.permute.xlu0 %5654
  %5656 = vset.pattern.permute.xlu0 0
  %5657 = vperm.xlu0 %5656, %v5518
  %v5658 = vpop.permute.xlu0 %5657
  %5659 = vset.pattern.permute.xlu0 0
  %5660 = vperm.xlu0 %5659, %v5519
  %v5661 = vpop.permute.xlu0 %5660
  %5662 = vset.pattern.permute.xlu0 0
  %5663 = vperm.xlu0 %5662, %v5520
  %v5664 = vpop.permute.xlu0 %5663
  %5665 = vset.pattern.permute.xlu0 0
  %5666 = vperm.xlu0 %5665, %v5521
  %v5667 = vpop.permute.xlu0 %5666
  %5668 = vset.pattern.permute.xlu0 0
  %5669 = vperm.xlu0 %5668, %v5522
  %v5670 = vpop.permute.xlu0 %5669
  %5671 = vset.pattern.permute.xlu0 0
  %5672 = vperm.xlu0 %5671, %v5523
  %v5673 = vpop.permute.xlu0 %5672
  %5674 = vset.pattern.permute.xlu0 0
  %5675 = vperm.xlu0 %5674, %v5524
  %v5676 = vpop.permute.xlu0 %5675
  %5677 = vset.pattern.permute.xlu0 0
  %5678 = vperm.xlu0 %5677, %v5525
  %v5679 = vpop.permute.xlu0 %5678
  %5680 = vset.pattern.permute.xlu0 0
  %5681 = vperm.xlu0 %5680, %v5526
  %v5682 = vpop.permute.xlu0 %5681
  %5683 = vset.pattern.permute.xlu0 0
  %5684 = vperm.xlu0 %5683, %v5527
  %v5685 = vpop.permute.xlu0 %5684
  %5686 = vset.pattern.permute.xlu0 0
  %5687 = vperm.xlu0 %5686, %v5528
  %v5688 = vpop.permute.xlu0 %5687
  %5689 = vset.pattern.permute.xlu0 0
  %5690 = vperm.xlu0 %5689, %v5529
  %v5691 = vpop.permute.xlu0 %5690
  %5692 = vset.pattern.permute.xlu0 0
  %5693 = vperm.xlu0 %5692, %v5530
  %v5694 = vpop.permute.xlu0 %5693
  %5695 = vset.pattern.permute.xlu0 0
  %5696 = vperm.xlu0 %5695, %v5531
  %v5697 = vpop.permute.xlu0 %5696
  %5698 = vset.pattern.permute.xlu0 0
  %5699 = vperm.xlu0 %5698, %v5532
  %v5700 = vpop.permute.xlu0 %5699
  %5701 = vset.pattern.permute.xlu0 0
  %5702 = vperm.xlu0 %5701, %v5533
  %v5703 = vpop.permute.xlu0 %5702
  %5704 = vset.pattern.permute.xlu0 0
  %5705 = vperm.xlu0 %5704, %v5534
  %v5706 = vpop.permute.xlu0 %5705
  %5707 = vset.pattern.permute.xlu0 0
  %5708 = vperm.xlu0 %5707, %v5535
  %v5709 = vpop.permute.xlu0 %5708
  %5710 = vset.pattern.permute.xlu0 0
  %5711 = vperm.xlu0 %5710, %v5536
  %v5712 = vpop.permute.xlu0 %5711
  %5713 = vset.pattern.permute.xlu0 0
  %5714 = vperm.xlu0 %5713, %v5537
  %v5715 = vpop.permute.xlu0 %5714
  %5716 = vset.pattern.permute.xlu0 0
  %5717 = vperm.xlu0 %5716, %v5538
  %v5718 = vpop.permute.xlu0 %5717
  %5719 = vset.pattern.permute.xlu0 0
  %5720 = vperm.xlu0 %5719, %v5539
  %v5721 = vpop.permute.xlu0 %5720
  %5722 = vset.pattern.permute.xlu0 0
  %5723 = vperm.xlu0 %5722, %v5540
  %v5724 = vpop.permute.xlu0 %5723
  %5725 = vset.pattern.permute.xlu0 0
  %5726 = vperm.xlu0 %5725, %v5541
  %v5727 = vpop.permute.xlu0 %5726
  %5728 = vset.pattern.permute.xlu0 0
  %5729 = vperm.xlu0 %5728, %v5542
  %v5730 = vpop.permute.xlu0 %5729
  %5731 = vset.pattern.permute.xlu0 0
  %5732 = vperm.xlu0 %5731, %v5543
  %v5733 = vpop.permute.xlu0 %5732
  %5734 = vset.pattern.permute.xlu0 0
  %5735 = vperm.xlu0 %5734, %v5544
  %v5736 = vpop.permute.xlu0 %5735
  %vm5737 = vcmp.eq.s32.totalorder %v5547, 1
  %vm5738 = vcmp.eq.s32.totalorder %v5550, 1
  %vm5739 = vcmp.eq.s32.totalorder %v5553, 1
  %vm5740 = vcmp.eq.s32.totalorder %v5556, 1
  %vm5741 = vcmp.eq.s32.totalorder %v5559, 1
  %vm5742 = vcmp.eq.s32.totalorder %v5562, 1
  %vm5743 = vcmp.eq.s32.totalorder %v5565, 1
  %vm5744 = vcmp.eq.s32.totalorder %v5568, 1
  %vm5745 = vcmp.eq.s32.totalorder %v5571, 1
  %vm5746 = vcmp.eq.s32.totalorder %v5574, 1
  %vm5747 = vcmp.eq.s32.totalorder %v5577, 1
  %vm5748 = vcmp.eq.s32.totalorder %v5580, 1
  %vm5749 = vcmp.eq.s32.totalorder %v5583, 1
  %vm5750 = vcmp.eq.s32.totalorder %v5586, 1
  %vm5751 = vcmp.eq.s32.totalorder %v5589, 1
  %vm5752 = vcmp.eq.s32.totalorder %v5592, 1
  %vm5753 = vcmp.eq.s32.totalorder %v5595, 1
  %vm5754 = vcmp.eq.s32.totalorder %v5598, 1
  %vm5755 = vcmp.eq.s32.totalorder %v5601, 1
  %vm5756 = vcmp.eq.s32.totalorder %v5604, 1
  %vm5757 = vcmp.eq.s32.totalorder %v5607, 1
  %vm5758 = vcmp.eq.s32.totalorder %v5610, 1
  %vm5759 = vcmp.eq.s32.totalorder %v5613, 1
  %vm5760 = vcmp.eq.s32.totalorder %v5616, 1
  %vm5761 = vcmp.eq.s32.totalorder %v5619, 1
  %vm5762 = vcmp.eq.s32.totalorder %v5622, 1
  %vm5763 = vcmp.eq.s32.totalorder %v5625, 1
  %vm5764 = vcmp.eq.s32.totalorder %v5628, 1
  %vm5765 = vcmp.eq.s32.totalorder %v5631, 1
  %vm5766 = vcmp.eq.s32.totalorder %v5634, 1
  %vm5767 = vcmp.eq.s32.totalorder %v5637, 1
  %vm5768 = vcmp.eq.s32.totalorder %v5640, 1
  %vm5769 = vcmp.eq.s32.totalorder %v5643, 1
  %vm5770 = vcmp.eq.s32.totalorder %v5646, 1
  %vm5771 = vcmp.eq.s32.totalorder %v5649, 1
  %vm5772 = vcmp.eq.s32.totalorder %v5652, 1
  %vm5773 = vcmp.eq.s32.totalorder %v5655, 1
  %vm5774 = vcmp.eq.s32.totalorder %v5658, 1
  %vm5775 = vcmp.eq.s32.totalorder %v5661, 1
  %vm5776 = vcmp.eq.s32.totalorder %v5664, 1
  %vm5777 = vcmp.eq.s32.totalorder %v5667, 1
  %vm5778 = vcmp.eq.s32.totalorder %v5670, 1
  %vm5779 = vcmp.eq.s32.totalorder %v5673, 1
  %vm5780 = vcmp.eq.s32.totalorder %v5676, 1
  %vm5781 = vcmp.eq.s32.totalorder %v5679, 1
  %vm5782 = vcmp.eq.s32.totalorder %v5682, 1
  %vm5783 = vcmp.eq.s32.totalorder %v5685, 1
  %vm5784 = vcmp.eq.s32.totalorder %v5688, 1
  %vm5785 = vcmp.eq.s32.totalorder %v5691, 1
  %vm5786 = vcmp.eq.s32.totalorder %v5694, 1
  %vm5787 = vcmp.eq.s32.totalorder %v5697, 1
  %vm5788 = vcmp.eq.s32.totalorder %v5700, 1
  %vm5789 = vcmp.eq.s32.totalorder %v5703, 1
  %vm5790 = vcmp.eq.s32.totalorder %v5706, 1
  %vm5791 = vcmp.eq.s32.totalorder %v5709, 1
  %vm5792 = vcmp.eq.s32.totalorder %v5712, 1
  %vm5793 = vcmp.eq.s32.totalorder %v5715, 1
  %vm5794 = vcmp.eq.s32.totalorder %v5718, 1
  %vm5795 = vcmp.eq.s32.totalorder %v5721, 1
  %vm5796 = vcmp.eq.s32.totalorder %v5724, 1
  %vm5797 = vcmp.eq.s32.totalorder %v5727, 1
  %vm5798 = vcmp.eq.s32.totalorder %v5730, 1
  %vm5799 = vcmp.eq.s32.totalorder %v5733, 1
  %vm5800 = vcmp.eq.s32.totalorder %v5736, 1
  %v5801 = vsel %vm5737, %v549, 0.0
  %v5802 = vsel %vm5738, %v548, 0.0
  %v5803 = vsel %vm5739, %v547, 0.0
  %v5804 = vsel %vm5740, %v546, 0.0
  %v5805 = vsel %vm5741, %v545, 0.0
  %v5806 = vsel %vm5742, %v544, 0.0
  %v5807 = vsel %vm5743, %v543, 0.0
  %v5808 = vsel %vm5744, %v542, 0.0
  %v5809 = vsel %vm5745, %v541, 0.0
  %v5810 = vsel %vm5746, %v540, 0.0
  %v5811 = vsel %vm5747, %v539, 0.0
  %v5812 = vsel %vm5748, %v538, 0.0
  %v5813 = vsel %vm5749, %v537, 0.0
  %v5814 = vsel %vm5750, %v536, 0.0
  %v5815 = vsel %vm5751, %v535, 0.0
  %v5816 = vsel %vm5752, %v534, 0.0
  %v5817 = vsel %vm5753, %v533, 0.0
  %v5818 = vsel %vm5754, %v532, 0.0
  %v5819 = vsel %vm5755, %v531, 0.0
  %v5820 = vsel %vm5756, %v530, 0.0
  %v5821 = vsel %vm5757, %v529, 0.0
  %v5822 = vsel %vm5758, %v528, 0.0
  %v5823 = vsel %vm5759, %v527, 0.0
  %v5824 = vsel %vm5760, %v526, 0.0
  %v5825 = vsel %vm5761, %v525, 0.0
  %v5826 = vsel %vm5762, %v524, 0.0
  %v5827 = vsel %vm5763, %v523, 0.0
  %v5828 = vsel %vm5764, %v522, 0.0
  %v5829 = vsel %vm5765, %v521, 0.0
  %v5830 = vsel %vm5766, %v520, 0.0
  %v5831 = vsel %vm5767, %v519, 0.0
  %v5832 = vsel %vm5768, %v518, 0.0
  %v5833 = vsel %vm5769, %v517, 0.0
  %v5834 = vsel %vm5770, %v516, 0.0
  %v5835 = vsel %vm5771, %v515, 0.0
  %v5836 = vsel %vm5772, %v514, 0.0
  %v5837 = vsel %vm5773, %v513, 0.0
  %v5838 = vsel %vm5774, %v512, 0.0
  %v5839 = vsel %vm5775, %v511, 0.0
  %v5840 = vsel %vm5776, %v510, 0.0
  %v5841 = vsel %vm5777, %v509, 0.0
  %v5842 = vsel %vm5778, %v508, 0.0
  %v5843 = vsel %vm5779, %v507, 0.0
  %v5844 = vsel %vm5780, %v506, 0.0
  %v5845 = vsel %vm5781, %v505, 0.0
  %v5846 = vsel %vm5782, %v504, 0.0
  %v5847 = vsel %vm5783, %v503, 0.0
  %v5848 = vsel %vm5784, %v502, 0.0
  %v5849 = vsel %vm5785, %v501, 0.0
  %v5850 = vsel %vm5786, %v500, 0.0
  %v5851 = vsel %vm5787, %v499, 0.0
  %v5852 = vsel %vm5788, %v498, 0.0
  %v5853 = vsel %vm5789, %v497, 0.0
  %v5854 = vsel %vm5790, %v496, 0.0
  %v5855 = vsel %vm5791, %v495, 0.0
  %v5856 = vsel %vm5792, %v494, 0.0
  %v5857 = vsel %vm5793, %v493, 0.0
  %v5858 = vsel %vm5794, %v492, 0.0
  %v5859 = vsel %vm5795, %v491, 0.0
  %v5860 = vsel %vm5796, %v490, 0.0
  %v5861 = vsel %vm5797, %v489, 0.0
  %v5862 = vsel %vm5798, %v488, 0.0
  %v5863 = vsel %vm5799, %v551, 0.0
  %v5864 = vsel %vm5800, %v550, 0.0
  %5865 = vst [vmem:[#allocation2 + $0x30] sm:$0xff] %v5801
  %5866 = vst [vmem:[#allocation2 + $0x78] sm:$0xff] %v5802
  %5867 = vst [vmem:[#allocation2 + $0xc0] sm:$0xff] %v5803
  %5868 = vst [vmem:[#allocation2 + $0x108] sm:$0xff] %v5804
  %5869 = vst [vmem:[#allocation2 + $0x150] sm:$0xff] %v5805
  %5870 = vst [vmem:[#allocation2 + $0x198] sm:$0xff] %v5806
  %5871 = vst [vmem:[#allocation2 + $0x1e0] sm:$0xff] %v5807
  %5872 = vst [vmem:[#allocation2 + $0x228] sm:$0xff] %v5808
  %5873 = vst [vmem:[#allocation2 + $0x270] sm:$0xff] %v5809
  %5874 = vst [vmem:[#allocation2 + $0x2b8] sm:$0xff] %v5810
  %5875 = vst [vmem:[#allocation2 + $0x300] sm:$0xff] %v5811
  %5876 = vst [vmem:[#allocation2 + $0x348] sm:$0xff] %v5812
  %5877 = vst [vmem:[#allocation2 + $0x390] sm:$0xff] %v5813
  %5878 = vst [vmem:[#allocation2 + $0x3d8] sm:$0xff] %v5814
  %5879 = vst [vmem:[#allocation2 + $0x420] sm:$0xff] %v5815
  %5880 = vst [vmem:[#allocation2 + $0x468] sm:$0xff] %v5816
  %5881 = vst [vmem:[#allocation2 + $0x4b0] sm:$0xff] %v5817
  %5882 = vst [vmem:[#allocation2 + $0x4f8] sm:$0xff] %v5818
  %5883 = vst [vmem:[#allocation2 + $0x540] sm:$0xff] %v5819
  %5884 = vst [vmem:[#allocation2 + $0x588] sm:$0xff] %v5820
  %5885 = vst [vmem:[#allocation2 + $0x5d0] sm:$0xff] %v5821
  %5886 = vst [vmem:[#allocation2 + $0x618] sm:$0xff] %v5822
  %5887 = vst [vmem:[#allocation2 + $0x660] sm:$0xff] %v5823
  %5888 = vst [vmem:[#allocation2 + $0x6a8] sm:$0xff] %v5824
  %5889 = vst [vmem:[#allocation2 + $0x6f0] sm:$0xff] %v5825
  %5890 = vst [vmem:[#allocation2 + $0x738] sm:$0xff] %v5826
  %5891 = vst [vmem:[#allocation2 + $0x780] sm:$0xff] %v5827
  %5892 = vst [vmem:[#allocation2 + $0x7c8] sm:$0xff] %v5828
  %5893 = vst [vmem:[#allocation2 + $0x810] sm:$0xff] %v5829
  %5894 = vst [vmem:[#allocation2 + $0x858] sm:$0xff] %v5830
  %5895 = vst [vmem:[#allocation2 + $0x8a0] sm:$0xff] %v5831
  %5896 = vst [vmem:[#allocation2 + $0x8e8] sm:$0xff] %v5832
  %5897 = vst [vmem:[#allocation2 + $0x930] sm:$0xff] %v5833
  %5898 = vst [vmem:[#allocation2 + $0x978] sm:$0xff] %v5834
  %5899 = vst [vmem:[#allocation2 + $0x9c0] sm:$0xff] %v5835
  %5900 = vst [vmem:[#allocation2 + $0xa08] sm:$0xff] %v5836
  %5901 = vst [vmem:[#allocation2 + $0xa50] sm:$0xff] %v5837
  %5902 = vst [vmem:[#allocation2 + $0xa98] sm:$0xff] %v5838
  %5903 = vst [vmem:[#allocation2 + $0xae0] sm:$0xff] %v5839
  %5904 = vst [vmem:[#allocation2 + $0xb28] sm:$0xff] %v5840
  %5905 = vst [vmem:[#allocation2 + $0xb70] sm:$0xff] %v5841
  %5906 = vst [vmem:[#allocation2 + $0xbb8] sm:$0xff] %v5842
  %5907 = vst [vmem:[#allocation2 + $0xc00] sm:$0xff] %v5843
  %5908 = vst [vmem:[#allocation2 + $0xc48] sm:$0xff] %v5844
  %5909 = vst [vmem:[#allocation2 + $0xc90] sm:$0xff] %v5845
  %5910 = vst [vmem:[#allocation2 + $0xcd8] sm:$0xff] %v5846
  %5911 = vst [vmem:[#allocation2 + $0xd20] sm:$0xff] %v5847
  %5912 = vst [vmem:[#allocation2 + $0xd68] sm:$0xff] %v5848
  %5913 = vst [vmem:[#allocation2 + $0xdb0] sm:$0xff] %v5849
  %5914 = vst [vmem:[#allocation2 + $0xdf8] sm:$0xff] %v5850
  %5915 = vst [vmem:[#allocation2 + $0xe40] sm:$0xff] %v5851
  %5916 = vst [vmem:[#allocation2 + $0xe88] sm:$0xff] %v5852
  %5917 = vst [vmem:[#allocation2 + $0xed0] sm:$0xff] %v5853
  %5918 = vst [vmem:[#allocation2 + $0xf18] sm:$0xff] %v5854
  %5919 = vst [vmem:[#allocation2 + $0xf60] sm:$0xff] %v5855
  %5920 = vst [vmem:[#allocation2 + $0xfa8] sm:$0xff] %v5856
  %5921 = vst [vmem:[#allocation2 + $0xff0] sm:$0xff] %v5857
  %5922 = vst [vmem:[#allocation2 + $0x1038] sm:$0xff] %v5858
  %5923 = vst [vmem:[#allocation2 + $0x1080] sm:$0xff] %v5859
  %5924 = vst [vmem:[#allocation2 + $0x10c8] sm:$0xff] %v5860
  %5925 = vst [vmem:[#allocation2 + $0x1110] sm:$0xff] %v5861
  %5926 = vst [vmem:[#allocation2 + $0x1158] sm:$0xff] %v5862
  %5927 = vst [vmem:[#allocation2 + $0x11a0] sm:$0xff] %v5863
  %5928 = vst [vmem:[#allocation2 + $0x11e8] sm:$0xff] %v5864
  %vm5929 = vmand %vm5289, %vm1576
  %vm5930 = vmand %vm5290, %vm1577
  %vm5931 = vmand %vm5291, %vm1578
  %vm5932 = vmand %vm5292, %vm1579
  %vm5933 = vmand %vm5293, %vm1580
  %vm5934 = vmand %vm5294, %vm1581
  %vm5935 = vmand %vm5295, %vm1582
  %vm5936 = vmand %vm5296, %vm1583
  %vm5937 = vmand %vm5297, %vm1584
  %vm5938 = vmand %vm5298, %vm1585
  %vm5939 = vmand %vm5299, %vm1586
  %vm5940 = vmand %vm5300, %vm1587
  %vm5941 = vmand %vm5301, %vm1588
  %vm5942 = vmand %vm5302, %vm1589
  %vm5943 = vmand %vm5303, %vm1590
  %vm5944 = vmand %vm5304, %vm1591
  %vm5945 = vmand %vm5305, %vm1592
  %vm5946 = vmand %vm5306, %vm1593
  %vm5947 = vmand %vm5307, %vm1594
  %vm5948 = vmand %vm5308, %vm1595
  %vm5949 = vmand %vm5309, %vm1596
  %vm5950 = vmand %vm5310, %vm1597
  %vm5951 = vmand %vm5311, %vm1598
  %vm5952 = vmand %vm5312, %vm1599
  %vm5953 = vmand %vm5313, %vm1600
  %vm5954 = vmand %vm5314, %vm1601
  %vm5955 = vmand %vm5315, %vm1602
  %vm5956 = vmand %vm5316, %vm1603
  %vm5957 = vmand %vm5317, %vm1604
  %vm5958 = vmand %vm5318, %vm1605
  %vm5959 = vmand %vm5319, %vm1606
  %vm5960 = vmand %vm5320, %vm1607
  %vm5961 = vmand %vm5321, %vm1608
  %vm5962 = vmand %vm5322, %vm1609
  %vm5963 = vmand %vm5323, %vm1610
  %vm5964 = vmand %vm5324, %vm1611
  %vm5965 = vmand %vm5325, %vm1612
  %vm5966 = vmand %vm5326, %vm1613
  %vm5967 = vmand %vm5327, %vm1614
  %vm5968 = vmand %vm5328, %vm1615
  %vm5969 = vmand %vm5329, %vm1616
  %vm5970 = vmand %vm5330, %vm1617
  %vm5971 = vmand %vm5331, %vm1618
  %vm5972 = vmand %vm5332, %vm1619
  %vm5973 = vmand %vm5333, %vm1620
  %vm5974 = vmand %vm5334, %vm1621
  %vm5975 = vmand %vm5335, %vm1622
  %vm5976 = vmand %vm5336, %vm1623
  %vm5977 = vmand %vm5337, %vm1624
  %vm5978 = vmand %vm5338, %vm1625
  %vm5979 = vmand %vm5339, %vm1626
  %vm5980 = vmand %vm5340, %vm1627
  %vm5981 = vmand %vm5341, %vm1628
  %vm5982 = vmand %vm5342, %vm1629
  %vm5983 = vmand %vm5343, %vm1630
  %vm5984 = vmand %vm5344, %vm1631
  %vm5985 = vmand %vm5345, %vm1632
  %vm5986 = vmand %vm5346, %vm1633
  %vm5987 = vmand %vm5347, %vm1634
  %vm5988 = vmand %vm5348, %vm1635
  %vm5989 = vmand %vm5349, %vm1636
  %vm5990 = vmand %vm5350, %vm1637
  %vm5991 = vmand %vm5351, %vm1638
  %vm5992 = vmand %vm5352, %vm1639
  %vm5993 = vmand %vm5929, %vm1704
  %vm5994 = vmand %vm5930, %vm1705
  %vm5995 = vmand %vm5931, %vm1706
  %vm5996 = vmand %vm5932, %vm1707
  %vm5997 = vmand %vm5933, %vm1708
  %vm5998 = vmand %vm5934, %vm1709
  %vm5999 = vmand %vm5935, %vm1710
  %vm6000 = vmand %vm5936, %vm1711
  %vm6001 = vmand %vm5937, %vm1712
  %vm6002 = vmand %vm5938, %vm1713
  %vm6003 = vmand %vm5939, %vm1714
  %vm6004 = vmand %vm5940, %vm1715
  %vm6005 = vmand %vm5941, %vm1716
  %vm6006 = vmand %vm5942, %vm1717
  %vm6007 = vmand %vm5943, %vm1718
  %vm6008 = vmand %vm5944, %vm1719
  %vm6009 = vmand %vm5945, %vm1720
  %vm6010 = vmand %vm5946, %vm1721
  %vm6011 = vmand %vm5947, %vm1722
  %vm6012 = vmand %vm5948, %vm1723
  %vm6013 = vmand %vm5949, %vm1724
  %vm6014 = vmand %vm5950, %vm1725
  %vm6015 = vmand %vm5951, %vm1726
  %vm6016 = vmand %vm5952, %vm1727
  %vm6017 = vmand %vm5953, %vm1728
  %vm6018 = vmand %vm5954, %vm1729
  %vm6019 = vmand %vm5955, %vm1730
  %vm6020 = vmand %vm5956, %vm1731
  %vm6021 = vmand %vm5957, %vm1732
  %vm6022 = vmand %vm5958, %vm1733
  %vm6023 = vmand %vm5959, %vm1734
  %vm6024 = vmand %vm5960, %vm1735
  %vm6025 = vmand %vm5961, %vm1736
  %vm6026 = vmand %vm5962, %vm1737
  %vm6027 = vmand %vm5963, %vm1738
  %vm6028 = vmand %vm5964, %vm1739
  %vm6029 = vmand %vm5965, %vm1740
  %vm6030 = vmand %vm5966, %vm1741
  %vm6031 = vmand %vm5967, %vm1742
  %vm6032 = vmand %vm5968, %vm1743
  %vm6033 = vmand %vm5969, %vm1744
  %vm6034 = vmand %vm5970, %vm1745
  %vm6035 = vmand %vm5971, %vm1746
  %vm6036 = vmand %vm5972, %vm1747
  %vm6037 = vmand %vm5973, %vm1748
  %vm6038 = vmand %vm5974, %vm1749
  %vm6039 = vmand %vm5975, %vm1750
  %vm6040 = vmand %vm5976, %vm1751
  %vm6041 = vmand %vm5977, %vm1752
  %vm6042 = vmand %vm5978, %vm1753
  %vm6043 = vmand %vm5979, %vm1754
  %vm6044 = vmand %vm5980, %vm1755
  %vm6045 = vmand %vm5981, %vm1756
  %vm6046 = vmand %vm5982, %vm1757
  %vm6047 = vmand %vm5983, %vm1758
  %vm6048 = vmand %vm5984, %vm1759
  %vm6049 = vmand %vm5985, %vm1760
  %vm6050 = vmand %vm5986, %vm1761
  %vm6051 = vmand %vm5987, %vm1762
  %vm6052 = vmand %vm5988, %vm1763
  %vm6053 = vmand %vm5989, %vm1764
  %vm6054 = vmand %vm5990, %vm1765
  %vm6055 = vmand %vm5991, %vm1766
  %vm6056 = vmand %vm5992, %vm1767
  %v6057 = vsel %vm5993, 1, 0
  %v6058 = vsel %vm5994, 1, 0
  %v6059 = vsel %vm5995, 1, 0
  %v6060 = vsel %vm5996, 1, 0
  %v6061 = vsel %vm5997, 1, 0
  %v6062 = vsel %vm5998, 1, 0
  %v6063 = vsel %vm5999, 1, 0
  %v6064 = vsel %vm6000, 1, 0
  %v6065 = vsel %vm6001, 1, 0
  %v6066 = vsel %vm6002, 1, 0
  %v6067 = vsel %vm6003, 1, 0
  %v6068 = vsel %vm6004, 1, 0
  %v6069 = vsel %vm6005, 1, 0
  %v6070 = vsel %vm6006, 1, 0
  %v6071 = vsel %vm6007, 1, 0
  %v6072 = vsel %vm6008, 1, 0
  %v6073 = vsel %vm6009, 1, 0
  %v6074 = vsel %vm6010, 1, 0
  %v6075 = vsel %vm6011, 1, 0
  %v6076 = vsel %vm6012, 1, 0
  %v6077 = vsel %vm6013, 1, 0
  %v6078 = vsel %vm6014, 1, 0
  %v6079 = vsel %vm6015, 1, 0
  %v6080 = vsel %vm6016, 1, 0
  %v6081 = vsel %vm6017, 1, 0
  %v6082 = vsel %vm6018, 1, 0
  %v6083 = vsel %vm6019, 1, 0
  %v6084 = vsel %vm6020, 1, 0
  %v6085 = vsel %vm6021, 1, 0
  %v6086 = vsel %vm6022, 1, 0
  %v6087 = vsel %vm6023, 1, 0
  %v6088 = vsel %vm6024, 1, 0
  %v6089 = vsel %vm6025, 1, 0
  %v6090 = vsel %vm6026, 1, 0
  %v6091 = vsel %vm6027, 1, 0
  %v6092 = vsel %vm6028, 1, 0
  %v6093 = vsel %vm6029, 1, 0
  %v6094 = vsel %vm6030, 1, 0
  %v6095 = vsel %vm6031, 1, 0
  %v6096 = vsel %vm6032, 1, 0
  %v6097 = vsel %vm6033, 1, 0
  %v6098 = vsel %vm6034, 1, 0
  %v6099 = vsel %vm6035, 1, 0
  %v6100 = vsel %vm6036, 1, 0
  %v6101 = vsel %vm6037, 1, 0
  %v6102 = vsel %vm6038, 1, 0
  %v6103 = vsel %vm6039, 1, 0
  %v6104 = vsel %vm6040, 1, 0
  %v6105 = vsel %vm6041, 1, 0
  %v6106 = vsel %vm6042, 1, 0
  %v6107 = vsel %vm6043, 1, 0
  %v6108 = vsel %vm6044, 1, 0
  %v6109 = vsel %vm6045, 1, 0
  %v6110 = vsel %vm6046, 1, 0
  %v6111 = vsel %vm6047, 1, 0
  %v6112 = vsel %vm6048, 1, 0
  %v6113 = vsel %vm6049, 1, 0
  %v6114 = vsel %vm6050, 1, 0
  %v6115 = vsel %vm6051, 1, 0
  %v6116 = vsel %vm6052, 1, 0
  %v6117 = vsel %vm6053, 1, 0
  %v6118 = vsel %vm6054, 1, 0
  %v6119 = vsel %vm6055, 1, 0
  %v6120 = vsel %vm6056, 1, 0
  %6121 = vset.pattern.permute.xlu0 0
  %6122 = vperm.xlu0 %6121, %v6057
  %v6123 = vpop.permute.xlu0 %6122
  %6124 = vset.pattern.permute.xlu0 0
  %6125 = vperm.xlu0 %6124, %v6058
  %v6126 = vpop.permute.xlu0 %6125
  %6127 = vset.pattern.permute.xlu0 0
  %6128 = vperm.xlu0 %6127, %v6059
  %v6129 = vpop.permute.xlu0 %6128
  %6130 = vset.pattern.permute.xlu0 0
  %6131 = vperm.xlu0 %6130, %v6060
  %v6132 = vpop.permute.xlu0 %6131
  %6133 = vset.pattern.permute.xlu0 0
  %6134 = vperm.xlu0 %6133, %v6061
  %v6135 = vpop.permute.xlu0 %6134
  %6136 = vset.pattern.permute.xlu0 0
  %6137 = vperm.xlu0 %6136, %v6062
  %v6138 = vpop.permute.xlu0 %6137
  %6139 = vset.pattern.permute.xlu0 0
  %6140 = vperm.xlu0 %6139, %v6063
  %v6141 = vpop.permute.xlu0 %6140
  %6142 = vset.pattern.permute.xlu0 0
  %6143 = vperm.xlu0 %6142, %v6064
  %v6144 = vpop.permute.xlu0 %6143
  %6145 = vset.pattern.permute.xlu0 0
  %6146 = vperm.xlu0 %6145, %v6065
  %v6147 = vpop.permute.xlu0 %6146
  %6148 = vset.pattern.permute.xlu0 0
  %6149 = vperm.xlu0 %6148, %v6066
  %v6150 = vpop.permute.xlu0 %6149
  %6151 = vset.pattern.permute.xlu0 0
  %6152 = vperm.xlu0 %6151, %v6067
  %v6153 = vpop.permute.xlu0 %6152
  %6154 = vset.pattern.permute.xlu0 0
  %6155 = vperm.xlu0 %6154, %v6068
  %v6156 = vpop.permute.xlu0 %6155
  %6157 = vset.pattern.permute.xlu0 0
  %6158 = vperm.xlu0 %6157, %v6069
  %v6159 = vpop.permute.xlu0 %6158
  %6160 = vset.pattern.permute.xlu0 0
  %6161 = vperm.xlu0 %6160, %v6070
  %v6162 = vpop.permute.xlu0 %6161
  %6163 = vset.pattern.permute.xlu0 0
  %6164 = vperm.xlu0 %6163, %v6071
  %v6165 = vpop.permute.xlu0 %6164
  %6166 = vset.pattern.permute.xlu0 0
  %6167 = vperm.xlu0 %6166, %v6072
  %v6168 = vpop.permute.xlu0 %6167
  %6169 = vset.pattern.permute.xlu0 0
  %6170 = vperm.xlu0 %6169, %v6073
  %v6171 = vpop.permute.xlu0 %6170
  %6172 = vset.pattern.permute.xlu0 0
  %6173 = vperm.xlu0 %6172, %v6074
  %v6174 = vpop.permute.xlu0 %6173
  %6175 = vset.pattern.permute.xlu0 0
  %6176 = vperm.xlu0 %6175, %v6075
  %v6177 = vpop.permute.xlu0 %6176
  %6178 = vset.pattern.permute.xlu0 0
  %6179 = vperm.xlu0 %6178, %v6076
  %v6180 = vpop.permute.xlu0 %6179
  %6181 = vset.pattern.permute.xlu0 0
  %6182 = vperm.xlu0 %6181, %v6077
  %v6183 = vpop.permute.xlu0 %6182
  %6184 = vset.pattern.permute.xlu0 0
  %6185 = vperm.xlu0 %6184, %v6078
  %v6186 = vpop.permute.xlu0 %6185
  %6187 = vset.pattern.permute.xlu0 0
  %6188 = vperm.xlu0 %6187, %v6079
  %v6189 = vpop.permute.xlu0 %6188
  %6190 = vset.pattern.permute.xlu0 0
  %6191 = vperm.xlu0 %6190, %v6080
  %v6192 = vpop.permute.xlu0 %6191
  %6193 = vset.pattern.permute.xlu0 0
  %6194 = vperm.xlu0 %6193, %v6081
  %v6195 = vpop.permute.xlu0 %6194
  %6196 = vset.pattern.permute.xlu0 0
  %6197 = vperm.xlu0 %6196, %v6082
  %v6198 = vpop.permute.xlu0 %6197
  %6199 = vset.pattern.permute.xlu0 0
  %6200 = vperm.xlu0 %6199, %v6083
  %v6201 = vpop.permute.xlu0 %6200
  %6202 = vset.pattern.permute.xlu0 0
  %6203 = vperm.xlu0 %6202, %v6084
  %v6204 = vpop.permute.xlu0 %6203
  %6205 = vset.pattern.permute.xlu0 0
  %6206 = vperm.xlu0 %6205, %v6085
  %v6207 = vpop.permute.xlu0 %6206
  %6208 = vset.pattern.permute.xlu0 0
  %6209 = vperm.xlu0 %6208, %v6086
  %v6210 = vpop.permute.xlu0 %6209
  %6211 = vset.pattern.permute.xlu0 0
  %6212 = vperm.xlu0 %6211, %v6087
  %v6213 = vpop.permute.xlu0 %6212
  %6214 = vset.pattern.permute.xlu0 0
  %6215 = vperm.xlu0 %6214, %v6088
  %v6216 = vpop.permute.xlu0 %6215
  %6217 = vset.pattern.permute.xlu0 0
  %6218 = vperm.xlu0 %6217, %v6089
  %v6219 = vpop.permute.xlu0 %6218
  %6220 = vset.pattern.permute.xlu0 0
  %6221 = vperm.xlu0 %6220, %v6090
  %v6222 = vpop.permute.xlu0 %6221
  %6223 = vset.pattern.permute.xlu0 0
  %6224 = vperm.xlu0 %6223, %v6091
  %v6225 = vpop.permute.xlu0 %6224
  %6226 = vset.pattern.permute.xlu0 0
  %6227 = vperm.xlu0 %6226, %v6092
  %v6228 = vpop.permute.xlu0 %6227
  %6229 = vset.pattern.permute.xlu0 0
  %6230 = vperm.xlu0 %6229, %v6093
  %v6231 = vpop.permute.xlu0 %6230
  %6232 = vset.pattern.permute.xlu0 0
  %6233 = vperm.xlu0 %6232, %v6094
  %v6234 = vpop.permute.xlu0 %6233
  %6235 = vset.pattern.permute.xlu0 0
  %6236 = vperm.xlu0 %6235, %v6095
  %v6237 = vpop.permute.xlu0 %6236
  %6238 = vset.pattern.permute.xlu0 0
  %6239 = vperm.xlu0 %6238, %v6096
  %v6240 = vpop.permute.xlu0 %6239
  %6241 = vset.pattern.permute.xlu0 0
  %6242 = vperm.xlu0 %6241, %v6097
  %v6243 = vpop.permute.xlu0 %6242
  %6244 = vset.pattern.permute.xlu0 0
  %6245 = vperm.xlu0 %6244, %v6098
  %v6246 = vpop.permute.xlu0 %6245
  %6247 = vset.pattern.permute.xlu0 0
  %6248 = vperm.xlu0 %6247, %v6099
  %v6249 = vpop.permute.xlu0 %6248
  %6250 = vset.pattern.permute.xlu0 0
  %6251 = vperm.xlu0 %6250, %v6100
  %v6252 = vpop.permute.xlu0 %6251
  %6253 = vset.pattern.permute.xlu0 0
  %6254 = vperm.xlu0 %6253, %v6101
  %v6255 = vpop.permute.xlu0 %6254
  %6256 = vset.pattern.permute.xlu0 0
  %6257 = vperm.xlu0 %6256, %v6102
  %v6258 = vpop.permute.xlu0 %6257
  %6259 = vset.pattern.permute.xlu0 0
  %6260 = vperm.xlu0 %6259, %v6103
  %v6261 = vpop.permute.xlu0 %6260
  %6262 = vset.pattern.permute.xlu0 0
  %6263 = vperm.xlu0 %6262, %v6104
  %v6264 = vpop.permute.xlu0 %6263
  %6265 = vset.pattern.permute.xlu0 0
  %6266 = vperm.xlu0 %6265, %v6105
  %v6267 = vpop.permute.xlu0 %6266
  %6268 = vset.pattern.permute.xlu0 0
  %6269 = vperm.xlu0 %6268, %v6106
  %v6270 = vpop.permute.xlu0 %6269
  %6271 = vset.pattern.permute.xlu0 0
  %6272 = vperm.xlu0 %6271, %v6107
  %v6273 = vpop.permute.xlu0 %6272
  %6274 = vset.pattern.permute.xlu0 0
  %6275 = vperm.xlu0 %6274, %v6108
  %v6276 = vpop.permute.xlu0 %6275
  %6277 = vset.pattern.permute.xlu0 0
  %6278 = vperm.xlu0 %6277, %v6109
  %v6279 = vpop.permute.xlu0 %6278
  %6280 = vset.pattern.permute.xlu0 0
  %6281 = vperm.xlu0 %6280, %v6110
  %v6282 = vpop.permute.xlu0 %6281
  %6283 = vset.pattern.permute.xlu0 0
  %6284 = vperm.xlu0 %6283, %v6111
  %v6285 = vpop.permute.xlu0 %6284
  %6286 = vset.pattern.permute.xlu0 0
  %6287 = vperm.xlu0 %6286, %v6112
  %v6288 = vpop.permute.xlu0 %6287
  %6289 = vset.pattern.permute.xlu0 0
  %6290 = vperm.xlu0 %6289, %v6113
  %v6291 = vpop.permute.xlu0 %6290
  %6292 = vset.pattern.permute.xlu0 0
  %6293 = vperm.xlu0 %6292, %v6114
  %v6294 = vpop.permute.xlu0 %6293
  %6295 = vset.pattern.permute.xlu0 0
  %6296 = vperm.xlu0 %6295, %v6115
  %v6297 = vpop.permute.xlu0 %6296
  %6298 = vset.pattern.permute.xlu0 0
  %6299 = vperm.xlu0 %6298, %v6116
  %v6300 = vpop.permute.xlu0 %6299
  %6301 = vset.pattern.permute.xlu0 0
  %6302 = vperm.xlu0 %6301, %v6117
  %v6303 = vpop.permute.xlu0 %6302
  %6304 = vset.pattern.permute.xlu0 0
  %6305 = vperm.xlu0 %6304, %v6118
  %v6306 = vpop.permute.xlu0 %6305
  %6307 = vset.pattern.permute.xlu0 0
  %6308 = vperm.xlu0 %6307, %v6119
  %v6309 = vpop.permute.xlu0 %6308
  %6310 = vset.pattern.permute.xlu0 0
  %6311 = vperm.xlu0 %6310, %v6120
  %v6312 = vpop.permute.xlu0 %6311
  %vm6313 = vcmp.eq.s32.totalorder %v6123, 1
  %vm6314 = vcmp.eq.s32.totalorder %v6126, 1
  %vm6315 = vcmp.eq.s32.totalorder %v6129, 1
  %vm6316 = vcmp.eq.s32.totalorder %v6132, 1
  %vm6317 = vcmp.eq.s32.totalorder %v6135, 1
  %vm6318 = vcmp.eq.s32.totalorder %v6138, 1
  %vm6319 = vcmp.eq.s32.totalorder %v6141, 1
  %vm6320 = vcmp.eq.s32.totalorder %v6144, 1
  %vm6321 = vcmp.eq.s32.totalorder %v6147, 1
  %vm6322 = vcmp.eq.s32.totalorder %v6150, 1
  %vm6323 = vcmp.eq.s32.totalorder %v6153, 1
  %vm6324 = vcmp.eq.s32.totalorder %v6156, 1
  %vm6325 = vcmp.eq.s32.totalorder %v6159, 1
  %vm6326 = vcmp.eq.s32.totalorder %v6162, 1
  %vm6327 = vcmp.eq.s32.totalorder %v6165, 1
  %vm6328 = vcmp.eq.s32.totalorder %v6168, 1
  %vm6329 = vcmp.eq.s32.totalorder %v6171, 1
  %vm6330 = vcmp.eq.s32.totalorder %v6174, 1
  %vm6331 = vcmp.eq.s32.totalorder %v6177, 1
  %vm6332 = vcmp.eq.s32.totalorder %v6180, 1
  %vm6333 = vcmp.eq.s32.totalorder %v6183, 1
  %vm6334 = vcmp.eq.s32.totalorder %v6186, 1
  %vm6335 = vcmp.eq.s32.totalorder %v6189, 1
  %vm6336 = vcmp.eq.s32.totalorder %v6192, 1
  %vm6337 = vcmp.eq.s32.totalorder %v6195, 1
  %vm6338 = vcmp.eq.s32.totalorder %v6198, 1
  %vm6339 = vcmp.eq.s32.totalorder %v6201, 1
  %vm6340 = vcmp.eq.s32.totalorder %v6204, 1
  %vm6341 = vcmp.eq.s32.totalorder %v6207, 1
  %vm6342 = vcmp.eq.s32.totalorder %v6210, 1
  %vm6343 = vcmp.eq.s32.totalorder %v6213, 1
  %vm6344 = vcmp.eq.s32.totalorder %v6216, 1
  %vm6345 = vcmp.eq.s32.totalorder %v6219, 1
  %vm6346 = vcmp.eq.s32.totalorder %v6222, 1
  %vm6347 = vcmp.eq.s32.totalorder %v6225, 1
  %vm6348 = vcmp.eq.s32.totalorder %v6228, 1
  %vm6349 = vcmp.eq.s32.totalorder %v6231, 1
  %vm6350 = vcmp.eq.s32.totalorder %v6234, 1
  %vm6351 = vcmp.eq.s32.totalorder %v6237, 1
  %vm6352 = vcmp.eq.s32.totalorder %v6240, 1
  %vm6353 = vcmp.eq.s32.totalorder %v6243, 1
  %vm6354 = vcmp.eq.s32.totalorder %v6246, 1
  %vm6355 = vcmp.eq.s32.totalorder %v6249, 1
  %vm6356 = vcmp.eq.s32.totalorder %v6252, 1
  %vm6357 = vcmp.eq.s32.totalorder %v6255, 1
  %vm6358 = vcmp.eq.s32.totalorder %v6258, 1
  %vm6359 = vcmp.eq.s32.totalorder %v6261, 1
  %vm6360 = vcmp.eq.s32.totalorder %v6264, 1
  %vm6361 = vcmp.eq.s32.totalorder %v6267, 1
  %vm6362 = vcmp.eq.s32.totalorder %v6270, 1
  %vm6363 = vcmp.eq.s32.totalorder %v6273, 1
  %vm6364 = vcmp.eq.s32.totalorder %v6276, 1
  %vm6365 = vcmp.eq.s32.totalorder %v6279, 1
  %vm6366 = vcmp.eq.s32.totalorder %v6282, 1
  %vm6367 = vcmp.eq.s32.totalorder %v6285, 1
  %vm6368 = vcmp.eq.s32.totalorder %v6288, 1
  %vm6369 = vcmp.eq.s32.totalorder %v6291, 1
  %vm6370 = vcmp.eq.s32.totalorder %v6294, 1
  %vm6371 = vcmp.eq.s32.totalorder %v6297, 1
  %vm6372 = vcmp.eq.s32.totalorder %v6300, 1
  %vm6373 = vcmp.eq.s32.totalorder %v6303, 1
  %vm6374 = vcmp.eq.s32.totalorder %v6306, 1
  %vm6375 = vcmp.eq.s32.totalorder %v6309, 1
  %vm6376 = vcmp.eq.s32.totalorder %v6312, 1
  %v6377 = vsel %vm6313, %v231, 0.0
  %v6378 = vsel %vm6314, %v232, 0.0
  %v6379 = vsel %vm6315, %v233, 0.0
  %v6380 = vsel %vm6316, %v234, 0.0
  %v6381 = vsel %vm6317, %v235, 0.0
  %v6382 = vsel %vm6318, %v236, 0.0
  %v6383 = vsel %vm6319, %v237, 0.0
  %v6384 = vsel %vm6320, %v238, 0.0
  %v6385 = vsel %vm6321, %v239, 0.0
  %v6386 = vsel %vm6322, %v240, 0.0
  %v6387 = vsel %vm6323, %v241, 0.0
  %v6388 = vsel %vm6324, %v242, 0.0
  %v6389 = vsel %vm6325, %v243, 0.0
  %v6390 = vsel %vm6326, %v244, 0.0
  %v6391 = vsel %vm6327, %v245, 0.0
  %v6392 = vsel %vm6328, %v246, 0.0
  %v6393 = vsel %vm6329, %v247, 0.0
  %v6394 = vsel %vm6330, %v248, 0.0
  %v6395 = vsel %vm6331, %v249, 0.0
  %v6396 = vsel %vm6332, %v250, 0.0
  %v6397 = vsel %vm6333, %v251, 0.0
  %v6398 = vsel %vm6334, %v252, 0.0
  %v6399 = vsel %vm6335, %v253, 0.0
  %v6400 = vsel %vm6336, %v254, 0.0
  %v6401 = vsel %vm6337, %v255, 0.0
  %v6402 = vsel %vm6338, %v256, 0.0
  %v6403 = vsel %vm6339, %v257, 0.0
  %v6404 = vsel %vm6340, %v258, 0.0
  %v6405 = vsel %vm6341, %v259, 0.0
  %v6406 = vsel %vm6342, %v260, 0.0
  %v6407 = vsel %vm6343, %v261, 0.0
  %v6408 = vsel %vm6344, %v262, 0.0
  %v6409 = vsel %vm6345, %v263, 0.0
  %v6410 = vsel %vm6346, %v264, 0.0
  %v6411 = vsel %vm6347, %v265, 0.0
  %v6412 = vsel %vm6348, %v266, 0.0
  %v6413 = vsel %vm6349, %v267, 0.0
  %v6414 = vsel %vm6350, %v268, 0.0
  %v6415 = vsel %vm6351, %v269, 0.0
  %v6416 = vsel %vm6352, %v270, 0.0
  %v6417 = vsel %vm6353, %v271, 0.0
  %v6418 = vsel %vm6354, %v272, 0.0
  %v6419 = vsel %vm6355, %v273, 0.0
  %v6420 = vsel %vm6356, %v274, 0.0
  %v6421 = vsel %vm6357, %v275, 0.0
  %v6422 = vsel %vm6358, %v276, 0.0
  %v6423 = vsel %vm6359, %v277, 0.0
  %v6424 = vsel %vm6360, %v278, 0.0
  %v6425 = vsel %vm6361, %v279, 0.0
  %v6426 = vsel %vm6362, %v280, 0.0
  %v6427 = vsel %vm6363, %v281, 0.0
  %v6428 = vsel %vm6364, %v282, 0.0
  %v6429 = vsel %vm6365, %v283, 0.0
  %v6430 = vsel %vm6366, %v284, 0.0
  %v6431 = vsel %vm6367, %v285, 0.0
  %v6432 = vsel %vm6368, %v286, 0.0
  %v6433 = vsel %vm6369, %v287, 0.0
  %v6434 = vsel %vm6370, %v288, 0.0
  %v6435 = vsel %vm6371, %v289, 0.0
  %v6436 = vsel %vm6372, %v290, 0.0
  %v6437 = vsel %vm6373, %v291, 0.0
  %v6438 = vsel %vm6374, %v292, 0.0
  %v6439 = vsel %vm6375, %v229, 0.0
  %v6440 = vsel %vm6376, %v230, 0.0
  %6441 = vst [vmem:[#allocation2 + $0x38] sm:$0xff] %v6377
  %6442 = vst [vmem:[#allocation2 + $0x80] sm:$0xff] %v6378
  %6443 = vst [vmem:[#allocation2 + $0xc8] sm:$0xff] %v6379
  %6444 = vst [vmem:[#allocation2 + $0x110] sm:$0xff] %v6380
  %6445 = vst [vmem:[#allocation2 + $0x158] sm:$0xff] %v6381
  %6446 = vst [vmem:[#allocation2 + $0x1a0] sm:$0xff] %v6382
  %6447 = vst [vmem:[#allocation2 + $0x1e8] sm:$0xff] %v6383
  %6448 = vst [vmem:[#allocation2 + $0x230] sm:$0xff] %v6384
  %6449 = vst [vmem:[#allocation2 + $0x278] sm:$0xff] %v6385
  %6450 = vst [vmem:[#allocation2 + $0x2c0] sm:$0xff] %v6386
  %6451 = vst [vmem:[#allocation2 + $0x308] sm:$0xff] %v6387
  %6452 = vst [vmem:[#allocation2 + $0x350] sm:$0xff] %v6388
  %6453 = vst [vmem:[#allocation2 + $0x398] sm:$0xff] %v6389
  %6454 = vst [vmem:[#allocation2 + $0x3e0] sm:$0xff] %v6390
  %6455 = vst [vmem:[#allocation2 + $0x428] sm:$0xff] %v6391
  %6456 = vst [vmem:[#allocation2 + $0x470] sm:$0xff] %v6392
  %6457 = vst [vmem:[#allocation2 + $0x4b8] sm:$0xff] %v6393
  %6458 = vst [vmem:[#allocation2 + $0x500] sm:$0xff] %v6394
  %6459 = vst [vmem:[#allocation2 + $0x548] sm:$0xff] %v6395
  %6460 = vst [vmem:[#allocation2 + $0x590] sm:$0xff] %v6396
  %6461 = vst [vmem:[#allocation2 + $0x5d8] sm:$0xff] %v6397
  %6462 = vst [vmem:[#allocation2 + $0x620] sm:$0xff] %v6398
  %6463 = vst [vmem:[#allocation2 + $0x668] sm:$0xff] %v6399
  %6464 = vst [vmem:[#allocation2 + $0x6b0] sm:$0xff] %v6400
  %6465 = vst [vmem:[#allocation2 + $0x6f8] sm:$0xff] %v6401
  %6466 = vst [vmem:[#allocation2 + $0x740] sm:$0xff] %v6402
  %6467 = vst [vmem:[#allocation2 + $0x788] sm:$0xff] %v6403
  %6468 = vst [vmem:[#allocation2 + $0x7d0] sm:$0xff] %v6404
  %6469 = vst [vmem:[#allocation2 + $0x818] sm:$0xff] %v6405
  %6470 = vst [vmem:[#allocation2 + $0x860] sm:$0xff] %v6406
  %6471 = vst [vmem:[#allocation2 + $0x8a8] sm:$0xff] %v6407
  %6472 = vst [vmem:[#allocation2 + $0x8f0] sm:$0xff] %v6408
  %6473 = vst [vmem:[#allocation2 + $0x938] sm:$0xff] %v6409
  %6474 = vst [vmem:[#allocation2 + $0x980] sm:$0xff] %v6410
  %6475 = vst [vmem:[#allocation2 + $0x9c8] sm:$0xff] %v6411
  %6476 = vst [vmem:[#allocation2 + $0xa10] sm:$0xff] %v6412
  %6477 = vst [vmem:[#allocation2 + $0xa58] sm:$0xff] %v6413
  %6478 = vst [vmem:[#allocation2 + $0xaa0] sm:$0xff] %v6414
  %6479 = vst [vmem:[#allocation2 + $0xae8] sm:$0xff] %v6415
  %6480 = vst [vmem:[#allocation2 + $0xb30] sm:$0xff] %v6416
  %6481 = vst [vmem:[#allocation2 + $0xb78] sm:$0xff] %v6417
  %6482 = vst [vmem:[#allocation2 + $0xbc0] sm:$0xff] %v6418
  %6483 = vst [vmem:[#allocation2 + $0xc08] sm:$0xff] %v6419
  %6484 = vst [vmem:[#allocation2 + $0xc50] sm:$0xff] %v6420
  %6485 = vst [vmem:[#allocation2 + $0xc98] sm:$0xff] %v6421
  %6486 = vst [vmem:[#allocation2 + $0xce0] sm:$0xff] %v6422
  %6487 = vst [vmem:[#allocation2 + $0xd28] sm:$0xff] %v6423
  %6488 = vst [vmem:[#allocation2 + $0xd70] sm:$0xff] %v6424
  %6489 = vst [vmem:[#allocation2 + $0xdb8] sm:$0xff] %v6425
  %6490 = vst [vmem:[#allocation2 + $0xe00] sm:$0xff] %v6426
  %6491 = vst [vmem:[#allocation2 + $0xe48] sm:$0xff] %v6427
  %6492 = vst [vmem:[#allocation2 + $0xe90] sm:$0xff] %v6428
  %6493 = vst [vmem:[#allocation2 + $0xed8] sm:$0xff] %v6429
  %6494 = vst [vmem:[#allocation2 + $0xf20] sm:$0xff] %v6430
  %6495 = vst [vmem:[#allocation2 + $0xf68] sm:$0xff] %v6431
  %6496 = vst [vmem:[#allocation2 + $0xfb0] sm:$0xff] %v6432
  %6497 = vst [vmem:[#allocation2 + $0xff8] sm:$0xff] %v6433
  %6498 = vst [vmem:[#allocation2 + $0x1040] sm:$0xff] %v6434
  %6499 = vst [vmem:[#allocation2 + $0x1088] sm:$0xff] %v6435
  %6500 = vst [vmem:[#allocation2 + $0x10d0] sm:$0xff] %v6436
  %6501 = vst [vmem:[#allocation2 + $0x1118] sm:$0xff] %v6437
  %6502 = vst [vmem:[#allocation2 + $0x1160] sm:$0xff] %v6438
  %6503 = vst [vmem:[#allocation2 + $0x11a8] sm:$0xff] %v6439
  %6504 = vst [vmem:[#allocation2 + $0x11f0] sm:$0xff] %v6440
  %vm6505 = vmand %vm5289, %vm2473
  %vm6506 = vmand %vm5290, %vm2474
  %vm6507 = vmand %vm5291, %vm2475
  %vm6508 = vmand %vm5292, %vm2476
  %vm6509 = vmand %vm5293, %vm2477
  %vm6510 = vmand %vm5294, %vm2478
  %vm6511 = vmand %vm5295, %vm2479
  %vm6512 = vmand %vm5296, %vm2480
  %vm6513 = vmand %vm5297, %vm2481
  %vm6514 = vmand %vm5298, %vm2482
  %vm6515 = vmand %vm5299, %vm2483
  %vm6516 = vmand %vm5300, %vm2484
  %vm6517 = vmand %vm5301, %vm2485
  %vm6518 = vmand %vm5302, %vm2486
  %vm6519 = vmand %vm5303, %vm2487
  %vm6520 = vmand %vm5304, %vm2488
  %vm6521 = vmand %vm5305, %vm2489
  %vm6522 = vmand %vm5306, %vm2490
  %vm6523 = vmand %vm5307, %vm2491
  %vm6524 = vmand %vm5308, %vm2492
  %vm6525 = vmand %vm5309, %vm2493
  %vm6526 = vmand %vm5310, %vm2494
  %vm6527 = vmand %vm5311, %vm2495
  %vm6528 = vmand %vm5312, %vm2496
  %vm6529 = vmand %vm5313, %vm2497
  %vm6530 = vmand %vm5314, %vm2498
  %vm6531 = vmand %vm5315, %vm2499
  %vm6532 = vmand %vm5316, %vm2500
  %vm6533 = vmand %vm5317, %vm2501
  %vm6534 = vmand %vm5318, %vm2502
  %vm6535 = vmand %vm5319, %vm2503
  %vm6536 = vmand %vm5320, %vm2504
  %vm6537 = vmand %vm5321, %vm2505
  %vm6538 = vmand %vm5322, %vm2506
  %vm6539 = vmand %vm5323, %vm2507
  %vm6540 = vmand %vm5324, %vm2508
  %vm6541 = vmand %vm5325, %vm2509
  %vm6542 = vmand %vm5326, %vm2510
  %vm6543 = vmand %vm5327, %vm2511
  %vm6544 = vmand %vm5328, %vm2512
  %vm6545 = vmand %vm5329, %vm2513
  %vm6546 = vmand %vm5330, %vm2514
  %vm6547 = vmand %vm5331, %vm2515
  %vm6548 = vmand %vm5332, %vm2516
  %vm6549 = vmand %vm5333, %vm2517
  %vm6550 = vmand %vm5334, %vm2518
  %vm6551 = vmand %vm5335, %vm2519
  %vm6552 = vmand %vm5336, %vm2520
  %vm6553 = vmand %vm5337, %vm2521
  %vm6554 = vmand %vm5338, %vm2522
  %vm6555 = vmand %vm5339, %vm2523
  %vm6556 = vmand %vm5340, %vm2524
  %vm6557 = vmand %vm5341, %vm2525
  %vm6558 = vmand %vm5342, %vm2526
  %vm6559 = vmand %vm5343, %vm2527
  %vm6560 = vmand %vm5344, %vm2528
  %vm6561 = vmand %vm5345, %vm2529
  %vm6562 = vmand %vm5346, %vm2530
  %vm6563 = vmand %vm5347, %vm2531
  %vm6564 = vmand %vm5348, %vm2532
  %vm6565 = vmand %vm5349, %vm2533
  %vm6566 = vmand %vm5350, %vm2534
  %vm6567 = vmand %vm5351, %vm2535
  %vm6568 = vmand %vm5352, %vm2536
  %vm6569 = vmand %vm6505, %vm2601
  %vm6570 = vmand %vm6506, %vm2602
  %vm6571 = vmand %vm6507, %vm2603
  %vm6572 = vmand %vm6508, %vm2604
  %vm6573 = vmand %vm6509, %vm2605
  %vm6574 = vmand %vm6510, %vm2606
  %vm6575 = vmand %vm6511, %vm2607
  %vm6576 = vmand %vm6512, %vm2608
  %vm6577 = vmand %vm6513, %vm2609
  %vm6578 = vmand %vm6514, %vm2610
  %vm6579 = vmand %vm6515, %vm2611
  %vm6580 = vmand %vm6516, %vm2612
  %vm6581 = vmand %vm6517, %vm2613
  %vm6582 = vmand %vm6518, %vm2614
  %vm6583 = vmand %vm6519, %vm2615
  %vm6584 = vmand %vm6520, %vm2616
  %vm6585 = vmand %vm6521, %vm2617
  %vm6586 = vmand %vm6522, %vm2618
  %vm6587 = vmand %vm6523, %vm2619
  %vm6588 = vmand %vm6524, %vm2620
  %vm6589 = vmand %vm6525, %vm2621
  %vm6590 = vmand %vm6526, %vm2622
  %vm6591 = vmand %vm6527, %vm2623
  %vm6592 = vmand %vm6528, %vm2624
  %vm6593 = vmand %vm6529, %vm2625
  %vm6594 = vmand %vm6530, %vm2626
  %vm6595 = vmand %vm6531, %vm2627
  %vm6596 = vmand %vm6532, %vm2628
  %vm6597 = vmand %vm6533, %vm2629
  %vm6598 = vmand %vm6534, %vm2630
  %vm6599 = vmand %vm6535, %vm2631
  %vm6600 = vmand %vm6536, %vm2632
  %vm6601 = vmand %vm6537, %vm2633
  %vm6602 = vmand %vm6538, %vm2634
  %vm6603 = vmand %vm6539, %vm2635
  %vm6604 = vmand %vm6540, %vm2636
  %vm6605 = vmand %vm6541, %vm2637
  %vm6606 = vmand %vm6542, %vm2638
  %vm6607 = vmand %vm6543, %vm2639
  %vm6608 = vmand %vm6544, %vm2640
  %vm6609 = vmand %vm6545, %vm2641
  %vm6610 = vmand %vm6546, %vm2642
  %vm6611 = vmand %vm6547, %vm2643
  %vm6612 = vmand %vm6548, %vm2644
  %vm6613 = vmand %vm6549, %vm2645
  %vm6614 = vmand %vm6550, %vm2646
  %vm6615 = vmand %vm6551, %vm2647
  %vm6616 = vmand %vm6552, %vm2648
  %vm6617 = vmand %vm6553, %vm2649
  %vm6618 = vmand %vm6554, %vm2650
  %vm6619 = vmand %vm6555, %vm2651
  %vm6620 = vmand %vm6556, %vm2652
  %vm6621 = vmand %vm6557, %vm2653
  %vm6622 = vmand %vm6558, %vm2654
  %vm6623 = vmand %vm6559, %vm2655
  %vm6624 = vmand %vm6560, %vm2656
  %vm6625 = vmand %vm6561, %vm2657
  %vm6626 = vmand %vm6562, %vm2658
  %vm6627 = vmand %vm6563, %vm2659
  %vm6628 = vmand %vm6564, %vm2660
  %vm6629 = vmand %vm6565, %vm2661
  %vm6630 = vmand %vm6566, %vm2662
  %vm6631 = vmand %vm6567, %vm2663
  %vm6632 = vmand %vm6568, %vm2664
  %v6633 = vsel %vm6569, 1, 0
  %v6634 = vsel %vm6570, 1, 0
  %v6635 = vsel %vm6571, 1, 0
  %v6636 = vsel %vm6572, 1, 0
  %v6637 = vsel %vm6573, 1, 0
  %v6638 = vsel %vm6574, 1, 0
  %v6639 = vsel %vm6575, 1, 0
  %v6640 = vsel %vm6576, 1, 0
  %v6641 = vsel %vm6577, 1, 0
  %v6642 = vsel %vm6578, 1, 0
  %v6643 = vsel %vm6579, 1, 0
  %v6644 = vsel %vm6580, 1, 0
  %v6645 = vsel %vm6581, 1, 0
  %v6646 = vsel %vm6582, 1, 0
  %v6647 = vsel %vm6583, 1, 0
  %v6648 = vsel %vm6584, 1, 0
  %v6649 = vsel %vm6585, 1, 0
  %v6650 = vsel %vm6586, 1, 0
  %v6651 = vsel %vm6587, 1, 0
  %v6652 = vsel %vm6588, 1, 0
  %v6653 = vsel %vm6589, 1, 0
  %v6654 = vsel %vm6590, 1, 0
  %v6655 = vsel %vm6591, 1, 0
  %v6656 = vsel %vm6592, 1, 0
  %v6657 = vsel %vm6593, 1, 0
  %v6658 = vsel %vm6594, 1, 0
  %v6659 = vsel %vm6595, 1, 0
  %v6660 = vsel %vm6596, 1, 0
  %v6661 = vsel %vm6597, 1, 0
  %v6662 = vsel %vm6598, 1, 0
  %v6663 = vsel %vm6599, 1, 0
  %v6664 = vsel %vm6600, 1, 0
  %v6665 = vsel %vm6601, 1, 0
  %v6666 = vsel %vm6602, 1, 0
  %v6667 = vsel %vm6603, 1, 0
  %v6668 = vsel %vm6604, 1, 0
  %v6669 = vsel %vm6605, 1, 0
  %v6670 = vsel %vm6606, 1, 0
  %v6671 = vsel %vm6607, 1, 0
  %v6672 = vsel %vm6608, 1, 0
  %v6673 = vsel %vm6609, 1, 0
  %v6674 = vsel %vm6610, 1, 0
  %v6675 = vsel %vm6611, 1, 0
  %v6676 = vsel %vm6612, 1, 0
  %v6677 = vsel %vm6613, 1, 0
  %v6678 = vsel %vm6614, 1, 0
  %v6679 = vsel %vm6615, 1, 0
  %v6680 = vsel %vm6616, 1, 0
  %v6681 = vsel %vm6617, 1, 0
  %v6682 = vsel %vm6618, 1, 0
  %v6683 = vsel %vm6619, 1, 0
  %v6684 = vsel %vm6620, 1, 0
  %v6685 = vsel %vm6621, 1, 0
  %v6686 = vsel %vm6622, 1, 0
  %v6687 = vsel %vm6623, 1, 0
  %v6688 = vsel %vm6624, 1, 0
  %v6689 = vsel %vm6625, 1, 0
  %v6690 = vsel %vm6626, 1, 0
  %v6691 = vsel %vm6627, 1, 0
  %v6692 = vsel %vm6628, 1, 0
  %v6693 = vsel %vm6629, 1, 0
  %v6694 = vsel %vm6630, 1, 0
  %v6695 = vsel %vm6631, 1, 0
  %v6696 = vsel %vm6632, 1, 0
  %6697 = vset.pattern.permute.xlu0 0
  %6698 = vperm.xlu0 %6697, %v6633
  %v6699 = vpop.permute.xlu0 %6698
  %6700 = vset.pattern.permute.xlu0 0
  %6701 = vperm.xlu0 %6700, %v6634
  %v6702 = vpop.permute.xlu0 %6701
  %6703 = vset.pattern.permute.xlu0 0
  %6704 = vperm.xlu0 %6703, %v6635
  %v6705 = vpop.permute.xlu0 %6704
  %6706 = vset.pattern.permute.xlu0 0
  %6707 = vperm.xlu0 %6706, %v6636
  %v6708 = vpop.permute.xlu0 %6707
  %6709 = vset.pattern.permute.xlu0 0
  %6710 = vperm.xlu0 %6709, %v6637
  %v6711 = vpop.permute.xlu0 %6710
  %6712 = vset.pattern.permute.xlu0 0
  %6713 = vperm.xlu0 %6712, %v6638
  %v6714 = vpop.permute.xlu0 %6713
  %6715 = vset.pattern.permute.xlu0 0
  %6716 = vperm.xlu0 %6715, %v6639
  %v6717 = vpop.permute.xlu0 %6716
  %6718 = vset.pattern.permute.xlu0 0
  %6719 = vperm.xlu0 %6718, %v6640
  %v6720 = vpop.permute.xlu0 %6719
  %6721 = vset.pattern.permute.xlu0 0
  %6722 = vperm.xlu0 %6721, %v6641
  %v6723 = vpop.permute.xlu0 %6722
  %6724 = vset.pattern.permute.xlu0 0
  %6725 = vperm.xlu0 %6724, %v6642
  %v6726 = vpop.permute.xlu0 %6725
  %6727 = vset.pattern.permute.xlu0 0
  %6728 = vperm.xlu0 %6727, %v6643
  %v6729 = vpop.permute.xlu0 %6728
  %6730 = vset.pattern.permute.xlu0 0
  %6731 = vperm.xlu0 %6730, %v6644
  %v6732 = vpop.permute.xlu0 %6731
  %6733 = vset.pattern.permute.xlu0 0
  %6734 = vperm.xlu0 %6733, %v6645
  %v6735 = vpop.permute.xlu0 %6734
  %6736 = vset.pattern.permute.xlu0 0
  %6737 = vperm.xlu0 %6736, %v6646
  %v6738 = vpop.permute.xlu0 %6737
  %6739 = vset.pattern.permute.xlu0 0
  %6740 = vperm.xlu0 %6739, %v6647
  %v6741 = vpop.permute.xlu0 %6740
  %6742 = vset.pattern.permute.xlu0 0
  %6743 = vperm.xlu0 %6742, %v6648
  %v6744 = vpop.permute.xlu0 %6743
  %6745 = vset.pattern.permute.xlu0 0
  %6746 = vperm.xlu0 %6745, %v6649
  %v6747 = vpop.permute.xlu0 %6746
  %6748 = vset.pattern.permute.xlu0 0
  %6749 = vperm.xlu0 %6748, %v6650
  %v6750 = vpop.permute.xlu0 %6749
  %6751 = vset.pattern.permute.xlu0 0
  %6752 = vperm.xlu0 %6751, %v6651
  %v6753 = vpop.permute.xlu0 %6752
  %6754 = vset.pattern.permute.xlu0 0
  %6755 = vperm.xlu0 %6754, %v6652
  %v6756 = vpop.permute.xlu0 %6755
  %6757 = vset.pattern.permute.xlu0 0
  %6758 = vperm.xlu0 %6757, %v6653
  %v6759 = vpop.permute.xlu0 %6758
  %6760 = vset.pattern.permute.xlu0 0
  %6761 = vperm.xlu0 %6760, %v6654
  %v6762 = vpop.permute.xlu0 %6761
  %6763 = vset.pattern.permute.xlu0 0
  %6764 = vperm.xlu0 %6763, %v6655
  %v6765 = vpop.permute.xlu0 %6764
  %6766 = vset.pattern.permute.xlu0 0
  %6767 = vperm.xlu0 %6766, %v6656
  %v6768 = vpop.permute.xlu0 %6767
  %6769 = vset.pattern.permute.xlu0 0
  %6770 = vperm.xlu0 %6769, %v6657
  %v6771 = vpop.permute.xlu0 %6770
  %6772 = vset.pattern.permute.xlu0 0
  %6773 = vperm.xlu0 %6772, %v6658
  %v6774 = vpop.permute.xlu0 %6773
  %6775 = vset.pattern.permute.xlu0 0
  %6776 = vperm.xlu0 %6775, %v6659
  %v6777 = vpop.permute.xlu0 %6776
  %6778 = vset.pattern.permute.xlu0 0
  %6779 = vperm.xlu0 %6778, %v6660
  %v6780 = vpop.permute.xlu0 %6779
  %6781 = vset.pattern.permute.xlu0 0
  %6782 = vperm.xlu0 %6781, %v6661
  %v6783 = vpop.permute.xlu0 %6782
  %6784 = vset.pattern.permute.xlu0 0
  %6785 = vperm.xlu0 %6784, %v6662
  %v6786 = vpop.permute.xlu0 %6785
  %6787 = vset.pattern.permute.xlu0 0
  %6788 = vperm.xlu0 %6787, %v6663
  %v6789 = vpop.permute.xlu0 %6788
  %6790 = vset.pattern.permute.xlu0 0
  %6791 = vperm.xlu0 %6790, %v6664
  %v6792 = vpop.permute.xlu0 %6791
  %6793 = vset.pattern.permute.xlu0 0
  %6794 = vperm.xlu0 %6793, %v6665
  %v6795 = vpop.permute.xlu0 %6794
  %6796 = vset.pattern.permute.xlu0 0
  %6797 = vperm.xlu0 %6796, %v6666
  %v6798 = vpop.permute.xlu0 %6797
  %6799 = vset.pattern.permute.xlu0 0
  %6800 = vperm.xlu0 %6799, %v6667
  %v6801 = vpop.permute.xlu0 %6800
  %6802 = vset.pattern.permute.xlu0 0
  %6803 = vperm.xlu0 %6802, %v6668
  %v6804 = vpop.permute.xlu0 %6803
  %6805 = vset.pattern.permute.xlu0 0
  %6806 = vperm.xlu0 %6805, %v6669
  %v6807 = vpop.permute.xlu0 %6806
  %6808 = vset.pattern.permute.xlu0 0
  %6809 = vperm.xlu0 %6808, %v6670
  %v6810 = vpop.permute.xlu0 %6809
  %6811 = vset.pattern.permute.xlu0 0
  %6812 = vperm.xlu0 %6811, %v6671
  %v6813 = vpop.permute.xlu0 %6812
  %6814 = vset.pattern.permute.xlu0 0
  %6815 = vperm.xlu0 %6814, %v6672
  %v6816 = vpop.permute.xlu0 %6815
  %6817 = vset.pattern.permute.xlu0 0
  %6818 = vperm.xlu0 %6817, %v6673
  %v6819 = vpop.permute.xlu0 %6818
  %6820 = vset.pattern.permute.xlu0 0
  %6821 = vperm.xlu0 %6820, %v6674
  %v6822 = vpop.permute.xlu0 %6821
  %6823 = vset.pattern.permute.xlu0 0
  %6824 = vperm.xlu0 %6823, %v6675
  %v6825 = vpop.permute.xlu0 %6824
  %6826 = vset.pattern.permute.xlu0 0
  %6827 = vperm.xlu0 %6826, %v6676
  %v6828 = vpop.permute.xlu0 %6827
  %6829 = vset.pattern.permute.xlu0 0
  %6830 = vperm.xlu0 %6829, %v6677
  %v6831 = vpop.permute.xlu0 %6830
  %6832 = vset.pattern.permute.xlu0 0
  %6833 = vperm.xlu0 %6832, %v6678
  %v6834 = vpop.permute.xlu0 %6833
  %6835 = vset.pattern.permute.xlu0 0
  %6836 = vperm.xlu0 %6835, %v6679
  %v6837 = vpop.permute.xlu0 %6836
  %6838 = vset.pattern.permute.xlu0 0
  %6839 = vperm.xlu0 %6838, %v6680
  %v6840 = vpop.permute.xlu0 %6839
  %6841 = vset.pattern.permute.xlu0 0
  %6842 = vperm.xlu0 %6841, %v6681
  %v6843 = vpop.permute.xlu0 %6842
  %6844 = vset.pattern.permute.xlu0 0
  %6845 = vperm.xlu0 %6844, %v6682
  %v6846 = vpop.permute.xlu0 %6845
  %6847 = vset.pattern.permute.xlu0 0
  %6848 = vperm.xlu0 %6847, %v6683
  %v6849 = vpop.permute.xlu0 %6848
  %6850 = vset.pattern.permute.xlu0 0
  %6851 = vperm.xlu0 %6850, %v6684
  %v6852 = vpop.permute.xlu0 %6851
  %6853 = vset.pattern.permute.xlu0 0
  %6854 = vperm.xlu0 %6853, %v6685
  %v6855 = vpop.permute.xlu0 %6854
  %6856 = vset.pattern.permute.xlu0 0
  %6857 = vperm.xlu0 %6856, %v6686
  %v6858 = vpop.permute.xlu0 %6857
  %6859 = vset.pattern.permute.xlu0 0
  %6860 = vperm.xlu0 %6859, %v6687
  %v6861 = vpop.permute.xlu0 %6860
  %6862 = vset.pattern.permute.xlu0 0
  %6863 = vperm.xlu0 %6862, %v6688
  %v6864 = vpop.permute.xlu0 %6863
  %6865 = vset.pattern.permute.xlu0 0
  %6866 = vperm.xlu0 %6865, %v6689
  %v6867 = vpop.permute.xlu0 %6866
  %6868 = vset.pattern.permute.xlu0 0
  %6869 = vperm.xlu0 %6868, %v6690
  %v6870 = vpop.permute.xlu0 %6869
  %6871 = vset.pattern.permute.xlu0 0
  %6872 = vperm.xlu0 %6871, %v6691
  %v6873 = vpop.permute.xlu0 %6872
  %6874 = vset.pattern.permute.xlu0 0
  %6875 = vperm.xlu0 %6874, %v6692
  %v6876 = vpop.permute.xlu0 %6875
  %6877 = vset.pattern.permute.xlu0 0
  %6878 = vperm.xlu0 %6877, %v6693
  %v6879 = vpop.permute.xlu0 %6878
  %6880 = vset.pattern.permute.xlu0 0
  %6881 = vperm.xlu0 %6880, %v6694
  %v6882 = vpop.permute.xlu0 %6881
  %6883 = vset.pattern.permute.xlu0 0
  %6884 = vperm.xlu0 %6883, %v6695
  %v6885 = vpop.permute.xlu0 %6884
  %6886 = vset.pattern.permute.xlu0 0
  %6887 = vperm.xlu0 %6886, %v6696
  %v6888 = vpop.permute.xlu0 %6887
  %vm6889 = vcmp.eq.s32.totalorder %v6699, 1
  %vm6890 = vcmp.eq.s32.totalorder %v6702, 1
  %vm6891 = vcmp.eq.s32.totalorder %v6705, 1
  %vm6892 = vcmp.eq.s32.totalorder %v6708, 1
  %vm6893 = vcmp.eq.s32.totalorder %v6711, 1
  %vm6894 = vcmp.eq.s32.totalorder %v6714, 1
  %vm6895 = vcmp.eq.s32.totalorder %v6717, 1
  %vm6896 = vcmp.eq.s32.totalorder %v6720, 1
  %vm6897 = vcmp.eq.s32.totalorder %v6723, 1
  %vm6898 = vcmp.eq.s32.totalorder %v6726, 1
  %vm6899 = vcmp.eq.s32.totalorder %v6729, 1
  %vm6900 = vcmp.eq.s32.totalorder %v6732, 1
  %vm6901 = vcmp.eq.s32.totalorder %v6735, 1
  %vm6902 = vcmp.eq.s32.totalorder %v6738, 1
  %vm6903 = vcmp.eq.s32.totalorder %v6741, 1
  %vm6904 = vcmp.eq.s32.totalorder %v6744, 1
  %vm6905 = vcmp.eq.s32.totalorder %v6747, 1
  %vm6906 = vcmp.eq.s32.totalorder %v6750, 1
  %vm6907 = vcmp.eq.s32.totalorder %v6753, 1
  %vm6908 = vcmp.eq.s32.totalorder %v6756, 1
  %vm6909 = vcmp.eq.s32.totalorder %v6759, 1
  %vm6910 = vcmp.eq.s32.totalorder %v6762, 1
  %vm6911 = vcmp.eq.s32.totalorder %v6765, 1
  %vm6912 = vcmp.eq.s32.totalorder %v6768, 1
  %vm6913 = vcmp.eq.s32.totalorder %v6771, 1
  %vm6914 = vcmp.eq.s32.totalorder %v6774, 1
  %vm6915 = vcmp.eq.s32.totalorder %v6777, 1
  %vm6916 = vcmp.eq.s32.totalorder %v6780, 1
  %vm6917 = vcmp.eq.s32.totalorder %v6783, 1
  %vm6918 = vcmp.eq.s32.totalorder %v6786, 1
  %vm6919 = vcmp.eq.s32.totalorder %v6789, 1
  %vm6920 = vcmp.eq.s32.totalorder %v6792, 1
  %vm6921 = vcmp.eq.s32.totalorder %v6795, 1
  %vm6922 = vcmp.eq.s32.totalorder %v6798, 1
  %vm6923 = vcmp.eq.s32.totalorder %v6801, 1
  %vm6924 = vcmp.eq.s32.totalorder %v6804, 1
  %vm6925 = vcmp.eq.s32.totalorder %v6807, 1
  %vm6926 = vcmp.eq.s32.totalorder %v6810, 1
  %vm6927 = vcmp.eq.s32.totalorder %v6813, 1
  %vm6928 = vcmp.eq.s32.totalorder %v6816, 1
  %vm6929 = vcmp.eq.s32.totalorder %v6819, 1
  %vm6930 = vcmp.eq.s32.totalorder %v6822, 1
  %vm6931 = vcmp.eq.s32.totalorder %v6825, 1
  %vm6932 = vcmp.eq.s32.totalorder %v6828, 1
  %vm6933 = vcmp.eq.s32.totalorder %v6831, 1
  %vm6934 = vcmp.eq.s32.totalorder %v6834, 1
  %vm6935 = vcmp.eq.s32.totalorder %v6837, 1
  %vm6936 = vcmp.eq.s32.totalorder %v6840, 1
  %vm6937 = vcmp.eq.s32.totalorder %v6843, 1
  %vm6938 = vcmp.eq.s32.totalorder %v6846, 1
  %vm6939 = vcmp.eq.s32.totalorder %v6849, 1
  %vm6940 = vcmp.eq.s32.totalorder %v6852, 1
  %vm6941 = vcmp.eq.s32.totalorder %v6855, 1
  %vm6942 = vcmp.eq.s32.totalorder %v6858, 1
  %vm6943 = vcmp.eq.s32.totalorder %v6861, 1
  %vm6944 = vcmp.eq.s32.totalorder %v6864, 1
  %vm6945 = vcmp.eq.s32.totalorder %v6867, 1
  %vm6946 = vcmp.eq.s32.totalorder %v6870, 1
  %vm6947 = vcmp.eq.s32.totalorder %v6873, 1
  %vm6948 = vcmp.eq.s32.totalorder %v6876, 1
  %vm6949 = vcmp.eq.s32.totalorder %v6879, 1
  %vm6950 = vcmp.eq.s32.totalorder %v6882, 1
  %vm6951 = vcmp.eq.s32.totalorder %v6885, 1
  %vm6952 = vcmp.eq.s32.totalorder %v6888, 1
  %v6953 = vsel %vm6889, %v2405, 0.0
  %v6954 = vsel %vm6890, %v2404, 0.0
  %v6955 = vsel %vm6891, %v2403, 0.0
  %v6956 = vsel %vm6892, %v2402, 0.0
  %v6957 = vsel %vm6893, %v2401, 0.0
  %v6958 = vsel %vm6894, %v2400, 0.0
  %v6959 = vsel %vm6895, %v2399, 0.0
  %v6960 = vsel %vm6896, %v2398, 0.0
  %v6961 = vsel %vm6897, %v2397, 0.0
  %v6962 = vsel %vm6898, %v2396, 0.0
  %v6963 = vsel %vm6899, %v2395, 0.0
  %v6964 = vsel %vm6900, %v2394, 0.0
  %v6965 = vsel %vm6901, %v2393, 0.0
  %v6966 = vsel %vm6902, %v2392, 0.0
  %v6967 = vsel %vm6903, %v2391, 0.0
  %v6968 = vsel %vm6904, %v2390, 0.0
  %v6969 = vsel %vm6905, %v2389, 0.0
  %v6970 = vsel %vm6906, %v2388, 0.0
  %v6971 = vsel %vm6907, %v2387, 0.0
  %v6972 = vsel %vm6908, %v2386, 0.0
  %v6973 = vsel %vm6909, %v2385, 0.0
  %v6974 = vsel %vm6910, %v2384, 0.0
  %v6975 = vsel %vm6911, %v2383, 0.0
  %v6976 = vsel %vm6912, %v2382, 0.0
  %v6977 = vsel %vm6913, %v2381, 0.0
  %v6978 = vsel %vm6914, %v2380, 0.0
  %v6979 = vsel %vm6915, %v2379, 0.0
  %v6980 = vsel %vm6916, %v2378, 0.0
  %v6981 = vsel %vm6917, %v2377, 0.0
  %v6982 = vsel %vm6918, %v2376, 0.0
  %v6983 = vsel %vm6919, %v2375, 0.0
  %v6984 = vsel %vm6920, %v2374, 0.0
  %v6985 = vsel %vm6921, %v2373, 0.0
  %v6986 = vsel %vm6922, %v2372, 0.0
  %v6987 = vsel %vm6923, %v2371, 0.0
  %v6988 = vsel %vm6924, %v2370, 0.0
  %v6989 = vsel %vm6925, %v2369, 0.0
  %v6990 = vsel %vm6926, %v2368, 0.0
  %v6991 = vsel %vm6927, %v2367, 0.0
  %v6992 = vsel %vm6928, %v2366, 0.0
  %v6993 = vsel %vm6929, %v2365, 0.0
  %v6994 = vsel %vm6930, %v2364, 0.0
  %v6995 = vsel %vm6931, %v2363, 0.0
  %v6996 = vsel %vm6932, %v2362, 0.0
  %v6997 = vsel %vm6933, %v2361, 0.0
  %v6998 = vsel %vm6934, %v2360, 0.0
  %v6999 = vsel %vm6935, %v2359, 0.0
  %v7000 = vsel %vm6936, %v2358, 0.0
  %v7001 = vsel %vm6937, %v2357, 0.0
  %v7002 = vsel %vm6938, %v2356, 0.0
  %v7003 = vsel %vm6939, %v2355, 0.0
  %v7004 = vsel %vm6940, %v2354, 0.0
  %v7005 = vsel %vm6941, %v2353, 0.0
  %v7006 = vsel %vm6942, %v2352, 0.0
  %v7007 = vsel %vm6943, %v2351, 0.0
  %v7008 = vsel %vm6944, %v2350, 0.0
  %v7009 = vsel %vm6945, %v2349, 0.0
  %v7010 = vsel %vm6946, %v2348, 0.0
  %v7011 = vsel %vm6947, %v2347, 0.0
  %v7012 = vsel %vm6948, %v2346, 0.0
  %v7013 = vsel %vm6949, %v2345, 0.0
  %v7014 = vsel %vm6950, %v2408, 0.0
  %v7015 = vsel %vm6951, %v2407, 0.0
  %v7016 = vsel %vm6952, %v2406, 0.0
  %7017 = vst [vmem:[#allocation2 + $0x40] sm:$0xff] %v6953
  %7018 = vst [vmem:[#allocation2 + $0x88] sm:$0xff] %v6954
  %7019 = vst [vmem:[#allocation2 + $0xd0] sm:$0xff] %v6955
  %7020 = vst [vmem:[#allocation2 + $0x118] sm:$0xff] %v6956
  %7021 = vst [vmem:[#allocation2 + $0x160] sm:$0xff] %v6957
  %7022 = vst [vmem:[#allocation2 + $0x1a8] sm:$0xff] %v6958
  %7023 = vst [vmem:[#allocation2 + $0x1f0] sm:$0xff] %v6959
  %7024 = vst [vmem:[#allocation2 + $0x238] sm:$0xff] %v6960
  %7025 = vst [vmem:[#allocation2 + $0x280] sm:$0xff] %v6961
  %7026 = vst [vmem:[#allocation2 + $0x2c8] sm:$0xff] %v6962
  %7027 = vst [vmem:[#allocation2 + $0x310] sm:$0xff] %v6963
  %7028 = vst [vmem:[#allocation2 + $0x358] sm:$0xff] %v6964
  %7029 = vst [vmem:[#allocation2 + $0x3a0] sm:$0xff] %v6965
  %7030 = vst [vmem:[#allocation2 + $0x3e8] sm:$0xff] %v6966
  %7031 = vst [vmem:[#allocation2 + $0x430] sm:$0xff] %v6967
  %7032 = vst [vmem:[#allocation2 + $0x478] sm:$0xff] %v6968
  %7033 = vst [vmem:[#allocation2 + $0x4c0] sm:$0xff] %v6969
  %7034 = vst [vmem:[#allocation2 + $0x508] sm:$0xff] %v6970
  %7035 = vst [vmem:[#allocation2 + $0x550] sm:$0xff] %v6971
  %7036 = vst [vmem:[#allocation2 + $0x598] sm:$0xff] %v6972
  %7037 = vst [vmem:[#allocation2 + $0x5e0] sm:$0xff] %v6973
  %7038 = vst [vmem:[#allocation2 + $0x628] sm:$0xff] %v6974
  %7039 = vst [vmem:[#allocation2 + $0x670] sm:$0xff] %v6975
  %7040 = vst [vmem:[#allocation2 + $0x6b8] sm:$0xff] %v6976
  %7041 = vst [vmem:[#allocation2 + $0x700] sm:$0xff] %v6977
  %7042 = vst [vmem:[#allocation2 + $0x748] sm:$0xff] %v6978
  %7043 = vst [vmem:[#allocation2 + $0x790] sm:$0xff] %v6979
  %7044 = vst [vmem:[#allocation2 + $0x7d8] sm:$0xff] %v6980
  %7045 = vst [vmem:[#allocation2 + $0x820] sm:$0xff] %v6981
  %7046 = vst [vmem:[#allocation2 + $0x868] sm:$0xff] %v6982
  %7047 = vst [vmem:[#allocation2 + $0x8b0] sm:$0xff] %v6983
  %7048 = vst [vmem:[#allocation2 + $0x8f8] sm:$0xff] %v6984
  %7049 = vst [vmem:[#allocation2 + $0x940] sm:$0xff] %v6985
  %7050 = vst [vmem:[#allocation2 + $0x988] sm:$0xff] %v6986
  %7051 = vst [vmem:[#allocation2 + $0x9d0] sm:$0xff] %v6987
  %7052 = vst [vmem:[#allocation2 + $0xa18] sm:$0xff] %v6988
  %7053 = vst [vmem:[#allocation2 + $0xa60] sm:$0xff] %v6989
  %7054 = vst [vmem:[#allocation2 + $0xaa8] sm:$0xff] %v6990
  %7055 = vst [vmem:[#allocation2 + $0xaf0] sm:$0xff] %v6991
  %7056 = vst [vmem:[#allocation2 + $0xb38] sm:$0xff] %v6992
  %7057 = vst [vmem:[#allocation2 + $0xb80] sm:$0xff] %v6993
  %7058 = vst [vmem:[#allocation2 + $0xbc8] sm:$0xff] %v6994
  %7059 = vst [vmem:[#allocation2 + $0xc10] sm:$0xff] %v6995
  %7060 = vst [vmem:[#allocation2 + $0xc58] sm:$0xff] %v6996
  %7061 = vst [vmem:[#allocation2 + $0xca0] sm:$0xff] %v6997
  %7062 = vst [vmem:[#allocation2 + $0xce8] sm:$0xff] %v6998
  %7063 = vst [vmem:[#allocation2 + $0xd30] sm:$0xff] %v6999
  %7064 = vst [vmem:[#allocation2 + $0xd78] sm:$0xff] %v7000
  %7065 = vst [vmem:[#allocation2 + $0xdc0] sm:$0xff] %v7001
  %7066 = vst [vmem:[#allocation2 + $0xe08] sm:$0xff] %v7002
  %7067 = vst [vmem:[#allocation2 + $0xe50] sm:$0xff] %v7003
  %7068 = vst [vmem:[#allocation2 + $0xe98] sm:$0xff] %v7004
  %7069 = vst [vmem:[#allocation2 + $0xee0] sm:$0xff] %v7005
  %7070 = vst [vmem:[#allocation2 + $0xf28] sm:$0xff] %v7006
  %7071 = vst [vmem:[#allocation2 + $0xf70] sm:$0xff] %v7007
  %7072 = vst [vmem:[#allocation2 + $0xfb8] sm:$0xff] %v7008
  %7073 = vst [vmem:[#allocation2 + $0x1000] sm:$0xff] %v7009
  %7074 = vst [vmem:[#allocation2 + $0x1048] sm:$0xff] %v7010
  %7075 = vst [vmem:[#allocation2 + $0x1090] sm:$0xff] %v7011
  %7076 = vst [vmem:[#allocation2 + $0x10d8] sm:$0xff] %v7012
  %7077 = vst [vmem:[#allocation2 + $0x1120] sm:$0xff] %v7013
  %7078 = vst [vmem:[#allocation2 + $0x1168] sm:$0xff] %v7014
  %7079 = vst [vmem:[#allocation2 + $0x11b0] sm:$0xff] %v7015
  %7080 = vst [vmem:[#allocation2 + $0x11f8] sm:$0xff] %v7016
  %v7081 = vld [vmem:[#allocation2] sm:$0xff]
  %v7082 = vld [vmem:[#allocation2 + $0x8] sm:$0xff]
  %v7083 = vld [vmem:[#allocation2 + $0x10] sm:$0xff]
  %v7084 = vld [vmem:[#allocation2 + $0x18] sm:$0xff]
  %v7085 = vld [vmem:[#allocation2 + $0x20] sm:$0xff]
  %v7086 = vld [vmem:[#allocation2 + $0x28] sm:$0xff]
  %v7087 = vld [vmem:[#allocation2 + $0x30] sm:$0xff]
  %v7088 = vld [vmem:[#allocation2 + $0x38] sm:$0xff]
  %v7089 = vld [vmem:[#allocation2 + $0x40] sm:$0xff]
  %v7090 = vld [vmem:[#allocation2 + $0x48] sm:$0xff]
  %v7091 = vld [vmem:[#allocation2 + $0x50] sm:$0xff]
  %v7092 = vld [vmem:[#allocation2 + $0x58] sm:$0xff]
  %v7093 = vld [vmem:[#allocation2 + $0x60] sm:$0xff]
  %v7094 = vld [vmem:[#allocation2 + $0x68] sm:$0xff]
  %v7095 = vld [vmem:[#allocation2 + $0x70] sm:$0xff]
  %v7096 = vld [vmem:[#allocation2 + $0x78] sm:$0xff]
  %v7097 = vld [vmem:[#allocation2 + $0x80] sm:$0xff]
  %v7098 = vld [vmem:[#allocation2 + $0x88] sm:$0xff]
  %v7099 = vld [vmem:[#allocation2 + $0x90] sm:$0xff]
  %v7100 = vld [vmem:[#allocation2 + $0x98] sm:$0xff]
  %v7101 = vld [vmem:[#allocation2 + $0xa0] sm:$0xff]
  %v7102 = vld [vmem:[#allocation2 + $0xa8] sm:$0xff]
  %v7103 = vld [vmem:[#allocation2 + $0xb0] sm:$0xff]
  %v7104 = vld [vmem:[#allocation2 + $0xb8] sm:$0xff]
  %v7105 = vld [vmem:[#allocation2 + $0xc0] sm:$0xff]
  %v7106 = vld [vmem:[#allocation2 + $0xc8] sm:$0xff]
  %v7107 = vld [vmem:[#allocation2 + $0xd0] sm:$0xff]
  %v7108 = vld [vmem:[#allocation2 + $0xd8] sm:$0xff]
  %v7109 = vld [vmem:[#allocation2 + $0xe0] sm:$0xff]
  %v7110 = vld [vmem:[#allocation2 + $0xe8] sm:$0xff]
  %v7111 = vld [vmem:[#allocation2 + $0xf0] sm:$0xff]
  %v7112 = vld [vmem:[#allocation2 + $0xf8] sm:$0xff]
  %v7113 = vld [vmem:[#allocation2 + $0x100] sm:$0xff]
  %v7114 = vld [vmem:[#allocation2 + $0x108] sm:$0xff]
  %v7115 = vld [vmem:[#allocation2 + $0x110] sm:$0xff]
  %v7116 = vld [vmem:[#allocation2 + $0x118] sm:$0xff]
  %v7117 = vld [vmem:[#allocation2 + $0x120] sm:$0xff]
  %v7118 = vld [vmem:[#allocation2 + $0x128] sm:$0xff]
  %v7119 = vld [vmem:[#allocation2 + $0x130] sm:$0xff]
  %v7120 = vld [vmem:[#allocation2 + $0x138] sm:$0xff]
  %v7121 = vld [vmem:[#allocation2 + $0x140] sm:$0xff]
  %v7122 = vld [vmem:[#allocation2 + $0x148] sm:$0xff]
  %v7123 = vld [vmem:[#allocation2 + $0x150] sm:$0xff]
  %v7124 = vld [vmem:[#allocation2 + $0x158] sm:$0xff]
  %v7125 = vld [vmem:[#allocation2 + $0x160] sm:$0xff]
  %v7126 = vld [vmem:[#allocation2 + $0x168] sm:$0xff]
  %v7127 = vld [vmem:[#allocation2 + $0x170] sm:$0xff]
  %v7128 = vld [vmem:[#allocation2 + $0x178] sm:$0xff]
  %v7129 = vld [vmem:[#allocation2 + $0x180] sm:$0xff]
  %v7130 = vld [vmem:[#allocation2 + $0x188] sm:$0xff]
  %v7131 = vld [vmem:[#allocation2 + $0x190] sm:$0xff]
  %v7132 = vld [vmem:[#allocation2 + $0x198] sm:$0xff]
  %v7133 = vld [vmem:[#allocation2 + $0x1a0] sm:$0xff]
  %v7134 = vld [vmem:[#allocation2 + $0x1a8] sm:$0xff]
  %v7135 = vld [vmem:[#allocation2 + $0x1b0] sm:$0xff]
  %v7136 = vld [vmem:[#allocation2 + $0x1b8] sm:$0xff]
  %v7137 = vld [vmem:[#allocation2 + $0x1c0] sm:$0xff]
  %v7138 = vld [vmem:[#allocation2 + $0x1c8] sm:$0xff]
  %v7139 = vld [vmem:[#allocation2 + $0x1d0] sm:$0xff]
  %v7140 = vld [vmem:[#allocation2 + $0x1d8] sm:$0xff]
  %v7141 = vld [vmem:[#allocation2 + $0x1e0] sm:$0xff]
  %v7142 = vld [vmem:[#allocation2 + $0x1e8] sm:$0xff]
  %v7143 = vld [vmem:[#allocation2 + $0x1f0] sm:$0xff]
  %v7144 = vld [vmem:[#allocation2 + $0x1f8] sm:$0xff]
  %v7145 = vld [vmem:[#allocation2 + $0x200] sm:$0xff]
  %v7146 = vld [vmem:[#allocation2 + $0x208] sm:$0xff]
  %v7147 = vld [vmem:[#allocation2 + $0x210] sm:$0xff]
  %v7148 = vld [vmem:[#allocation2 + $0x218] sm:$0xff]
  %v7149 = vld [vmem:[#allocation2 + $0x220] sm:$0xff]
  %v7150 = vld [vmem:[#allocation2 + $0x228] sm:$0xff]
  %v7151 = vld [vmem:[#allocation2 + $0x230] sm:$0xff]
  %v7152 = vld [vmem:[#allocation2 + $0x238] sm:$0xff]
  %v7153 = vld [vmem:[#allocation2 + $0x240] sm:$0xff]
  %v7154 = vld [vmem:[#allocation2 + $0x248] sm:$0xff]
  %v7155 = vld [vmem:[#allocation2 + $0x250] sm:$0xff]
  %v7156 = vld [vmem:[#allocation2 + $0x258] sm:$0xff]
  %v7157 = vld [vmem:[#allocation2 + $0x260] sm:$0xff]
  %v7158 = vld [vmem:[#allocation2 + $0x268] sm:$0xff]
  %v7159 = vld [vmem:[#allocation2 + $0x270] sm:$0xff]
  %v7160 = vld [vmem:[#allocation2 + $0x278] sm:$0xff]
  %v7161 = vld [vmem:[#allocation2 + $0x280] sm:$0xff]
  %v7162 = vld [vmem:[#allocation2 + $0x288] sm:$0xff]
  %v7163 = vld [vmem:[#allocation2 + $0x290] sm:$0xff]
  %v7164 = vld [vmem:[#allocation2 + $0x298] sm:$0xff]
  %v7165 = vld [vmem:[#allocation2 + $0x2a0] sm:$0xff]
  %v7166 = vld [vmem:[#allocation2 + $0x2a8] sm:$0xff]
  %v7167 = vld [vmem:[#allocation2 + $0x2b0] sm:$0xff]
  %v7168 = vld [vmem:[#allocation2 + $0x2b8] sm:$0xff]
  %v7169 = vld [vmem:[#allocation2 + $0x2c0] sm:$0xff]
  %v7170 = vld [vmem:[#allocation2 + $0x2c8] sm:$0xff]
  %v7171 = vld [vmem:[#allocation2 + $0x2d0] sm:$0xff]
  %v7172 = vld [vmem:[#allocation2 + $0x2d8] sm:$0xff]
  %v7173 = vld [vmem:[#allocation2 + $0x2e0] sm:$0xff]
  %v7174 = vld [vmem:[#allocation2 + $0x2e8] sm:$0xff]
  %v7175 = vld [vmem:[#allocation2 + $0x2f0] sm:$0xff]
  %v7176 = vld [vmem:[#allocation2 + $0x2f8] sm:$0xff]
  %v7177 = vld [vmem:[#allocation2 + $0x300] sm:$0xff]
  %v7178 = vld [vmem:[#allocation2 + $0x308] sm:$0xff]
  %v7179 = vld [vmem:[#allocation2 + $0x310] sm:$0xff]
  %v7180 = vld [vmem:[#allocation2 + $0x318] sm:$0xff]
  %v7181 = vld [vmem:[#allocation2 + $0x320] sm:$0xff]
  %v7182 = vld [vmem:[#allocation2 + $0x328] sm:$0xff]
  %v7183 = vld [vmem:[#allocation2 + $0x330] sm:$0xff]
  %v7184 = vld [vmem:[#allocation2 + $0x338] sm:$0xff]
  %v7185 = vld [vmem:[#allocation2 + $0x340] sm:$0xff]
  %v7186 = vld [vmem:[#allocation2 + $0x348] sm:$0xff]
  %v7187 = vld [vmem:[#allocation2 + $0x350] sm:$0xff]
  %v7188 = vld [vmem:[#allocation2 + $0x358] sm:$0xff]
  %v7189 = vld [vmem:[#allocation2 + $0x360] sm:$0xff]
  %v7190 = vld [vmem:[#allocation2 + $0x368] sm:$0xff]
  %v7191 = vld [vmem:[#allocation2 + $0x370] sm:$0xff]
  %v7192 = vld [vmem:[#allocation2 + $0x378] sm:$0xff]
  %v7193 = vld [vmem:[#allocation2 + $0x380] sm:$0xff]
  %v7194 = vld [vmem:[#allocation2 + $0x388] sm:$0xff]
  %v7195 = vld [vmem:[#allocation2 + $0x390] sm:$0xff]
  %v7196 = vld [vmem:[#allocation2 + $0x398] sm:$0xff]
  %v7197 = vld [vmem:[#allocation2 + $0x3a0] sm:$0xff]
  %v7198 = vld [vmem:[#allocation2 + $0x3a8] sm:$0xff]
  %v7199 = vld [vmem:[#allocation2 + $0x3b0] sm:$0xff]
  %v7200 = vld [vmem:[#allocation2 + $0x3b8] sm:$0xff]
  %v7201 = vld [vmem:[#allocation2 + $0x3c0] sm:$0xff]
  %v7202 = vld [vmem:[#allocation2 + $0x3c8] sm:$0xff]
  %v7203 = vld [vmem:[#allocation2 + $0x3d0] sm:$0xff]
  %v7204 = vld [vmem:[#allocation2 + $0x3d8] sm:$0xff]
  %v7205 = vld [vmem:[#allocation2 + $0x3e0] sm:$0xff]
  %v7206 = vld [vmem:[#allocation2 + $0x3e8] sm:$0xff]
  %v7207 = vld [vmem:[#allocation2 + $0x3f0] sm:$0xff]
  %v7208 = vld [vmem:[#allocation2 + $0x3f8] sm:$0xff]
  %v7209 = vld [vmem:[#allocation2 + $0x400] sm:$0xff]
  %v7210 = vld [vmem:[#allocation2 + $0x408] sm:$0xff]
  %v7211 = vld [vmem:[#allocation2 + $0x410] sm:$0xff]
  %v7212 = vld [vmem:[#allocation2 + $0x418] sm:$0xff]
  %v7213 = vld [vmem:[#allocation2 + $0x420] sm:$0xff]
  %v7214 = vld [vmem:[#allocation2 + $0x428] sm:$0xff]
  %v7215 = vld [vmem:[#allocation2 + $0x430] sm:$0xff]
  %v7216 = vld [vmem:[#allocation2 + $0x438] sm:$0xff]
  %v7217 = vld [vmem:[#allocation2 + $0x440] sm:$0xff]
  %v7218 = vld [vmem:[#allocation2 + $0x448] sm:$0xff]
  %v7219 = vld [vmem:[#allocation2 + $0x450] sm:$0xff]
  %v7220 = vld [vmem:[#allocation2 + $0x458] sm:$0xff]
  %v7221 = vld [vmem:[#allocation2 + $0x460] sm:$0xff]
  %v7222 = vld [vmem:[#allocation2 + $0x468] sm:$0xff]
  %v7223 = vld [vmem:[#allocation2 + $0x470] sm:$0xff]
  %v7224 = vld [vmem:[#allocation2 + $0x478] sm:$0xff]
  %v7225 = vld [vmem:[#allocation2 + $0x480] sm:$0xff]
  %v7226 = vld [vmem:[#allocation2 + $0x488] sm:$0xff]
  %v7227 = vld [vmem:[#allocation2 + $0x490] sm:$0xff]
  %v7228 = vld [vmem:[#allocation2 + $0x498] sm:$0xff]
  %v7229 = vld [vmem:[#allocation2 + $0x4a0] sm:$0xff]
  %v7230 = vld [vmem:[#allocation2 + $0x4a8] sm:$0xff]
  %v7231 = vld [vmem:[#allocation2 + $0x4b0] sm:$0xff]
  %v7232 = vld [vmem:[#allocation2 + $0x4b8] sm:$0xff]
  %v7233 = vld [vmem:[#allocation2 + $0x4c0] sm:$0xff]
  %v7234 = vld [vmem:[#allocation2 + $0x4c8] sm:$0xff]
  %v7235 = vld [vmem:[#allocation2 + $0x4d0] sm:$0xff]
  %v7236 = vld [vmem:[#allocation2 + $0x4d8] sm:$0xff]
  %v7237 = vld [vmem:[#allocation2 + $0x4e0] sm:$0xff]
  %v7238 = vld [vmem:[#allocation2 + $0x4e8] sm:$0xff]
  %v7239 = vld [vmem:[#allocation2 + $0x4f0] sm:$0xff]
  %v7240 = vld [vmem:[#allocation2 + $0x4f8] sm:$0xff]
  %v7241 = vld [vmem:[#allocation2 + $0x500] sm:$0xff]
  %v7242 = vld [vmem:[#allocation2 + $0x508] sm:$0xff]
  %v7243 = vld [vmem:[#allocation2 + $0x510] sm:$0xff]
  %v7244 = vld [vmem:[#allocation2 + $0x518] sm:$0xff]
  %v7245 = vld [vmem:[#allocation2 + $0x520] sm:$0xff]
  %v7246 = vld [vmem:[#allocation2 + $0x528] sm:$0xff]
  %v7247 = vld [vmem:[#allocation2 + $0x530] sm:$0xff]
  %v7248 = vld [vmem:[#allocation2 + $0x538] sm:$0xff]
  %v7249 = vld [vmem:[#allocation2 + $0x540] sm:$0xff]
  %v7250 = vld [vmem:[#allocation2 + $0x548] sm:$0xff]
  %v7251 = vld [vmem:[#allocation2 + $0x550] sm:$0xff]
  %v7252 = vld [vmem:[#allocation2 + $0x558] sm:$0xff]
  %v7253 = vld [vmem:[#allocation2 + $0x560] sm:$0xff]
  %v7254 = vld [vmem:[#allocation2 + $0x568] sm:$0xff]
  %v7255 = vld [vmem:[#allocation2 + $0x570] sm:$0xff]
  %v7256 = vld [vmem:[#allocation2 + $0x578] sm:$0xff]
  %v7257 = vld [vmem:[#allocation2 + $0x580] sm:$0xff]
  %v7258 = vld [vmem:[#allocation2 + $0x588] sm:$0xff]
  %v7259 = vld [vmem:[#allocation2 + $0x590] sm:$0xff]
  %v7260 = vld [vmem:[#allocation2 + $0x598] sm:$0xff]
  %v7261 = vld [vmem:[#allocation2 + $0x5a0] sm:$0xff]
  %v7262 = vld [vmem:[#allocation2 + $0x5a8] sm:$0xff]
  %v7263 = vld [vmem:[#allocation2 + $0x5b0] sm:$0xff]
  %v7264 = vld [vmem:[#allocation2 + $0x5b8] sm:$0xff]
  %v7265 = vld [vmem:[#allocation2 + $0x5c0] sm:$0xff]
  %v7266 = vld [vmem:[#allocation2 + $0x5c8] sm:$0xff]
  %v7267 = vld [vmem:[#allocation2 + $0x5d0] sm:$0xff]
  %v7268 = vld [vmem:[#allocation2 + $0x5d8] sm:$0xff]
  %v7269 = vld [vmem:[#allocation2 + $0x5e0] sm:$0xff]
  %v7270 = vld [vmem:[#allocation2 + $0x5e8] sm:$0xff]
  %v7271 = vld [vmem:[#allocation2 + $0x5f0] sm:$0xff]
  %v7272 = vld [vmem:[#allocation2 + $0x5f8] sm:$0xff]
  %v7273 = vld [vmem:[#allocation2 + $0x600] sm:$0xff]
  %v7274 = vld [vmem:[#allocation2 + $0x608] sm:$0xff]
  %v7275 = vld [vmem:[#allocation2 + $0x610] sm:$0xff]
  %v7276 = vld [vmem:[#allocation2 + $0x618] sm:$0xff]
  %v7277 = vld [vmem:[#allocation2 + $0x620] sm:$0xff]
  %v7278 = vld [vmem:[#allocation2 + $0x628] sm:$0xff]
  %v7279 = vld [vmem:[#allocation2 + $0x630] sm:$0xff]
  %v7280 = vld [vmem:[#allocation2 + $0x638] sm:$0xff]
  %v7281 = vld [vmem:[#allocation2 + $0x640] sm:$0xff]
  %v7282 = vld [vmem:[#allocation2 + $0x648] sm:$0xff]
  %v7283 = vld [vmem:[#allocation2 + $0x650] sm:$0xff]
  %v7284 = vld [vmem:[#allocation2 + $0x658] sm:$0xff]
  %v7285 = vld [vmem:[#allocation2 + $0x660] sm:$0xff]
  %v7286 = vld [vmem:[#allocation2 + $0x668] sm:$0xff]
  %v7287 = vld [vmem:[#allocation2 + $0x670] sm:$0xff]
  %v7288 = vld [vmem:[#allocation2 + $0x678] sm:$0xff]
  %v7289 = vld [vmem:[#allocation2 + $0x680] sm:$0xff]
  %v7290 = vld [vmem:[#allocation2 + $0x688] sm:$0xff]
  %v7291 = vld [vmem:[#allocation2 + $0x690] sm:$0xff]
  %v7292 = vld [vmem:[#allocation2 + $0x698] sm:$0xff]
  %v7293 = vld [vmem:[#allocation2 + $0x6a0] sm:$0xff]
  %v7294 = vld [vmem:[#allocation2 + $0x6a8] sm:$0xff]
  %v7295 = vld [vmem:[#allocation2 + $0x6b0] sm:$0xff]
  %v7296 = vld [vmem:[#allocation2 + $0x6b8] sm:$0xff]
  %v7297 = vld [vmem:[#allocation2 + $0x6c0] sm:$0xff]
  %v7298 = vld [vmem:[#allocation2 + $0x6c8] sm:$0xff]
  %v7299 = vld [vmem:[#allocation2 + $0x6d0] sm:$0xff]
  %v7300 = vld [vmem:[#allocation2 + $0x6d8] sm:$0xff]
  %v7301 = vld [vmem:[#allocation2 + $0x6e0] sm:$0xff]
  %v7302 = vld [vmem:[#allocation2 + $0x6e8] sm:$0xff]
  %v7303 = vld [vmem:[#allocation2 + $0x6f0] sm:$0xff]
  %v7304 = vld [vmem:[#allocation2 + $0x6f8] sm:$0xff]
  %v7305 = vld [vmem:[#allocation2 + $0x700] sm:$0xff]
  %v7306 = vld [vmem:[#allocation2 + $0x708] sm:$0xff]
  %v7307 = vld [vmem:[#allocation2 + $0x710] sm:$0xff]
  %v7308 = vld [vmem:[#allocation2 + $0x718] sm:$0xff]
  %v7309 = vld [vmem:[#allocation2 + $0x720] sm:$0xff]
  %v7310 = vld [vmem:[#allocation2 + $0x728] sm:$0xff]
  %v7311 = vld [vmem:[#allocation2 + $0x730] sm:$0xff]
  %v7312 = vld [vmem:[#allocation2 + $0x738] sm:$0xff]
  %v7313 = vld [vmem:[#allocation2 + $0x740] sm:$0xff]
  %v7314 = vld [vmem:[#allocation2 + $0x748] sm:$0xff]
  %v7315 = vld [vmem:[#allocation2 + $0x750] sm:$0xff]
  %v7316 = vld [vmem:[#allocation2 + $0x758] sm:$0xff]
  %v7317 = vld [vmem:[#allocation2 + $0x760] sm:$0xff]
  %v7318 = vld [vmem:[#allocation2 + $0x768] sm:$0xff]
  %v7319 = vld [vmem:[#allocation2 + $0x770] sm:$0xff]
  %v7320 = vld [vmem:[#allocation2 + $0x778] sm:$0xff]
  %v7321 = vld [vmem:[#allocation2 + $0x780] sm:$0xff]
  %v7322 = vld [vmem:[#allocation2 + $0x788] sm:$0xff]
  %v7323 = vld [vmem:[#allocation2 + $0x790] sm:$0xff]
  %v7324 = vld [vmem:[#allocation2 + $0x798] sm:$0xff]
  %v7325 = vld [vmem:[#allocation2 + $0x7a0] sm:$0xff]
  %v7326 = vld [vmem:[#allocation2 + $0x7a8] sm:$0xff]
  %v7327 = vld [vmem:[#allocation2 + $0x7b0] sm:$0xff]
  %v7328 = vld [vmem:[#allocation2 + $0x7b8] sm:$0xff]
  %v7329 = vld [vmem:[#allocation2 + $0x7c0] sm:$0xff]
  %v7330 = vld [vmem:[#allocation2 + $0x7c8] sm:$0xff]
  %v7331 = vld [vmem:[#allocation2 + $0x7d0] sm:$0xff]
  %v7332 = vld [vmem:[#allocation2 + $0x7d8] sm:$0xff]
  %v7333 = vld [vmem:[#allocation2 + $0x7e0] sm:$0xff]
  %v7334 = vld [vmem:[#allocation2 + $0x7e8] sm:$0xff]
  %v7335 = vld [vmem:[#allocation2 + $0x7f0] sm:$0xff]
  %v7336 = vld [vmem:[#allocation2 + $0x7f8] sm:$0xff]
  %v7337 = vld [vmem:[#allocation2 + $0x800] sm:$0xff]
  %v7338 = vld [vmem:[#allocation2 + $0x808] sm:$0xff]
  %v7339 = vld [vmem:[#allocation2 + $0x810] sm:$0xff]
  %v7340 = vld [vmem:[#allocation2 + $0x818] sm:$0xff]
  %v7341 = vld [vmem:[#allocation2 + $0x820] sm:$0xff]
  %v7342 = vld [vmem:[#allocation2 + $0x828] sm:$0xff]
  %v7343 = vld [vmem:[#allocation2 + $0x830] sm:$0xff]
  %v7344 = vld [vmem:[#allocation2 + $0x838] sm:$0xff]
  %v7345 = vld [vmem:[#allocation2 + $0x840] sm:$0xff]
  %v7346 = vld [vmem:[#allocation2 + $0x848] sm:$0xff]
  %v7347 = vld [vmem:[#allocation2 + $0x850] sm:$0xff]
  %v7348 = vld [vmem:[#allocation2 + $0x858] sm:$0xff]
  %v7349 = vld [vmem:[#allocation2 + $0x860] sm:$0xff]
  %v7350 = vld [vmem:[#allocation2 + $0x868] sm:$0xff]
  %v7351 = vld [vmem:[#allocation2 + $0x870] sm:$0xff]
  %v7352 = vld [vmem:[#allocation2 + $0x878] sm:$0xff]
  %v7353 = vld [vmem:[#allocation2 + $0x880] sm:$0xff]
  %v7354 = vld [vmem:[#allocation2 + $0x888] sm:$0xff]
  %v7355 = vld [vmem:[#allocation2 + $0x890] sm:$0xff]
  %v7356 = vld [vmem:[#allocation2 + $0x898] sm:$0xff]
  %v7357 = vld [vmem:[#allocation2 + $0x8a0] sm:$0xff]
  %v7358 = vld [vmem:[#allocation2 + $0x8a8] sm:$0xff]
  %v7359 = vld [vmem:[#allocation2 + $0x8b0] sm:$0xff]
  %v7360 = vld [vmem:[#allocation2 + $0x8b8] sm:$0xff]
  %v7361 = vld [vmem:[#allocation2 + $0x8c0] sm:$0xff]
  %v7362 = vld [vmem:[#allocation2 + $0x8c8] sm:$0xff]
  %v7363 = vld [vmem:[#allocation2 + $0x8d0] sm:$0xff]
  %v7364 = vld [vmem:[#allocation2 + $0x8d8] sm:$0xff]
  %v7365 = vld [vmem:[#allocation2 + $0x8e0] sm:$0xff]
  %v7366 = vld [vmem:[#allocation2 + $0x8e8] sm:$0xff]
  %v7367 = vld [vmem:[#allocation2 + $0x8f0] sm:$0xff]
  %v7368 = vld [vmem:[#allocation2 + $0x8f8] sm:$0xff]
  %v7369 = vld [vmem:[#allocation2 + $0x900] sm:$0xff]
  %v7370 = vld [vmem:[#allocation2 + $0x908] sm:$0xff]
  %v7371 = vld [vmem:[#allocation2 + $0x910] sm:$0xff]
  %v7372 = vld [vmem:[#allocation2 + $0x918] sm:$0xff]
  %v7373 = vld [vmem:[#allocation2 + $0x920] sm:$0xff]
  %v7374 = vld [vmem:[#allocation2 + $0x928] sm:$0xff]
  %v7375 = vld [vmem:[#allocation2 + $0x930] sm:$0xff]
  %v7376 = vld [vmem:[#allocation2 + $0x938] sm:$0xff]
  %v7377 = vld [vmem:[#allocation2 + $0x940] sm:$0xff]
  %v7378 = vld [vmem:[#allocation2 + $0x948] sm:$0xff]
  %v7379 = vld [vmem:[#allocation2 + $0x950] sm:$0xff]
  %v7380 = vld [vmem:[#allocation2 + $0x958] sm:$0xff]
  %v7381 = vld [vmem:[#allocation2 + $0x960] sm:$0xff]
  %v7382 = vld [vmem:[#allocation2 + $0x968] sm:$0xff]
  %v7383 = vld [vmem:[#allocation2 + $0x970] sm:$0xff]
  %v7384 = vld [vmem:[#allocation2 + $0x978] sm:$0xff]
  %v7385 = vld [vmem:[#allocation2 + $0x980] sm:$0xff]
  %v7386 = vld [vmem:[#allocation2 + $0x988] sm:$0xff]
  %v7387 = vld [vmem:[#allocation2 + $0x990] sm:$0xff]
  %v7388 = vld [vmem:[#allocation2 + $0x998] sm:$0xff]
  %v7389 = vld [vmem:[#allocation2 + $0x9a0] sm:$0xff]
  %v7390 = vld [vmem:[#allocation2 + $0x9a8] sm:$0xff]
  %v7391 = vld [vmem:[#allocation2 + $0x9b0] sm:$0xff]
  %v7392 = vld [vmem:[#allocation2 + $0x9b8] sm:$0xff]
  %v7393 = vld [vmem:[#allocation2 + $0x9c0] sm:$0xff]
  %v7394 = vld [vmem:[#allocation2 + $0x9c8] sm:$0xff]
  %v7395 = vld [vmem:[#allocation2 + $0x9d0] sm:$0xff]
  %v7396 = vld [vmem:[#allocation2 + $0x9d8] sm:$0xff]
  %v7397 = vld [vmem:[#allocation2 + $0x9e0] sm:$0xff]
  %v7398 = vld [vmem:[#allocation2 + $0x9e8] sm:$0xff]
  %v7399 = vld [vmem:[#allocation2 + $0x9f0] sm:$0xff]
  %v7400 = vld [vmem:[#allocation2 + $0x9f8] sm:$0xff]
  %v7401 = vld [vmem:[#allocation2 + $0xa00] sm:$0xff]
  %v7402 = vld [vmem:[#allocation2 + $0xa08] sm:$0xff]
  %v7403 = vld [vmem:[#allocation2 + $0xa10] sm:$0xff]
  %v7404 = vld [vmem:[#allocation2 + $0xa18] sm:$0xff]
  %v7405 = vld [vmem:[#allocation2 + $0xa20] sm:$0xff]
  %v7406 = vld [vmem:[#allocation2 + $0xa28] sm:$0xff]
  %v7407 = vld [vmem:[#allocation2 + $0xa30] sm:$0xff]
  %v7408 = vld [vmem:[#allocation2 + $0xa38] sm:$0xff]
  %v7409 = vld [vmem:[#allocation2 + $0xa40] sm:$0xff]
  %v7410 = vld [vmem:[#allocation2 + $0xa48] sm:$0xff]
  %v7411 = vld [vmem:[#allocation2 + $0xa50] sm:$0xff]
  %v7412 = vld [vmem:[#allocation2 + $0xa58] sm:$0xff]
  %v7413 = vld [vmem:[#allocation2 + $0xa60] sm:$0xff]
  %v7414 = vld [vmem:[#allocation2 + $0xa68] sm:$0xff]
  %v7415 = vld [vmem:[#allocation2 + $0xa70] sm:$0xff]
  %v7416 = vld [vmem:[#allocation2 + $0xa78] sm:$0xff]
  %v7417 = vld [vmem:[#allocation2 + $0xa80] sm:$0xff]
  %v7418 = vld [vmem:[#allocation2 + $0xa88] sm:$0xff]
  %v7419 = vld [vmem:[#allocation2 + $0xa90] sm:$0xff]
  %v7420 = vld [vmem:[#allocation2 + $0xa98] sm:$0xff]
  %v7421 = vld [vmem:[#allocation2 + $0xaa0] sm:$0xff]
  %v7422 = vld [vmem:[#allocation2 + $0xaa8] sm:$0xff]
  %v7423 = vld [vmem:[#allocation2 + $0xab0] sm:$0xff]
  %v7424 = vld [vmem:[#allocation2 + $0xab8] sm:$0xff]
  %v7425 = vld [vmem:[#allocation2 + $0xac0] sm:$0xff]
  %v7426 = vld [vmem:[#allocation2 + $0xac8] sm:$0xff]
  %v7427 = vld [vmem:[#allocation2 + $0xad0] sm:$0xff]
  %v7428 = vld [vmem:[#allocation2 + $0xad8] sm:$0xff]
  %v7429 = vld [vmem:[#allocation2 + $0xae0] sm:$0xff]
  %v7430 = vld [vmem:[#allocation2 + $0xae8] sm:$0xff]
  %v7431 = vld [vmem:[#allocation2 + $0xaf0] sm:$0xff]
  %v7432 = vld [vmem:[#allocation2 + $0xaf8] sm:$0xff]
  %v7433 = vld [vmem:[#allocation2 + $0xb00] sm:$0xff]
  %v7434 = vld [vmem:[#allocation2 + $0xb08] sm:$0xff]
  %v7435 = vld [vmem:[#allocation2 + $0xb10] sm:$0xff]
  %v7436 = vld [vmem:[#allocation2 + $0xb18] sm:$0xff]
  %v7437 = vld [vmem:[#allocation2 + $0xb20] sm:$0xff]
  %v7438 = vld [vmem:[#allocation2 + $0xb28] sm:$0xff]
  %v7439 = vld [vmem:[#allocation2 + $0xb30] sm:$0xff]
  %v7440 = vld [vmem:[#allocation2 + $0xb38] sm:$0xff]
  %v7441 = vld [vmem:[#allocation2 + $0xb40] sm:$0xff]
  %v7442 = vld [vmem:[#allocation2 + $0xb48] sm:$0xff]
  %v7443 = vld [vmem:[#allocation2 + $0xb50] sm:$0xff]
  %v7444 = vld [vmem:[#allocation2 + $0xb58] sm:$0xff]
  %v7445 = vld [vmem:[#allocation2 + $0xb60] sm:$0xff]
  %v7446 = vld [vmem:[#allocation2 + $0xb68] sm:$0xff]
  %v7447 = vld [vmem:[#allocation2 + $0xb70] sm:$0xff]
  %v7448 = vld [vmem:[#allocation2 + $0xb78] sm:$0xff]
  %v7449 = vld [vmem:[#allocation2 + $0xb80] sm:$0xff]
  %v7450 = vld [vmem:[#allocation2 + $0xb88] sm:$0xff]
  %v7451 = vld [vmem:[#allocation2 + $0xb90] sm:$0xff]
  %v7452 = vld [vmem:[#allocation2 + $0xb98] sm:$0xff]
  %v7453 = vld [vmem:[#allocation2 + $0xba0] sm:$0xff]
  %v7454 = vld [vmem:[#allocation2 + $0xba8] sm:$0xff]
  %v7455 = vld [vmem:[#allocation2 + $0xbb0] sm:$0xff]
  %v7456 = vld [vmem:[#allocation2 + $0xbb8] sm:$0xff]
  %v7457 = vld [vmem:[#allocation2 + $0xbc0] sm:$0xff]
  %v7458 = vld [vmem:[#allocation2 + $0xbc8] sm:$0xff]
  %v7459 = vld [vmem:[#allocation2 + $0xbd0] sm:$0xff]
  %v7460 = vld [vmem:[#allocation2 + $0xbd8] sm:$0xff]
  %v7461 = vld [vmem:[#allocation2 + $0xbe0] sm:$0xff]
  %v7462 = vld [vmem:[#allocation2 + $0xbe8] sm:$0xff]
  %v7463 = vld [vmem:[#allocation2 + $0xbf0] sm:$0xff]
  %v7464 = vld [vmem:[#allocation2 + $0xbf8] sm:$0xff]
  %v7465 = vld [vmem:[#allocation2 + $0xc00] sm:$0xff]
  %v7466 = vld [vmem:[#allocation2 + $0xc08] sm:$0xff]
  %v7467 = vld [vmem:[#allocation2 + $0xc10] sm:$0xff]
  %v7468 = vld [vmem:[#allocation2 + $0xc18] sm:$0xff]
  %v7469 = vld [vmem:[#allocation2 + $0xc20] sm:$0xff]
  %v7470 = vld [vmem:[#allocation2 + $0xc28] sm:$0xff]
  %v7471 = vld [vmem:[#allocation2 + $0xc30] sm:$0xff]
  %v7472 = vld [vmem:[#allocation2 + $0xc38] sm:$0xff]
  %v7473 = vld [vmem:[#allocation2 + $0xc40] sm:$0xff]
  %v7474 = vld [vmem:[#allocation2 + $0xc48] sm:$0xff]
  %v7475 = vld [vmem:[#allocation2 + $0xc50] sm:$0xff]
  %v7476 = vld [vmem:[#allocation2 + $0xc58] sm:$0xff]
  %v7477 = vld [vmem:[#allocation2 + $0xc60] sm:$0xff]
  %v7478 = vld [vmem:[#allocation2 + $0xc68] sm:$0xff]
  %v7479 = vld [vmem:[#allocation2 + $0xc70] sm:$0xff]
  %v7480 = vld [vmem:[#allocation2 + $0xc78] sm:$0xff]
  %v7481 = vld [vmem:[#allocation2 + $0xc80] sm:$0xff]
  %v7482 = vld [vmem:[#allocation2 + $0xc88] sm:$0xff]
  %v7483 = vld [vmem:[#allocation2 + $0xc90] sm:$0xff]
  %v7484 = vld [vmem:[#allocation2 + $0xc98] sm:$0xff]
  %v7485 = vld [vmem:[#allocation2 + $0xca0] sm:$0xff]
  %v7486 = vld [vmem:[#allocation2 + $0xca8] sm:$0xff]
  %v7487 = vld [vmem:[#allocation2 + $0xcb0] sm:$0xff]
  %v7488 = vld [vmem:[#allocation2 + $0xcb8] sm:$0xff]
  %v7489 = vld [vmem:[#allocation2 + $0xcc0] sm:$0xff]
  %v7490 = vld [vmem:[#allocation2 + $0xcc8] sm:$0xff]
  %v7491 = vld [vmem:[#allocation2 + $0xcd0] sm:$0xff]
  %v7492 = vld [vmem:[#allocation2 + $0xcd8] sm:$0xff]
  %v7493 = vld [vmem:[#allocation2 + $0xce0] sm:$0xff]
  %v7494 = vld [vmem:[#allocation2 + $0xce8] sm:$0xff]
  %v7495 = vld [vmem:[#allocation2 + $0xcf0] sm:$0xff]
  %v7496 = vld [vmem:[#allocation2 + $0xcf8] sm:$0xff]
  %v7497 = vld [vmem:[#allocation2 + $0xd00] sm:$0xff]
  %v7498 = vld [vmem:[#allocation2 + $0xd08] sm:$0xff]
  %v7499 = vld [vmem:[#allocation2 + $0xd10] sm:$0xff]
  %v7500 = vld [vmem:[#allocation2 + $0xd18] sm:$0xff]
  %v7501 = vld [vmem:[#allocation2 + $0xd20] sm:$0xff]
  %v7502 = vld [vmem:[#allocation2 + $0xd28] sm:$0xff]
  %v7503 = vld [vmem:[#allocation2 + $0xd30] sm:$0xff]
  %v7504 = vld [vmem:[#allocation2 + $0xd38] sm:$0xff]
  %v7505 = vld [vmem:[#allocation2 + $0xd40] sm:$0xff]
  %v7506 = vld [vmem:[#allocation2 + $0xd48] sm:$0xff]
  %v7507 = vld [vmem:[#allocation2 + $0xd50] sm:$0xff]
  %v7508 = vld [vmem:[#allocation2 + $0xd58] sm:$0xff]
  %v7509 = vld [vmem:[#allocation2 + $0xd60] sm:$0xff]
  %v7510 = vld [vmem:[#allocation2 + $0xd68] sm:$0xff]
  %v7511 = vld [vmem:[#allocation2 + $0xd70] sm:$0xff]
  %v7512 = vld [vmem:[#allocation2 + $0xd78] sm:$0xff]
  %v7513 = vld [vmem:[#allocation2 + $0xd80] sm:$0xff]
  %v7514 = vld [vmem:[#allocation2 + $0xd88] sm:$0xff]
  %v7515 = vld [vmem:[#allocation2 + $0xd90] sm:$0xff]
  %v7516 = vld [vmem:[#allocation2 + $0xd98] sm:$0xff]
  %v7517 = vld [vmem:[#allocation2 + $0xda0] sm:$0xff]
  %v7518 = vld [vmem:[#allocation2 + $0xda8] sm:$0xff]
  %v7519 = vld [vmem:[#allocation2 + $0xdb0] sm:$0xff]
  %v7520 = vld [vmem:[#allocation2 + $0xdb8] sm:$0xff]
  %v7521 = vld [vmem:[#allocation2 + $0xdc0] sm:$0xff]
  %v7522 = vld [vmem:[#allocation2 + $0xdc8] sm:$0xff]
  %v7523 = vld [vmem:[#allocation2 + $0xdd0] sm:$0xff]
  %v7524 = vld [vmem:[#allocation2 + $0xdd8] sm:$0xff]
  %v7525 = vld [vmem:[#allocation2 + $0xde0] sm:$0xff]
  %v7526 = vld [vmem:[#allocation2 + $0xde8] sm:$0xff]
  %v7527 = vld [vmem:[#allocation2 + $0xdf0] sm:$0xff]
  %v7528 = vld [vmem:[#allocation2 + $0xdf8] sm:$0xff]
  %v7529 = vld [vmem:[#allocation2 + $0xe00] sm:$0xff]
  %v7530 = vld [vmem:[#allocation2 + $0xe08] sm:$0xff]
  %v7531 = vld [vmem:[#allocation2 + $0xe10] sm:$0xff]
  %v7532 = vld [vmem:[#allocation2 + $0xe18] sm:$0xff]
  %v7533 = vld [vmem:[#allocation2 + $0xe20] sm:$0xff]
  %v7534 = vld [vmem:[#allocation2 + $0xe28] sm:$0xff]
  %v7535 = vld [vmem:[#allocation2 + $0xe30] sm:$0xff]
  %v7536 = vld [vmem:[#allocation2 + $0xe38] sm:$0xff]
  %v7537 = vld [vmem:[#allocation2 + $0xe40] sm:$0xff]
  %v7538 = vld [vmem:[#allocation2 + $0xe48] sm:$0xff]
  %v7539 = vld [vmem:[#allocation2 + $0xe50] sm:$0xff]
  %v7540 = vld [vmem:[#allocation2 + $0xe58] sm:$0xff]
  %v7541 = vld [vmem:[#allocation2 + $0xe60] sm:$0xff]
  %v7542 = vld [vmem:[#allocation2 + $0xe68] sm:$0xff]
  %v7543 = vld [vmem:[#allocation2 + $0xe70] sm:$0xff]
  %v7544 = vld [vmem:[#allocation2 + $0xe78] sm:$0xff]
  %v7545 = vld [vmem:[#allocation2 + $0xe80] sm:$0xff]
  %v7546 = vld [vmem:[#allocation2 + $0xe88] sm:$0xff]
  %v7547 = vld [vmem:[#allocation2 + $0xe90] sm:$0xff]
  %v7548 = vld [vmem:[#allocation2 + $0xe98] sm:$0xff]
  %v7549 = vld [vmem:[#allocation2 + $0xea0] sm:$0xff]
  %v7550 = vld [vmem:[#allocation2 + $0xea8] sm:$0xff]
  %v7551 = vld [vmem:[#allocation2 + $0xeb0] sm:$0xff]
  %v7552 = vld [vmem:[#allocation2 + $0xeb8] sm:$0xff]
  %v7553 = vld [vmem:[#allocation2 + $0xec0] sm:$0xff]
  %v7554 = vld [vmem:[#allocation2 + $0xec8] sm:$0xff]
  %v7555 = vld [vmem:[#allocation2 + $0xed0] sm:$0xff]
  %v7556 = vld [vmem:[#allocation2 + $0xed8] sm:$0xff]
  %v7557 = vld [vmem:[#allocation2 + $0xee0] sm:$0xff]
  %v7558 = vld [vmem:[#allocation2 + $0xee8] sm:$0xff]
  %v7559 = vld [vmem:[#allocation2 + $0xef0] sm:$0xff]
  %v7560 = vld [vmem:[#allocation2 + $0xef8] sm:$0xff]
  %v7561 = vld [vmem:[#allocation2 + $0xf00] sm:$0xff]
  %v7562 = vld [vmem:[#allocation2 + $0xf08] sm:$0xff]
  %v7563 = vld [vmem:[#allocation2 + $0xf10] sm:$0xff]
  %v7564 = vld [vmem:[#allocation2 + $0xf18] sm:$0xff]
  %v7565 = vld [vmem:[#allocation2 + $0xf20] sm:$0xff]
  %v7566 = vld [vmem:[#allocation2 + $0xf28] sm:$0xff]
  %v7567 = vld [vmem:[#allocation2 + $0xf30] sm:$0xff]
  %v7568 = vld [vmem:[#allocation2 + $0xf38] sm:$0xff]
  %v7569 = vld [vmem:[#allocation2 + $0xf40] sm:$0xff]
  %v7570 = vld [vmem:[#allocation2 + $0xf48] sm:$0xff]
  %v7571 = vld [vmem:[#allocation2 + $0xf50] sm:$0xff]
  %v7572 = vld [vmem:[#allocation2 + $0xf58] sm:$0xff]
  %v7573 = vld [vmem:[#allocation2 + $0xf60] sm:$0xff]
  %v7574 = vld [vmem:[#allocation2 + $0xf68] sm:$0xff]
  %v7575 = vld [vmem:[#allocation2 + $0xf70] sm:$0xff]
  %v7576 = vld [vmem:[#allocation2 + $0xf78] sm:$0xff]
  %v7577 = vld [vmem:[#allocation2 + $0xf80] sm:$0xff]
  %v7578 = vld [vmem:[#allocation2 + $0xf88] sm:$0xff]
  %v7579 = vld [vmem:[#allocation2 + $0xf90] sm:$0xff]
  %v7580 = vld [vmem:[#allocation2 + $0xf98] sm:$0xff]
  %v7581 = vld [vmem:[#allocation2 + $0xfa0] sm:$0xff]
  %v7582 = vld [vmem:[#allocation2 + $0xfa8] sm:$0xff]
  %v7583 = vld [vmem:[#allocation2 + $0xfb0] sm:$0xff]
  %v7584 = vld [vmem:[#allocation2 + $0xfb8] sm:$0xff]
  %v7585 = vld [vmem:[#allocation2 + $0xfc0] sm:$0xff]
  %v7586 = vld [vmem:[#allocation2 + $0xfc8] sm:$0xff]
  %v7587 = vld [vmem:[#allocation2 + $0xfd0] sm:$0xff]
  %v7588 = vld [vmem:[#allocation2 + $0xfd8] sm:$0xff]
  %v7589 = vld [vmem:[#allocation2 + $0xfe0] sm:$0xff]
  %v7590 = vld [vmem:[#allocation2 + $0xfe8] sm:$0xff]
  %v7591 = vld [vmem:[#allocation2 + $0xff0] sm:$0xff]
  %v7592 = vld [vmem:[#allocation2 + $0xff8] sm:$0xff]
  %v7593 = vld [vmem:[#allocation2 + $0x1000] sm:$0xff]
  %v7594 = vld [vmem:[#allocation2 + $0x1008] sm:$0xff]
  %v7595 = vld [vmem:[#allocation2 + $0x1010] sm:$0xff]
  %v7596 = vld [vmem:[#allocation2 + $0x1018] sm:$0xff]
  %v7597 = vld [vmem:[#allocation2 + $0x1020] sm:$0xff]
  %v7598 = vld [vmem:[#allocation2 + $0x1028] sm:$0xff]
  %v7599 = vld [vmem:[#allocation2 + $0x1030] sm:$0xff]
  %v7600 = vld [vmem:[#allocation2 + $0x1038] sm:$0xff]
  %v7601 = vld [vmem:[#allocation2 + $0x1040] sm:$0xff]
  %v7602 = vld [vmem:[#allocation2 + $0x1048] sm:$0xff]
  %v7603 = vld [vmem:[#allocation2 + $0x1050] sm:$0xff]
  %v7604 = vld [vmem:[#allocation2 + $0x1058] sm:$0xff]
  %v7605 = vld [vmem:[#allocation2 + $0x1060] sm:$0xff]
  %v7606 = vld [vmem:[#allocation2 + $0x1068] sm:$0xff]
  %v7607 = vld [vmem:[#allocation2 + $0x1070] sm:$0xff]
  %v7608 = vld [vmem:[#allocation2 + $0x1078] sm:$0xff]
  %v7609 = vld [vmem:[#allocation2 + $0x1080] sm:$0xff]
  %v7610 = vld [vmem:[#allocation2 + $0x1088] sm:$0xff]
  %v7611 = vld [vmem:[#allocation2 + $0x1090] sm:$0xff]
  %v7612 = vld [vmem:[#allocation2 + $0x1098] sm:$0xff]
  %v7613 = vld [vmem:[#allocation2 + $0x10a0] sm:$0xff]
  %v7614 = vld [vmem:[#allocation2 + $0x10a8] sm:$0xff]
  %v7615 = vld [vmem:[#allocation2 + $0x10b0] sm:$0xff]
  %v7616 = vld [vmem:[#allocation2 + $0x10b8] sm:$0xff]
  %v7617 = vld [vmem:[#allocation2 + $0x10c0] sm:$0xff]
  %v7618 = vld [vmem:[#allocation2 + $0x10c8] sm:$0xff]
  %v7619 = vld [vmem:[#allocation2 + $0x10d0] sm:$0xff]
  %v7620 = vld [vmem:[#allocation2 + $0x10d8] sm:$0xff]
  %v7621 = vld [vmem:[#allocation2 + $0x10e0] sm:$0xff]
  %v7622 = vld [vmem:[#allocation2 + $0x10e8] sm:$0xff]
  %v7623 = vld [vmem:[#allocation2 + $0x10f0] sm:$0xff]
  %v7624 = vld [vmem:[#allocation2 + $0x10f8] sm:$0xff]
  %v7625 = vld [vmem:[#allocation2 + $0x1100] sm:$0xff]
  %v7626 = vld [vmem:[#allocation2 + $0x1108] sm:$0xff]
  %v7627 = vld [vmem:[#allocation2 + $0x1110] sm:$0xff]
  %v7628 = vld [vmem:[#allocation2 + $0x1118] sm:$0xff]
  %v7629 = vld [vmem:[#allocation2 + $0x1120] sm:$0xff]
  %v7630 = vld [vmem:[#allocation2 + $0x1128] sm:$0xff]
  %v7631 = vld [vmem:[#allocation2 + $0x1130] sm:$0xff]
  %v7632 = vld [vmem:[#allocation2 + $0x1138] sm:$0xff]
  %v7633 = vld [vmem:[#allocation2 + $0x1140] sm:$0xff]
  %v7634 = vld [vmem:[#allocation2 + $0x1148] sm:$0xff]
  %v7635 = vld [vmem:[#allocation2 + $0x1150] sm:$0xff]
  %v7636 = vld [vmem:[#allocation2 + $0x1158] sm:$0xff]
  %v7637 = vld [vmem:[#allocation2 + $0x1160] sm:$0xff]
  %v7638 = vld [vmem:[#allocation2 + $0x1168] sm:$0xff]
  %v7639 = vld [vmem:[#allocation2 + $0x1170] sm:$0xff]
  %v7640 = vld [vmem:[#allocation2 + $0x1178] sm:$0xff]
  %v7641 = vld [vmem:[#allocation2 + $0x1180] sm:$0xff]
  %v7642 = vld [vmem:[#allocation2 + $0x1188] sm:$0xff]
  %v7643 = vld [vmem:[#allocation2 + $0x1190] sm:$0xff]
  %v7644 = vld [vmem:[#allocation2 + $0x1198] sm:$0xff]
  %v7645 = vld [vmem:[#allocation2 + $0x11a0] sm:$0xff]
  %v7646 = vld [vmem:[#allocation2 + $0x11a8] sm:$0xff]
  %v7647 = vld [vmem:[#allocation2 + $0x11b0] sm:$0xff]
  %v7648 = vld [vmem:[#allocation2 + $0x11b8] sm:$0xff]
  %v7649 = vld [vmem:[#allocation2 + $0x11c0] sm:$0xff]
  %v7650 = vld [vmem:[#allocation2 + $0x11c8] sm:$0xff]
  %v7651 = vld [vmem:[#allocation2 + $0x11d0] sm:$0xff]
  %v7652 = vld [vmem:[#allocation2 + $0x11d8] sm:$0xff]
  %v7653 = vld [vmem:[#allocation2 + $0x11e0] sm:$0xff]
  %v7654 = vld [vmem:[#allocation2 + $0x11e8] sm:$0xff]
  %v7655 = vld [vmem:[#allocation2 + $0x11f0] sm:$0xff]
  %v7656 = vld [vmem:[#allocation2 + $0x11f8] sm:$0xff]
  %v7657 = vld [vmem:[%s3] sm:$0xff]
  %v7658 = vld [vmem:[%s3 + $0x8] sm:$0xff]
  %v7659 = vld [vmem:[%s3 + $0x10] sm:$0xff]
  %v7660 = vld [vmem:[%s3 + $0x18] sm:$0xff]
  %v7661 = vld [vmem:[%s3 + $0x20] sm:$0xff]
  %v7662 = vld [vmem:[%s3 + $0x28] sm:$0xff]
  %v7663 = vld [vmem:[%s3 + $0x30] sm:$0xff]
  %v7664 = vld [vmem:[%s3 + $0x38] sm:$0xff]
  %v7665 = vld [vmem:[%s3 + $0x40] sm:$0xff]
  %v7666 = vld [vmem:[%s3 + $0x48] sm:$0xff]
  %v7667 = vld [vmem:[%s3 + $0x50] sm:$0xff]
  %v7668 = vld [vmem:[%s3 + $0x58] sm:$0xff]
  %v7669 = vld [vmem:[%s3 + $0x60] sm:$0xff]
  %v7670 = vld [vmem:[%s3 + $0x68] sm:$0xff]
  %v7671 = vld [vmem:[%s3 + $0x70] sm:$0xff]
  %v7672 = vld [vmem:[%s3 + $0x78] sm:$0xff]
  %v7673 = vld [vmem:[%s3 + $0x80] sm:$0xff]
  %v7674 = vld [vmem:[%s3 + $0x88] sm:$0xff]
  %v7675 = vld [vmem:[%s3 + $0x90] sm:$0xff]
  %v7676 = vld [vmem:[%s3 + $0x98] sm:$0xff]
  %v7677 = vld [vmem:[%s3 + $0xa0] sm:$0xff]
  %v7678 = vld [vmem:[%s3 + $0xa8] sm:$0xff]
  %v7679 = vld [vmem:[%s3 + $0xb0] sm:$0xff]
  %v7680 = vld [vmem:[%s3 + $0xb8] sm:$0xff]
  %v7681 = vld [vmem:[%s3 + $0xc0] sm:$0xff]
  %v7682 = vld [vmem:[%s3 + $0xc8] sm:$0xff]
  %v7683 = vld [vmem:[%s3 + $0xd0] sm:$0xff]
  %v7684 = vld [vmem:[%s3 + $0xd8] sm:$0xff]
  %v7685 = vld [vmem:[%s3 + $0xe0] sm:$0xff]
  %v7686 = vld [vmem:[%s3 + $0xe8] sm:$0xff]
  %v7687 = vld [vmem:[%s3 + $0xf0] sm:$0xff]
  %v7688 = vld [vmem:[%s3 + $0xf8] sm:$0xff]
  %v7689 = vld [vmem:[%s3 + $0x100] sm:$0xff]
  %v7690 = vld [vmem:[%s3 + $0x108] sm:$0xff]
  %v7691 = vld [vmem:[%s3 + $0x110] sm:$0xff]
  %v7692 = vld [vmem:[%s3 + $0x118] sm:$0xff]
  %v7693 = vld [vmem:[%s3 + $0x120] sm:$0xff]
  %v7694 = vld [vmem:[%s3 + $0x128] sm:$0xff]
  %v7695 = vld [vmem:[%s3 + $0x130] sm:$0xff]
  %v7696 = vld [vmem:[%s3 + $0x138] sm:$0xff]
  %v7697 = vld [vmem:[%s3 + $0x140] sm:$0xff]
  %v7698 = vld [vmem:[%s3 + $0x148] sm:$0xff]
  %v7699 = vld [vmem:[%s3 + $0x150] sm:$0xff]
  %v7700 = vld [vmem:[%s3 + $0x158] sm:$0xff]
  %v7701 = vld [vmem:[%s3 + $0x160] sm:$0xff]
  %v7702 = vld [vmem:[%s3 + $0x168] sm:$0xff]
  %v7703 = vld [vmem:[%s3 + $0x170] sm:$0xff]
  %v7704 = vld [vmem:[%s3 + $0x178] sm:$0xff]
  %v7705 = vld [vmem:[%s3 + $0x180] sm:$0xff]
  %v7706 = vld [vmem:[%s3 + $0x188] sm:$0xff]
  %v7707 = vld [vmem:[%s3 + $0x190] sm:$0xff]
  %v7708 = vld [vmem:[%s3 + $0x198] sm:$0xff]
  %v7709 = vld [vmem:[%s3 + $0x1a0] sm:$0xff]
  %v7710 = vld [vmem:[%s3 + $0x1a8] sm:$0xff]
  %v7711 = vld [vmem:[%s3 + $0x1b0] sm:$0xff]
  %v7712 = vld [vmem:[%s3 + $0x1b8] sm:$0xff]
  %v7713 = vld [vmem:[%s3 + $0x1c0] sm:$0xff]
  %v7714 = vld [vmem:[%s3 + $0x1c8] sm:$0xff]
  %v7715 = vld [vmem:[%s3 + $0x1d0] sm:$0xff]
  %v7716 = vld [vmem:[%s3 + $0x1d8] sm:$0xff]
  %v7717 = vld [vmem:[%s3 + $0x1e0] sm:$0xff]
  %v7718 = vld [vmem:[%s3 + $0x1e8] sm:$0xff]
  %v7719 = vld [vmem:[%s3 + $0x1f0] sm:$0xff]
  %v7720 = vld [vmem:[%s3 + $0x1f8] sm:$0xff]
  %v7721 = vld [vmem:[%s3 + $0x200] sm:$0xff]
  %v7722 = vld [vmem:[%s3 + $0x208] sm:$0xff]
  %v7723 = vld [vmem:[%s3 + $0x210] sm:$0xff]
  %v7724 = vld [vmem:[%s3 + $0x218] sm:$0xff]
  %v7725 = vld [vmem:[%s3 + $0x220] sm:$0xff]
  %v7726 = vld [vmem:[%s3 + $0x228] sm:$0xff]
  %v7727 = vld [vmem:[%s3 + $0x230] sm:$0xff]
  %v7728 = vld [vmem:[%s3 + $0x238] sm:$0xff]
  %v7729 = vld [vmem:[%s3 + $0x240] sm:$0xff]
  %v7730 = vld [vmem:[%s3 + $0x248] sm:$0xff]
  %v7731 = vld [vmem:[%s3 + $0x250] sm:$0xff]
  %v7732 = vld [vmem:[%s3 + $0x258] sm:$0xff]
  %v7733 = vld [vmem:[%s3 + $0x260] sm:$0xff]
  %v7734 = vld [vmem:[%s3 + $0x268] sm:$0xff]
  %v7735 = vld [vmem:[%s3 + $0x270] sm:$0xff]
  %v7736 = vld [vmem:[%s3 + $0x278] sm:$0xff]
  %v7737 = vld [vmem:[%s3 + $0x280] sm:$0xff]
  %v7738 = vld [vmem:[%s3 + $0x288] sm:$0xff]
  %v7739 = vld [vmem:[%s3 + $0x290] sm:$0xff]
  %v7740 = vld [vmem:[%s3 + $0x298] sm:$0xff]
  %v7741 = vld [vmem:[%s3 + $0x2a0] sm:$0xff]
  %v7742 = vld [vmem:[%s3 + $0x2a8] sm:$0xff]
  %v7743 = vld [vmem:[%s3 + $0x2b0] sm:$0xff]
  %v7744 = vld [vmem:[%s3 + $0x2b8] sm:$0xff]
  %v7745 = vld [vmem:[%s3 + $0x2c0] sm:$0xff]
  %v7746 = vld [vmem:[%s3 + $0x2c8] sm:$0xff]
  %v7747 = vld [vmem:[%s3 + $0x2d0] sm:$0xff]
  %v7748 = vld [vmem:[%s3 + $0x2d8] sm:$0xff]
  %v7749 = vld [vmem:[%s3 + $0x2e0] sm:$0xff]
  %v7750 = vld [vmem:[%s3 + $0x2e8] sm:$0xff]
  %v7751 = vld [vmem:[%s3 + $0x2f0] sm:$0xff]
  %v7752 = vld [vmem:[%s3 + $0x2f8] sm:$0xff]
  %v7753 = vld [vmem:[%s3 + $0x300] sm:$0xff]
  %v7754 = vld [vmem:[%s3 + $0x308] sm:$0xff]
  %v7755 = vld [vmem:[%s3 + $0x310] sm:$0xff]
  %v7756 = vld [vmem:[%s3 + $0x318] sm:$0xff]
  %v7757 = vld [vmem:[%s3 + $0x320] sm:$0xff]
  %v7758 = vld [vmem:[%s3 + $0x328] sm:$0xff]
  %v7759 = vld [vmem:[%s3 + $0x330] sm:$0xff]
  %v7760 = vld [vmem:[%s3 + $0x338] sm:$0xff]
  %v7761 = vld [vmem:[%s3 + $0x340] sm:$0xff]
  %v7762 = vld [vmem:[%s3 + $0x348] sm:$0xff]
  %v7763 = vld [vmem:[%s3 + $0x350] sm:$0xff]
  %v7764 = vld [vmem:[%s3 + $0x358] sm:$0xff]
  %v7765 = vld [vmem:[%s3 + $0x360] sm:$0xff]
  %v7766 = vld [vmem:[%s3 + $0x368] sm:$0xff]
  %v7767 = vld [vmem:[%s3 + $0x370] sm:$0xff]
  %v7768 = vld [vmem:[%s3 + $0x378] sm:$0xff]
  %v7769 = vld [vmem:[%s3 + $0x380] sm:$0xff]
  %v7770 = vld [vmem:[%s3 + $0x388] sm:$0xff]
  %v7771 = vld [vmem:[%s3 + $0x390] sm:$0xff]
  %v7772 = vld [vmem:[%s3 + $0x398] sm:$0xff]
  %v7773 = vld [vmem:[%s3 + $0x3a0] sm:$0xff]
  %v7774 = vld [vmem:[%s3 + $0x3a8] sm:$0xff]
  %v7775 = vld [vmem:[%s3 + $0x3b0] sm:$0xff]
  %v7776 = vld [vmem:[%s3 + $0x3b8] sm:$0xff]
  %v7777 = vld [vmem:[%s3 + $0x3c0] sm:$0xff]
  %v7778 = vld [vmem:[%s3 + $0x3c8] sm:$0xff]
  %v7779 = vld [vmem:[%s3 + $0x3d0] sm:$0xff]
  %v7780 = vld [vmem:[%s3 + $0x3d8] sm:$0xff]
  %v7781 = vld [vmem:[%s3 + $0x3e0] sm:$0xff]
  %v7782 = vld [vmem:[%s3 + $0x3e8] sm:$0xff]
  %v7783 = vld [vmem:[%s3 + $0x3f0] sm:$0xff]
  %v7784 = vld [vmem:[%s3 + $0x3f8] sm:$0xff]
  %v7785 = vld [vmem:[%s3 + $0x400] sm:$0xff]
  %v7786 = vld [vmem:[%s3 + $0x408] sm:$0xff]
  %v7787 = vld [vmem:[%s3 + $0x410] sm:$0xff]
  %v7788 = vld [vmem:[%s3 + $0x418] sm:$0xff]
  %v7789 = vld [vmem:[%s3 + $0x420] sm:$0xff]
  %v7790 = vld [vmem:[%s3 + $0x428] sm:$0xff]
  %v7791 = vld [vmem:[%s3 + $0x430] sm:$0xff]
  %v7792 = vld [vmem:[%s3 + $0x438] sm:$0xff]
  %v7793 = vld [vmem:[%s3 + $0x440] sm:$0xff]
  %v7794 = vld [vmem:[%s3 + $0x448] sm:$0xff]
  %v7795 = vld [vmem:[%s3 + $0x450] sm:$0xff]
  %v7796 = vld [vmem:[%s3 + $0x458] sm:$0xff]
  %v7797 = vld [vmem:[%s3 + $0x460] sm:$0xff]
  %v7798 = vld [vmem:[%s3 + $0x468] sm:$0xff]
  %v7799 = vld [vmem:[%s3 + $0x470] sm:$0xff]
  %v7800 = vld [vmem:[%s3 + $0x478] sm:$0xff]
  %7801 = vmatprep.subr.mxu0 0.0
  %7802 = vmatpush1.msra.mxu0 %v7672
  %7803 = vmatprep.subr.mxu0 0.0
  %7804 = vmatpush1.msra.mxu0 %v7671
  %7805 = vmatprep.subr.mxu0 0.0
  %7806 = vmatpush1.msra.mxu0 %v7670
  %7807 = vmatprep.subr.mxu0 0.0
  %7808 = vmatpush1.msra.mxu0 %v7669
  %7809 = vmatprep.subr.mxu0 0.0
  %7810 = vmatpush1.msra.mxu0 %v7668
  %7811 = vmatprep.subr.mxu0 0.0
  %7812 = vmatpush1.msra.mxu0 %v7667
  %7813 = vmatprep.subr.mxu0 0.0
  %7814 = vmatpush1.msra.mxu0 %v7666
  %7815 = vmatprep.subr.mxu0 0.0
  %7816 = vmatpush1.msra.mxu0 %v7665
  %7817 = vmatprep.subr.mxu0 0.0
  %7818 = vmatpush1.msra.mxu0 %v7664
  %7819 = vmatprep.subr.mxu0 0.0
  %7820 = vmatpush1.msra.mxu0 %v7663
  %7821 = vmatprep.subr.mxu0 0.0
  %7822 = vmatpush1.msra.mxu0 %v7662
  %7823 = vmatprep.subr.mxu0 0.0
  %7824 = vmatpush1.msra.mxu0 %v7661
  %7825 = vmatprep.subr.mxu0 0.0
  %7826 = vmatpush1.msra.mxu0 %v7660
  %7827 = vmatprep.subr.mxu0 0.0
  %7828 = vmatpush1.msra.mxu0 %v7659
  %7829 = vmatprep.subr.mxu0 0.0
  %7830 = vmatpush1.msra.mxu0 %v7658
  %7831 = vmatprep.subr.mxu0 0.0
  %7832 = vmatpush1.msra.mxu0 %v7657
  %7833 = vmatprep.subr.mxu0 0.0
  %7834 = vmatpush2.msra.mxu0 %v7688
  %7835 = vmatprep.subr.mxu0 0.0
  %7836 = vmatpush2.msra.mxu0 %v7687
  %7837 = vmatprep.subr.mxu0 0.0
  %7838 = vmatpush2.msra.mxu0 %v7686
  %7839 = vmatprep.subr.mxu0 0.0
  %7840 = vmatpush2.msra.mxu0 %v7685
  %7841 = vmatprep.subr.mxu0 0.0
  %7842 = vmatpush2.msra.mxu0 %v7684
  %7843 = vmatprep.subr.mxu0 0.0
  %7844 = vmatpush2.msra.mxu0 %v7683
  %7845 = vmatprep.subr.mxu0 0.0
  %7846 = vmatpush2.msra.mxu0 %v7682
  %7847 = vmatprep.subr.mxu0 0.0
  %7848 = vmatpush2.msra.mxu0 %v7681
  %7849 = vmatprep.subr.mxu0 0.0
  %7850 = vmatpush2.msra.mxu0 %v7680
  %7851 = vmatprep.subr.mxu0 0.0
  %7852 = vmatpush2.msra.mxu0 %v7679
  %7853 = vmatprep.subr.mxu0 0.0
  %7854 = vmatpush2.msra.mxu0 %v7678
  %7855 = vmatprep.subr.mxu0 0.0
  %7856 = vmatpush2.msra.mxu0 %v7677
  %7857 = vmatprep.subr.mxu0 0.0
  %7858 = vmatpush2.msra.mxu0 %v7676
  %7859 = vmatprep.subr.mxu0 0.0
  %7860 = vmatpush2.msra.mxu0 %v7675
  %7861 = vmatprep.subr.mxu0 0.0
  %7862 = vmatpush2.msra.mxu0 %v7674
  %7863 = vmatprep.subr.mxu0 0.0
  %7864 = vmatpush2.msra.mxu0 %v7673
  %7865 = vmatprep.mubr.f32.mxu0 %v7082
  %7866 = vmatmul.mubr.f32.gmra.mxu0 %v7081
  %v7867 = vpop.f32.mrf.mxu0
  %v7868 = vadd.f32 0.0, %v7867
  %v7869 = vpop.f32.mrf.mxu0
  %7870 = vmatprep.mubr.f32.mxu0 %v7091
  %7871 = vmatmul.mubr.f32.gmra.mxu0 %v7090
  %v7872 = vpop.f32.mrf.mxu0
  %v7873 = vadd.f32 0.0, %v7872
  %v7874 = vpop.f32.mrf.mxu0
  %7875 = vmatprep.mubr.f32.mxu0 %v7100
  %7876 = vmatmul.mubr.f32.gmra.mxu0 %v7099
  %v7877 = vpop.f32.mrf.mxu0
  %v7878 = vadd.f32 0.0, %v7877
  %v7879 = vpop.f32.mrf.mxu0
  %7880 = vmatprep.mubr.f32.mxu0 %v7109
  %7881 = vmatmul.mubr.f32.gmra.mxu0 %v7108
  %v7882 = vpop.f32.mrf.mxu0
  %v7883 = vadd.f32 0.0, %v7882
  %v7884 = vpop.f32.mrf.mxu0
  %7885 = vmatprep.mubr.f32.mxu0 %v7118
  %7886 = vmatmul.mubr.f32.gmra.mxu0 %v7117
  %v7887 = vpop.f32.mrf.mxu0
  %v7888 = vadd.f32 0.0, %v7887
  %v7889 = vpop.f32.mrf.mxu0
  %7890 = vmatprep.mubr.f32.mxu0 %v7127
  %7891 = vmatmul.mubr.f32.gmra.mxu0 %v7126
  %v7892 = vpop.f32.mrf.mxu0
  %v7893 = vadd.f32 0.0, %v7892
  %v7894 = vpop.f32.mrf.mxu0
  %7895 = vmatprep.mubr.f32.mxu0 %v7136
  %7896 = vmatmul.mubr.f32.gmra.mxu0 %v7135
  %v7897 = vpop.f32.mrf.mxu0
  %v7898 = vadd.f32 0.0, %v7897
  %v7899 = vpop.f32.mrf.mxu0
  %7900 = vmatprep.mubr.f32.mxu0 %v7145
  %7901 = vmatmul.mubr.f32.gmra.mxu0 %v7144
  %v7902 = vpop.f32.mrf.mxu0
  %v7903 = vadd.f32 0.0, %v7902
  %v7904 = vpop.f32.mrf.mxu0
  %7905 = vmatprep.mubr.f32.mxu0 %v7154
  %7906 = vmatmul.mubr.f32.gmra.mxu0 %v7153
  %v7907 = vpop.f32.mrf.mxu0
  %v7908 = vadd.f32 0.0, %v7907
  %v7909 = vpop.f32.mrf.mxu0
  %7910 = vmatprep.mubr.f32.mxu0 %v7163
  %7911 = vmatmul.mubr.f32.gmra.mxu0 %v7162
  %v7912 = vpop.f32.mrf.mxu0
  %v7913 = vadd.f32 0.0, %v7912
  %v7914 = vpop.f32.mrf.mxu0
  %7915 = vmatprep.mubr.f32.mxu0 %v7172
  %7916 = vmatmul.mubr.f32.gmra.mxu0 %v7171
  %v7917 = vpop.f32.mrf.mxu0
  %v7918 = vadd.f32 0.0, %v7917
  %v7919 = vpop.f32.mrf.mxu0
  %7920 = vmatprep.mubr.f32.mxu0 %v7181
  %7921 = vmatmul.mubr.f32.gmra.mxu0 %v7180
  %v7922 = vpop.f32.mrf.mxu0
  %v7923 = vadd.f32 0.0, %v7922
  %v7924 = vpop.f32.mrf.mxu0
  %7925 = vmatprep.mubr.f32.mxu0 %v7190
  %7926 = vmatmul.mubr.f32.gmra.mxu0 %v7189
  %v7927 = vpop.f32.mrf.mxu0
  %v7928 = vadd.f32 0.0, %v7927
  %v7929 = vpop.f32.mrf.mxu0
  %7930 = vmatprep.mubr.f32.mxu0 %v7199
  %7931 = vmatmul.mubr.f32.gmra.mxu0 %v7198
  %v7932 = vpop.f32.mrf.mxu0
  %v7933 = vadd.f32 0.0, %v7932
  %v7934 = vpop.f32.mrf.mxu0
  %7935 = vmatprep.mubr.f32.mxu0 %v7208
  %7936 = vmatmul.mubr.f32.gmra.mxu0 %v7207
  %v7937 = vpop.f32.mrf.mxu0
  %v7938 = vadd.f32 0.0, %v7937
  %v7939 = vpop.f32.mrf.mxu0
  %7940 = vmatprep.mubr.f32.mxu0 %v7217
  %7941 = vmatmul.mubr.f32.gmra.mxu0 %v7216
  %v7942 = vpop.f32.mrf.mxu0
  %v7943 = vadd.f32 0.0, %v7942
  %v7944 = vpop.f32.mrf.mxu0
  %7945 = vmatprep.mubr.f32.mxu0 %v7226
  %7946 = vmatmul.mubr.f32.gmra.mxu0 %v7225
  %v7947 = vpop.f32.mrf.mxu0
  %v7948 = vadd.f32 0.0, %v7947
  %v7949 = vpop.f32.mrf.mxu0
  %7950 = vmatprep.mubr.f32.mxu0 %v7235
  %7951 = vmatmul.mubr.f32.gmra.mxu0 %v7234
  %v7952 = vpop.f32.mrf.mxu0
  %v7953 = vadd.f32 0.0, %v7952
  %v7954 = vpop.f32.mrf.mxu0
  %7955 = vmatprep.mubr.f32.mxu0 %v7244
  %7956 = vmatmul.mubr.f32.gmra.mxu0 %v7243
  %v7957 = vpop.f32.mrf.mxu0
  %v7958 = vadd.f32 0.0, %v7957
  %v7959 = vpop.f32.mrf.mxu0
  %7960 = vmatprep.mubr.f32.mxu0 %v7253
  %7961 = vmatmul.mubr.f32.gmra.mxu0 %v7252
  %v7962 = vpop.f32.mrf.mxu0
  %v7963 = vadd.f32 0.0, %v7962
  %v7964 = vpop.f32.mrf.mxu0
  %7965 = vmatprep.mubr.f32.mxu0 %v7262
  %7966 = vmatmul.mubr.f32.gmra.mxu0 %v7261
  %v7967 = vpop.f32.mrf.mxu0
  %v7968 = vadd.f32 0.0, %v7967
  %v7969 = vpop.f32.mrf.mxu0
  %7970 = vmatprep.mubr.f32.mxu0 %v7271
  %7971 = vmatmul.mubr.f32.gmra.mxu0 %v7270
  %v7972 = vpop.f32.mrf.mxu0
  %v7973 = vadd.f32 0.0, %v7972
  %v7974 = vpop.f32.mrf.mxu0
  %7975 = vmatprep.mubr.f32.mxu0 %v7280
  %7976 = vmatmul.mubr.f32.gmra.mxu0 %v7279
  %v7977 = vpop.f32.mrf.mxu0
  %v7978 = vadd.f32 0.0, %v7977
  %v7979 = vpop.f32.mrf.mxu0
  %7980 = vmatprep.mubr.f32.mxu0 %v7289
  %7981 = vmatmul.mubr.f32.gmra.mxu0 %v7288
  %v7982 = vpop.f32.mrf.mxu0
  %v7983 = vadd.f32 0.0, %v7982
  %v7984 = vpop.f32.mrf.mxu0
  %7985 = vmatprep.mubr.f32.mxu0 %v7298
  %7986 = vmatmul.mubr.f32.gmra.mxu0 %v7297
  %v7987 = vpop.f32.mrf.mxu0
  %v7988 = vadd.f32 0.0, %v7987
  %v7989 = vpop.f32.mrf.mxu0
  %7990 = vmatprep.mubr.f32.mxu0 %v7307
  %7991 = vmatmul.mubr.f32.gmra.mxu0 %v7306
  %v7992 = vpop.f32.mrf.mxu0
  %v7993 = vadd.f32 0.0, %v7992
  %v7994 = vpop.f32.mrf.mxu0
  %7995 = vmatprep.mubr.f32.mxu0 %v7316
  %7996 = vmatmul.mubr.f32.gmra.mxu0 %v7315
  %v7997 = vpop.f32.mrf.mxu0
  %v7998 = vadd.f32 0.0, %v7997
  %v7999 = vpop.f32.mrf.mxu0
  %8000 = vmatprep.mubr.f32.mxu0 %v7325
  %8001 = vmatmul.mubr.f32.gmra.mxu0 %v7324
  %v8002 = vpop.f32.mrf.mxu0
  %v8003 = vadd.f32 0.0, %v8002
  %v8004 = vpop.f32.mrf.mxu0
  %8005 = vmatprep.mubr.f32.mxu0 %v7334
  %8006 = vmatmul.mubr.f32.gmra.mxu0 %v7333
  %v8007 = vpop.f32.mrf.mxu0
  %v8008 = vadd.f32 0.0, %v8007
  %v8009 = vpop.f32.mrf.mxu0
  %8010 = vmatprep.mubr.f32.mxu0 %v7343
  %8011 = vmatmul.mubr.f32.gmra.mxu0 %v7342
  %v8012 = vpop.f32.mrf.mxu0
  %v8013 = vadd.f32 0.0, %v8012
  %v8014 = vpop.f32.mrf.mxu0
  %8015 = vmatprep.mubr.f32.mxu0 %v7352
  %8016 = vmatmul.mubr.f32.gmra.mxu0 %v7351
  %v8017 = vpop.f32.mrf.mxu0
  %v8018 = vadd.f32 0.0, %v8017
  %v8019 = vpop.f32.mrf.mxu0
  %8020 = vmatprep.mubr.f32.mxu0 %v7361
  %8021 = vmatmul.mubr.f32.gmra.mxu0 %v7360
  %v8022 = vpop.f32.mrf.mxu0
  %v8023 = vadd.f32 0.0, %v8022
  %v8024 = vpop.f32.mrf.mxu0
  %8025 = vmatprep.mubr.f32.mxu0 %v7370
  %8026 = vmatmul.mubr.f32.gmra.mxu0 %v7369
  %v8027 = vpop.f32.mrf.mxu0
  %v8028 = vadd.f32 0.0, %v8027
  %v8029 = vpop.f32.mrf.mxu0
  %8030 = vmatprep.mubr.f32.mxu0 %v7379
  %8031 = vmatmul.mubr.f32.gmra.mxu0 %v7378
  %v8032 = vpop.f32.mrf.mxu0
  %v8033 = vadd.f32 0.0, %v8032
  %v8034 = vpop.f32.mrf.mxu0
  %8035 = vmatprep.mubr.f32.mxu0 %v7388
  %8036 = vmatmul.mubr.f32.gmra.mxu0 %v7387
  %v8037 = vpop.f32.mrf.mxu0
  %v8038 = vadd.f32 0.0, %v8037
  %v8039 = vpop.f32.mrf.mxu0
  %8040 = vmatprep.mubr.f32.mxu0 %v7397
  %8041 = vmatmul.mubr.f32.gmra.mxu0 %v7396
  %v8042 = vpop.f32.mrf.mxu0
  %v8043 = vadd.f32 0.0, %v8042
  %v8044 = vpop.f32.mrf.mxu0
  %8045 = vmatprep.mubr.f32.mxu0 %v7406
  %8046 = vmatmul.mubr.f32.gmra.mxu0 %v7405
  %v8047 = vpop.f32.mrf.mxu0
  %v8048 = vadd.f32 0.0, %v8047
  %v8049 = vpop.f32.mrf.mxu0
  %8050 = vmatprep.mubr.f32.mxu0 %v7415
  %8051 = vmatmul.mubr.f32.gmra.mxu0 %v7414
  %v8052 = vpop.f32.mrf.mxu0
  %v8053 = vadd.f32 0.0, %v8052
  %v8054 = vpop.f32.mrf.mxu0
  %8055 = vmatprep.mubr.f32.mxu0 %v7424
  %8056 = vmatmul.mubr.f32.gmra.mxu0 %v7423
  %v8057 = vpop.f32.mrf.mxu0
  %v8058 = vadd.f32 0.0, %v8057
  %v8059 = vpop.f32.mrf.mxu0
  %8060 = vmatprep.mubr.f32.mxu0 %v7433
  %8061 = vmatmul.mubr.f32.gmra.mxu0 %v7432
  %v8062 = vpop.f32.mrf.mxu0
  %v8063 = vadd.f32 0.0, %v8062
  %v8064 = vpop.f32.mrf.mxu0
  %8065 = vmatprep.mubr.f32.mxu0 %v7442
  %8066 = vmatmul.mubr.f32.gmra.mxu0 %v7441
  %v8067 = vpop.f32.mrf.mxu0
  %v8068 = vadd.f32 0.0, %v8067
  %v8069 = vpop.f32.mrf.mxu0
  %8070 = vmatprep.mubr.f32.mxu0 %v7451
  %8071 = vmatmul.mubr.f32.gmra.mxu0 %v7450
  %v8072 = vpop.f32.mrf.mxu0
  %v8073 = vadd.f32 0.0, %v8072
  %v8074 = vpop.f32.mrf.mxu0
  %8075 = vmatprep.mubr.f32.mxu0 %v7460
  %8076 = vmatmul.mubr.f32.gmra.mxu0 %v7459
  %v8077 = vpop.f32.mrf.mxu0
  %v8078 = vadd.f32 0.0, %v8077
  %v8079 = vpop.f32.mrf.mxu0
  %8080 = vmatprep.mubr.f32.mxu0 %v7469
  %8081 = vmatmul.mubr.f32.gmra.mxu0 %v7468
  %v8082 = vpop.f32.mrf.mxu0
  %v8083 = vadd.f32 0.0, %v8082
  %v8084 = vpop.f32.mrf.mxu0
  %8085 = vmatprep.mubr.f32.mxu0 %v7478
  %8086 = vmatmul.mubr.f32.gmra.mxu0 %v7477
  %v8087 = vpop.f32.mrf.mxu0
  %v8088 = vadd.f32 0.0, %v8087
  %v8089 = vpop.f32.mrf.mxu0
  %8090 = vmatprep.mubr.f32.mxu0 %v7487
  %8091 = vmatmul.mubr.f32.gmra.mxu0 %v7486
  %v8092 = vpop.f32.mrf.mxu0
  %v8093 = vadd.f32 0.0, %v8092
  %v8094 = vpop.f32.mrf.mxu0
  %8095 = vmatprep.mubr.f32.mxu0 %v7496
  %8096 = vmatmul.mubr.f32.gmra.mxu0 %v7495
  %v8097 = vpop.f32.mrf.mxu0
  %v8098 = vadd.f32 0.0, %v8097
  %v8099 = vpop.f32.mrf.mxu0
  %8100 = vmatprep.mubr.f32.mxu0 %v7505
  %8101 = vmatmul.mubr.f32.gmra.mxu0 %v7504
  %v8102 = vpop.f32.mrf.mxu0
  %v8103 = vadd.f32 0.0, %v8102
  %v8104 = vpop.f32.mrf.mxu0
  %8105 = vmatprep.mubr.f32.mxu0 %v7514
  %8106 = vmatmul.mubr.f32.gmra.mxu0 %v7513
  %v8107 = vpop.f32.mrf.mxu0
  %v8108 = vadd.f32 0.0, %v8107
  %v8109 = vpop.f32.mrf.mxu0
  %8110 = vmatprep.mubr.f32.mxu0 %v7523
  %8111 = vmatmul.mubr.f32.gmra.mxu0 %v7522
  %v8112 = vpop.f32.mrf.mxu0
  %v8113 = vadd.f32 0.0, %v8112
  %v8114 = vpop.f32.mrf.mxu0
  %8115 = vmatprep.mubr.f32.mxu0 %v7532
  %8116 = vmatmul.mubr.f32.gmra.mxu0 %v7531
  %v8117 = vpop.f32.mrf.mxu0
  %v8118 = vadd.f32 0.0, %v8117
  %v8119 = vpop.f32.mrf.mxu0
  %8120 = vmatprep.mubr.f32.mxu0 %v7541
  %8121 = vmatmul.mubr.f32.gmra.mxu0 %v7540
  %v8122 = vpop.f32.mrf.mxu0
  %v8123 = vadd.f32 0.0, %v8122
  %v8124 = vpop.f32.mrf.mxu0
  %8125 = vmatprep.mubr.f32.mxu0 %v7550
  %8126 = vmatmul.mubr.f32.gmra.mxu0 %v7549
  %v8127 = vpop.f32.mrf.mxu0
  %v8128 = vadd.f32 0.0, %v8127
  %v8129 = vpop.f32.mrf.mxu0
  %8130 = vmatprep.mubr.f32.mxu0 %v7559
  %8131 = vmatmul.mubr.f32.gmra.mxu0 %v7558
  %v8132 = vpop.f32.mrf.mxu0
  %v8133 = vadd.f32 0.0, %v8132
  %v8134 = vpop.f32.mrf.mxu0
  %8135 = vmatprep.mubr.f32.mxu0 %v7568
  %8136 = vmatmul.mubr.f32.gmra.mxu0 %v7567
  %v8137 = vpop.f32.mrf.mxu0
  %v8138 = vadd.f32 0.0, %v8137
  %v8139 = vpop.f32.mrf.mxu0
  %8140 = vmatprep.mubr.f32.mxu0 %v7577
  %8141 = vmatmul.mubr.f32.gmra.mxu0 %v7576
  %v8142 = vpop.f32.mrf.mxu0
  %v8143 = vadd.f32 0.0, %v8142
  %v8144 = vpop.f32.mrf.mxu0
  %8145 = vmatprep.mubr.f32.mxu0 %v7586
  %8146 = vmatmul.mubr.f32.gmra.mxu0 %v7585
  %v8147 = vpop.f32.mrf.mxu0
  %v8148 = vadd.f32 0.0, %v8147
  %v8149 = vpop.f32.mrf.mxu0
  %8150 = vmatprep.mubr.f32.mxu0 %v7595
  %8151 = vmatmul.mubr.f32.gmra.mxu0 %v7594
  %v8152 = vpop.f32.mrf.mxu0
  %v8153 = vadd.f32 0.0, %v8152
  %v8154 = vpop.f32.mrf.mxu0
  %8155 = vmatprep.mubr.f32.mxu0 %v7604
  %8156 = vmatmul.mubr.f32.gmra.mxu0 %v7603
  %v8157 = vpop.f32.mrf.mxu0
  %v8158 = vadd.f32 0.0, %v8157
  %v8159 = vpop.f32.mrf.mxu0
  %8160 = vmatprep.mubr.f32.mxu0 %v7613
  %8161 = vmatmul.mubr.f32.gmra.mxu0 %v7612
  %v8162 = vpop.f32.mrf.mxu0
  %v8163 = vadd.f32 0.0, %v8162
  %v8164 = vpop.f32.mrf.mxu0
  %8165 = vmatprep.mubr.f32.mxu0 %v7622
  %8166 = vmatmul.mubr.f32.gmra.mxu0 %v7621
  %v8167 = vpop.f32.mrf.mxu0
  %v8168 = vadd.f32 0.0, %v8167
  %v8169 = vpop.f32.mrf.mxu0
  %8170 = vmatprep.mubr.f32.mxu0 %v7631
  %8171 = vmatmul.mubr.f32.gmra.mxu0 %v7630
  %v8172 = vpop.f32.mrf.mxu0
  %v8173 = vadd.f32 0.0, %v8172
  %v8174 = vpop.f32.mrf.mxu0
  %8175 = vmatprep.mubr.f32.mxu0 %v7640
  %8176 = vmatmul.mubr.f32.gmra.mxu0 %v7639
  %v8177 = vpop.f32.mrf.mxu0
  %v8178 = vadd.f32 0.0, %v8177
  %v8179 = vpop.f32.mrf.mxu0
  %8180 = vmatprep.mubr.f32.mxu0 %v7649
  %8181 = vmatmul.mubr.f32.gmra.mxu0 %v7648
  %v8182 = vpop.f32.mrf.mxu0
  %v8183 = vadd.f32 0.0, %v8182
  %v8184 = vpop.f32.mrf.mxu0
  %8185 = vdwg.mxu0
  %8186 = vmatprep.subr.mxu0 0.0
  %8187 = vmatpush1.msra.mxu0 %v7704
  %8188 = vmatprep.subr.mxu0 0.0
  %8189 = vmatpush1.msra.mxu0 %v7703
  %8190 = vmatprep.subr.mxu0 0.0
  %8191 = vmatpush1.msra.mxu0 %v7702
  %8192 = vmatprep.subr.mxu0 0.0
  %8193 = vmatpush1.msra.mxu0 %v7701
  %8194 = vmatprep.subr.mxu0 0.0
  %8195 = vmatpush1.msra.mxu0 %v7700
  %8196 = vmatprep.subr.mxu0 0.0
  %8197 = vmatpush1.msra.mxu0 %v7699
  %8198 = vmatprep.subr.mxu0 0.0
  %8199 = vmatpush1.msra.mxu0 %v7698
  %8200 = vmatprep.subr.mxu0 0.0
  %8201 = vmatpush1.msra.mxu0 %v7697
  %8202 = vmatprep.subr.mxu0 0.0
  %8203 = vmatpush1.msra.mxu0 %v7696
  %8204 = vmatprep.subr.mxu0 0.0
  %8205 = vmatpush1.msra.mxu0 %v7695
  %8206 = vmatprep.subr.mxu0 0.0
  %8207 = vmatpush1.msra.mxu0 %v7694
  %8208 = vmatprep.subr.mxu0 0.0
  %8209 = vmatpush1.msra.mxu0 %v7693
  %8210 = vmatprep.subr.mxu0 0.0
  %8211 = vmatpush1.msra.mxu0 %v7692
  %8212 = vmatprep.subr.mxu0 0.0
  %8213 = vmatpush1.msra.mxu0 %v7691
  %8214 = vmatprep.subr.mxu0 0.0
  %8215 = vmatpush1.msra.mxu0 %v7690
  %8216 = vmatprep.subr.mxu0 0.0
  %8217 = vmatpush1.msra.mxu0 %v7689
  %8218 = vmatprep.subr.mxu0 0.0
  %8219 = vmatpush2.msra.mxu0 %v7720
  %8220 = vmatprep.subr.mxu0 0.0
  %8221 = vmatpush2.msra.mxu0 %v7719
  %8222 = vmatprep.subr.mxu0 0.0
  %8223 = vmatpush2.msra.mxu0 %v7718
  %8224 = vmatprep.subr.mxu0 0.0
  %8225 = vmatpush2.msra.mxu0 %v7717
  %8226 = vmatprep.subr.mxu0 0.0
  %8227 = vmatpush2.msra.mxu0 %v7716
  %8228 = vmatprep.subr.mxu0 0.0
  %8229 = vmatpush2.msra.mxu0 %v7715
  %8230 = vmatprep.subr.mxu0 0.0
  %8231 = vmatpush2.msra.mxu0 %v7714
  %8232 = vmatprep.subr.mxu0 0.0
  %8233 = vmatpush2.msra.mxu0 %v7713
  %8234 = vmatprep.subr.mxu0 0.0
  %8235 = vmatpush2.msra.mxu0 %v7712
  %8236 = vmatprep.subr.mxu0 0.0
  %8237 = vmatpush2.msra.mxu0 %v7711
  %8238 = vmatprep.subr.mxu0 0.0
  %8239 = vmatpush2.msra.mxu0 %v7710
  %8240 = vmatprep.subr.mxu0 0.0
  %8241 = vmatpush2.msra.mxu0 %v7709
  %8242 = vmatprep.subr.mxu0 0.0
  %8243 = vmatpush2.msra.mxu0 %v7708
  %8244 = vmatprep.subr.mxu0 0.0
  %8245 = vmatpush2.msra.mxu0 %v7707
  %8246 = vmatprep.subr.mxu0 0.0
  %8247 = vmatpush2.msra.mxu0 %v7706
  %8248 = vmatprep.subr.mxu0 0.0
  %8249 = vmatpush2.msra.mxu0 %v7705
  %8250 = vmatprep.mubr.f32.mxu0 %v7084
  %8251 = vmatmul.mubr.f32.gmra.mxu0 %v7083
  %v8252 = vpop.f32.mrf.mxu0
  %v8253 = vadd.f32 %v7868, %v8252
  %v8254 = vpop.f32.mrf.mxu0
  %8255 = vmatprep.mubr.f32.mxu0 %v7093
  %8256 = vmatmul.mubr.f32.gmra.mxu0 %v7092
  %v8257 = vpop.f32.mrf.mxu0
  %v8258 = vadd.f32 %v7873, %v8257
  %v8259 = vpop.f32.mrf.mxu0
  %8260 = vmatprep.mubr.f32.mxu0 %v7102
  %8261 = vmatmul.mubr.f32.gmra.mxu0 %v7101
  %v8262 = vpop.f32.mrf.mxu0
  %v8263 = vadd.f32 %v7878, %v8262
  %v8264 = vpop.f32.mrf.mxu0
  %8265 = vmatprep.mubr.f32.mxu0 %v7111
  %8266 = vmatmul.mubr.f32.gmra.mxu0 %v7110
  %v8267 = vpop.f32.mrf.mxu0
  %v8268 = vadd.f32 %v7883, %v8267
  %v8269 = vpop.f32.mrf.mxu0
  %8270 = vmatprep.mubr.f32.mxu0 %v7120
  %8271 = vmatmul.mubr.f32.gmra.mxu0 %v7119
  %v8272 = vpop.f32.mrf.mxu0
  %v8273 = vadd.f32 %v7888, %v8272
  %v8274 = vpop.f32.mrf.mxu0
  %8275 = vmatprep.mubr.f32.mxu0 %v7129
  %8276 = vmatmul.mubr.f32.gmra.mxu0 %v7128
  %v8277 = vpop.f32.mrf.mxu0
  %v8278 = vadd.f32 %v7893, %v8277
  %v8279 = vpop.f32.mrf.mxu0
  %8280 = vmatprep.mubr.f32.mxu0 %v7138
  %8281 = vmatmul.mubr.f32.gmra.mxu0 %v7137
  %v8282 = vpop.f32.mrf.mxu0
  %v8283 = vadd.f32 %v7898, %v8282
  %v8284 = vpop.f32.mrf.mxu0
  %8285 = vmatprep.mubr.f32.mxu0 %v7147
  %8286 = vmatmul.mubr.f32.gmra.mxu0 %v7146
  %v8287 = vpop.f32.mrf.mxu0
  %v8288 = vadd.f32 %v7903, %v8287
  %v8289 = vpop.f32.mrf.mxu0
  %8290 = vmatprep.mubr.f32.mxu0 %v7156
  %8291 = vmatmul.mubr.f32.gmra.mxu0 %v7155
  %v8292 = vpop.f32.mrf.mxu0
  %v8293 = vadd.f32 %v7908, %v8292
  %v8294 = vpop.f32.mrf.mxu0
  %8295 = vmatprep.mubr.f32.mxu0 %v7165
  %8296 = vmatmul.mubr.f32.gmra.mxu0 %v7164
  %v8297 = vpop.f32.mrf.mxu0
  %v8298 = vadd.f32 %v7913, %v8297
  %v8299 = vpop.f32.mrf.mxu0
  %8300 = vmatprep.mubr.f32.mxu0 %v7174
  %8301 = vmatmul.mubr.f32.gmra.mxu0 %v7173
  %v8302 = vpop.f32.mrf.mxu0
  %v8303 = vadd.f32 %v7918, %v8302
  %v8304 = vpop.f32.mrf.mxu0
  %8305 = vmatprep.mubr.f32.mxu0 %v7183
  %8306 = vmatmul.mubr.f32.gmra.mxu0 %v7182
  %v8307 = vpop.f32.mrf.mxu0
  %v8308 = vadd.f32 %v7923, %v8307
  %v8309 = vpop.f32.mrf.mxu0
  %8310 = vmatprep.mubr.f32.mxu0 %v7192
  %8311 = vmatmul.mubr.f32.gmra.mxu0 %v7191
  %v8312 = vpop.f32.mrf.mxu0
  %v8313 = vadd.f32 %v7928, %v8312
  %v8314 = vpop.f32.mrf.mxu0
  %8315 = vmatprep.mubr.f32.mxu0 %v7201
  %8316 = vmatmul.mubr.f32.gmra.mxu0 %v7200
  %v8317 = vpop.f32.mrf.mxu0
  %v8318 = vadd.f32 %v7933, %v8317
  %v8319 = vpop.f32.mrf.mxu0
  %8320 = vmatprep.mubr.f32.mxu0 %v7210
  %8321 = vmatmul.mubr.f32.gmra.mxu0 %v7209
  %v8322 = vpop.f32.mrf.mxu0
  %v8323 = vadd.f32 %v7938, %v8322
  %v8324 = vpop.f32.mrf.mxu0
  %8325 = vmatprep.mubr.f32.mxu0 %v7219
  %8326 = vmatmul.mubr.f32.gmra.mxu0 %v7218
  %v8327 = vpop.f32.mrf.mxu0
  %v8328 = vadd.f32 %v7943, %v8327
  %v8329 = vpop.f32.mrf.mxu0
  %8330 = vmatprep.mubr.f32.mxu0 %v7228
  %8331 = vmatmul.mubr.f32.gmra.mxu0 %v7227
  %v8332 = vpop.f32.mrf.mxu0
  %v8333 = vadd.f32 %v7948, %v8332
  %v8334 = vpop.f32.mrf.mxu0
  %8335 = vmatprep.mubr.f32.mxu0 %v7237
  %8336 = vmatmul.mubr.f32.gmra.mxu0 %v7236
  %v8337 = vpop.f32.mrf.mxu0
  %v8338 = vadd.f32 %v7953, %v8337
  %v8339 = vpop.f32.mrf.mxu0
  %8340 = vmatprep.mubr.f32.mxu0 %v7246
  %8341 = vmatmul.mubr.f32.gmra.mxu0 %v7245
  %v8342 = vpop.f32.mrf.mxu0
  %v8343 = vadd.f32 %v7958, %v8342
  %v8344 = vpop.f32.mrf.mxu0
  %8345 = vmatprep.mubr.f32.mxu0 %v7255
  %8346 = vmatmul.mubr.f32.gmra.mxu0 %v7254
  %v8347 = vpop.f32.mrf.mxu0
  %v8348 = vadd.f32 %v7963, %v8347
  %v8349 = vpop.f32.mrf.mxu0
  %8350 = vmatprep.mubr.f32.mxu0 %v7264
  %8351 = vmatmul.mubr.f32.gmra.mxu0 %v7263
  %v8352 = vpop.f32.mrf.mxu0
  %v8353 = vadd.f32 %v7968, %v8352
  %v8354 = vpop.f32.mrf.mxu0
  %8355 = vmatprep.mubr.f32.mxu0 %v7273
  %8356 = vmatmul.mubr.f32.gmra.mxu0 %v7272
  %v8357 = vpop.f32.mrf.mxu0
  %v8358 = vadd.f32 %v7973, %v8357
  %v8359 = vpop.f32.mrf.mxu0
  %8360 = vmatprep.mubr.f32.mxu0 %v7282
  %8361 = vmatmul.mubr.f32.gmra.mxu0 %v7281
  %v8362 = vpop.f32.mrf.mxu0
  %v8363 = vadd.f32 %v7978, %v8362
  %v8364 = vpop.f32.mrf.mxu0
  %8365 = vmatprep.mubr.f32.mxu0 %v7291
  %8366 = vmatmul.mubr.f32.gmra.mxu0 %v7290
  %v8367 = vpop.f32.mrf.mxu0
  %v8368 = vadd.f32 %v7983, %v8367
  %v8369 = vpop.f32.mrf.mxu0
  %8370 = vmatprep.mubr.f32.mxu0 %v7300
  %8371 = vmatmul.mubr.f32.gmra.mxu0 %v7299
  %v8372 = vpop.f32.mrf.mxu0
  %v8373 = vadd.f32 %v7988, %v8372
  %v8374 = vpop.f32.mrf.mxu0
  %8375 = vmatprep.mubr.f32.mxu0 %v7309
  %8376 = vmatmul.mubr.f32.gmra.mxu0 %v7308
  %v8377 = vpop.f32.mrf.mxu0
  %v8378 = vadd.f32 %v7993, %v8377
  %v8379 = vpop.f32.mrf.mxu0
  %8380 = vmatprep.mubr.f32.mxu0 %v7318
  %8381 = vmatmul.mubr.f32.gmra.mxu0 %v7317
  %v8382 = vpop.f32.mrf.mxu0
  %v8383 = vadd.f32 %v7998, %v8382
  %v8384 = vpop.f32.mrf.mxu0
  %8385 = vmatprep.mubr.f32.mxu0 %v7327
  %8386 = vmatmul.mubr.f32.gmra.mxu0 %v7326
  %v8387 = vpop.f32.mrf.mxu0
  %v8388 = vadd.f32 %v8003, %v8387
  %v8389 = vpop.f32.mrf.mxu0
  %8390 = vmatprep.mubr.f32.mxu0 %v7336
  %8391 = vmatmul.mubr.f32.gmra.mxu0 %v7335
  %v8392 = vpop.f32.mrf.mxu0
  %v8393 = vadd.f32 %v8008, %v8392
  %v8394 = vpop.f32.mrf.mxu0
  %8395 = vmatprep.mubr.f32.mxu0 %v7345
  %8396 = vmatmul.mubr.f32.gmra.mxu0 %v7344
  %v8397 = vpop.f32.mrf.mxu0
  %v8398 = vadd.f32 %v8013, %v8397
  %v8399 = vpop.f32.mrf.mxu0
  %8400 = vmatprep.mubr.f32.mxu0 %v7354
  %8401 = vmatmul.mubr.f32.gmra.mxu0 %v7353
  %v8402 = vpop.f32.mrf.mxu0
  %v8403 = vadd.f32 %v8018, %v8402
  %v8404 = vpop.f32.mrf.mxu0
  %8405 = vmatprep.mubr.f32.mxu0 %v7363
  %8406 = vmatmul.mubr.f32.gmra.mxu0 %v7362
  %v8407 = vpop.f32.mrf.mxu0
  %v8408 = vadd.f32 %v8023, %v8407
  %v8409 = vpop.f32.mrf.mxu0
  %8410 = vmatprep.mubr.f32.mxu0 %v7372
  %8411 = vmatmul.mubr.f32.gmra.mxu0 %v7371
  %v8412 = vpop.f32.mrf.mxu0
  %v8413 = vadd.f32 %v8028, %v8412
  %v8414 = vpop.f32.mrf.mxu0
  %8415 = vmatprep.mubr.f32.mxu0 %v7381
  %8416 = vmatmul.mubr.f32.gmra.mxu0 %v7380
  %v8417 = vpop.f32.mrf.mxu0
  %v8418 = vadd.f32 %v8033, %v8417
  %v8419 = vpop.f32.mrf.mxu0
  %8420 = vmatprep.mubr.f32.mxu0 %v7390
  %8421 = vmatmul.mubr.f32.gmra.mxu0 %v7389
  %v8422 = vpop.f32.mrf.mxu0
  %v8423 = vadd.f32 %v8038, %v8422
  %v8424 = vpop.f32.mrf.mxu0
  %8425 = vmatprep.mubr.f32.mxu0 %v7399
  %8426 = vmatmul.mubr.f32.gmra.mxu0 %v7398
  %v8427 = vpop.f32.mrf.mxu0
  %v8428 = vadd.f32 %v8043, %v8427
  %v8429 = vpop.f32.mrf.mxu0
  %8430 = vmatprep.mubr.f32.mxu0 %v7408
  %8431 = vmatmul.mubr.f32.gmra.mxu0 %v7407
  %v8432 = vpop.f32.mrf.mxu0
  %v8433 = vadd.f32 %v8048, %v8432
  %v8434 = vpop.f32.mrf.mxu0
  %8435 = vmatprep.mubr.f32.mxu0 %v7417
  %8436 = vmatmul.mubr.f32.gmra.mxu0 %v7416
  %v8437 = vpop.f32.mrf.mxu0
  %v8438 = vadd.f32 %v8053, %v8437
  %v8439 = vpop.f32.mrf.mxu0
  %8440 = vmatprep.mubr.f32.mxu0 %v7426
  %8441 = vmatmul.mubr.f32.gmra.mxu0 %v7425
  %v8442 = vpop.f32.mrf.mxu0
  %v8443 = vadd.f32 %v8058, %v8442
  %v8444 = vpop.f32.mrf.mxu0
  %8445 = vmatprep.mubr.f32.mxu0 %v7435
  %8446 = vmatmul.mubr.f32.gmra.mxu0 %v7434
  %v8447 = vpop.f32.mrf.mxu0
  %v8448 = vadd.f32 %v8063, %v8447
  %v8449 = vpop.f32.mrf.mxu0
  %8450 = vmatprep.mubr.f32.mxu0 %v7444
  %8451 = vmatmul.mubr.f32.gmra.mxu0 %v7443
  %v8452 = vpop.f32.mrf.mxu0
  %v8453 = vadd.f32 %v8068, %v8452
  %v8454 = vpop.f32.mrf.mxu0
  %8455 = vmatprep.mubr.f32.mxu0 %v7453
  %8456 = vmatmul.mubr.f32.gmra.mxu0 %v7452
  %v8457 = vpop.f32.mrf.mxu0
  %v8458 = vadd.f32 %v8073, %v8457
  %v8459 = vpop.f32.mrf.mxu0
  %8460 = vmatprep.mubr.f32.mxu0 %v7462
  %8461 = vmatmul.mubr.f32.gmra.mxu0 %v7461
  %v8462 = vpop.f32.mrf.mxu0
  %v8463 = vadd.f32 %v8078, %v8462
  %v8464 = vpop.f32.mrf.mxu0
  %8465 = vmatprep.mubr.f32.mxu0 %v7471
  %8466 = vmatmul.mubr.f32.gmra.mxu0 %v7470
  %v8467 = vpop.f32.mrf.mxu0
  %v8468 = vadd.f32 %v8083, %v8467
  %v8469 = vpop.f32.mrf.mxu0
  %8470 = vmatprep.mubr.f32.mxu0 %v7480
  %8471 = vmatmul.mubr.f32.gmra.mxu0 %v7479
  %v8472 = vpop.f32.mrf.mxu0
  %v8473 = vadd.f32 %v8088, %v8472
  %v8474 = vpop.f32.mrf.mxu0
  %8475 = vmatprep.mubr.f32.mxu0 %v7489
  %8476 = vmatmul.mubr.f32.gmra.mxu0 %v7488
  %v8477 = vpop.f32.mrf.mxu0
  %v8478 = vadd.f32 %v8093, %v8477
  %v8479 = vpop.f32.mrf.mxu0
  %8480 = vmatprep.mubr.f32.mxu0 %v7498
  %8481 = vmatmul.mubr.f32.gmra.mxu0 %v7497
  %v8482 = vpop.f32.mrf.mxu0
  %v8483 = vadd.f32 %v8098, %v8482
  %v8484 = vpop.f32.mrf.mxu0
  %8485 = vmatprep.mubr.f32.mxu0 %v7507
  %8486 = vmatmul.mubr.f32.gmra.mxu0 %v7506
  %v8487 = vpop.f32.mrf.mxu0
  %v8488 = vadd.f32 %v8103, %v8487
  %v8489 = vpop.f32.mrf.mxu0
  %8490 = vmatprep.mubr.f32.mxu0 %v7516
  %8491 = vmatmul.mubr.f32.gmra.mxu0 %v7515
  %v8492 = vpop.f32.mrf.mxu0
  %v8493 = vadd.f32 %v8108, %v8492
  %v8494 = vpop.f32.mrf.mxu0
  %8495 = vmatprep.mubr.f32.mxu0 %v7525
  %8496 = vmatmul.mubr.f32.gmra.mxu0 %v7524
  %v8497 = vpop.f32.mrf.mxu0
  %v8498 = vadd.f32 %v8113, %v8497
  %v8499 = vpop.f32.mrf.mxu0
  %8500 = vmatprep.mubr.f32.mxu0 %v7534
  %8501 = vmatmul.mubr.f32.gmra.mxu0 %v7533
  %v8502 = vpop.f32.mrf.mxu0
  %v8503 = vadd.f32 %v8118, %v8502
  %v8504 = vpop.f32.mrf.mxu0
  %8505 = vmatprep.mubr.f32.mxu0 %v7543
  %8506 = vmatmul.mubr.f32.gmra.mxu0 %v7542
  %v8507 = vpop.f32.mrf.mxu0
  %v8508 = vadd.f32 %v8123, %v8507
  %v8509 = vpop.f32.mrf.mxu0
  %8510 = vmatprep.mubr.f32.mxu0 %v7552
  %8511 = vmatmul.mubr.f32.gmra.mxu0 %v7551
  %v8512 = vpop.f32.mrf.mxu0
  %v8513 = vadd.f32 %v8128, %v8512
  %v8514 = vpop.f32.mrf.mxu0
  %8515 = vmatprep.mubr.f32.mxu0 %v7561
  %8516 = vmatmul.mubr.f32.gmra.mxu0 %v7560
  %v8517 = vpop.f32.mrf.mxu0
  %v8518 = vadd.f32 %v8133, %v8517
  %v8519 = vpop.f32.mrf.mxu0
  %8520 = vmatprep.mubr.f32.mxu0 %v7570
  %8521 = vmatmul.mubr.f32.gmra.mxu0 %v7569
  %v8522 = vpop.f32.mrf.mxu0
  %v8523 = vadd.f32 %v8138, %v8522
  %v8524 = vpop.f32.mrf.mxu0
  %8525 = vmatprep.mubr.f32.mxu0 %v7579
  %8526 = vmatmul.mubr.f32.gmra.mxu0 %v7578
  %v8527 = vpop.f32.mrf.mxu0
  %v8528 = vadd.f32 %v8143, %v8527
  %v8529 = vpop.f32.mrf.mxu0
  %8530 = vmatprep.mubr.f32.mxu0 %v7588
  %8531 = vmatmul.mubr.f32.gmra.mxu0 %v7587
  %v8532 = vpop.f32.mrf.mxu0
  %v8533 = vadd.f32 %v8148, %v8532
  %v8534 = vpop.f32.mrf.mxu0
  %8535 = vmatprep.mubr.f32.mxu0 %v7597
  %8536 = vmatmul.mubr.f32.gmra.mxu0 %v7596
  %v8537 = vpop.f32.mrf.mxu0
  %v8538 = vadd.f32 %v8153, %v8537
  %v8539 = vpop.f32.mrf.mxu0
  %8540 = vmatprep.mubr.f32.mxu0 %v7606
  %8541 = vmatmul.mubr.f32.gmra.mxu0 %v7605
  %v8542 = vpop.f32.mrf.mxu0
  %v8543 = vadd.f32 %v8158, %v8542
  %v8544 = vpop.f32.mrf.mxu0
  %8545 = vmatprep.mubr.f32.mxu0 %v7615
  %8546 = vmatmul.mubr.f32.gmra.mxu0 %v7614
  %v8547 = vpop.f32.mrf.mxu0
  %v8548 = vadd.f32 %v8163, %v8547
  %v8549 = vpop.f32.mrf.mxu0
  %8550 = vmatprep.mubr.f32.mxu0 %v7624
  %8551 = vmatmul.mubr.f32.gmra.mxu0 %v7623
  %v8552 = vpop.f32.mrf.mxu0
  %v8553 = vadd.f32 %v8168, %v8552
  %v8554 = vpop.f32.mrf.mxu0
  %8555 = vmatprep.mubr.f32.mxu0 %v7633
  %8556 = vmatmul.mubr.f32.gmra.mxu0 %v7632
  %v8557 = vpop.f32.mrf.mxu0
  %v8558 = vadd.f32 %v8173, %v8557
  %v8559 = vpop.f32.mrf.mxu0
  %8560 = vmatprep.mubr.f32.mxu0 %v7642
  %8561 = vmatmul.mubr.f32.gmra.mxu0 %v7641
  %v8562 = vpop.f32.mrf.mxu0
  %v8563 = vadd.f32 %v8178, %v8562
  %v8564 = vpop.f32.mrf.mxu0
  %8565 = vmatprep.mubr.f32.mxu0 %v7651
  %8566 = vmatmul.mubr.f32.gmra.mxu0 %v7650
  %v8567 = vpop.f32.mrf.mxu0
  %v8568 = vadd.f32 %v8183, %v8567
  %v8569 = vpop.f32.mrf.mxu0
  %8570 = vdwg.mxu0
  %8571 = vmatprep.subr.mxu0 0.0
  %8572 = vmatpush1.msra.mxu0 %v7736
  %8573 = vmatprep.subr.mxu0 0.0
  %8574 = vmatpush1.msra.mxu0 %v7735
  %8575 = vmatprep.subr.mxu0 0.0
  %8576 = vmatpush1.msra.mxu0 %v7734
  %8577 = vmatprep.subr.mxu0 0.0
  %8578 = vmatpush1.msra.mxu0 %v7733
  %8579 = vmatprep.subr.mxu0 0.0
  %8580 = vmatpush1.msra.mxu0 %v7732
  %8581 = vmatprep.subr.mxu0 0.0
  %8582 = vmatpush1.msra.mxu0 %v7731
  %8583 = vmatprep.subr.mxu0 0.0
  %8584 = vmatpush1.msra.mxu0 %v7730
  %8585 = vmatprep.subr.mxu0 0.0
  %8586 = vmatpush1.msra.mxu0 %v7729
  %8587 = vmatprep.subr.mxu0 0.0
  %8588 = vmatpush1.msra.mxu0 %v7728
  %8589 = vmatprep.subr.mxu0 0.0
  %8590 = vmatpush1.msra.mxu0 %v7727
  %8591 = vmatprep.subr.mxu0 0.0
  %8592 = vmatpush1.msra.mxu0 %v7726
  %8593 = vmatprep.subr.mxu0 0.0
  %8594 = vmatpush1.msra.mxu0 %v7725
  %8595 = vmatprep.subr.mxu0 0.0
  %8596 = vmatpush1.msra.mxu0 %v7724
  %8597 = vmatprep.subr.mxu0 0.0
  %8598 = vmatpush1.msra.mxu0 %v7723
  %8599 = vmatprep.subr.mxu0 0.0
  %8600 = vmatpush1.msra.mxu0 %v7722
  %8601 = vmatprep.subr.mxu0 0.0
  %8602 = vmatpush1.msra.mxu0 %v7721
  %8603 = vmatprep.subr.mxu0 0.0
  %8604 = vmatpush2.msra.mxu0 %v7752
  %8605 = vmatprep.subr.mxu0 0.0
  %8606 = vmatpush2.msra.mxu0 %v7751
  %8607 = vmatprep.subr.mxu0 0.0
  %8608 = vmatpush2.msra.mxu0 %v7750
  %8609 = vmatprep.subr.mxu0 0.0
  %8610 = vmatpush2.msra.mxu0 %v7749
  %8611 = vmatprep.subr.mxu0 0.0
  %8612 = vmatpush2.msra.mxu0 %v7748
  %8613 = vmatprep.subr.mxu0 0.0
  %8614 = vmatpush2.msra.mxu0 %v7747
  %8615 = vmatprep.subr.mxu0 0.0
  %8616 = vmatpush2.msra.mxu0 %v7746
  %8617 = vmatprep.subr.mxu0 0.0
  %8618 = vmatpush2.msra.mxu0 %v7745
  %8619 = vmatprep.subr.mxu0 0.0
  %8620 = vmatpush2.msra.mxu0 %v7744
  %8621 = vmatprep.subr.mxu0 0.0
  %8622 = vmatpush2.msra.mxu0 %v7743
  %8623 = vmatprep.subr.mxu0 0.0
  %8624 = vmatpush2.msra.mxu0 %v7742
  %8625 = vmatprep.subr.mxu0 0.0
  %8626 = vmatpush2.msra.mxu0 %v7741
  %8627 = vmatprep.subr.mxu0 0.0
  %8628 = vmatpush2.msra.mxu0 %v7740
  %8629 = vmatprep.subr.mxu0 0.0
  %8630 = vmatpush2.msra.mxu0 %v7739
  %8631 = vmatprep.subr.mxu0 0.0
  %8632 = vmatpush2.msra.mxu0 %v7738
  %8633 = vmatprep.subr.mxu0 0.0
  %8634 = vmatpush2.msra.mxu0 %v7737
  %8635 = vmatprep.mubr.f32.mxu0 %v7086
  %8636 = vmatmul.mubr.f32.gmra.mxu0 %v7085
  %v8637 = vpop.f32.mrf.mxu0
  %v8638 = vadd.f32 %v8253, %v8637
  %v8639 = vpop.f32.mrf.mxu0
  %8640 = vmatprep.mubr.f32.mxu0 %v7095
  %8641 = vmatmul.mubr.f32.gmra.mxu0 %v7094
  %v8642 = vpop.f32.mrf.mxu0
  %v8643 = vadd.f32 %v8258, %v8642
  %v8644 = vpop.f32.mrf.mxu0
  %8645 = vmatprep.mubr.f32.mxu0 %v7104
  %8646 = vmatmul.mubr.f32.gmra.mxu0 %v7103
  %v8647 = vpop.f32.mrf.mxu0
  %v8648 = vadd.f32 %v8263, %v8647
  %v8649 = vpop.f32.mrf.mxu0
  %8650 = vmatprep.mubr.f32.mxu0 %v7113
  %8651 = vmatmul.mubr.f32.gmra.mxu0 %v7112
  %v8652 = vpop.f32.mrf.mxu0
  %v8653 = vadd.f32 %v8268, %v8652
  %v8654 = vpop.f32.mrf.mxu0
  %8655 = vmatprep.mubr.f32.mxu0 %v7122
  %8656 = vmatmul.mubr.f32.gmra.mxu0 %v7121
  %v8657 = vpop.f32.mrf.mxu0
  %v8658 = vadd.f32 %v8273, %v8657
  %v8659 = vpop.f32.mrf.mxu0
  %8660 = vmatprep.mubr.f32.mxu0 %v7131
  %8661 = vmatmul.mubr.f32.gmra.mxu0 %v7130
  %v8662 = vpop.f32.mrf.mxu0
  %v8663 = vadd.f32 %v8278, %v8662
  %v8664 = vpop.f32.mrf.mxu0
  %8665 = vmatprep.mubr.f32.mxu0 %v7140
  %8666 = vmatmul.mubr.f32.gmra.mxu0 %v7139
  %v8667 = vpop.f32.mrf.mxu0
  %v8668 = vadd.f32 %v8283, %v8667
  %v8669 = vpop.f32.mrf.mxu0
  %8670 = vmatprep.mubr.f32.mxu0 %v7149
  %8671 = vmatmul.mubr.f32.gmra.mxu0 %v7148
  %v8672 = vpop.f32.mrf.mxu0
  %v8673 = vadd.f32 %v8288, %v8672
  %v8674 = vpop.f32.mrf.mxu0
  %8675 = vmatprep.mubr.f32.mxu0 %v7158
  %8676 = vmatmul.mubr.f32.gmra.mxu0 %v7157
  %v8677 = vpop.f32.mrf.mxu0
  %v8678 = vadd.f32 %v8293, %v8677
  %v8679 = vpop.f32.mrf.mxu0
  %8680 = vmatprep.mubr.f32.mxu0 %v7167
  %8681 = vmatmul.mubr.f32.gmra.mxu0 %v7166
  %v8682 = vpop.f32.mrf.mxu0
  %v8683 = vadd.f32 %v8298, %v8682
  %v8684 = vpop.f32.mrf.mxu0
  %8685 = vmatprep.mubr.f32.mxu0 %v7176
  %8686 = vmatmul.mubr.f32.gmra.mxu0 %v7175
  %v8687 = vpop.f32.mrf.mxu0
  %v8688 = vadd.f32 %v8303, %v8687
  %v8689 = vpop.f32.mrf.mxu0
  %8690 = vmatprep.mubr.f32.mxu0 %v7185
  %8691 = vmatmul.mubr.f32.gmra.mxu0 %v7184
  %v8692 = vpop.f32.mrf.mxu0
  %v8693 = vadd.f32 %v8308, %v8692
  %v8694 = vpop.f32.mrf.mxu0
  %8695 = vmatprep.mubr.f32.mxu0 %v7194
  %8696 = vmatmul.mubr.f32.gmra.mxu0 %v7193
  %v8697 = vpop.f32.mrf.mxu0
  %v8698 = vadd.f32 %v8313, %v8697
  %v8699 = vpop.f32.mrf.mxu0
  %8700 = vmatprep.mubr.f32.mxu0 %v7203
  %8701 = vmatmul.mubr.f32.gmra.mxu0 %v7202
  %v8702 = vpop.f32.mrf.mxu0
  %v8703 = vadd.f32 %v8318, %v8702
  %v8704 = vpop.f32.mrf.mxu0
  %8705 = vmatprep.mubr.f32.mxu0 %v7212
  %8706 = vmatmul.mubr.f32.gmra.mxu0 %v7211
  %v8707 = vpop.f32.mrf.mxu0
  %v8708 = vadd.f32 %v8323, %v8707
  %v8709 = vpop.f32.mrf.mxu0
  %8710 = vmatprep.mubr.f32.mxu0 %v7221
  %8711 = vmatmul.mubr.f32.gmra.mxu0 %v7220
  %v8712 = vpop.f32.mrf.mxu0
  %v8713 = vadd.f32 %v8328, %v8712
  %v8714 = vpop.f32.mrf.mxu0
  %8715 = vmatprep.mubr.f32.mxu0 %v7230
  %8716 = vmatmul.mubr.f32.gmra.mxu0 %v7229
  %v8717 = vpop.f32.mrf.mxu0
  %v8718 = vadd.f32 %v8333, %v8717
  %v8719 = vpop.f32.mrf.mxu0
  %8720 = vmatprep.mubr.f32.mxu0 %v7239
  %8721 = vmatmul.mubr.f32.gmra.mxu0 %v7238
  %v8722 = vpop.f32.mrf.mxu0
  %v8723 = vadd.f32 %v8338, %v8722
  %v8724 = vpop.f32.mrf.mxu0
  %8725 = vmatprep.mubr.f32.mxu0 %v7248
  %8726 = vmatmul.mubr.f32.gmra.mxu0 %v7247
  %v8727 = vpop.f32.mrf.mxu0
  %v8728 = vadd.f32 %v8343, %v8727
  %v8729 = vpop.f32.mrf.mxu0
  %8730 = vmatprep.mubr.f32.mxu0 %v7257
  %8731 = vmatmul.mubr.f32.gmra.mxu0 %v7256
  %v8732 = vpop.f32.mrf.mxu0
  %v8733 = vadd.f32 %v8348, %v8732
  %v8734 = vpop.f32.mrf.mxu0
  %8735 = vmatprep.mubr.f32.mxu0 %v7266
  %8736 = vmatmul.mubr.f32.gmra.mxu0 %v7265
  %v8737 = vpop.f32.mrf.mxu0
  %v8738 = vadd.f32 %v8353, %v8737
  %v8739 = vpop.f32.mrf.mxu0
  %8740 = vmatprep.mubr.f32.mxu0 %v7275
  %8741 = vmatmul.mubr.f32.gmra.mxu0 %v7274
  %v8742 = vpop.f32.mrf.mxu0
  %v8743 = vadd.f32 %v8358, %v8742
  %v8744 = vpop.f32.mrf.mxu0
  %8745 = vmatprep.mubr.f32.mxu0 %v7284
  %8746 = vmatmul.mubr.f32.gmra.mxu0 %v7283
  %v8747 = vpop.f32.mrf.mxu0
  %v8748 = vadd.f32 %v8363, %v8747
  %v8749 = vpop.f32.mrf.mxu0
  %8750 = vmatprep.mubr.f32.mxu0 %v7293
  %8751 = vmatmul.mubr.f32.gmra.mxu0 %v7292
  %v8752 = vpop.f32.mrf.mxu0
  %v8753 = vadd.f32 %v8368, %v8752
  %v8754 = vpop.f32.mrf.mxu0
  %8755 = vmatprep.mubr.f32.mxu0 %v7302
  %8756 = vmatmul.mubr.f32.gmra.mxu0 %v7301
  %v8757 = vpop.f32.mrf.mxu0
  %v8758 = vadd.f32 %v8373, %v8757
  %v8759 = vpop.f32.mrf.mxu0
  %8760 = vmatprep.mubr.f32.mxu0 %v7311
  %8761 = vmatmul.mubr.f32.gmra.mxu0 %v7310
  %v8762 = vpop.f32.mrf.mxu0
  %v8763 = vadd.f32 %v8378, %v8762
  %v8764 = vpop.f32.mrf.mxu0
  %8765 = vmatprep.mubr.f32.mxu0 %v7320
  %8766 = vmatmul.mubr.f32.gmra.mxu0 %v7319
  %v8767 = vpop.f32.mrf.mxu0
  %v8768 = vadd.f32 %v8383, %v8767
  %v8769 = vpop.f32.mrf.mxu0
  %8770 = vmatprep.mubr.f32.mxu0 %v7329
  %8771 = vmatmul.mubr.f32.gmra.mxu0 %v7328
  %v8772 = vpop.f32.mrf.mxu0
  %v8773 = vadd.f32 %v8388, %v8772
  %v8774 = vpop.f32.mrf.mxu0
  %8775 = vmatprep.mubr.f32.mxu0 %v7338
  %8776 = vmatmul.mubr.f32.gmra.mxu0 %v7337
  %v8777 = vpop.f32.mrf.mxu0
  %v8778 = vadd.f32 %v8393, %v8777
  %v8779 = vpop.f32.mrf.mxu0
  %8780 = vmatprep.mubr.f32.mxu0 %v7347
  %8781 = vmatmul.mubr.f32.gmra.mxu0 %v7346
  %v8782 = vpop.f32.mrf.mxu0
  %v8783 = vadd.f32 %v8398, %v8782
  %v8784 = vpop.f32.mrf.mxu0
  %8785 = vmatprep.mubr.f32.mxu0 %v7356
  %8786 = vmatmul.mubr.f32.gmra.mxu0 %v7355
  %v8787 = vpop.f32.mrf.mxu0
  %v8788 = vadd.f32 %v8403, %v8787
  %v8789 = vpop.f32.mrf.mxu0
  %8790 = vmatprep.mubr.f32.mxu0 %v7365
  %8791 = vmatmul.mubr.f32.gmra.mxu0 %v7364
  %v8792 = vpop.f32.mrf.mxu0
  %v8793 = vadd.f32 %v8408, %v8792
  %v8794 = vpop.f32.mrf.mxu0
  %8795 = vmatprep.mubr.f32.mxu0 %v7374
  %8796 = vmatmul.mubr.f32.gmra.mxu0 %v7373
  %v8797 = vpop.f32.mrf.mxu0
  %v8798 = vadd.f32 %v8413, %v8797
  %v8799 = vpop.f32.mrf.mxu0
  %8800 = vmatprep.mubr.f32.mxu0 %v7383
  %8801 = vmatmul.mubr.f32.gmra.mxu0 %v7382
  %v8802 = vpop.f32.mrf.mxu0
  %v8803 = vadd.f32 %v8418, %v8802
  %v8804 = vpop.f32.mrf.mxu0
  %8805 = vmatprep.mubr.f32.mxu0 %v7392
  %8806 = vmatmul.mubr.f32.gmra.mxu0 %v7391
  %v8807 = vpop.f32.mrf.mxu0
  %v8808 = vadd.f32 %v8423, %v8807
  %v8809 = vpop.f32.mrf.mxu0
  %8810 = vmatprep.mubr.f32.mxu0 %v7401
  %8811 = vmatmul.mubr.f32.gmra.mxu0 %v7400
  %v8812 = vpop.f32.mrf.mxu0
  %v8813 = vadd.f32 %v8428, %v8812
  %v8814 = vpop.f32.mrf.mxu0
  %8815 = vmatprep.mubr.f32.mxu0 %v7410
  %8816 = vmatmul.mubr.f32.gmra.mxu0 %v7409
  %v8817 = vpop.f32.mrf.mxu0
  %v8818 = vadd.f32 %v8433, %v8817
  %v8819 = vpop.f32.mrf.mxu0
  %8820 = vmatprep.mubr.f32.mxu0 %v7419
  %8821 = vmatmul.mubr.f32.gmra.mxu0 %v7418
  %v8822 = vpop.f32.mrf.mxu0
  %v8823 = vadd.f32 %v8438, %v8822
  %v8824 = vpop.f32.mrf.mxu0
  %8825 = vmatprep.mubr.f32.mxu0 %v7428
  %8826 = vmatmul.mubr.f32.gmra.mxu0 %v7427
  %v8827 = vpop.f32.mrf.mxu0
  %v8828 = vadd.f32 %v8443, %v8827
  %v8829 = vpop.f32.mrf.mxu0
  %8830 = vmatprep.mubr.f32.mxu0 %v7437
  %8831 = vmatmul.mubr.f32.gmra.mxu0 %v7436
  %v8832 = vpop.f32.mrf.mxu0
  %v8833 = vadd.f32 %v8448, %v8832
  %v8834 = vpop.f32.mrf.mxu0
  %8835 = vmatprep.mubr.f32.mxu0 %v7446
  %8836 = vmatmul.mubr.f32.gmra.mxu0 %v7445
  %v8837 = vpop.f32.mrf.mxu0
  %v8838 = vadd.f32 %v8453, %v8837
  %v8839 = vpop.f32.mrf.mxu0
  %8840 = vmatprep.mubr.f32.mxu0 %v7455
  %8841 = vmatmul.mubr.f32.gmra.mxu0 %v7454
  %v8842 = vpop.f32.mrf.mxu0
  %v8843 = vadd.f32 %v8458, %v8842
  %v8844 = vpop.f32.mrf.mxu0
  %8845 = vmatprep.mubr.f32.mxu0 %v7464
  %8846 = vmatmul.mubr.f32.gmra.mxu0 %v7463
  %v8847 = vpop.f32.mrf.mxu0
  %v8848 = vadd.f32 %v8463, %v8847
  %v8849 = vpop.f32.mrf.mxu0
  %8850 = vmatprep.mubr.f32.mxu0 %v7473
  %8851 = vmatmul.mubr.f32.gmra.mxu0 %v7472
  %v8852 = vpop.f32.mrf.mxu0
  %v8853 = vadd.f32 %v8468, %v8852
  %v8854 = vpop.f32.mrf.mxu0
  %8855 = vmatprep.mubr.f32.mxu0 %v7482
  %8856 = vmatmul.mubr.f32.gmra.mxu0 %v7481
  %v8857 = vpop.f32.mrf.mxu0
  %v8858 = vadd.f32 %v8473, %v8857
  %v8859 = vpop.f32.mrf.mxu0
  %8860 = vmatprep.mubr.f32.mxu0 %v7491
  %8861 = vmatmul.mubr.f32.gmra.mxu0 %v7490
  %v8862 = vpop.f32.mrf.mxu0
  %v8863 = vadd.f32 %v8478, %v8862
  %v8864 = vpop.f32.mrf.mxu0
  %8865 = vmatprep.mubr.f32.mxu0 %v7500
  %8866 = vmatmul.mubr.f32.gmra.mxu0 %v7499
  %v8867 = vpop.f32.mrf.mxu0
  %v8868 = vadd.f32 %v8483, %v8867
  %v8869 = vpop.f32.mrf.mxu0
  %8870 = vmatprep.mubr.f32.mxu0 %v7509
  %8871 = vmatmul.mubr.f32.gmra.mxu0 %v7508
  %v8872 = vpop.f32.mrf.mxu0
  %v8873 = vadd.f32 %v8488, %v8872
  %v8874 = vpop.f32.mrf.mxu0
  %8875 = vmatprep.mubr.f32.mxu0 %v7518
  %8876 = vmatmul.mubr.f32.gmra.mxu0 %v7517
  %v8877 = vpop.f32.mrf.mxu0
  %v8878 = vadd.f32 %v8493, %v8877
  %v8879 = vpop.f32.mrf.mxu0
  %8880 = vmatprep.mubr.f32.mxu0 %v7527
  %8881 = vmatmul.mubr.f32.gmra.mxu0 %v7526
  %v8882 = vpop.f32.mrf.mxu0
  %v8883 = vadd.f32 %v8498, %v8882
  %v8884 = vpop.f32.mrf.mxu0
  %8885 = vmatprep.mubr.f32.mxu0 %v7536
  %8886 = vmatmul.mubr.f32.gmra.mxu0 %v7535
  %v8887 = vpop.f32.mrf.mxu0
  %v8888 = vadd.f32 %v8503, %v8887
  %v8889 = vpop.f32.mrf.mxu0
  %8890 = vmatprep.mubr.f32.mxu0 %v7545
  %8891 = vmatmul.mubr.f32.gmra.mxu0 %v7544
  %v8892 = vpop.f32.mrf.mxu0
  %v8893 = vadd.f32 %v8508, %v8892
  %v8894 = vpop.f32.mrf.mxu0
  %8895 = vmatprep.mubr.f32.mxu0 %v7554
  %8896 = vmatmul.mubr.f32.gmra.mxu0 %v7553
  %v8897 = vpop.f32.mrf.mxu0
  %v8898 = vadd.f32 %v8513, %v8897
  %v8899 = vpop.f32.mrf.mxu0
  %8900 = vmatprep.mubr.f32.mxu0 %v7563
  %8901 = vmatmul.mubr.f32.gmra.mxu0 %v7562
  %v8902 = vpop.f32.mrf.mxu0
  %v8903 = vadd.f32 %v8518, %v8902
  %v8904 = vpop.f32.mrf.mxu0
  %8905 = vmatprep.mubr.f32.mxu0 %v7572
  %8906 = vmatmul.mubr.f32.gmra.mxu0 %v7571
  %v8907 = vpop.f32.mrf.mxu0
  %v8908 = vadd.f32 %v8523, %v8907
  %v8909 = vpop.f32.mrf.mxu0
  %8910 = vmatprep.mubr.f32.mxu0 %v7581
  %8911 = vmatmul.mubr.f32.gmra.mxu0 %v7580
  %v8912 = vpop.f32.mrf.mxu0
  %v8913 = vadd.f32 %v8528, %v8912
  %v8914 = vpop.f32.mrf.mxu0
  %8915 = vmatprep.mubr.f32.mxu0 %v7590
  %8916 = vmatmul.mubr.f32.gmra.mxu0 %v7589
  %v8917 = vpop.f32.mrf.mxu0
  %v8918 = vadd.f32 %v8533, %v8917
  %v8919 = vpop.f32.mrf.mxu0
  %8920 = vmatprep.mubr.f32.mxu0 %v7599
  %8921 = vmatmul.mubr.f32.gmra.mxu0 %v7598
  %v8922 = vpop.f32.mrf.mxu0
  %v8923 = vadd.f32 %v8538, %v8922
  %v8924 = vpop.f32.mrf.mxu0
  %8925 = vmatprep.mubr.f32.mxu0 %v7608
  %8926 = vmatmul.mubr.f32.gmra.mxu0 %v7607
  %v8927 = vpop.f32.mrf.mxu0
  %v8928 = vadd.f32 %v8543, %v8927
  %v8929 = vpop.f32.mrf.mxu0
  %8930 = vmatprep.mubr.f32.mxu0 %v7617
  %8931 = vmatmul.mubr.f32.gmra.mxu0 %v7616
  %v8932 = vpop.f32.mrf.mxu0
  %v8933 = vadd.f32 %v8548, %v8932
  %v8934 = vpop.f32.mrf.mxu0
  %8935 = vmatprep.mubr.f32.mxu0 %v7626
  %8936 = vmatmul.mubr.f32.gmra.mxu0 %v7625
  %v8937 = vpop.f32.mrf.mxu0
  %v8938 = vadd.f32 %v8553, %v8937
  %v8939 = vpop.f32.mrf.mxu0
  %8940 = vmatprep.mubr.f32.mxu0 %v7635
  %8941 = vmatmul.mubr.f32.gmra.mxu0 %v7634
  %v8942 = vpop.f32.mrf.mxu0
  %v8943 = vadd.f32 %v8558, %v8942
  %v8944 = vpop.f32.mrf.mxu0
  %8945 = vmatprep.mubr.f32.mxu0 %v7644
  %8946 = vmatmul.mubr.f32.gmra.mxu0 %v7643
  %v8947 = vpop.f32.mrf.mxu0
  %v8948 = vadd.f32 %v8563, %v8947
  %v8949 = vpop.f32.mrf.mxu0
  %8950 = vmatprep.mubr.f32.mxu0 %v7653
  %8951 = vmatmul.mubr.f32.gmra.mxu0 %v7652
  %v8952 = vpop.f32.mrf.mxu0
  %v8953 = vadd.f32 %v8568, %v8952
  %v8954 = vpop.f32.mrf.mxu0
  %8955 = vdwg.mxu0
  %8956 = vmatprep.subr.mxu0 0.0
  %8957 = vmatpush1.msra.mxu0 %v7768
  %8958 = vmatprep.subr.mxu0 0.0
  %8959 = vmatpush1.msra.mxu0 %v7767
  %8960 = vmatprep.subr.mxu0 0.0
  %8961 = vmatpush1.msra.mxu0 %v7766
  %8962 = vmatprep.subr.mxu0 0.0
  %8963 = vmatpush1.msra.mxu0 %v7765
  %8964 = vmatprep.subr.mxu0 0.0
  %8965 = vmatpush1.msra.mxu0 %v7764
  %8966 = vmatprep.subr.mxu0 0.0
  %8967 = vmatpush1.msra.mxu0 %v7763
  %8968 = vmatprep.subr.mxu0 0.0
  %8969 = vmatpush1.msra.mxu0 %v7762
  %8970 = vmatprep.subr.mxu0 0.0
  %8971 = vmatpush1.msra.mxu0 %v7761
  %8972 = vmatprep.subr.mxu0 0.0
  %8973 = vmatpush1.msra.mxu0 %v7760
  %8974 = vmatprep.subr.mxu0 0.0
  %8975 = vmatpush1.msra.mxu0 %v7759
  %8976 = vmatprep.subr.mxu0 0.0
  %8977 = vmatpush1.msra.mxu0 %v7758
  %8978 = vmatprep.subr.mxu0 0.0
  %8979 = vmatpush1.msra.mxu0 %v7757
  %8980 = vmatprep.subr.mxu0 0.0
  %8981 = vmatpush1.msra.mxu0 %v7756
  %8982 = vmatprep.subr.mxu0 0.0
  %8983 = vmatpush1.msra.mxu0 %v7755
  %8984 = vmatprep.subr.mxu0 0.0
  %8985 = vmatpush1.msra.mxu0 %v7754
  %8986 = vmatprep.subr.mxu0 0.0
  %8987 = vmatpush1.msra.mxu0 %v7753
  %8988 = vmatprep.subr.mxu0 0.0
  %8989 = vmatpush2.msra.mxu0 %v7784
  %8990 = vmatprep.subr.mxu0 0.0
  %8991 = vmatpush2.msra.mxu0 %v7783
  %8992 = vmatprep.subr.mxu0 0.0
  %8993 = vmatpush2.msra.mxu0 %v7782
  %8994 = vmatprep.subr.mxu0 0.0
  %8995 = vmatpush2.msra.mxu0 %v7781
  %8996 = vmatprep.subr.mxu0 0.0
  %8997 = vmatpush2.msra.mxu0 %v7780
  %8998 = vmatprep.subr.mxu0 0.0
  %8999 = vmatpush2.msra.mxu0 %v7779
  %9000 = vmatprep.subr.mxu0 0.0
  %9001 = vmatpush2.msra.mxu0 %v7778
  %9002 = vmatprep.subr.mxu0 0.0
  %9003 = vmatpush2.msra.mxu0 %v7777
  %9004 = vmatprep.subr.mxu0 0.0
  %9005 = vmatpush2.msra.mxu0 %v7776
  %9006 = vmatprep.subr.mxu0 0.0
  %9007 = vmatpush2.msra.mxu0 %v7775
  %9008 = vmatprep.subr.mxu0 0.0
  %9009 = vmatpush2.msra.mxu0 %v7774
  %9010 = vmatprep.subr.mxu0 0.0
  %9011 = vmatpush2.msra.mxu0 %v7773
  %9012 = vmatprep.subr.mxu0 0.0
  %9013 = vmatpush2.msra.mxu0 %v7772
  %9014 = vmatprep.subr.mxu0 0.0
  %9015 = vmatpush2.msra.mxu0 %v7771
  %9016 = vmatprep.subr.mxu0 0.0
  %9017 = vmatpush2.msra.mxu0 %v7770
  %9018 = vmatprep.subr.mxu0 0.0
  %9019 = vmatpush2.msra.mxu0 %v7769
  %9020 = vmatprep.mubr.f32.mxu0 %v7088
  %9021 = vmatmul.mubr.f32.gmra.mxu0 %v7087
  %v9022 = vpop.f32.mrf.mxu0
  %v9023 = vadd.f32 %v8638, %v9022
  %v9024 = vpop.f32.mrf.mxu0
  %9025 = vmatprep.mubr.f32.mxu0 %v7097
  %9026 = vmatmul.mubr.f32.gmra.mxu0 %v7096
  %v9027 = vpop.f32.mrf.mxu0
  %v9028 = vadd.f32 %v8643, %v9027
  %v9029 = vpop.f32.mrf.mxu0
  %9030 = vmatprep.mubr.f32.mxu0 %v7106
  %9031 = vmatmul.mubr.f32.gmra.mxu0 %v7105
  %v9032 = vpop.f32.mrf.mxu0
  %v9033 = vadd.f32 %v8648, %v9032
  %v9034 = vpop.f32.mrf.mxu0
  %9035 = vmatprep.mubr.f32.mxu0 %v7115
  %9036 = vmatmul.mubr.f32.gmra.mxu0 %v7114
  %v9037 = vpop.f32.mrf.mxu0
  %v9038 = vadd.f32 %v8653, %v9037
  %v9039 = vpop.f32.mrf.mxu0
  %9040 = vmatprep.mubr.f32.mxu0 %v7124
  %9041 = vmatmul.mubr.f32.gmra.mxu0 %v7123
  %v9042 = vpop.f32.mrf.mxu0
  %v9043 = vadd.f32 %v8658, %v9042
  %v9044 = vpop.f32.mrf.mxu0
  %9045 = vmatprep.mubr.f32.mxu0 %v7133
  %9046 = vmatmul.mubr.f32.gmra.mxu0 %v7132
  %v9047 = vpop.f32.mrf.mxu0
  %v9048 = vadd.f32 %v8663, %v9047
  %v9049 = vpop.f32.mrf.mxu0
  %9050 = vmatprep.mubr.f32.mxu0 %v7142
  %9051 = vmatmul.mubr.f32.gmra.mxu0 %v7141
  %v9052 = vpop.f32.mrf.mxu0
  %v9053 = vadd.f32 %v8668, %v9052
  %v9054 = vpop.f32.mrf.mxu0
  %9055 = vmatprep.mubr.f32.mxu0 %v7151
  %9056 = vmatmul.mubr.f32.gmra.mxu0 %v7150
  %v9057 = vpop.f32.mrf.mxu0
  %v9058 = vadd.f32 %v8673, %v9057
  %v9059 = vpop.f32.mrf.mxu0
  %9060 = vmatprep.mubr.f32.mxu0 %v7160
  %9061 = vmatmul.mubr.f32.gmra.mxu0 %v7159
  %v9062 = vpop.f32.mrf.mxu0
  %v9063 = vadd.f32 %v8678, %v9062
  %v9064 = vpop.f32.mrf.mxu0
  %9065 = vmatprep.mubr.f32.mxu0 %v7169
  %9066 = vmatmul.mubr.f32.gmra.mxu0 %v7168
  %v9067 = vpop.f32.mrf.mxu0
  %v9068 = vadd.f32 %v8683, %v9067
  %v9069 = vpop.f32.mrf.mxu0
  %9070 = vmatprep.mubr.f32.mxu0 %v7178
  %9071 = vmatmul.mubr.f32.gmra.mxu0 %v7177
  %v9072 = vpop.f32.mrf.mxu0
  %v9073 = vadd.f32 %v8688, %v9072
  %v9074 = vpop.f32.mrf.mxu0
  %9075 = vmatprep.mubr.f32.mxu0 %v7187
  %9076 = vmatmul.mubr.f32.gmra.mxu0 %v7186
  %v9077 = vpop.f32.mrf.mxu0
  %v9078 = vadd.f32 %v8693, %v9077
  %v9079 = vpop.f32.mrf.mxu0
  %9080 = vmatprep.mubr.f32.mxu0 %v7196
  %9081 = vmatmul.mubr.f32.gmra.mxu0 %v7195
  %v9082 = vpop.f32.mrf.mxu0
  %v9083 = vadd.f32 %v8698, %v9082
  %v9084 = vpop.f32.mrf.mxu0
  %9085 = vmatprep.mubr.f32.mxu0 %v7205
  %9086 = vmatmul.mubr.f32.gmra.mxu0 %v7204
  %v9087 = vpop.f32.mrf.mxu0
  %v9088 = vadd.f32 %v8703, %v9087
  %v9089 = vpop.f32.mrf.mxu0
  %9090 = vmatprep.mubr.f32.mxu0 %v7214
  %9091 = vmatmul.mubr.f32.gmra.mxu0 %v7213
  %v9092 = vpop.f32.mrf.mxu0
  %v9093 = vadd.f32 %v8708, %v9092
  %v9094 = vpop.f32.mrf.mxu0
  %9095 = vmatprep.mubr.f32.mxu0 %v7223
  %9096 = vmatmul.mubr.f32.gmra.mxu0 %v7222
  %v9097 = vpop.f32.mrf.mxu0
  %v9098 = vadd.f32 %v8713, %v9097
  %v9099 = vpop.f32.mrf.mxu0
  %9100 = vmatprep.mubr.f32.mxu0 %v7232
  %9101 = vmatmul.mubr.f32.gmra.mxu0 %v7231
  %v9102 = vpop.f32.mrf.mxu0
  %v9103 = vadd.f32 %v8718, %v9102
  %v9104 = vpop.f32.mrf.mxu0
  %9105 = vmatprep.mubr.f32.mxu0 %v7241
  %9106 = vmatmul.mubr.f32.gmra.mxu0 %v7240
  %v9107 = vpop.f32.mrf.mxu0
  %v9108 = vadd.f32 %v8723, %v9107
  %v9109 = vpop.f32.mrf.mxu0
  %9110 = vmatprep.mubr.f32.mxu0 %v7250
  %9111 = vmatmul.mubr.f32.gmra.mxu0 %v7249
  %v9112 = vpop.f32.mrf.mxu0
  %v9113 = vadd.f32 %v8728, %v9112
  %v9114 = vpop.f32.mrf.mxu0
  %9115 = vmatprep.mubr.f32.mxu0 %v7259
  %9116 = vmatmul.mubr.f32.gmra.mxu0 %v7258
  %v9117 = vpop.f32.mrf.mxu0
  %v9118 = vadd.f32 %v8733, %v9117
  %v9119 = vpop.f32.mrf.mxu0
  %9120 = vmatprep.mubr.f32.mxu0 %v7268
  %9121 = vmatmul.mubr.f32.gmra.mxu0 %v7267
  %v9122 = vpop.f32.mrf.mxu0
  %v9123 = vadd.f32 %v8738, %v9122
  %v9124 = vpop.f32.mrf.mxu0
  %9125 = vmatprep.mubr.f32.mxu0 %v7277
  %9126 = vmatmul.mubr.f32.gmra.mxu0 %v7276
  %v9127 = vpop.f32.mrf.mxu0
  %v9128 = vadd.f32 %v8743, %v9127
  %v9129 = vpop.f32.mrf.mxu0
  %9130 = vmatprep.mubr.f32.mxu0 %v7286
  %9131 = vmatmul.mubr.f32.gmra.mxu0 %v7285
  %v9132 = vpop.f32.mrf.mxu0
  %v9133 = vadd.f32 %v8748, %v9132
  %v9134 = vpop.f32.mrf.mxu0
  %9135 = vmatprep.mubr.f32.mxu0 %v7295
  %9136 = vmatmul.mubr.f32.gmra.mxu0 %v7294
  %v9137 = vpop.f32.mrf.mxu0
  %v9138 = vadd.f32 %v8753, %v9137
  %v9139 = vpop.f32.mrf.mxu0
  %9140 = vmatprep.mubr.f32.mxu0 %v7304
  %9141 = vmatmul.mubr.f32.gmra.mxu0 %v7303
  %v9142 = vpop.f32.mrf.mxu0
  %v9143 = vadd.f32 %v8758, %v9142
  %v9144 = vpop.f32.mrf.mxu0
  %9145 = vmatprep.mubr.f32.mxu0 %v7313
  %9146 = vmatmul.mubr.f32.gmra.mxu0 %v7312
  %v9147 = vpop.f32.mrf.mxu0
  %v9148 = vadd.f32 %v8763, %v9147
  %v9149 = vpop.f32.mrf.mxu0
  %9150 = vmatprep.mubr.f32.mxu0 %v7322
  %9151 = vmatmul.mubr.f32.gmra.mxu0 %v7321
  %v9152 = vpop.f32.mrf.mxu0
  %v9153 = vadd.f32 %v8768, %v9152
  %v9154 = vpop.f32.mrf.mxu0
  %9155 = vmatprep.mubr.f32.mxu0 %v7331
  %9156 = vmatmul.mubr.f32.gmra.mxu0 %v7330
  %v9157 = vpop.f32.mrf.mxu0
  %v9158 = vadd.f32 %v8773, %v9157
  %v9159 = vpop.f32.mrf.mxu0
  %9160 = vmatprep.mubr.f32.mxu0 %v7340
  %9161 = vmatmul.mubr.f32.gmra.mxu0 %v7339
  %v9162 = vpop.f32.mrf.mxu0
  %v9163 = vadd.f32 %v8778, %v9162
  %v9164 = vpop.f32.mrf.mxu0
  %9165 = vmatprep.mubr.f32.mxu0 %v7349
  %9166 = vmatmul.mubr.f32.gmra.mxu0 %v7348
  %v9167 = vpop.f32.mrf.mxu0
  %v9168 = vadd.f32 %v8783, %v9167
  %v9169 = vpop.f32.mrf.mxu0
  %9170 = vmatprep.mubr.f32.mxu0 %v7358
  %9171 = vmatmul.mubr.f32.gmra.mxu0 %v7357
  %v9172 = vpop.f32.mrf.mxu0
  %v9173 = vadd.f32 %v8788, %v9172
  %v9174 = vpop.f32.mrf.mxu0
  %9175 = vmatprep.mubr.f32.mxu0 %v7367
  %9176 = vmatmul.mubr.f32.gmra.mxu0 %v7366
  %v9177 = vpop.f32.mrf.mxu0
  %v9178 = vadd.f32 %v8793, %v9177
  %v9179 = vpop.f32.mrf.mxu0
  %9180 = vmatprep.mubr.f32.mxu0 %v7376
  %9181 = vmatmul.mubr.f32.gmra.mxu0 %v7375
  %v9182 = vpop.f32.mrf.mxu0
  %v9183 = vadd.f32 %v8798, %v9182
  %v9184 = vpop.f32.mrf.mxu0
  %9185 = vmatprep.mubr.f32.mxu0 %v7385
  %9186 = vmatmul.mubr.f32.gmra.mxu0 %v7384
  %v9187 = vpop.f32.mrf.mxu0
  %v9188 = vadd.f32 %v8803, %v9187
  %v9189 = vpop.f32.mrf.mxu0
  %9190 = vmatprep.mubr.f32.mxu0 %v7394
  %9191 = vmatmul.mubr.f32.gmra.mxu0 %v7393
  %v9192 = vpop.f32.mrf.mxu0
  %v9193 = vadd.f32 %v8808, %v9192
  %v9194 = vpop.f32.mrf.mxu0
  %9195 = vmatprep.mubr.f32.mxu0 %v7403
  %9196 = vmatmul.mubr.f32.gmra.mxu0 %v7402
  %v9197 = vpop.f32.mrf.mxu0
  %v9198 = vadd.f32 %v8813, %v9197
  %v9199 = vpop.f32.mrf.mxu0
  %9200 = vmatprep.mubr.f32.mxu0 %v7412
  %9201 = vmatmul.mubr.f32.gmra.mxu0 %v7411
  %v9202 = vpop.f32.mrf.mxu0
  %v9203 = vadd.f32 %v8818, %v9202
  %v9204 = vpop.f32.mrf.mxu0
  %9205 = vmatprep.mubr.f32.mxu0 %v7421
  %9206 = vmatmul.mubr.f32.gmra.mxu0 %v7420
  %v9207 = vpop.f32.mrf.mxu0
  %v9208 = vadd.f32 %v8823, %v9207
  %v9209 = vpop.f32.mrf.mxu0
  %9210 = vmatprep.mubr.f32.mxu0 %v7430
  %9211 = vmatmul.mubr.f32.gmra.mxu0 %v7429
  %v9212 = vpop.f32.mrf.mxu0
  %v9213 = vadd.f32 %v8828, %v9212
  %v9214 = vpop.f32.mrf.mxu0
  %9215 = vmatprep.mubr.f32.mxu0 %v7439
  %9216 = vmatmul.mubr.f32.gmra.mxu0 %v7438
  %v9217 = vpop.f32.mrf.mxu0
  %v9218 = vadd.f32 %v8833, %v9217
  %v9219 = vpop.f32.mrf.mxu0
  %9220 = vmatprep.mubr.f32.mxu0 %v7448
  %9221 = vmatmul.mubr.f32.gmra.mxu0 %v7447
  %v9222 = vpop.f32.mrf.mxu0
  %v9223 = vadd.f32 %v8838, %v9222
  %v9224 = vpop.f32.mrf.mxu0
  %9225 = vmatprep.mubr.f32.mxu0 %v7457
  %9226 = vmatmul.mubr.f32.gmra.mxu0 %v7456
  %v9227 = vpop.f32.mrf.mxu0
  %v9228 = vadd.f32 %v8843, %v9227
  %v9229 = vpop.f32.mrf.mxu0
  %9230 = vmatprep.mubr.f32.mxu0 %v7466
  %9231 = vmatmul.mubr.f32.gmra.mxu0 %v7465
  %v9232 = vpop.f32.mrf.mxu0
  %v9233 = vadd.f32 %v8848, %v9232
  %v9234 = vpop.f32.mrf.mxu0
  %9235 = vmatprep.mubr.f32.mxu0 %v7475
  %9236 = vmatmul.mubr.f32.gmra.mxu0 %v7474
  %v9237 = vpop.f32.mrf.mxu0
  %v9238 = vadd.f32 %v8853, %v9237
  %v9239 = vpop.f32.mrf.mxu0
  %9240 = vmatprep.mubr.f32.mxu0 %v7484
  %9241 = vmatmul.mubr.f32.gmra.mxu0 %v7483
  %v9242 = vpop.f32.mrf.mxu0
  %v9243 = vadd.f32 %v8858, %v9242
  %v9244 = vpop.f32.mrf.mxu0
  %9245 = vmatprep.mubr.f32.mxu0 %v7493
  %9246 = vmatmul.mubr.f32.gmra.mxu0 %v7492
  %v9247 = vpop.f32.mrf.mxu0
  %v9248 = vadd.f32 %v8863, %v9247
  %v9249 = vpop.f32.mrf.mxu0
  %9250 = vmatprep.mubr.f32.mxu0 %v7502
  %9251 = vmatmul.mubr.f32.gmra.mxu0 %v7501
  %v9252 = vpop.f32.mrf.mxu0
  %v9253 = vadd.f32 %v8868, %v9252
  %v9254 = vpop.f32.mrf.mxu0
  %9255 = vmatprep.mubr.f32.mxu0 %v7511
  %9256 = vmatmul.mubr.f32.gmra.mxu0 %v7510
  %v9257 = vpop.f32.mrf.mxu0
  %v9258 = vadd.f32 %v8873, %v9257
  %v9259 = vpop.f32.mrf.mxu0
  %9260 = vmatprep.mubr.f32.mxu0 %v7520
  %9261 = vmatmul.mubr.f32.gmra.mxu0 %v7519
  %v9262 = vpop.f32.mrf.mxu0
  %v9263 = vadd.f32 %v8878, %v9262
  %v9264 = vpop.f32.mrf.mxu0
  %9265 = vmatprep.mubr.f32.mxu0 %v7529
  %9266 = vmatmul.mubr.f32.gmra.mxu0 %v7528
  %v9267 = vpop.f32.mrf.mxu0
  %v9268 = vadd.f32 %v8883, %v9267
  %v9269 = vpop.f32.mrf.mxu0
  %9270 = vmatprep.mubr.f32.mxu0 %v7538
  %9271 = vmatmul.mubr.f32.gmra.mxu0 %v7537
  %v9272 = vpop.f32.mrf.mxu0
  %v9273 = vadd.f32 %v8888, %v9272
  %v9274 = vpop.f32.mrf.mxu0
  %9275 = vmatprep.mubr.f32.mxu0 %v7547
  %9276 = vmatmul.mubr.f32.gmra.mxu0 %v7546
  %v9277 = vpop.f32.mrf.mxu0
  %v9278 = vadd.f32 %v8893, %v9277
  %v9279 = vpop.f32.mrf.mxu0
  %9280 = vmatprep.mubr.f32.mxu0 %v7556
  %9281 = vmatmul.mubr.f32.gmra.mxu0 %v7555
  %v9282 = vpop.f32.mrf.mxu0
  %v9283 = vadd.f32 %v8898, %v9282
  %v9284 = vpop.f32.mrf.mxu0
  %9285 = vmatprep.mubr.f32.mxu0 %v7565
  %9286 = vmatmul.mubr.f32.gmra.mxu0 %v7564
  %v9287 = vpop.f32.mrf.mxu0
  %v9288 = vadd.f32 %v8903, %v9287
  %v9289 = vpop.f32.mrf.mxu0
  %9290 = vmatprep.mubr.f32.mxu0 %v7574
  %9291 = vmatmul.mubr.f32.gmra.mxu0 %v7573
  %v9292 = vpop.f32.mrf.mxu0
  %v9293 = vadd.f32 %v8908, %v9292
  %v9294 = vpop.f32.mrf.mxu0
  %9295 = vmatprep.mubr.f32.mxu0 %v7583
  %9296 = vmatmul.mubr.f32.gmra.mxu0 %v7582
  %v9297 = vpop.f32.mrf.mxu0
  %v9298 = vadd.f32 %v8913, %v9297
  %v9299 = vpop.f32.mrf.mxu0
  %9300 = vmatprep.mubr.f32.mxu0 %v7592
  %9301 = vmatmul.mubr.f32.gmra.mxu0 %v7591
  %v9302 = vpop.f32.mrf.mxu0
  %v9303 = vadd.f32 %v8918, %v9302
  %v9304 = vpop.f32.mrf.mxu0
  %9305 = vmatprep.mubr.f32.mxu0 %v7601
  %9306 = vmatmul.mubr.f32.gmra.mxu0 %v7600
  %v9307 = vpop.f32.mrf.mxu0
  %v9308 = vadd.f32 %v8923, %v9307
  %v9309 = vpop.f32.mrf.mxu0
  %9310 = vmatprep.mubr.f32.mxu0 %v7610
  %9311 = vmatmul.mubr.f32.gmra.mxu0 %v7609
  %v9312 = vpop.f32.mrf.mxu0
  %v9313 = vadd.f32 %v8928, %v9312
  %v9314 = vpop.f32.mrf.mxu0
  %9315 = vmatprep.mubr.f32.mxu0 %v7619
  %9316 = vmatmul.mubr.f32.gmra.mxu0 %v7618
  %v9317 = vpop.f32.mrf.mxu0
  %v9318 = vadd.f32 %v8933, %v9317
  %v9319 = vpop.f32.mrf.mxu0
  %9320 = vmatprep.mubr.f32.mxu0 %v7628
  %9321 = vmatmul.mubr.f32.gmra.mxu0 %v7627
  %v9322 = vpop.f32.mrf.mxu0
  %v9323 = vadd.f32 %v8938, %v9322
  %v9324 = vpop.f32.mrf.mxu0
  %9325 = vmatprep.mubr.f32.mxu0 %v7637
  %9326 = vmatmul.mubr.f32.gmra.mxu0 %v7636
  %v9327 = vpop.f32.mrf.mxu0
  %v9328 = vadd.f32 %v8943, %v9327
  %v9329 = vpop.f32.mrf.mxu0
  %9330 = vmatprep.mubr.f32.mxu0 %v7646
  %9331 = vmatmul.mubr.f32.gmra.mxu0 %v7645
  %v9332 = vpop.f32.mrf.mxu0
  %v9333 = vadd.f32 %v8948, %v9332
  %v9334 = vpop.f32.mrf.mxu0
  %9335 = vmatprep.mubr.f32.mxu0 %v7655
  %9336 = vmatmul.mubr.f32.gmra.mxu0 %v7654
  %v9337 = vpop.f32.mrf.mxu0
  %v9338 = vadd.f32 %v8953, %v9337
  %v9339 = vpop.f32.mrf.mxu0
  %9340 = vdwg.mxu0
  %9341 = vmatprep.subr.mxu0 0.0
  %9342 = vmatpush1.msra.mxu0 %v7800
  %9343 = vmatprep.subr.mxu0 0.0
  %9344 = vmatpush1.msra.mxu0 %v7799
  %9345 = vmatprep.subr.mxu0 0.0
  %9346 = vmatpush1.msra.mxu0 %v7798
  %9347 = vmatprep.subr.mxu0 0.0
  %9348 = vmatpush1.msra.mxu0 %v7797
  %9349 = vmatprep.subr.mxu0 0.0
  %9350 = vmatpush1.msra.mxu0 %v7796
  %9351 = vmatprep.subr.mxu0 0.0
  %9352 = vmatpush1.msra.mxu0 %v7795
  %9353 = vmatprep.subr.mxu0 0.0
  %9354 = vmatpush1.msra.mxu0 %v7794
  %9355 = vmatprep.subr.mxu0 0.0
  %9356 = vmatpush1.msra.mxu0 %v7793
  %9357 = vmatprep.subr.mxu0 0.0
  %9358 = vmatpush1.msra.mxu0 %v7792
  %9359 = vmatprep.subr.mxu0 0.0
  %9360 = vmatpush1.msra.mxu0 %v7791
  %9361 = vmatprep.subr.mxu0 0.0
  %9362 = vmatpush1.msra.mxu0 %v7790
  %9363 = vmatprep.subr.mxu0 0.0
  %9364 = vmatpush1.msra.mxu0 %v7789
  %9365 = vmatprep.subr.mxu0 0.0
  %9366 = vmatpush1.msra.mxu0 %v7788
  %9367 = vmatprep.subr.mxu0 0.0
  %9368 = vmatpush1.msra.mxu0 %v7787
  %9369 = vmatprep.subr.mxu0 0.0
  %9370 = vmatpush1.msra.mxu0 %v7786
  %9371 = vmatprep.subr.mxu0 0.0
  %9372 = vmatpush1.msra.mxu0 %v7785
  %9373 = vmatprep.subr.mxu0 0.0
  %9374 = vmatpush2.msra.mxu0 0.0
  %9375 = vmatprep.subr.mxu0 0.0
  %9376 = vmatpush2.msra.mxu0 0.0
  %9377 = vmatprep.subr.mxu0 0.0
  %9378 = vmatpush2.msra.mxu0 0.0
  %9379 = vmatprep.subr.mxu0 0.0
  %9380 = vmatpush2.msra.mxu0 0.0
  %9381 = vmatprep.subr.mxu0 0.0
  %9382 = vmatpush2.msra.mxu0 0.0
  %9383 = vmatprep.subr.mxu0 0.0
  %9384 = vmatpush2.msra.mxu0 0.0
  %9385 = vmatprep.subr.mxu0 0.0
  %9386 = vmatpush2.msra.mxu0 0.0
  %9387 = vmatprep.subr.mxu0 0.0
  %9388 = vmatpush2.msra.mxu0 0.0
  %9389 = vmatprep.subr.mxu0 0.0
  %9390 = vmatpush2.msra.mxu0 0.0
  %9391 = vmatprep.subr.mxu0 0.0
  %9392 = vmatpush2.msra.mxu0 0.0
  %9393 = vmatprep.subr.mxu0 0.0
  %9394 = vmatpush2.msra.mxu0 0.0
  %9395 = vmatprep.subr.mxu0 0.0
  %9396 = vmatpush2.msra.mxu0 0.0
  %9397 = vmatprep.subr.mxu0 0.0
  %9398 = vmatpush2.msra.mxu0 0.0
  %9399 = vmatprep.subr.mxu0 0.0
  %9400 = vmatpush2.msra.mxu0 0.0
  %9401 = vmatprep.subr.mxu0 0.0
  %9402 = vmatpush2.msra.mxu0 0.0
  %9403 = vmatprep.subr.mxu0 0.0
  %9404 = vmatpush2.msra.mxu0 0.0
  %9405 = vmatprep.mubr.f32.mxu0 0.0
  %9406 = vmatmul.mubr.f32.gmra.mxu0 %v7089
  %v9407 = vpop.f32.mrf.mxu0
  %v9408 = vadd.f32 %v9023, %v9407
  %v9409 = vpop.f32.mrf.mxu0
  %9410 = vmatprep.mubr.f32.mxu0 0.0
  %9411 = vmatmul.mubr.f32.gmra.mxu0 %v7098
  %v9412 = vpop.f32.mrf.mxu0
  %v9413 = vadd.f32 %v9028, %v9412
  %v9414 = vpop.f32.mrf.mxu0
  %9415 = vmatprep.mubr.f32.mxu0 0.0
  %9416 = vmatmul.mubr.f32.gmra.mxu0 %v7107
  %v9417 = vpop.f32.mrf.mxu0
  %v9418 = vadd.f32 %v9033, %v9417
  %v9419 = vpop.f32.mrf.mxu0
  %9420 = vmatprep.mubr.f32.mxu0 0.0
  %9421 = vmatmul.mubr.f32.gmra.mxu0 %v7116
  %v9422 = vpop.f32.mrf.mxu0
  %v9423 = vadd.f32 %v9038, %v9422
  %v9424 = vpop.f32.mrf.mxu0
  %9425 = vmatprep.mubr.f32.mxu0 0.0
  %9426 = vmatmul.mubr.f32.gmra.mxu0 %v7125
  %v9427 = vpop.f32.mrf.mxu0
  %v9428 = vadd.f32 %v9043, %v9427
  %v9429 = vpop.f32.mrf.mxu0
  %9430 = vmatprep.mubr.f32.mxu0 0.0
  %9431 = vmatmul.mubr.f32.gmra.mxu0 %v7134
  %v9432 = vpop.f32.mrf.mxu0
  %v9433 = vadd.f32 %v9048, %v9432
  %v9434 = vpop.f32.mrf.mxu0
  %9435 = vmatprep.mubr.f32.mxu0 0.0
  %9436 = vmatmul.mubr.f32.gmra.mxu0 %v7143
  %v9437 = vpop.f32.mrf.mxu0
  %v9438 = vadd.f32 %v9053, %v9437
  %v9439 = vpop.f32.mrf.mxu0
  %9440 = vmatprep.mubr.f32.mxu0 0.0
  %9441 = vmatmul.mubr.f32.gmra.mxu0 %v7152
  %v9442 = vpop.f32.mrf.mxu0
  %v9443 = vadd.f32 %v9058, %v9442
  %v9444 = vpop.f32.mrf.mxu0
  %9445 = vmatprep.mubr.f32.mxu0 0.0
  %9446 = vmatmul.mubr.f32.gmra.mxu0 %v7161
  %v9447 = vpop.f32.mrf.mxu0
  %v9448 = vadd.f32 %v9063, %v9447
  %v9449 = vpop.f32.mrf.mxu0
  %9450 = vmatprep.mubr.f32.mxu0 0.0
  %9451 = vmatmul.mubr.f32.gmra.mxu0 %v7170
  %v9452 = vpop.f32.mrf.mxu0
  %v9453 = vadd.f32 %v9068, %v9452
  %v9454 = vpop.f32.mrf.mxu0
  %9455 = vmatprep.mubr.f32.mxu0 0.0
  %9456 = vmatmul.mubr.f32.gmra.mxu0 %v7179
  %v9457 = vpop.f32.mrf.mxu0
  %v9458 = vadd.f32 %v9073, %v9457
  %v9459 = vpop.f32.mrf.mxu0
  %9460 = vmatprep.mubr.f32.mxu0 0.0
  %9461 = vmatmul.mubr.f32.gmra.mxu0 %v7188
  %v9462 = vpop.f32.mrf.mxu0
  %v9463 = vadd.f32 %v9078, %v9462
  %v9464 = vpop.f32.mrf.mxu0
  %9465 = vmatprep.mubr.f32.mxu0 0.0
  %9466 = vmatmul.mubr.f32.gmra.mxu0 %v7197
  %v9467 = vpop.f32.mrf.mxu0
  %v9468 = vadd.f32 %v9083, %v9467
  %v9469 = vpop.f32.mrf.mxu0
  %9470 = vmatprep.mubr.f32.mxu0 0.0
  %9471 = vmatmul.mubr.f32.gmra.mxu0 %v7206
  %v9472 = vpop.f32.mrf.mxu0
  %v9473 = vadd.f32 %v9088, %v9472
  %v9474 = vpop.f32.mrf.mxu0
  %9475 = vmatprep.mubr.f32.mxu0 0.0
  %9476 = vmatmul.mubr.f32.gmra.mxu0 %v7215
  %v9477 = vpop.f32.mrf.mxu0
  %v9478 = vadd.f32 %v9093, %v9477
  %v9479 = vpop.f32.mrf.mxu0
  %9480 = vmatprep.mubr.f32.mxu0 0.0
  %9481 = vmatmul.mubr.f32.gmra.mxu0 %v7224
  %v9482 = vpop.f32.mrf.mxu0
  %v9483 = vadd.f32 %v9098, %v9482
  %v9484 = vpop.f32.mrf.mxu0
  %9485 = vmatprep.mubr.f32.mxu0 0.0
  %9486 = vmatmul.mubr.f32.gmra.mxu0 %v7233
  %v9487 = vpop.f32.mrf.mxu0
  %v9488 = vadd.f32 %v9103, %v9487
  %v9489 = vpop.f32.mrf.mxu0
  %9490 = vmatprep.mubr.f32.mxu0 0.0
  %9491 = vmatmul.mubr.f32.gmra.mxu0 %v7242
  %v9492 = vpop.f32.mrf.mxu0
  %v9493 = vadd.f32 %v9108, %v9492
  %v9494 = vpop.f32.mrf.mxu0
  %9495 = vmatprep.mubr.f32.mxu0 0.0
  %9496 = vmatmul.mubr.f32.gmra.mxu0 %v7251
  %v9497 = vpop.f32.mrf.mxu0
  %v9498 = vadd.f32 %v9113, %v9497
  %v9499 = vpop.f32.mrf.mxu0
  %9500 = vmatprep.mubr.f32.mxu0 0.0
  %9501 = vmatmul.mubr.f32.gmra.mxu0 %v7260
  %v9502 = vpop.f32.mrf.mxu0
  %v9503 = vadd.f32 %v9118, %v9502
  %v9504 = vpop.f32.mrf.mxu0
  %9505 = vmatprep.mubr.f32.mxu0 0.0
  %9506 = vmatmul.mubr.f32.gmra.mxu0 %v7269
  %v9507 = vpop.f32.mrf.mxu0
  %v9508 = vadd.f32 %v9123, %v9507
  %v9509 = vpop.f32.mrf.mxu0
  %9510 = vmatprep.mubr.f32.mxu0 0.0
  %9511 = vmatmul.mubr.f32.gmra.mxu0 %v7278
  %v9512 = vpop.f32.mrf.mxu0
  %v9513 = vadd.f32 %v9128, %v9512
  %v9514 = vpop.f32.mrf.mxu0
  %9515 = vmatprep.mubr.f32.mxu0 0.0
  %9516 = vmatmul.mubr.f32.gmra.mxu0 %v7287
  %v9517 = vpop.f32.mrf.mxu0
  %v9518 = vadd.f32 %v9133, %v9517
  %v9519 = vpop.f32.mrf.mxu0
  %9520 = vmatprep.mubr.f32.mxu0 0.0
  %9521 = vmatmul.mubr.f32.gmra.mxu0 %v7296
  %v9522 = vpop.f32.mrf.mxu0
  %v9523 = vadd.f32 %v9138, %v9522
  %v9524 = vpop.f32.mrf.mxu0
  %9525 = vmatprep.mubr.f32.mxu0 0.0
  %9526 = vmatmul.mubr.f32.gmra.mxu0 %v7305
  %v9527 = vpop.f32.mrf.mxu0
  %v9528 = vadd.f32 %v9143, %v9527
  %v9529 = vpop.f32.mrf.mxu0
  %9530 = vmatprep.mubr.f32.mxu0 0.0
  %9531 = vmatmul.mubr.f32.gmra.mxu0 %v7314
  %v9532 = vpop.f32.mrf.mxu0
  %v9533 = vadd.f32 %v9148, %v9532
  %v9534 = vpop.f32.mrf.mxu0
  %9535 = vmatprep.mubr.f32.mxu0 0.0
  %9536 = vmatmul.mubr.f32.gmra.mxu0 %v7323
  %v9537 = vpop.f32.mrf.mxu0
  %v9538 = vadd.f32 %v9153, %v9537
  %v9539 = vpop.f32.mrf.mxu0
  %9540 = vmatprep.mubr.f32.mxu0 0.0
  %9541 = vmatmul.mubr.f32.gmra.mxu0 %v7332
  %v9542 = vpop.f32.mrf.mxu0
  %v9543 = vadd.f32 %v9158, %v9542
  %v9544 = vpop.f32.mrf.mxu0
  %9545 = vmatprep.mubr.f32.mxu0 0.0
  %9546 = vmatmul.mubr.f32.gmra.mxu0 %v7341
  %v9547 = vpop.f32.mrf.mxu0
  %v9548 = vadd.f32 %v9163, %v9547
  %v9549 = vpop.f32.mrf.mxu0
  %9550 = vmatprep.mubr.f32.mxu0 0.0
  %9551 = vmatmul.mubr.f32.gmra.mxu0 %v7350
  %v9552 = vpop.f32.mrf.mxu0
  %v9553 = vadd.f32 %v9168, %v9552
  %v9554 = vpop.f32.mrf.mxu0
  %9555 = vmatprep.mubr.f32.mxu0 0.0
  %9556 = vmatmul.mubr.f32.gmra.mxu0 %v7359
  %v9557 = vpop.f32.mrf.mxu0
  %v9558 = vadd.f32 %v9173, %v9557
  %v9559 = vpop.f32.mrf.mxu0
  %9560 = vmatprep.mubr.f32.mxu0 0.0
  %9561 = vmatmul.mubr.f32.gmra.mxu0 %v7368
  %v9562 = vpop.f32.mrf.mxu0
  %v9563 = vadd.f32 %v9178, %v9562
  %v9564 = vpop.f32.mrf.mxu0
  %9565 = vmatprep.mubr.f32.mxu0 0.0
  %9566 = vmatmul.mubr.f32.gmra.mxu0 %v7377
  %v9567 = vpop.f32.mrf.mxu0
  %v9568 = vadd.f32 %v9183, %v9567
  %v9569 = vpop.f32.mrf.mxu0
  %9570 = vmatprep.mubr.f32.mxu0 0.0
  %9571 = vmatmul.mubr.f32.gmra.mxu0 %v7386
  %v9572 = vpop.f32.mrf.mxu0
  %v9573 = vadd.f32 %v9188, %v9572
  %v9574 = vpop.f32.mrf.mxu0
  %9575 = vmatprep.mubr.f32.mxu0 0.0
  %9576 = vmatmul.mubr.f32.gmra.mxu0 %v7395
  %v9577 = vpop.f32.mrf.mxu0
  %v9578 = vadd.f32 %v9193, %v9577
  %v9579 = vpop.f32.mrf.mxu0
  %9580 = vmatprep.mubr.f32.mxu0 0.0
  %9581 = vmatmul.mubr.f32.gmra.mxu0 %v7404
  %v9582 = vpop.f32.mrf.mxu0
  %v9583 = vadd.f32 %v9198, %v9582
  %v9584 = vpop.f32.mrf.mxu0
  %9585 = vmatprep.mubr.f32.mxu0 0.0
  %9586 = vmatmul.mubr.f32.gmra.mxu0 %v7413
  %v9587 = vpop.f32.mrf.mxu0
  %v9588 = vadd.f32 %v9203, %v9587
  %v9589 = vpop.f32.mrf.mxu0
  %9590 = vmatprep.mubr.f32.mxu0 0.0
  %9591 = vmatmul.mubr.f32.gmra.mxu0 %v7422
  %v9592 = vpop.f32.mrf.mxu0
  %v9593 = vadd.f32 %v9208, %v9592
  %v9594 = vpop.f32.mrf.mxu0
  %9595 = vmatprep.mubr.f32.mxu0 0.0
  %9596 = vmatmul.mubr.f32.gmra.mxu0 %v7431
  %v9597 = vpop.f32.mrf.mxu0
  %v9598 = vadd.f32 %v9213, %v9597
  %v9599 = vpop.f32.mrf.mxu0
  %9600 = vmatprep.mubr.f32.mxu0 0.0
  %9601 = vmatmul.mubr.f32.gmra.mxu0 %v7440
  %v9602 = vpop.f32.mrf.mxu0
  %v9603 = vadd.f32 %v9218, %v9602
  %v9604 = vpop.f32.mrf.mxu0
  %9605 = vmatprep.mubr.f32.mxu0 0.0
  %9606 = vmatmul.mubr.f32.gmra.mxu0 %v7449
  %v9607 = vpop.f32.mrf.mxu0
  %v9608 = vadd.f32 %v9223, %v9607
  %v9609 = vpop.f32.mrf.mxu0
  %9610 = vmatprep.mubr.f32.mxu0 0.0
  %9611 = vmatmul.mubr.f32.gmra.mxu0 %v7458
  %v9612 = vpop.f32.mrf.mxu0
  %v9613 = vadd.f32 %v9228, %v9612
  %v9614 = vpop.f32.mrf.mxu0
  %9615 = vmatprep.mubr.f32.mxu0 0.0
  %9616 = vmatmul.mubr.f32.gmra.mxu0 %v7467
  %v9617 = vpop.f32.mrf.mxu0
  %v9618 = vadd.f32 %v9233, %v9617
  %v9619 = vpop.f32.mrf.mxu0
  %9620 = vmatprep.mubr.f32.mxu0 0.0
  %9621 = vmatmul.mubr.f32.gmra.mxu0 %v7476
  %v9622 = vpop.f32.mrf.mxu0
  %v9623 = vadd.f32 %v9238, %v9622
  %v9624 = vpop.f32.mrf.mxu0
  %9625 = vmatprep.mubr.f32.mxu0 0.0
  %9626 = vmatmul.mubr.f32.gmra.mxu0 %v7485
  %v9627 = vpop.f32.mrf.mxu0
  %v9628 = vadd.f32 %v9243, %v9627
  %v9629 = vpop.f32.mrf.mxu0
  %9630 = vmatprep.mubr.f32.mxu0 0.0
  %9631 = vmatmul.mubr.f32.gmra.mxu0 %v7494
  %v9632 = vpop.f32.mrf.mxu0
  %v9633 = vadd.f32 %v9248, %v9632
  %v9634 = vpop.f32.mrf.mxu0
  %9635 = vmatprep.mubr.f32.mxu0 0.0
  %9636 = vmatmul.mubr.f32.gmra.mxu0 %v7503
  %v9637 = vpop.f32.mrf.mxu0
  %v9638 = vadd.f32 %v9253, %v9637
  %v9639 = vpop.f32.mrf.mxu0
  %9640 = vmatprep.mubr.f32.mxu0 0.0
  %9641 = vmatmul.mubr.f32.gmra.mxu0 %v7512
  %v9642 = vpop.f32.mrf.mxu0
  %v9643 = vadd.f32 %v9258, %v9642
  %v9644 = vpop.f32.mrf.mxu0
  %9645 = vmatprep.mubr.f32.mxu0 0.0
  %9646 = vmatmul.mubr.f32.gmra.mxu0 %v7521
  %v9647 = vpop.f32.mrf.mxu0
  %v9648 = vadd.f32 %v9263, %v9647
  %v9649 = vpop.f32.mrf.mxu0
  %9650 = vmatprep.mubr.f32.mxu0 0.0
  %9651 = vmatmul.mubr.f32.gmra.mxu0 %v7530
  %v9652 = vpop.f32.mrf.mxu0
  %v9653 = vadd.f32 %v9268, %v9652
  %v9654 = vpop.f32.mrf.mxu0
  %9655 = vmatprep.mubr.f32.mxu0 0.0
  %9656 = vmatmul.mubr.f32.gmra.mxu0 %v7539
  %v9657 = vpop.f32.mrf.mxu0
  %v9658 = vadd.f32 %v9273, %v9657
  %v9659 = vpop.f32.mrf.mxu0
  %9660 = vmatprep.mubr.f32.mxu0 0.0
  %9661 = vmatmul.mubr.f32.gmra.mxu0 %v7548
  %v9662 = vpop.f32.mrf.mxu0
  %v9663 = vadd.f32 %v9278, %v9662
  %v9664 = vpop.f32.mrf.mxu0
  %9665 = vmatprep.mubr.f32.mxu0 0.0
  %9666 = vmatmul.mubr.f32.gmra.mxu0 %v7557
  %v9667 = vpop.f32.mrf.mxu0
  %v9668 = vadd.f32 %v9283, %v9667
  %v9669 = vpop.f32.mrf.mxu0
  %9670 = vmatprep.mubr.f32.mxu0 0.0
  %9671 = vmatmul.mubr.f32.gmra.mxu0 %v7566
  %v9672 = vpop.f32.mrf.mxu0
  %v9673 = vadd.f32 %v9288, %v9672
  %v9674 = vpop.f32.mrf.mxu0
  %9675 = vmatprep.mubr.f32.mxu0 0.0
  %9676 = vmatmul.mubr.f32.gmra.mxu0 %v7575
  %v9677 = vpop.f32.mrf.mxu0
  %v9678 = vadd.f32 %v9293, %v9677
  %v9679 = vpop.f32.mrf.mxu0
  %9680 = vmatprep.mubr.f32.mxu0 0.0
  %9681 = vmatmul.mubr.f32.gmra.mxu0 %v7584
  %v9682 = vpop.f32.mrf.mxu0
  %v9683 = vadd.f32 %v9298, %v9682
  %v9684 = vpop.f32.mrf.mxu0
  %9685 = vmatprep.mubr.f32.mxu0 0.0
  %9686 = vmatmul.mubr.f32.gmra.mxu0 %v7593
  %v9687 = vpop.f32.mrf.mxu0
  %v9688 = vadd.f32 %v9303, %v9687
  %v9689 = vpop.f32.mrf.mxu0
  %9690 = vmatprep.mubr.f32.mxu0 0.0
  %9691 = vmatmul.mubr.f32.gmra.mxu0 %v7602
  %v9692 = vpop.f32.mrf.mxu0
  %v9693 = vadd.f32 %v9308, %v9692
  %v9694 = vpop.f32.mrf.mxu0
  %9695 = vmatprep.mubr.f32.mxu0 0.0
  %9696 = vmatmul.mubr.f32.gmra.mxu0 %v7611
  %v9697 = vpop.f32.mrf.mxu0
  %v9698 = vadd.f32 %v9313, %v9697
  %v9699 = vpop.f32.mrf.mxu0
  %9700 = vmatprep.mubr.f32.mxu0 0.0
  %9701 = vmatmul.mubr.f32.gmra.mxu0 %v7620
  %v9702 = vpop.f32.mrf.mxu0
  %v9703 = vadd.f32 %v9318, %v9702
  %v9704 = vpop.f32.mrf.mxu0
  %9705 = vmatprep.mubr.f32.mxu0 0.0
  %9706 = vmatmul.mubr.f32.gmra.mxu0 %v7629
  %v9707 = vpop.f32.mrf.mxu0
  %v9708 = vadd.f32 %v9323, %v9707
  %v9709 = vpop.f32.mrf.mxu0
  %9710 = vmatprep.mubr.f32.mxu0 0.0
  %9711 = vmatmul.mubr.f32.gmra.mxu0 %v7638
  %v9712 = vpop.f32.mrf.mxu0
  %v9713 = vadd.f32 %v9328, %v9712
  %v9714 = vpop.f32.mrf.mxu0
  %9715 = vmatprep.mubr.f32.mxu0 0.0
  %9716 = vmatmul.mubr.f32.gmra.mxu0 %v7647
  %v9717 = vpop.f32.mrf.mxu0
  %v9718 = vadd.f32 %v9333, %v9717
  %v9719 = vpop.f32.mrf.mxu0
  %9720 = vmatprep.mubr.f32.mxu0 0.0
  %9721 = vmatmul.mubr.f32.gmra.mxu0 %v7656
  %v9722 = vpop.f32.mrf.mxu0
  %v9723 = vadd.f32 %v9338, %v9722
  %v9724 = vpop.f32.mrf.mxu0
  %9725 = vdwg.mxu0
  %9726 = vst [vmem:[%s6] sm:$0xff] %v9408
  %9727 = vst [vmem:[%s6 + $0x8] sm:$0xff] %v9413
  %9728 = vst [vmem:[%s6 + $0x10] sm:$0xff] %v9418
  %9729 = vst [vmem:[%s6 + $0x18] sm:$0xff] %v9423
  %9730 = vst [vmem:[%s6 + $0x20] sm:$0xff] %v9428
  %9731 = vst [vmem:[%s6 + $0x28] sm:$0xff] %v9433
  %9732 = vst [vmem:[%s6 + $0x30] sm:$0xff] %v9438
  %9733 = vst [vmem:[%s6 + $0x38] sm:$0xff] %v9443
  %9734 = vst [vmem:[%s6 + $0x40] sm:$0xff] %v9448
  %9735 = vst [vmem:[%s6 + $0x48] sm:$0xff] %v9453
  %9736 = vst [vmem:[%s6 + $0x50] sm:$0xff] %v9458
  %9737 = vst [vmem:[%s6 + $0x58] sm:$0xff] %v9463
  %9738 = vst [vmem:[%s6 + $0x60] sm:$0xff] %v9468
  %9739 = vst [vmem:[%s6 + $0x68] sm:$0xff] %v9473
  %9740 = vst [vmem:[%s6 + $0x70] sm:$0xff] %v9478
  %9741 = vst [vmem:[%s6 + $0x78] sm:$0xff] %v9483
  %9742 = vst [vmem:[%s6 + $0x80] sm:$0xff] %v9488
  %9743 = vst [vmem:[%s6 + $0x88] sm:$0xff] %v9493
  %9744 = vst [vmem:[%s6 + $0x90] sm:$0xff] %v9498
  %9745 = vst [vmem:[%s6 + $0x98] sm:$0xff] %v9503
  %9746 = vst [vmem:[%s6 + $0xa0] sm:$0xff] %v9508
  %9747 = vst [vmem:[%s6 + $0xa8] sm:$0xff] %v9513
  %9748 = vst [vmem:[%s6 + $0xb0] sm:$0xff] %v9518
  %9749 = vst [vmem:[%s6 + $0xb8] sm:$0xff] %v9523
  %9750 = vst [vmem:[%s6 + $0xc0] sm:$0xff] %v9528
  %9751 = vst [vmem:[%s6 + $0xc8] sm:$0xff] %v9533
  %9752 = vst [vmem:[%s6 + $0xd0] sm:$0xff] %v9538
  %9753 = vst [vmem:[%s6 + $0xd8] sm:$0xff] %v9543
  %9754 = vst [vmem:[%s6 + $0xe0] sm:$0xff] %v9548
  %9755 = vst [vmem:[%s6 + $0xe8] sm:$0xff] %v9553
  %9756 = vst [vmem:[%s6 + $0xf0] sm:$0xff] %v9558
  %9757 = vst [vmem:[%s6 + $0xf8] sm:$0xff] %v9563
  %9758 = vst [vmem:[%s6 + $0x100] sm:$0xff] %v9568
  %9759 = vst [vmem:[%s6 + $0x108] sm:$0xff] %v9573
  %9760 = vst [vmem:[%s6 + $0x110] sm:$0xff] %v9578
  %9761 = vst [vmem:[%s6 + $0x118] sm:$0xff] %v9583
  %9762 = vst [vmem:[%s6 + $0x120] sm:$0xff] %v9588
  %9763 = vst [vmem:[%s6 + $0x128] sm:$0xff] %v9593
  %9764 = vst [vmem:[%s6 + $0x130] sm:$0xff] %v9598
  %9765 = vst [vmem:[%s6 + $0x138] sm:$0xff] %v9603
  %9766 = vst [vmem:[%s6 + $0x140] sm:$0xff] %v9608
  %9767 = vst [vmem:[%s6 + $0x148] sm:$0xff] %v9613
  %9768 = vst [vmem:[%s6 + $0x150] sm:$0xff] %v9618
  %9769 = vst [vmem:[%s6 + $0x158] sm:$0xff] %v9623
  %9770 = vst [vmem:[%s6 + $0x160] sm:$0xff] %v9628
  %9771 = vst [vmem:[%s6 + $0x168] sm:$0xff] %v9633
  %9772 = vst [vmem:[%s6 + $0x170] sm:$0xff] %v9638
  %9773 = vst [vmem:[%s6 + $0x178] sm:$0xff] %v9643
  %9774 = vst [vmem:[%s6 + $0x180] sm:$0xff] %v9648
  %9775 = vst [vmem:[%s6 + $0x188] sm:$0xff] %v9653
  %9776 = vst [vmem:[%s6 + $0x190] sm:$0xff] %v9658
  %9777 = vst [vmem:[%s6 + $0x198] sm:$0xff] %v9663
  %9778 = vst [vmem:[%s6 + $0x1a0] sm:$0xff] %v9668
  %9779 = vst [vmem:[%s6 + $0x1a8] sm:$0xff] %v9673
  %9780 = vst [vmem:[%s6 + $0x1b0] sm:$0xff] %v9678
  %9781 = vst [vmem:[%s6 + $0x1b8] sm:$0xff] %v9683
  %9782 = vst [vmem:[%s6 + $0x1c0] sm:$0xff] %v9688
  %9783 = vst [vmem:[%s6 + $0x1c8] sm:$0xff] %v9693
  %9784 = vst [vmem:[%s6 + $0x1d0] sm:$0xff] %v9698
  %9785 = vst [vmem:[%s6 + $0x1d8] sm:$0xff] %v9703
  %9786 = vst [vmem:[%s6 + $0x1e0] sm:$0xff] %v9708
  %9787 = vst [vmem:[%s6 + $0x1e8] sm:$0xff] %v9713
  %9788 = vst [vmem:[%s6 + $0x1f0] sm:$0xff] %v9718
  %9789 = vst [vmem:[%s6 + $0x1f8] sm:$0xff] %v9723
  // Predicated region
  $region26: #{dense_layer_forward.3} parent=0 // pred_check
    _
  $region27: #{dense_layer_forward.3} parent=0 // pred_check_branch
    %9791 = sbr.rel (0) target = $region29
  $region28: #{dense_layer_forward.3} parent=0 // pred_region
    _
  $region29: #{dense_layer_forward.3} parent=0 // pred_fallthru
    _
  // Predicated region
  $region30: #{dense_layer_forward.3} parent=0 // pred_check
    _
  $region31: #{dense_layer_forward.3} parent=0 // pred_check_branch
    %9793 = sbr.rel (0) target = $region33
  $region32: #{dense_layer_forward.3} parent=0 // pred_region
    _
  $region33: #{dense_layer_forward.3} parent=0 // pred_fallthru
    _

</llo_original>
